<compile_context>
chip_gen: v7x
topology: tpu7x:2x2x1
jax: 0.10.0
libtpu: 0.0.40
codegen_flags: <defaults>
</compile_context>

<pallas_src>
import functools
import math

import jax
import jax.numpy as jnp
from jax.experimental import pallas as pl
from jax.experimental.pallas import tpu as pltpu

# ----------------------------- config -----------------------------
VOCAB_SIZE = 16
D_MODEL = 32
NHEAD = 4
DH = D_MODEL // NHEAD
DIM_FF = 64
NUM_ENC = 2
NUM_DEC = 2
LN_EPS = 1e-5
NEG_INF = -1e9
SQRT_D = math.sqrt(D_MODEL)
ATTN_SCALE = 1.0 / math.sqrt(DH)


# ----------------------------- in-kernel building blocks -----------------------------
def _layernorm(x, g, b):
    mean = jnp.mean(x, axis=-1, keepdims=True)
    c = x - mean
    var = jnp.mean(c * c, axis=-1, keepdims=True)
    return c * jax.lax.rsqrt(var + LN_EPS) * g + b


def _softmax_rows(s):
    s = s - jnp.max(s, axis=-1, keepdims=True)
    p = jnp.exp(s)
    denom = jnp.sum(p, axis=-1, keepdims=True)
    # EUP reciprocal (free slot) instead of a VALU divide.
    return p * pl.reciprocal(denom, approx=True)


def _attention(q, k, v, mask):
    """q: [Nq, D], k/v: [Nk, D], mask: [Nq, Nk] additive (batch-block + user).

    Heads are static lane slices; every head is one MXU matmul over the whole
    batch (batch separation enforced by the block-diagonal mask)."""
    outs = []
    for h in range(NHEAD):
        lo = h * DH
        qh = q[:, lo:lo + DH]
        kh = k[:, lo:lo + DH]
        vh = v[:, lo:lo + DH]
        s = jax.lax.dot_general(qh, kh, (((1,), (1,)), ((), ())),
                                preferred_element_type=jnp.float32)
        s = s * ATTN_SCALE + mask
        p = _softmax_rows(s)
        outs.append(jnp.dot(p, vh, preferred_element_type=jnp.float32))
    return jnp.concatenate(outs, axis=-1)  # [Nq, D]


def _self_mha(x, p, mask):
    qkv = jnp.dot(x, p["wqkv"], preferred_element_type=jnp.float32) + p["bqkv"]
    q = qkv[:, :D_MODEL]
    k = qkv[:, D_MODEL:2 * D_MODEL]
    v = qkv[:, 2 * D_MODEL:]
    a = _attention(q, k, v, mask)
    return jnp.dot(a, p["wo"], preferred_element_type=jnp.float32) + p["bo"]


def _cross_mha(x, mem, p, mask):
    q = jnp.dot(x, p["wq"], preferred_element_type=jnp.float32) + p["bq"]
    kv = jnp.dot(mem, p["wkv"], preferred_element_type=jnp.float32) + p["bkv"]
    k = kv[:, :D_MODEL]
    v = kv[:, D_MODEL:]
    a = _attention(q, k, v, mask)
    return jnp.dot(a, p["wo"], preferred_element_type=jnp.float32) + p["bo"]


def _ffn(x, p):
    h = jnp.dot(x, p["w1"], preferred_element_type=jnp.float32) + p["b1"]
    h = jnp.maximum(h, 0.0)
    return jnp.dot(h, p["w2"], preferred_element_type=jnp.float32) + p["b2"]


# ----------------------------- the fused kernel -----------------------------
def _transformer_kernel(treedef, dims, *refs):
    B, Ls, Lt = dims
    src_ref, tgt_ref, enc_mask_ref, dec_mask_ref, cross_mask_ref = refs[:5]
    param_refs = refs[5:-1]
    o_ref = refs[-1]

    # Load every (tiny) parameter once into VMEM/vregs and rebuild the pytree.
    params = jax.tree_util.tree_unflatten(
        treedef, [r[...] for r in param_refs])
    emb_table = params["embedding"]

    def embed(ids_col, n):
        # one-hot gather as an MXU matmul; fold in sqrt(d_model) scale.
        iota = jax.lax.broadcasted_iota(jnp.int32, (n, VOCAB_SIZE), 1)
        oh = jnp.where(ids_col == iota, 1.0, 0.0).astype(jnp.float32)
        return jnp.dot(oh, emb_table,
                       preferred_element_type=jnp.float32) * SQRT_D

    enc_mask = enc_mask_ref[...]
    dec_mask = dec_mask_ref[...]
    cross_mask = cross_mask_ref[...]

    # ----------------- encoder -----------------
    x = embed(src_ref[...], B * Ls)                       # [B*Ls, D]
    for lp in params["encoder_layers"]:
        a = _self_mha(x, lp["attn"], enc_mask)
        x = _layernorm(x + a, lp["ln1_g"], lp["ln1_b"])
        f = _ffn(x, lp["ffn"])
        x = _layernorm(x + f, lp["ln2_g"], lp["ln2_b"])
    memory = _layernorm(x, params["enc_norm_g"], params["enc_norm_b"])

    # ----------------- decoder -----------------
    y = embed(tgt_ref[...], B * Lt)                       # [B*Lt, D]
    for lp in params["decoder_layers"]:
        a = _self_mha(y, lp["self_attn"], dec_mask)
        y = _layernorm(y + a, lp["ln1_g"], lp["ln1_b"])
        a = _cross_mha(y, memory, lp["cross_attn"], cross_mask)
        y = _layernorm(y + a, lp["ln2_g"], lp["ln2_b"])
        f = _ffn(y, lp["ffn"])
        y = _layernorm(y + f, lp["ln3_g"], lp["ln3_b"])
    y = _layernorm(y, params["dec_norm_g"], params["dec_norm_b"])

    out = jnp.dot(y, params["out_w"],
                  preferred_element_type=jnp.float32) + params["out_b"]
    o_ref[...] = out.astype(o_ref.dtype)


# ----------------------------- host-side wrapper -----------------------------
def _block_batch_mask(B, Lq, Lk, user_mask=None):
    """Additive mask on the [B*Lq, B*Lk] score matrix: -1e9 across batches,
    plus the per-position user mask replicated on the diagonal blocks."""
    ri = jnp.arange(B * Lq)[:, None] // Lq
    ci = jnp.arange(B * Lk)[None, :] // Lk
    m = jnp.where(ri == ci, 0.0, NEG_INF).astype(jnp.float32)
    if user_mask is not None:
        m = m + jnp.tile(user_mask.astype(jnp.float32), (B, B))
    return m


def transformer_forward(params, src, tgt, src_mask, tgt_mask):
    B, Ls = src.shape
    Lt = tgt.shape[1]

    enc_mask = _block_batch_mask(B, Ls, Ls, src_mask)
    dec_mask = _block_batch_mask(B, Lt, Lt, tgt_mask)
    cross_mask = _block_batch_mask(B, Lt, Ls, None)   # memory_mask=None

    leaves, treedef = jax.tree_util.tree_flatten(params)
    kernel = functools.partial(_transformer_kernel, treedef, (B, Ls, Lt))

    n_inputs = 5 + len(leaves)
    vmem = pltpu.MemorySpace.VMEM
    out = pl.pallas_call(
        kernel,
        out_shape=jax.ShapeDtypeStruct((B * Lt, D_MODEL), jnp.float32),
        in_specs=[pl.BlockSpec(memory_space=vmem)] * n_inputs,
        out_specs=pl.BlockSpec(memory_space=vmem),
        compiler_params=pltpu.CompilerParams(
            vmem_limit_bytes=16 * 1024 * 1024),
    )(
        src.reshape(B * Ls, 1).astype(jnp.int32),
        tgt.reshape(B * Lt, 1).astype(jnp.int32),
        enc_mask, dec_mask, cross_mask,
        *leaves,
    )
    return out.reshape(B, Lt, D_MODEL)


# ----------------------------- param init -----------------------------
def _xavier(key, shape):
    fan_in, fan_out = shape[0], shape[1]
    a = math.sqrt(6.0 / (fan_in + fan_out))
    return jax.random.uniform(key, shape, jnp.float32, -a, a)


def _self_attn_params(key, d):
    ks = jax.random.split(key, 4)
    wqkv = jnp.concatenate([_xavier(ks[0], (d, d)),
                            _xavier(ks[1], (d, d)),
                            _xavier(ks[2], (d, d))], axis=1)
    return {
        "wqkv": wqkv, "bqkv": jnp.zeros((1, 3 * d), jnp.float32),
        "wo": _xavier(ks[3], (d, d)), "bo": jnp.zeros((1, d), jnp.float32),
    }


def _cross_attn_params(key, d):
    ks = jax.random.split(key, 4)
    return {
        "wq": _xavier(ks[0], (d, d)), "bq": jnp.zeros((1, d), jnp.float32),
        "wkv": jnp.concatenate([_xavier(ks[1], (d, d)),
                                _xavier(ks[2], (d, d))], axis=1),
        "bkv": jnp.zeros((1, 2 * d), jnp.float32),
        "wo": _xavier(ks[3], (d, d)), "bo": jnp.zeros((1, d), jnp.float32),
    }


def _ffn_params(key, d, dff):
    k1, k2 = jax.random.split(key)
    return {
        "w1": _xavier(k1, (d, dff)), "b1": jnp.zeros((1, dff), jnp.float32),
        "w2": _xavier(k2, (dff, d)), "b2": jnp.zeros((1, d), jnp.float32),
    }


def init_params(key):
    keys = jax.random.split(key, 2 + NUM_ENC + NUM_DEC)

    def ones():
        return jnp.ones((1, D_MODEL), jnp.float32)

    def zeros():
        return jnp.zeros((1, D_MODEL), jnp.float32)

    params = {
        "embedding": _xavier(keys[0], (VOCAB_SIZE, D_MODEL)),
        "out_w": _xavier(keys[1], (D_MODEL, D_MODEL)),
        "out_b": jnp.zeros((1, D_MODEL), jnp.float32),
        "enc_norm_g": ones(), "enc_norm_b": zeros(),
        "dec_norm_g": ones(), "dec_norm_b": zeros(),
        "encoder_layers": [],
        "decoder_layers": [],
    }
    for i in range(NUM_ENC):
        k1, k2 = jax.random.split(keys[2 + i])
        params["encoder_layers"].append({
            "attn": _self_attn_params(k1, D_MODEL),
            "ffn": _ffn_params(k2, D_MODEL, DIM_FF),
            "ln1_g": ones(), "ln1_b": zeros(),
            "ln2_g": ones(), "ln2_b": zeros(),
        })
    for i in range(NUM_DEC):
        k1, k2, k3 = jax.random.split(keys[2 + NUM_ENC + i], 3)
        params["decoder_layers"].append({
            "self_attn": _self_attn_params(k1, D_MODEL),
            "cross_attn": _cross_attn_params(k2, D_MODEL),
            "ffn": _ffn_params(k3, D_MODEL, DIM_FF),
            "ln1_g": ones(), "ln1_b": zeros(),
            "ln2_g": ones(), "ln2_b": zeros(),
            "ln3_g": ones(), "ln3_b": zeros(),
        })
    return params


# ----------------------------- main -----------------------------
if __name__ == "__main__":
    key = jax.random.PRNGKey(0)
    kp, ks, kt = jax.random.split(key, 3)

    params = init_params(kp)

    batch, src_len, tgt_len = 2, 8, 8
    src = jax.random.randint(ks, (batch, src_len), 0, VOCAB_SIZE, jnp.int32)
    tgt = jax.random.randint(kt, (batch, tgt_len), 0, VOCAB_SIZE, jnp.int32)

    # src_mask=None -> zeros; tgt_mask = causal (generate_square_subsequent_mask)
    src_mask = jnp.zeros((src_len, src_len), jnp.float32)
    causal = jnp.triu(jnp.ones((tgt_len, tgt_len), jnp.float32), k=1)
    tgt_mask = causal * NEG_INF

    fwd = jax.jit(transformer_forward)
    out = fwd(params, src, tgt, src_mask, tgt_mask)
    out = jax.block_until_ready(out)

    assert out.shape == (batch, tgt_len, D_MODEL)
    assert bool(jnp.all(jnp.isfinite(out)))
    print("KERNEL_OK")
</pallas_src>

<mosaic_0001>
module attributes {stable_mosaic.version = 11 : i64} {
  func.func @_transformer_kernel(%arg0: memref<16x1xi32, #tpu.memory_space<vmem>>, %arg1: memref<16x1xi32, #tpu.memory_space<vmem>>, %arg2: memref<16x16xf32, #tpu.memory_space<vmem>>, %arg3: memref<16x16xf32, #tpu.memory_space<vmem>>, %arg4: memref<16x16xf32, #tpu.memory_space<vmem>>, %arg5: memref<1x32xf32, #tpu.memory_space<vmem>>, %arg6: memref<1x32xf32, #tpu.memory_space<vmem>>, %arg7: memref<1x64xf32, #tpu.memory_space<vmem>>, %arg8: memref<1x32xf32, #tpu.memory_space<vmem>>, %arg9: memref<1x32xf32, #tpu.memory_space<vmem>>, %arg10: memref<32x64xf32, #tpu.memory_space<vmem>>, %arg11: memref<32x32xf32, #tpu.memory_space<vmem>>, %arg12: memref<32x32xf32, #tpu.memory_space<vmem>>, %arg13: memref<1x64xf32, #tpu.memory_space<vmem>>, %arg14: memref<1x32xf32, #tpu.memory_space<vmem>>, %arg15: memref<32x64xf32, #tpu.memory_space<vmem>>, %arg16: memref<64x32xf32, #tpu.memory_space<vmem>>, %arg17: memref<1x32xf32, #tpu.memory_space<vmem>>, %arg18: memref<1x32xf32, #tpu.memory_space<vmem>>, %arg19: memref<1x32xf32, #tpu.memory_space<vmem>>, %arg20: memref<1x32xf32, #tpu.memory_space<vmem>>, %arg21: memref<1x32xf32, #tpu.memory_space<vmem>>, %arg22: memref<1x32xf32, #tpu.memory_space<vmem>>, %arg23: memref<1x32xf32, #tpu.memory_space<vmem>>, %arg24: memref<1x96xf32, #tpu.memory_space<vmem>>, %arg25: memref<32x32xf32, #tpu.memory_space<vmem>>, %arg26: memref<32x96xf32, #tpu.memory_space<vmem>>, %arg27: memref<1x64xf32, #tpu.memory_space<vmem>>, %arg28: memref<1x32xf32, #tpu.memory_space<vmem>>, %arg29: memref<1x32xf32, #tpu.memory_space<vmem>>, %arg30: memref<32x64xf32, #tpu.memory_space<vmem>>, %arg31: memref<32x32xf32, #tpu.memory_space<vmem>>, %arg32: memref<32x32xf32, #tpu.memory_space<vmem>>, %arg33: memref<1x64xf32, #tpu.memory_space<vmem>>, %arg34: memref<1x32xf32, #tpu.memory_space<vmem>>, %arg35: memref<32x64xf32, #tpu.memory_space<vmem>>, %arg36: memref<64x32xf32, #tpu.memory_space<vmem>>, %arg37: memref<1x32xf32, #tpu.memory_space<vmem>>, %arg38: memref<1x32xf32, #tpu.memory_space<vmem>>, %arg39: memref<1x32xf32, #tpu.memory_space<vmem>>, %arg40: memref<1x32xf32, #tpu.memory_space<vmem>>, %arg41: memref<1x32xf32, #tpu.memory_space<vmem>>, %arg42: memref<1x32xf32, #tpu.memory_space<vmem>>, %arg43: memref<1x32xf32, #tpu.memory_space<vmem>>, %arg44: memref<1x96xf32, #tpu.memory_space<vmem>>, %arg45: memref<32x32xf32, #tpu.memory_space<vmem>>, %arg46: memref<32x96xf32, #tpu.memory_space<vmem>>, %arg47: memref<16x32xf32, #tpu.memory_space<vmem>>, %arg48: memref<1x32xf32, #tpu.memory_space<vmem>>, %arg49: memref<1x32xf32, #tpu.memory_space<vmem>>, %arg50: memref<1x32xf32, #tpu.memory_space<vmem>>, %arg51: memref<1x96xf32, #tpu.memory_space<vmem>>, %arg52: memref<32x32xf32, #tpu.memory_space<vmem>>, %arg53: memref<32x96xf32, #tpu.memory_space<vmem>>, %arg54: memref<1x64xf32, #tpu.memory_space<vmem>>, %arg55: memref<1x32xf32, #tpu.memory_space<vmem>>, %arg56: memref<32x64xf32, #tpu.memory_space<vmem>>, %arg57: memref<64x32xf32, #tpu.memory_space<vmem>>, %arg58: memref<1x32xf32, #tpu.memory_space<vmem>>, %arg59: memref<1x32xf32, #tpu.memory_space<vmem>>, %arg60: memref<1x32xf32, #tpu.memory_space<vmem>>, %arg61: memref<1x32xf32, #tpu.memory_space<vmem>>, %arg62: memref<1x32xf32, #tpu.memory_space<vmem>>, %arg63: memref<1x96xf32, #tpu.memory_space<vmem>>, %arg64: memref<32x32xf32, #tpu.memory_space<vmem>>, %arg65: memref<32x96xf32, #tpu.memory_space<vmem>>, %arg66: memref<1x64xf32, #tpu.memory_space<vmem>>, %arg67: memref<1x32xf32, #tpu.memory_space<vmem>>, %arg68: memref<32x64xf32, #tpu.memory_space<vmem>>, %arg69: memref<64x32xf32, #tpu.memory_space<vmem>>, %arg70: memref<1x32xf32, #tpu.memory_space<vmem>>, %arg71: memref<1x32xf32, #tpu.memory_space<vmem>>, %arg72: memref<1x32xf32, #tpu.memory_space<vmem>>, %arg73: memref<1x32xf32, #tpu.memory_space<vmem>>, %arg74: memref<1x32xf32, #tpu.memory_space<vmem>>, %arg75: memref<32x32xf32, #tpu.memory_space<vmem>>, %arg76: memref<16x32xf32, #tpu.memory_space<vmem>>) attributes {dimension_semantics = [], scalar_prefetch = 0 : i64, scratch_operands = 0 : i64, tpu.core_type = #tpu.core_type<tc>} {
    %c0 = arith.constant 0 : index
    %c0_0 = arith.constant 0 : index
    %0 = vector.load %arg5[%c0, %c0_0] : memref<1x32xf32, #tpu.memory_space<vmem>>, vector<1x32xf32>
    %c0_1 = arith.constant 0 : index
    %c0_2 = arith.constant 0 : index
    %1 = vector.load %arg6[%c0_1, %c0_2] : memref<1x32xf32, #tpu.memory_space<vmem>>, vector<1x32xf32>
    %c0_3 = arith.constant 0 : index
    %c0_4 = arith.constant 0 : index
    %2 = vector.load %arg7[%c0_3, %c0_4] : memref<1x64xf32, #tpu.memory_space<vmem>>, vector<1x64xf32>
    %c0_5 = arith.constant 0 : index
    %c0_6 = arith.constant 0 : index
    %3 = vector.load %arg8[%c0_5, %c0_6] : memref<1x32xf32, #tpu.memory_space<vmem>>, vector<1x32xf32>
    %c0_7 = arith.constant 0 : index
    %c0_8 = arith.constant 0 : index
    %4 = vector.load %arg9[%c0_7, %c0_8] : memref<1x32xf32, #tpu.memory_space<vmem>>, vector<1x32xf32>
    %c0_9 = arith.constant 0 : index
    %c0_10 = arith.constant 0 : index
    %5 = vector.load %arg10[%c0_9, %c0_10] : memref<32x64xf32, #tpu.memory_space<vmem>>, vector<32x64xf32>
    %c0_11 = arith.constant 0 : index
    %c0_12 = arith.constant 0 : index
    %6 = vector.load %arg11[%c0_11, %c0_12] : memref<32x32xf32, #tpu.memory_space<vmem>>, vector<32x32xf32>
    %c0_13 = arith.constant 0 : index
    %c0_14 = arith.constant 0 : index
    %7 = vector.load %arg12[%c0_13, %c0_14] : memref<32x32xf32, #tpu.memory_space<vmem>>, vector<32x32xf32>
    %c0_15 = arith.constant 0 : index
    %c0_16 = arith.constant 0 : index
    %8 = vector.load %arg13[%c0_15, %c0_16] : memref<1x64xf32, #tpu.memory_space<vmem>>, vector<1x64xf32>
    %c0_17 = arith.constant 0 : index
    %c0_18 = arith.constant 0 : index
    %9 = vector.load %arg14[%c0_17, %c0_18] : memref<1x32xf32, #tpu.memory_space<vmem>>, vector<1x32xf32>
    %c0_19 = arith.constant 0 : index
    %c0_20 = arith.constant 0 : index
    %10 = vector.load %arg15[%c0_19, %c0_20] : memref<32x64xf32, #tpu.memory_space<vmem>>, vector<32x64xf32>
    %c0_21 = arith.constant 0 : index
    %c0_22 = arith.constant 0 : index
    %11 = vector.load %arg16[%c0_21, %c0_22] : memref<64x32xf32, #tpu.memory_space<vmem>>, vector<64x32xf32>
    %c0_23 = arith.constant 0 : index
    %c0_24 = arith.constant 0 : index
    %12 = vector.load %arg17[%c0_23, %c0_24] : memref<1x32xf32, #tpu.memory_space<vmem>>, vector<1x32xf32>
    %c0_25 = arith.constant 0 : index
    %c0_26 = arith.constant 0 : index
    %13 = vector.load %arg18[%c0_25, %c0_26] : memref<1x32xf32, #tpu.memory_space<vmem>>, vector<1x32xf32>
    %c0_27 = arith.constant 0 : index
    %c0_28 = arith.constant 0 : index
    %14 = vector.load %arg19[%c0_27, %c0_28] : memref<1x32xf32, #tpu.memory_space<vmem>>, vector<1x32xf32>
    %c0_29 = arith.constant 0 : index
    %c0_30 = arith.constant 0 : index
    %15 = vector.load %arg20[%c0_29, %c0_30] : memref<1x32xf32, #tpu.memory_space<vmem>>, vector<1x32xf32>
    %c0_31 = arith.constant 0 : index
    %c0_32 = arith.constant 0 : index
    %16 = vector.load %arg21[%c0_31, %c0_32] : memref<1x32xf32, #tpu.memory_space<vmem>>, vector<1x32xf32>
    %c0_33 = arith.constant 0 : index
    %c0_34 = arith.constant 0 : index
    %17 = vector.load %arg22[%c0_33, %c0_34] : memref<1x32xf32, #tpu.memory_space<vmem>>, vector<1x32xf32>
    %c0_35 = arith.constant 0 : index
    %c0_36 = arith.constant 0 : index
    %18 = vector.load %arg23[%c0_35, %c0_36] : memref<1x32xf32, #tpu.memory_space<vmem>>, vector<1x32xf32>
    %c0_37 = arith.constant 0 : index
    %c0_38 = arith.constant 0 : index
    %19 = vector.load %arg24[%c0_37, %c0_38] : memref<1x96xf32, #tpu.memory_space<vmem>>, vector<1x96xf32>
    %c0_39 = arith.constant 0 : index
    %c0_40 = arith.constant 0 : index
    %20 = vector.load %arg25[%c0_39, %c0_40] : memref<32x32xf32, #tpu.memory_space<vmem>>, vector<32x32xf32>
    %c0_41 = arith.constant 0 : index
    %c0_42 = arith.constant 0 : index
    %21 = vector.load %arg26[%c0_41, %c0_42] : memref<32x96xf32, #tpu.memory_space<vmem>>, vector<32x96xf32>
    %c0_43 = arith.constant 0 : index
    %c0_44 = arith.constant 0 : index
    %22 = vector.load %arg27[%c0_43, %c0_44] : memref<1x64xf32, #tpu.memory_space<vmem>>, vector<1x64xf32>
    %c0_45 = arith.constant 0 : index
    %c0_46 = arith.constant 0 : index
    %23 = vector.load %arg28[%c0_45, %c0_46] : memref<1x32xf32, #tpu.memory_space<vmem>>, vector<1x32xf32>
    %c0_47 = arith.constant 0 : index
    %c0_48 = arith.constant 0 : index
    %24 = vector.load %arg29[%c0_47, %c0_48] : memref<1x32xf32, #tpu.memory_space<vmem>>, vector<1x32xf32>
    %c0_49 = arith.constant 0 : index
    %c0_50 = arith.constant 0 : index
    %25 = vector.load %arg30[%c0_49, %c0_50] : memref<32x64xf32, #tpu.memory_space<vmem>>, vector<32x64xf32>
    %c0_51 = arith.constant 0 : index
    %c0_52 = arith.constant 0 : index
    %26 = vector.load %arg31[%c0_51, %c0_52] : memref<32x32xf32, #tpu.memory_space<vmem>>, vector<32x32xf32>
    %c0_53 = arith.constant 0 : index
    %c0_54 = arith.constant 0 : index
    %27 = vector.load %arg32[%c0_53, %c0_54] : memref<32x32xf32, #tpu.memory_space<vmem>>, vector<32x32xf32>
    %c0_55 = arith.constant 0 : index
    %c0_56 = arith.constant 0 : index
    %28 = vector.load %arg33[%c0_55, %c0_56] : memref<1x64xf32, #tpu.memory_space<vmem>>, vector<1x64xf32>
    %c0_57 = arith.constant 0 : index
    %c0_58 = arith.constant 0 : index
    %29 = vector.load %arg34[%c0_57, %c0_58] : memref<1x32xf32, #tpu.memory_space<vmem>>, vector<1x32xf32>
    %c0_59 = arith.constant 0 : index
    %c0_60 = arith.constant 0 : index
    %30 = vector.load %arg35[%c0_59, %c0_60] : memref<32x64xf32, #tpu.memory_space<vmem>>, vector<32x64xf32>
    %c0_61 = arith.constant 0 : index
    %c0_62 = arith.constant 0 : index
    %31 = vector.load %arg36[%c0_61, %c0_62] : memref<64x32xf32, #tpu.memory_space<vmem>>, vector<64x32xf32>
    %c0_63 = arith.constant 0 : index
    %c0_64 = arith.constant 0 : index
    %32 = vector.load %arg37[%c0_63, %c0_64] : memref<1x32xf32, #tpu.memory_space<vmem>>, vector<1x32xf32>
    %c0_65 = arith.constant 0 : index
    %c0_66 = arith.constant 0 : index
    %33 = vector.load %arg38[%c0_65, %c0_66] : memref<1x32xf32, #tpu.memory_space<vmem>>, vector<1x32xf32>
    %c0_67 = arith.constant 0 : index
    %c0_68 = arith.constant 0 : index
    %34 = vector.load %arg39[%c0_67, %c0_68] : memref<1x32xf32, #tpu.memory_space<vmem>>, vector<1x32xf32>
    %c0_69 = arith.constant 0 : index
    %c0_70 = arith.constant 0 : index
    %35 = vector.load %arg40[%c0_69, %c0_70] : memref<1x32xf32, #tpu.memory_space<vmem>>, vector<1x32xf32>
    %c0_71 = arith.constant 0 : index
    %c0_72 = arith.constant 0 : index
    %36 = vector.load %arg41[%c0_71, %c0_72] : memref<1x32xf32, #tpu.memory_space<vmem>>, vector<1x32xf32>
    %c0_73 = arith.constant 0 : index
    %c0_74 = arith.constant 0 : index
    %37 = vector.load %arg42[%c0_73, %c0_74] : memref<1x32xf32, #tpu.memory_space<vmem>>, vector<1x32xf32>
    %c0_75 = arith.constant 0 : index
    %c0_76 = arith.constant 0 : index
    %38 = vector.load %arg43[%c0_75, %c0_76] : memref<1x32xf32, #tpu.memory_space<vmem>>, vector<1x32xf32>
    %c0_77 = arith.constant 0 : index
    %c0_78 = arith.constant 0 : index
    %39 = vector.load %arg44[%c0_77, %c0_78] : memref<1x96xf32, #tpu.memory_space<vmem>>, vector<1x96xf32>
    %c0_79 = arith.constant 0 : index
    %c0_80 = arith.constant 0 : index
    %40 = vector.load %arg45[%c0_79, %c0_80] : memref<32x32xf32, #tpu.memory_space<vmem>>, vector<32x32xf32>
    %c0_81 = arith.constant 0 : index
    %c0_82 = arith.constant 0 : index
    %41 = vector.load %arg46[%c0_81, %c0_82] : memref<32x96xf32, #tpu.memory_space<vmem>>, vector<32x96xf32>
    %c0_83 = arith.constant 0 : index
    %c0_84 = arith.constant 0 : index
    %42 = vector.load %arg47[%c0_83, %c0_84] : memref<16x32xf32, #tpu.memory_space<vmem>>, vector<16x32xf32>
    %c0_85 = arith.constant 0 : index
    %c0_86 = arith.constant 0 : index
    %43 = vector.load %arg48[%c0_85, %c0_86] : memref<1x32xf32, #tpu.memory_space<vmem>>, vector<1x32xf32>
    %c0_87 = arith.constant 0 : index
    %c0_88 = arith.constant 0 : index
    %44 = vector.load %arg49[%c0_87, %c0_88] : memref<1x32xf32, #tpu.memory_space<vmem>>, vector<1x32xf32>
    %c0_89 = arith.constant 0 : index
    %c0_90 = arith.constant 0 : index
    %45 = vector.load %arg50[%c0_89, %c0_90] : memref<1x32xf32, #tpu.memory_space<vmem>>, vector<1x32xf32>
    %c0_91 = arith.constant 0 : index
    %c0_92 = arith.constant 0 : index
    %46 = vector.load %arg51[%c0_91, %c0_92] : memref<1x96xf32, #tpu.memory_space<vmem>>, vector<1x96xf32>
    %c0_93 = arith.constant 0 : index
    %c0_94 = arith.constant 0 : index
    %47 = vector.load %arg52[%c0_93, %c0_94] : memref<32x32xf32, #tpu.memory_space<vmem>>, vector<32x32xf32>
    %c0_95 = arith.constant 0 : index
    %c0_96 = arith.constant 0 : index
    %48 = vector.load %arg53[%c0_95, %c0_96] : memref<32x96xf32, #tpu.memory_space<vmem>>, vector<32x96xf32>
    %c0_97 = arith.constant 0 : index
    %c0_98 = arith.constant 0 : index
    %49 = vector.load %arg54[%c0_97, %c0_98] : memref<1x64xf32, #tpu.memory_space<vmem>>, vector<1x64xf32>
    %c0_99 = arith.constant 0 : index
    %c0_100 = arith.constant 0 : index
    %50 = vector.load %arg55[%c0_99, %c0_100] : memref<1x32xf32, #tpu.memory_space<vmem>>, vector<1x32xf32>
    %c0_101 = arith.constant 0 : index
    %c0_102 = arith.constant 0 : index
    %51 = vector.load %arg56[%c0_101, %c0_102] : memref<32x64xf32, #tpu.memory_space<vmem>>, vector<32x64xf32>
    %c0_103 = arith.constant 0 : index
    %c0_104 = arith.constant 0 : index
    %52 = vector.load %arg57[%c0_103, %c0_104] : memref<64x32xf32, #tpu.memory_space<vmem>>, vector<64x32xf32>
    %c0_105 = arith.constant 0 : index
    %c0_106 = arith.constant 0 : index
    %53 = vector.load %arg58[%c0_105, %c0_106] : memref<1x32xf32, #tpu.memory_space<vmem>>, vector<1x32xf32>
    %c0_107 = arith.constant 0 : index
    %c0_108 = arith.constant 0 : index
    %54 = vector.load %arg59[%c0_107, %c0_108] : memref<1x32xf32, #tpu.memory_space<vmem>>, vector<1x32xf32>
    %c0_109 = arith.constant 0 : index
    %c0_110 = arith.constant 0 : index
    %55 = vector.load %arg60[%c0_109, %c0_110] : memref<1x32xf32, #tpu.memory_space<vmem>>, vector<1x32xf32>
    %c0_111 = arith.constant 0 : index
    %c0_112 = arith.constant 0 : index
    %56 = vector.load %arg61[%c0_111, %c0_112] : memref<1x32xf32, #tpu.memory_space<vmem>>, vector<1x32xf32>
    %c0_113 = arith.constant 0 : index
    %c0_114 = arith.constant 0 : index
    %57 = vector.load %arg62[%c0_113, %c0_114] : memref<1x32xf32, #tpu.memory_space<vmem>>, vector<1x32xf32>
    %c0_115 = arith.constant 0 : index
    %c0_116 = arith.constant 0 : index
    %58 = vector.load %arg63[%c0_115, %c0_116] : memref<1x96xf32, #tpu.memory_space<vmem>>, vector<1x96xf32>
    %c0_117 = arith.constant 0 : index
    %c0_118 = arith.constant 0 : index
    %59 = vector.load %arg64[%c0_117, %c0_118] : memref<32x32xf32, #tpu.memory_space<vmem>>, vector<32x32xf32>
    %c0_119 = arith.constant 0 : index
    %c0_120 = arith.constant 0 : index
    %60 = vector.load %arg65[%c0_119, %c0_120] : memref<32x96xf32, #tpu.memory_space<vmem>>, vector<32x96xf32>
    %c0_121 = arith.constant 0 : index
    %c0_122 = arith.constant 0 : index
    %61 = vector.load %arg66[%c0_121, %c0_122] : memref<1x64xf32, #tpu.memory_space<vmem>>, vector<1x64xf32>
    %c0_123 = arith.constant 0 : index
    %c0_124 = arith.constant 0 : index
    %62 = vector.load %arg67[%c0_123, %c0_124] : memref<1x32xf32, #tpu.memory_space<vmem>>, vector<1x32xf32>
    %c0_125 = arith.constant 0 : index
    %c0_126 = arith.constant 0 : index
    %63 = vector.load %arg68[%c0_125, %c0_126] : memref<32x64xf32, #tpu.memory_space<vmem>>, vector<32x64xf32>
    %c0_127 = arith.constant 0 : index
    %c0_128 = arith.constant 0 : index
    %64 = vector.load %arg69[%c0_127, %c0_128] : memref<64x32xf32, #tpu.memory_space<vmem>>, vector<64x32xf32>
    %c0_129 = arith.constant 0 : index
    %c0_130 = arith.constant 0 : index
    %65 = vector.load %arg70[%c0_129, %c0_130] : memref<1x32xf32, #tpu.memory_space<vmem>>, vector<1x32xf32>
    %c0_131 = arith.constant 0 : index
    %c0_132 = arith.constant 0 : index
    %66 = vector.load %arg71[%c0_131, %c0_132] : memref<1x32xf32, #tpu.memory_space<vmem>>, vector<1x32xf32>
    %c0_133 = arith.constant 0 : index
    %c0_134 = arith.constant 0 : index
    %67 = vector.load %arg72[%c0_133, %c0_134] : memref<1x32xf32, #tpu.memory_space<vmem>>, vector<1x32xf32>
    %c0_135 = arith.constant 0 : index
    %c0_136 = arith.constant 0 : index
    %68 = vector.load %arg73[%c0_135, %c0_136] : memref<1x32xf32, #tpu.memory_space<vmem>>, vector<1x32xf32>
    %c0_137 = arith.constant 0 : index
    %c0_138 = arith.constant 0 : index
    %69 = vector.load %arg74[%c0_137, %c0_138] : memref<1x32xf32, #tpu.memory_space<vmem>>, vector<1x32xf32>
    %c0_139 = arith.constant 0 : index
    %c0_140 = arith.constant 0 : index
    %70 = vector.load %arg75[%c0_139, %c0_140] : memref<32x32xf32, #tpu.memory_space<vmem>>, vector<32x32xf32>
    %c0_141 = arith.constant 0 : index
    %c0_142 = arith.constant 0 : index
    %71 = vector.load %arg2[%c0_141, %c0_142] : memref<16x16xf32, #tpu.memory_space<vmem>>, vector<16x16xf32>
    %c0_143 = arith.constant 0 : index
    %c0_144 = arith.constant 0 : index
    %72 = vector.load %arg3[%c0_143, %c0_144] : memref<16x16xf32, #tpu.memory_space<vmem>>, vector<16x16xf32>
    %c0_145 = arith.constant 0 : index
    %c0_146 = arith.constant 0 : index
    %73 = vector.load %arg4[%c0_145, %c0_146] : memref<16x16xf32, #tpu.memory_space<vmem>>, vector<16x16xf32>
    %c0_147 = arith.constant 0 : index
    %c0_148 = arith.constant 0 : index
    %74 = vector.load %arg0[%c0_147, %c0_148] : memref<16x1xi32, #tpu.memory_space<vmem>>, vector<16x1xi32>
    %75 = tpu.iota {dimensions = array<i32: 1>} : vector<16x16xi32>
    %76 = vector.broadcast %74 : vector<16x1xi32> to vector<16x16xi32>
    %77 = arith.cmpi eq, %76, %75 : vector<16x16xi32>
    %cst = arith.constant 1.000000e+00 : f32
    %cst_149 = arith.constant 0.000000e+00 : f32
    %78 = vector.broadcast %cst : f32 to vector<16x16xf32>
    %79 = vector.broadcast %cst_149 : f32 to vector<16x16xf32>
    %80 = arith.select %77, %78, %79 : vector<16x16xi1>, vector<16x16xf32>
    %cst_150 = arith.constant dense<0.000000e+00> : vector<16x32xf32>
    %81 = tpu.matmul %80, %42, %cst_150 {dimension_numbers = #tpu.dot_dimension_numbers<[1], [0], [0], [1], [0, 0, 1, 1], [], []>} : vector<16x16xf32>, vector<16x32xf32>, vector<16x32xf32> -> vector<16x32xf32>
    %cst_151 = arith.constant 5.65685415 : f32
    %82 = vector.broadcast %cst_151 : f32 to vector<16x32xf32>
    %83 = arith.mulf %81, %82 : vector<16x32xf32>
    %cst_152 = arith.constant dense<0.000000e+00> : vector<16x96xf32>
    %84 = tpu.matmul %83, %48, %cst_152 {dimension_numbers = #tpu.dot_dimension_numbers<[1], [0], [0], [1], [0, 0, 1, 1], [], []>} : vector<16x32xf32>, vector<32x96xf32>, vector<16x96xf32> -> vector<16x96xf32>
    %85 = vector.broadcast %46 : vector<1x96xf32> to vector<16x96xf32>
    %86 = arith.addf %84, %85 : vector<16x96xf32>
    %87 = vector.extract_strided_slice %86 {offsets = [0, 0], sizes = [16, 32], strides = [1, 1]} : vector<16x96xf32> to vector<16x32xf32>
    %88 = vector.extract_strided_slice %86 {offsets = [0, 32], sizes = [16, 32], strides = [1, 1]} : vector<16x96xf32> to vector<16x32xf32>
    %89 = vector.extract_strided_slice %86 {offsets = [0, 64], sizes = [16, 32], strides = [1, 1]} : vector<16x96xf32> to vector<16x32xf32>
    %90 = vector.extract_strided_slice %87 {offsets = [0, 0], sizes = [16, 8], strides = [1, 1]} : vector<16x32xf32> to vector<16x8xf32>
    %91 = vector.extract_strided_slice %88 {offsets = [0, 0], sizes = [16, 8], strides = [1, 1]} : vector<16x32xf32> to vector<16x8xf32>
    %92 = vector.extract_strided_slice %89 {offsets = [0, 0], sizes = [16, 8], strides = [1, 1]} : vector<16x32xf32> to vector<16x8xf32>
    %cst_153 = arith.constant dense<0.000000e+00> : vector<16x16xf32>
    %93 = tpu.matmul %90, %91, %cst_153 {dimension_numbers = #tpu.dot_dimension_numbers<[1], [1], [0], [0], [0, 0, 1, 0], [], []>} : vector<16x8xf32>, vector<16x8xf32>, vector<16x16xf32> -> vector<16x16xf32>
    %cst_154 = arith.constant 0.353553385 : f32
    %94 = vector.broadcast %cst_154 : f32 to vector<16x16xf32>
    %95 = arith.mulf %93, %94 : vector<16x16xf32>
    %96 = arith.addf %95, %71 : vector<16x16xf32>
    %cst_155 = arith.constant dense<0xFF800000> : vector<16xf32>
    %97 = vector.multi_reduction <maximumf>, %96, %cst_155 [1] : vector<16x16xf32> to vector<16xf32>
    %98 = vector.shape_cast %97 : vector<16xf32> to vector<16x1xf32>
    %99 = vector.broadcast %98 : vector<16x1xf32> to vector<16x16xf32>
    %100 = arith.subf %96, %99 : vector<16x16xf32>
    %101 = math.exp %100 : vector<16x16xf32>
    %cst_156 = arith.constant dense<0.000000e+00> : vector<16xf32>
    %102 = vector.multi_reduction <add>, %101, %cst_156 [1] : vector<16x16xf32> to vector<16xf32>
    %103 = vector.shape_cast %102 : vector<16xf32> to vector<16x1xf32>
    %104 = tpu.reciprocal %103 {approx = true} : vector<16x1xf32> -> vector<16x1xf32>
    %105 = vector.broadcast %104 : vector<16x1xf32> to vector<16x16xf32>
    %106 = arith.mulf %101, %105 : vector<16x16xf32>
    %cst_157 = arith.constant dense<0.000000e+00> : vector<16x8xf32>
    %107 = tpu.matmul %106, %92, %cst_157 {dimension_numbers = #tpu.dot_dimension_numbers<[1], [0], [0], [1], [0, 0, 1, 1], [], []>} : vector<16x16xf32>, vector<16x8xf32>, vector<16x8xf32> -> vector<16x8xf32>
    %108 = vector.extract_strided_slice %87 {offsets = [0, 8], sizes = [16, 8], strides = [1, 1]} : vector<16x32xf32> to vector<16x8xf32>
    %109 = vector.extract_strided_slice %88 {offsets = [0, 8], sizes = [16, 8], strides = [1, 1]} : vector<16x32xf32> to vector<16x8xf32>
    %110 = vector.extract_strided_slice %89 {offsets = [0, 8], sizes = [16, 8], strides = [1, 1]} : vector<16x32xf32> to vector<16x8xf32>
    %cst_158 = arith.constant dense<0.000000e+00> : vector<16x16xf32>
    %111 = tpu.matmul %108, %109, %cst_158 {dimension_numbers = #tpu.dot_dimension_numbers<[1], [1], [0], [0], [0, 0, 1, 0], [], []>} : vector<16x8xf32>, vector<16x8xf32>, vector<16x16xf32> -> vector<16x16xf32>
    %cst_159 = arith.constant 0.353553385 : f32
    %112 = vector.broadcast %cst_159 : f32 to vector<16x16xf32>
    %113 = arith.mulf %111, %112 : vector<16x16xf32>
    %114 = arith.addf %113, %71 : vector<16x16xf32>
    %cst_160 = arith.constant dense<0xFF800000> : vector<16xf32>
    %115 = vector.multi_reduction <maximumf>, %114, %cst_160 [1] : vector<16x16xf32> to vector<16xf32>
    %116 = vector.shape_cast %115 : vector<16xf32> to vector<16x1xf32>
    %117 = vector.broadcast %116 : vector<16x1xf32> to vector<16x16xf32>
    %118 = arith.subf %114, %117 : vector<16x16xf32>
    %119 = math.exp %118 : vector<16x16xf32>
    %cst_161 = arith.constant dense<0.000000e+00> : vector<16xf32>
    %120 = vector.multi_reduction <add>, %119, %cst_161 [1] : vector<16x16xf32> to vector<16xf32>
    %121 = vector.shape_cast %120 : vector<16xf32> to vector<16x1xf32>
    %122 = tpu.reciprocal %121 {approx = true} : vector<16x1xf32> -> vector<16x1xf32>
    %123 = vector.broadcast %122 : vector<16x1xf32> to vector<16x16xf32>
    %124 = arith.mulf %119, %123 : vector<16x16xf32>
    %cst_162 = arith.constant dense<0.000000e+00> : vector<16x8xf32>
    %125 = tpu.matmul %124, %110, %cst_162 {dimension_numbers = #tpu.dot_dimension_numbers<[1], [0], [0], [1], [0, 0, 1, 1], [], []>} : vector<16x16xf32>, vector<16x8xf32>, vector<16x8xf32> -> vector<16x8xf32>
    %126 = vector.extract_strided_slice %87 {offsets = [0, 16], sizes = [16, 8], strides = [1, 1]} : vector<16x32xf32> to vector<16x8xf32>
    %127 = vector.extract_strided_slice %88 {offsets = [0, 16], sizes = [16, 8], strides = [1, 1]} : vector<16x32xf32> to vector<16x8xf32>
    %128 = vector.extract_strided_slice %89 {offsets = [0, 16], sizes = [16, 8], strides = [1, 1]} : vector<16x32xf32> to vector<16x8xf32>
    %cst_163 = arith.constant dense<0.000000e+00> : vector<16x16xf32>
    %129 = tpu.matmul %126, %127, %cst_163 {dimension_numbers = #tpu.dot_dimension_numbers<[1], [1], [0], [0], [0, 0, 1, 0], [], []>} : vector<16x8xf32>, vector<16x8xf32>, vector<16x16xf32> -> vector<16x16xf32>
    %cst_164 = arith.constant 0.353553385 : f32
    %130 = vector.broadcast %cst_164 : f32 to vector<16x16xf32>
    %131 = arith.mulf %129, %130 : vector<16x16xf32>
    %132 = arith.addf %131, %71 : vector<16x16xf32>
    %cst_165 = arith.constant dense<0xFF800000> : vector<16xf32>
    %133 = vector.multi_reduction <maximumf>, %132, %cst_165 [1] : vector<16x16xf32> to vector<16xf32>
    %134 = vector.shape_cast %133 : vector<16xf32> to vector<16x1xf32>
    %135 = vector.broadcast %134 : vector<16x1xf32> to vector<16x16xf32>
    %136 = arith.subf %132, %135 : vector<16x16xf32>
    %137 = math.exp %136 : vector<16x16xf32>
    %cst_166 = arith.constant dense<0.000000e+00> : vector<16xf32>
    %138 = vector.multi_reduction <add>, %137, %cst_166 [1] : vector<16x16xf32> to vector<16xf32>
    %139 = vector.shape_cast %138 : vector<16xf32> to vector<16x1xf32>
    %140 = tpu.reciprocal %139 {approx = true} : vector<16x1xf32> -> vector<16x1xf32>
    %141 = vector.broadcast %140 : vector<16x1xf32> to vector<16x16xf32>
    %142 = arith.mulf %137, %141 : vector<16x16xf32>
    %cst_167 = arith.constant dense<0.000000e+00> : vector<16x8xf32>
    %143 = tpu.matmul %142, %128, %cst_167 {dimension_numbers = #tpu.dot_dimension_numbers<[1], [0], [0], [1], [0, 0, 1, 1], [], []>} : vector<16x16xf32>, vector<16x8xf32>, vector<16x8xf32> -> vector<16x8xf32>
    %144 = vector.extract_strided_slice %87 {offsets = [0, 24], sizes = [16, 8], strides = [1, 1]} : vector<16x32xf32> to vector<16x8xf32>
    %145 = vector.extract_strided_slice %88 {offsets = [0, 24], sizes = [16, 8], strides = [1, 1]} : vector<16x32xf32> to vector<16x8xf32>
    %146 = vector.extract_strided_slice %89 {offsets = [0, 24], sizes = [16, 8], strides = [1, 1]} : vector<16x32xf32> to vector<16x8xf32>
    %cst_168 = arith.constant dense<0.000000e+00> : vector<16x16xf32>
    %147 = tpu.matmul %144, %145, %cst_168 {dimension_numbers = #tpu.dot_dimension_numbers<[1], [1], [0], [0], [0, 0, 1, 0], [], []>} : vector<16x8xf32>, vector<16x8xf32>, vector<16x16xf32> -> vector<16x16xf32>
    %cst_169 = arith.constant 0.353553385 : f32
    %148 = vector.broadcast %cst_169 : f32 to vector<16x16xf32>
    %149 = arith.mulf %147, %148 : vector<16x16xf32>
    %150 = arith.addf %149, %71 : vector<16x16xf32>
    %cst_170 = arith.constant dense<0xFF800000> : vector<16xf32>
    %151 = vector.multi_reduction <maximumf>, %150, %cst_170 [1] : vector<16x16xf32> to vector<16xf32>
    %152 = vector.shape_cast %151 : vector<16xf32> to vector<16x1xf32>
    %153 = vector.broadcast %152 : vector<16x1xf32> to vector<16x16xf32>
    %154 = arith.subf %150, %153 : vector<16x16xf32>
    %155 = math.exp %154 : vector<16x16xf32>
    %cst_171 = arith.constant dense<0.000000e+00> : vector<16xf32>
    %156 = vector.multi_reduction <add>, %155, %cst_171 [1] : vector<16x16xf32> to vector<16xf32>
    %157 = vector.shape_cast %156 : vector<16xf32> to vector<16x1xf32>
    %158 = tpu.reciprocal %157 {approx = true} : vector<16x1xf32> -> vector<16x1xf32>
    %159 = vector.broadcast %158 : vector<16x1xf32> to vector<16x16xf32>
    %160 = arith.mulf %155, %159 : vector<16x16xf32>
    %cst_172 = arith.constant dense<0.000000e+00> : vector<16x8xf32>
    %161 = tpu.matmul %160, %146, %cst_172 {dimension_numbers = #tpu.dot_dimension_numbers<[1], [0], [0], [1], [0, 0, 1, 1], [], []>} : vector<16x16xf32>, vector<16x8xf32>, vector<16x8xf32> -> vector<16x8xf32>
    %162 = tpu.concatenate %107, %125, %143, %161 in 1 : vector<16x8xf32>, vector<16x8xf32>, vector<16x8xf32>, vector<16x8xf32> -> vector<16x32xf32>
    %cst_173 = arith.constant dense<0.000000e+00> : vector<16x32xf32>
    %163 = tpu.matmul %162, %47, %cst_173 {dimension_numbers = #tpu.dot_dimension_numbers<[1], [0], [0], [1], [0, 0, 1, 1], [], []>} : vector<16x32xf32>, vector<32x32xf32>, vector<16x32xf32> -> vector<16x32xf32>
    %164 = vector.broadcast %45 : vector<1x32xf32> to vector<16x32xf32>
    %165 = arith.addf %163, %164 : vector<16x32xf32>
    %166 = arith.addf %83, %165 : vector<16x32xf32>
    %cst_174 = arith.constant dense<0.000000e+00> : vector<16xf32>
    %167 = vector.multi_reduction <add>, %166, %cst_174 [1] : vector<16x32xf32> to vector<16xf32>
    %168 = vector.shape_cast %167 : vector<16xf32> to vector<16x1xf32>
    %cst_175 = arith.constant 3.200000e+01 : f32
    %169 = vector.broadcast %cst_175 : f32 to vector<16x1xf32>
    %170 = arith.divf %168, %169 : vector<16x1xf32>
    %171 = vector.broadcast %170 : vector<16x1xf32> to vector<16x32xf32>
    %172 = arith.subf %166, %171 : vector<16x32xf32>
    %173 = arith.mulf %172, %172 : vector<16x32xf32>
    %cst_176 = arith.constant dense<0.000000e+00> : vector<16xf32>
    %174 = vector.multi_reduction <add>, %173, %cst_176 [1] : vector<16x32xf32> to vector<16xf32>
    %175 = vector.shape_cast %174 : vector<16xf32> to vector<16x1xf32>
    %cst_177 = arith.constant 3.200000e+01 : f32
    %176 = vector.broadcast %cst_177 : f32 to vector<16x1xf32>
    %177 = arith.divf %175, %176 : vector<16x1xf32>
    %cst_178 = arith.constant 9.99999974E-6 : f32
    %178 = vector.broadcast %cst_178 : f32 to vector<16x1xf32>
    %179 = arith.addf %177, %178 : vector<16x1xf32>
    %180 = math.rsqrt %179 : vector<16x1xf32>
    %181 = vector.broadcast %180 : vector<16x1xf32> to vector<16x32xf32>
    %182 = arith.mulf %172, %181 : vector<16x32xf32>
    %183 = vector.broadcast %54 : vector<1x32xf32> to vector<16x32xf32>
    %184 = arith.mulf %182, %183 : vector<16x32xf32>
    %185 = vector.broadcast %53 : vector<1x32xf32> to vector<16x32xf32>
    %186 = arith.addf %184, %185 : vector<16x32xf32>
    %cst_179 = arith.constant dense<0.000000e+00> : vector<16x64xf32>
    %187 = tpu.matmul %186, %51, %cst_179 {dimension_numbers = #tpu.dot_dimension_numbers<[1], [0], [0], [1], [0, 0, 1, 1], [], []>} : vector<16x32xf32>, vector<32x64xf32>, vector<16x64xf32> -> vector<16x64xf32>
    %188 = vector.broadcast %49 : vector<1x64xf32> to vector<16x64xf32>
    %189 = arith.addf %187, %188 : vector<16x64xf32>
    %cst_180 = arith.constant 0.000000e+00 : f32
    %190 = vector.broadcast %cst_180 : f32 to vector<16x64xf32>
    %191 = arith.maximumf %189, %190 : vector<16x64xf32>
    %cst_181 = arith.constant dense<0.000000e+00> : vector<16x32xf32>
    %192 = tpu.matmul %191, %52, %cst_181 {dimension_numbers = #tpu.dot_dimension_numbers<[1], [0], [0], [1], [0, 0, 1, 1], [], []>} : vector<16x64xf32>, vector<64x32xf32>, vector<16x32xf32> -> vector<16x32xf32>
    %193 = vector.broadcast %50 : vector<1x32xf32> to vector<16x32xf32>
    %194 = arith.addf %192, %193 : vector<16x32xf32>
    %195 = arith.addf %186, %194 : vector<16x32xf32>
    %cst_182 = arith.constant dense<0.000000e+00> : vector<16xf32>
    %196 = vector.multi_reduction <add>, %195, %cst_182 [1] : vector<16x32xf32> to vector<16xf32>
    %197 = vector.shape_cast %196 : vector<16xf32> to vector<16x1xf32>
    %cst_183 = arith.constant 3.200000e+01 : f32
    %198 = vector.broadcast %cst_183 : f32 to vector<16x1xf32>
    %199 = arith.divf %197, %198 : vector<16x1xf32>
    %200 = vector.broadcast %199 : vector<16x1xf32> to vector<16x32xf32>
    %201 = arith.subf %195, %200 : vector<16x32xf32>
    %202 = arith.mulf %201, %201 : vector<16x32xf32>
    %cst_184 = arith.constant dense<0.000000e+00> : vector<16xf32>
    %203 = vector.multi_reduction <add>, %202, %cst_184 [1] : vector<16x32xf32> to vector<16xf32>
    %204 = vector.shape_cast %203 : vector<16xf32> to vector<16x1xf32>
    %cst_185 = arith.constant 3.200000e+01 : f32
    %205 = vector.broadcast %cst_185 : f32 to vector<16x1xf32>
    %206 = arith.divf %204, %205 : vector<16x1xf32>
    %cst_186 = arith.constant 9.99999974E-6 : f32
    %207 = vector.broadcast %cst_186 : f32 to vector<16x1xf32>
    %208 = arith.addf %206, %207 : vector<16x1xf32>
    %209 = math.rsqrt %208 : vector<16x1xf32>
    %210 = vector.broadcast %209 : vector<16x1xf32> to vector<16x32xf32>
    %211 = arith.mulf %201, %210 : vector<16x32xf32>
    %212 = vector.broadcast %56 : vector<1x32xf32> to vector<16x32xf32>
    %213 = arith.mulf %211, %212 : vector<16x32xf32>
    %214 = vector.broadcast %55 : vector<1x32xf32> to vector<16x32xf32>
    %215 = arith.addf %213, %214 : vector<16x32xf32>
    %cst_187 = arith.constant dense<0.000000e+00> : vector<16x96xf32>
    %216 = tpu.matmul %215, %60, %cst_187 {dimension_numbers = #tpu.dot_dimension_numbers<[1], [0], [0], [1], [0, 0, 1, 1], [], []>} : vector<16x32xf32>, vector<32x96xf32>, vector<16x96xf32> -> vector<16x96xf32>
    %217 = vector.broadcast %58 : vector<1x96xf32> to vector<16x96xf32>
    %218 = arith.addf %216, %217 : vector<16x96xf32>
    %219 = vector.extract_strided_slice %218 {offsets = [0, 0], sizes = [16, 32], strides = [1, 1]} : vector<16x96xf32> to vector<16x32xf32>
    %220 = vector.extract_strided_slice %218 {offsets = [0, 32], sizes = [16, 32], strides = [1, 1]} : vector<16x96xf32> to vector<16x32xf32>
    %221 = vector.extract_strided_slice %218 {offsets = [0, 64], sizes = [16, 32], strides = [1, 1]} : vector<16x96xf32> to vector<16x32xf32>
    %222 = vector.extract_strided_slice %219 {offsets = [0, 0], sizes = [16, 8], strides = [1, 1]} : vector<16x32xf32> to vector<16x8xf32>
    %223 = vector.extract_strided_slice %220 {offsets = [0, 0], sizes = [16, 8], strides = [1, 1]} : vector<16x32xf32> to vector<16x8xf32>
    %224 = vector.extract_strided_slice %221 {offsets = [0, 0], sizes = [16, 8], strides = [1, 1]} : vector<16x32xf32> to vector<16x8xf32>
    %cst_188 = arith.constant dense<0.000000e+00> : vector<16x16xf32>
    %225 = tpu.matmul %222, %223, %cst_188 {dimension_numbers = #tpu.dot_dimension_numbers<[1], [1], [0], [0], [0, 0, 1, 0], [], []>} : vector<16x8xf32>, vector<16x8xf32>, vector<16x16xf32> -> vector<16x16xf32>
    %cst_189 = arith.constant 0.353553385 : f32
    %226 = vector.broadcast %cst_189 : f32 to vector<16x16xf32>
    %227 = arith.mulf %225, %226 : vector<16x16xf32>
    %228 = arith.addf %227, %71 : vector<16x16xf32>
    %cst_190 = arith.constant dense<0xFF800000> : vector<16xf32>
    %229 = vector.multi_reduction <maximumf>, %228, %cst_190 [1] : vector<16x16xf32> to vector<16xf32>
    %230 = vector.shape_cast %229 : vector<16xf32> to vector<16x1xf32>
    %231 = vector.broadcast %230 : vector<16x1xf32> to vector<16x16xf32>
    %232 = arith.subf %228, %231 : vector<16x16xf32>
    %233 = math.exp %232 : vector<16x16xf32>
    %cst_191 = arith.constant dense<0.000000e+00> : vector<16xf32>
    %234 = vector.multi_reduction <add>, %233, %cst_191 [1] : vector<16x16xf32> to vector<16xf32>
    %235 = vector.shape_cast %234 : vector<16xf32> to vector<16x1xf32>
    %236 = tpu.reciprocal %235 {approx = true} : vector<16x1xf32> -> vector<16x1xf32>
    %237 = vector.broadcast %236 : vector<16x1xf32> to vector<16x16xf32>
    %238 = arith.mulf %233, %237 : vector<16x16xf32>
    %cst_192 = arith.constant dense<0.000000e+00> : vector<16x8xf32>
    %239 = tpu.matmul %238, %224, %cst_192 {dimension_numbers = #tpu.dot_dimension_numbers<[1], [0], [0], [1], [0, 0, 1, 1], [], []>} : vector<16x16xf32>, vector<16x8xf32>, vector<16x8xf32> -> vector<16x8xf32>
    %240 = vector.extract_strided_slice %219 {offsets = [0, 8], sizes = [16, 8], strides = [1, 1]} : vector<16x32xf32> to vector<16x8xf32>
    %241 = vector.extract_strided_slice %220 {offsets = [0, 8], sizes = [16, 8], strides = [1, 1]} : vector<16x32xf32> to vector<16x8xf32>
    %242 = vector.extract_strided_slice %221 {offsets = [0, 8], sizes = [16, 8], strides = [1, 1]} : vector<16x32xf32> to vector<16x8xf32>
    %cst_193 = arith.constant dense<0.000000e+00> : vector<16x16xf32>
    %243 = tpu.matmul %240, %241, %cst_193 {dimension_numbers = #tpu.dot_dimension_numbers<[1], [1], [0], [0], [0, 0, 1, 0], [], []>} : vector<16x8xf32>, vector<16x8xf32>, vector<16x16xf32> -> vector<16x16xf32>
    %cst_194 = arith.constant 0.353553385 : f32
    %244 = vector.broadcast %cst_194 : f32 to vector<16x16xf32>
    %245 = arith.mulf %243, %244 : vector<16x16xf32>
    %246 = arith.addf %245, %71 : vector<16x16xf32>
    %cst_195 = arith.constant dense<0xFF800000> : vector<16xf32>
    %247 = vector.multi_reduction <maximumf>, %246, %cst_195 [1] : vector<16x16xf32> to vector<16xf32>
    %248 = vector.shape_cast %247 : vector<16xf32> to vector<16x1xf32>
    %249 = vector.broadcast %248 : vector<16x1xf32> to vector<16x16xf32>
    %250 = arith.subf %246, %249 : vector<16x16xf32>
    %251 = math.exp %250 : vector<16x16xf32>
    %cst_196 = arith.constant dense<0.000000e+00> : vector<16xf32>
    %252 = vector.multi_reduction <add>, %251, %cst_196 [1] : vector<16x16xf32> to vector<16xf32>
    %253 = vector.shape_cast %252 : vector<16xf32> to vector<16x1xf32>
    %254 = tpu.reciprocal %253 {approx = true} : vector<16x1xf32> -> vector<16x1xf32>
    %255 = vector.broadcast %254 : vector<16x1xf32> to vector<16x16xf32>
    %256 = arith.mulf %251, %255 : vector<16x16xf32>
    %cst_197 = arith.constant dense<0.000000e+00> : vector<16x8xf32>
    %257 = tpu.matmul %256, %242, %cst_197 {dimension_numbers = #tpu.dot_dimension_numbers<[1], [0], [0], [1], [0, 0, 1, 1], [], []>} : vector<16x16xf32>, vector<16x8xf32>, vector<16x8xf32> -> vector<16x8xf32>
    %258 = vector.extract_strided_slice %219 {offsets = [0, 16], sizes = [16, 8], strides = [1, 1]} : vector<16x32xf32> to vector<16x8xf32>
    %259 = vector.extract_strided_slice %220 {offsets = [0, 16], sizes = [16, 8], strides = [1, 1]} : vector<16x32xf32> to vector<16x8xf32>
    %260 = vector.extract_strided_slice %221 {offsets = [0, 16], sizes = [16, 8], strides = [1, 1]} : vector<16x32xf32> to vector<16x8xf32>
    %cst_198 = arith.constant dense<0.000000e+00> : vector<16x16xf32>
    %261 = tpu.matmul %258, %259, %cst_198 {dimension_numbers = #tpu.dot_dimension_numbers<[1], [1], [0], [0], [0, 0, 1, 0], [], []>} : vector<16x8xf32>, vector<16x8xf32>, vector<16x16xf32> -> vector<16x16xf32>
    %cst_199 = arith.constant 0.353553385 : f32
    %262 = vector.broadcast %cst_199 : f32 to vector<16x16xf32>
    %263 = arith.mulf %261, %262 : vector<16x16xf32>
    %264 = arith.addf %263, %71 : vector<16x16xf32>
    %cst_200 = arith.constant dense<0xFF800000> : vector<16xf32>
    %265 = vector.multi_reduction <maximumf>, %264, %cst_200 [1] : vector<16x16xf32> to vector<16xf32>
    %266 = vector.shape_cast %265 : vector<16xf32> to vector<16x1xf32>
    %267 = vector.broadcast %266 : vector<16x1xf32> to vector<16x16xf32>
    %268 = arith.subf %264, %267 : vector<16x16xf32>
    %269 = math.exp %268 : vector<16x16xf32>
    %cst_201 = arith.constant dense<0.000000e+00> : vector<16xf32>
    %270 = vector.multi_reduction <add>, %269, %cst_201 [1] : vector<16x16xf32> to vector<16xf32>
    %271 = vector.shape_cast %270 : vector<16xf32> to vector<16x1xf32>
    %272 = tpu.reciprocal %271 {approx = true} : vector<16x1xf32> -> vector<16x1xf32>
    %273 = vector.broadcast %272 : vector<16x1xf32> to vector<16x16xf32>
    %274 = arith.mulf %269, %273 : vector<16x16xf32>
    %cst_202 = arith.constant dense<0.000000e+00> : vector<16x8xf32>
    %275 = tpu.matmul %274, %260, %cst_202 {dimension_numbers = #tpu.dot_dimension_numbers<[1], [0], [0], [1], [0, 0, 1, 1], [], []>} : vector<16x16xf32>, vector<16x8xf32>, vector<16x8xf32> -> vector<16x8xf32>
    %276 = vector.extract_strided_slice %219 {offsets = [0, 24], sizes = [16, 8], strides = [1, 1]} : vector<16x32xf32> to vector<16x8xf32>
    %277 = vector.extract_strided_slice %220 {offsets = [0, 24], sizes = [16, 8], strides = [1, 1]} : vector<16x32xf32> to vector<16x8xf32>
    %278 = vector.extract_strided_slice %221 {offsets = [0, 24], sizes = [16, 8], strides = [1, 1]} : vector<16x32xf32> to vector<16x8xf32>
    %cst_203 = arith.constant dense<0.000000e+00> : vector<16x16xf32>
    %279 = tpu.matmul %276, %277, %cst_203 {dimension_numbers = #tpu.dot_dimension_numbers<[1], [1], [0], [0], [0, 0, 1, 0], [], []>} : vector<16x8xf32>, vector<16x8xf32>, vector<16x16xf32> -> vector<16x16xf32>
    %cst_204 = arith.constant 0.353553385 : f32
    %280 = vector.broadcast %cst_204 : f32 to vector<16x16xf32>
    %281 = arith.mulf %279, %280 : vector<16x16xf32>
    %282 = arith.addf %281, %71 : vector<16x16xf32>
    %cst_205 = arith.constant dense<0xFF800000> : vector<16xf32>
    %283 = vector.multi_reduction <maximumf>, %282, %cst_205 [1] : vector<16x16xf32> to vector<16xf32>
    %284 = vector.shape_cast %283 : vector<16xf32> to vector<16x1xf32>
    %285 = vector.broadcast %284 : vector<16x1xf32> to vector<16x16xf32>
    %286 = arith.subf %282, %285 : vector<16x16xf32>
    %287 = math.exp %286 : vector<16x16xf32>
    %cst_206 = arith.constant dense<0.000000e+00> : vector<16xf32>
    %288 = vector.multi_reduction <add>, %287, %cst_206 [1] : vector<16x16xf32> to vector<16xf32>
    %289 = vector.shape_cast %288 : vector<16xf32> to vector<16x1xf32>
    %290 = tpu.reciprocal %289 {approx = true} : vector<16x1xf32> -> vector<16x1xf32>
    %291 = vector.broadcast %290 : vector<16x1xf32> to vector<16x16xf32>
    %292 = arith.mulf %287, %291 : vector<16x16xf32>
    %cst_207 = arith.constant dense<0.000000e+00> : vector<16x8xf32>
    %293 = tpu.matmul %292, %278, %cst_207 {dimension_numbers = #tpu.dot_dimension_numbers<[1], [0], [0], [1], [0, 0, 1, 1], [], []>} : vector<16x16xf32>, vector<16x8xf32>, vector<16x8xf32> -> vector<16x8xf32>
    %294 = tpu.concatenate %239, %257, %275, %293 in 1 : vector<16x8xf32>, vector<16x8xf32>, vector<16x8xf32>, vector<16x8xf32> -> vector<16x32xf32>
    %cst_208 = arith.constant dense<0.000000e+00> : vector<16x32xf32>
    %295 = tpu.matmul %294, %59, %cst_208 {dimension_numbers = #tpu.dot_dimension_numbers<[1], [0], [0], [1], [0, 0, 1, 1], [], []>} : vector<16x32xf32>, vector<32x32xf32>, vector<16x32xf32> -> vector<16x32xf32>
    %296 = vector.broadcast %57 : vector<1x32xf32> to vector<16x32xf32>
    %297 = arith.addf %295, %296 : vector<16x32xf32>
    %298 = arith.addf %215, %297 : vector<16x32xf32>
    %cst_209 = arith.constant dense<0.000000e+00> : vector<16xf32>
    %299 = vector.multi_reduction <add>, %298, %cst_209 [1] : vector<16x32xf32> to vector<16xf32>
    %300 = vector.shape_cast %299 : vector<16xf32> to vector<16x1xf32>
    %cst_210 = arith.constant 3.200000e+01 : f32
    %301 = vector.broadcast %cst_210 : f32 to vector<16x1xf32>
    %302 = arith.divf %300, %301 : vector<16x1xf32>
    %303 = vector.broadcast %302 : vector<16x1xf32> to vector<16x32xf32>
    %304 = arith.subf %298, %303 : vector<16x32xf32>
    %305 = arith.mulf %304, %304 : vector<16x32xf32>
    %cst_211 = arith.constant dense<0.000000e+00> : vector<16xf32>
    %306 = vector.multi_reduction <add>, %305, %cst_211 [1] : vector<16x32xf32> to vector<16xf32>
    %307 = vector.shape_cast %306 : vector<16xf32> to vector<16x1xf32>
    %cst_212 = arith.constant 3.200000e+01 : f32
    %308 = vector.broadcast %cst_212 : f32 to vector<16x1xf32>
    %309 = arith.divf %307, %308 : vector<16x1xf32>
    %cst_213 = arith.constant 9.99999974E-6 : f32
    %310 = vector.broadcast %cst_213 : f32 to vector<16x1xf32>
    %311 = arith.addf %309, %310 : vector<16x1xf32>
    %312 = math.rsqrt %311 : vector<16x1xf32>
    %313 = vector.broadcast %312 : vector<16x1xf32> to vector<16x32xf32>
    %314 = arith.mulf %304, %313 : vector<16x32xf32>
    %315 = vector.broadcast %66 : vector<1x32xf32> to vector<16x32xf32>
    %316 = arith.mulf %314, %315 : vector<16x32xf32>
    %317 = vector.broadcast %65 : vector<1x32xf32> to vector<16x32xf32>
    %318 = arith.addf %316, %317 : vector<16x32xf32>
    %cst_214 = arith.constant dense<0.000000e+00> : vector<16x64xf32>
    %319 = tpu.matmul %318, %63, %cst_214 {dimension_numbers = #tpu.dot_dimension_numbers<[1], [0], [0], [1], [0, 0, 1, 1], [], []>} : vector<16x32xf32>, vector<32x64xf32>, vector<16x64xf32> -> vector<16x64xf32>
    %320 = vector.broadcast %61 : vector<1x64xf32> to vector<16x64xf32>
    %321 = arith.addf %319, %320 : vector<16x64xf32>
    %cst_215 = arith.constant 0.000000e+00 : f32
    %322 = vector.broadcast %cst_215 : f32 to vector<16x64xf32>
    %323 = arith.maximumf %321, %322 : vector<16x64xf32>
    %cst_216 = arith.constant dense<0.000000e+00> : vector<16x32xf32>
    %324 = tpu.matmul %323, %64, %cst_216 {dimension_numbers = #tpu.dot_dimension_numbers<[1], [0], [0], [1], [0, 0, 1, 1], [], []>} : vector<16x64xf32>, vector<64x32xf32>, vector<16x32xf32> -> vector<16x32xf32>
    %325 = vector.broadcast %62 : vector<1x32xf32> to vector<16x32xf32>
    %326 = arith.addf %324, %325 : vector<16x32xf32>
    %327 = arith.addf %318, %326 : vector<16x32xf32>
    %cst_217 = arith.constant dense<0.000000e+00> : vector<16xf32>
    %328 = vector.multi_reduction <add>, %327, %cst_217 [1] : vector<16x32xf32> to vector<16xf32>
    %329 = vector.shape_cast %328 : vector<16xf32> to vector<16x1xf32>
    %cst_218 = arith.constant 3.200000e+01 : f32
    %330 = vector.broadcast %cst_218 : f32 to vector<16x1xf32>
    %331 = arith.divf %329, %330 : vector<16x1xf32>
    %332 = vector.broadcast %331 : vector<16x1xf32> to vector<16x32xf32>
    %333 = arith.subf %327, %332 : vector<16x32xf32>
    %334 = arith.mulf %333, %333 : vector<16x32xf32>
    %cst_219 = arith.constant dense<0.000000e+00> : vector<16xf32>
    %335 = vector.multi_reduction <add>, %334, %cst_219 [1] : vector<16x32xf32> to vector<16xf32>
    %336 = vector.shape_cast %335 : vector<16xf32> to vector<16x1xf32>
    %cst_220 = arith.constant 3.200000e+01 : f32
    %337 = vector.broadcast %cst_220 : f32 to vector<16x1xf32>
    %338 = arith.divf %336, %337 : vector<16x1xf32>
    %cst_221 = arith.constant 9.99999974E-6 : f32
    %339 = vector.broadcast %cst_221 : f32 to vector<16x1xf32>
    %340 = arith.addf %338, %339 : vector<16x1xf32>
    %341 = math.rsqrt %340 : vector<16x1xf32>
    %342 = vector.broadcast %341 : vector<16x1xf32> to vector<16x32xf32>
    %343 = arith.mulf %333, %342 : vector<16x32xf32>
    %344 = vector.broadcast %68 : vector<1x32xf32> to vector<16x32xf32>
    %345 = arith.mulf %343, %344 : vector<16x32xf32>
    %346 = vector.broadcast %67 : vector<1x32xf32> to vector<16x32xf32>
    %347 = arith.addf %345, %346 : vector<16x32xf32>
    %cst_222 = arith.constant dense<0.000000e+00> : vector<16xf32>
    %348 = vector.multi_reduction <add>, %347, %cst_222 [1] : vector<16x32xf32> to vector<16xf32>
    %349 = vector.shape_cast %348 : vector<16xf32> to vector<16x1xf32>
    %cst_223 = arith.constant 3.200000e+01 : f32
    %350 = vector.broadcast %cst_223 : f32 to vector<16x1xf32>
    %351 = arith.divf %349, %350 : vector<16x1xf32>
    %352 = vector.broadcast %351 : vector<16x1xf32> to vector<16x32xf32>
    %353 = arith.subf %347, %352 : vector<16x32xf32>
    %354 = arith.mulf %353, %353 : vector<16x32xf32>
    %cst_224 = arith.constant dense<0.000000e+00> : vector<16xf32>
    %355 = vector.multi_reduction <add>, %354, %cst_224 [1] : vector<16x32xf32> to vector<16xf32>
    %356 = vector.shape_cast %355 : vector<16xf32> to vector<16x1xf32>
    %cst_225 = arith.constant 3.200000e+01 : f32
    %357 = vector.broadcast %cst_225 : f32 to vector<16x1xf32>
    %358 = arith.divf %356, %357 : vector<16x1xf32>
    %cst_226 = arith.constant 9.99999974E-6 : f32
    %359 = vector.broadcast %cst_226 : f32 to vector<16x1xf32>
    %360 = arith.addf %358, %359 : vector<16x1xf32>
    %361 = math.rsqrt %360 : vector<16x1xf32>
    %362 = vector.broadcast %361 : vector<16x1xf32> to vector<16x32xf32>
    %363 = arith.mulf %353, %362 : vector<16x32xf32>
    %364 = vector.broadcast %44 : vector<1x32xf32> to vector<16x32xf32>
    %365 = arith.mulf %363, %364 : vector<16x32xf32>
    %366 = vector.broadcast %43 : vector<1x32xf32> to vector<16x32xf32>
    %367 = arith.addf %365, %366 : vector<16x32xf32>
    %c0_227 = arith.constant 0 : index
    %c0_228 = arith.constant 0 : index
    %368 = vector.load %arg1[%c0_227, %c0_228] : memref<16x1xi32, #tpu.memory_space<vmem>>, vector<16x1xi32>
    %369 = tpu.iota {dimensions = array<i32: 1>} : vector<16x16xi32>
    %370 = vector.broadcast %368 : vector<16x1xi32> to vector<16x16xi32>
    %371 = arith.cmpi eq, %370, %369 : vector<16x16xi32>
    %cst_229 = arith.constant 1.000000e+00 : f32
    %cst_230 = arith.constant 0.000000e+00 : f32
    %372 = vector.broadcast %cst_229 : f32 to vector<16x16xf32>
    %373 = vector.broadcast %cst_230 : f32 to vector<16x16xf32>
    %374 = arith.select %371, %372, %373 : vector<16x16xi1>, vector<16x16xf32>
    %cst_231 = arith.constant dense<0.000000e+00> : vector<16x32xf32>
    %375 = tpu.matmul %374, %42, %cst_231 {dimension_numbers = #tpu.dot_dimension_numbers<[1], [0], [0], [1], [0, 0, 1, 1], [], []>} : vector<16x16xf32>, vector<16x32xf32>, vector<16x32xf32> -> vector<16x32xf32>
    %cst_232 = arith.constant 5.65685415 : f32
    %376 = vector.broadcast %cst_232 : f32 to vector<16x32xf32>
    %377 = arith.mulf %375, %376 : vector<16x32xf32>
    %cst_233 = arith.constant dense<0.000000e+00> : vector<16x96xf32>
    %378 = tpu.matmul %377, %21, %cst_233 {dimension_numbers = #tpu.dot_dimension_numbers<[1], [0], [0], [1], [0, 0, 1, 1], [], []>} : vector<16x32xf32>, vector<32x96xf32>, vector<16x96xf32> -> vector<16x96xf32>
    %379 = vector.broadcast %19 : vector<1x96xf32> to vector<16x96xf32>
    %380 = arith.addf %378, %379 : vector<16x96xf32>
    %381 = vector.extract_strided_slice %380 {offsets = [0, 0], sizes = [16, 32], strides = [1, 1]} : vector<16x96xf32> to vector<16x32xf32>
    %382 = vector.extract_strided_slice %380 {offsets = [0, 32], sizes = [16, 32], strides = [1, 1]} : vector<16x96xf32> to vector<16x32xf32>
    %383 = vector.extract_strided_slice %380 {offsets = [0, 64], sizes = [16, 32], strides = [1, 1]} : vector<16x96xf32> to vector<16x32xf32>
    %384 = vector.extract_strided_slice %381 {offsets = [0, 0], sizes = [16, 8], strides = [1, 1]} : vector<16x32xf32> to vector<16x8xf32>
    %385 = vector.extract_strided_slice %382 {offsets = [0, 0], sizes = [16, 8], strides = [1, 1]} : vector<16x32xf32> to vector<16x8xf32>
    %386 = vector.extract_strided_slice %383 {offsets = [0, 0], sizes = [16, 8], strides = [1, 1]} : vector<16x32xf32> to vector<16x8xf32>
    %cst_234 = arith.constant dense<0.000000e+00> : vector<16x16xf32>
    %387 = tpu.matmul %384, %385, %cst_234 {dimension_numbers = #tpu.dot_dimension_numbers<[1], [1], [0], [0], [0, 0, 1, 0], [], []>} : vector<16x8xf32>, vector<16x8xf32>, vector<16x16xf32> -> vector<16x16xf32>
    %cst_235 = arith.constant 0.353553385 : f32
    %388 = vector.broadcast %cst_235 : f32 to vector<16x16xf32>
    %389 = arith.mulf %387, %388 : vector<16x16xf32>
    %390 = arith.addf %389, %72 : vector<16x16xf32>
    %cst_236 = arith.constant dense<0xFF800000> : vector<16xf32>
    %391 = vector.multi_reduction <maximumf>, %390, %cst_236 [1] : vector<16x16xf32> to vector<16xf32>
    %392 = vector.shape_cast %391 : vector<16xf32> to vector<16x1xf32>
    %393 = vector.broadcast %392 : vector<16x1xf32> to vector<16x16xf32>
    %394 = arith.subf %390, %393 : vector<16x16xf32>
    %395 = math.exp %394 : vector<16x16xf32>
    %cst_237 = arith.constant dense<0.000000e+00> : vector<16xf32>
    %396 = vector.multi_reduction <add>, %395, %cst_237 [1] : vector<16x16xf32> to vector<16xf32>
    %397 = vector.shape_cast %396 : vector<16xf32> to vector<16x1xf32>
    %398 = tpu.reciprocal %397 {approx = true} : vector<16x1xf32> -> vector<16x1xf32>
    %399 = vector.broadcast %398 : vector<16x1xf32> to vector<16x16xf32>
    %400 = arith.mulf %395, %399 : vector<16x16xf32>
    %cst_238 = arith.constant dense<0.000000e+00> : vector<16x8xf32>
    %401 = tpu.matmul %400, %386, %cst_238 {dimension_numbers = #tpu.dot_dimension_numbers<[1], [0], [0], [1], [0, 0, 1, 1], [], []>} : vector<16x16xf32>, vector<16x8xf32>, vector<16x8xf32> -> vector<16x8xf32>
    %402 = vector.extract_strided_slice %381 {offsets = [0, 8], sizes = [16, 8], strides = [1, 1]} : vector<16x32xf32> to vector<16x8xf32>
    %403 = vector.extract_strided_slice %382 {offsets = [0, 8], sizes = [16, 8], strides = [1, 1]} : vector<16x32xf32> to vector<16x8xf32>
    %404 = vector.extract_strided_slice %383 {offsets = [0, 8], sizes = [16, 8], strides = [1, 1]} : vector<16x32xf32> to vector<16x8xf32>
    %cst_239 = arith.constant dense<0.000000e+00> : vector<16x16xf32>
    %405 = tpu.matmul %402, %403, %cst_239 {dimension_numbers = #tpu.dot_dimension_numbers<[1], [1], [0], [0], [0, 0, 1, 0], [], []>} : vector<16x8xf32>, vector<16x8xf32>, vector<16x16xf32> -> vector<16x16xf32>
    %cst_240 = arith.constant 0.353553385 : f32
    %406 = vector.broadcast %cst_240 : f32 to vector<16x16xf32>
    %407 = arith.mulf %405, %406 : vector<16x16xf32>
    %408 = arith.addf %407, %72 : vector<16x16xf32>
    %cst_241 = arith.constant dense<0xFF800000> : vector<16xf32>
    %409 = vector.multi_reduction <maximumf>, %408, %cst_241 [1] : vector<16x16xf32> to vector<16xf32>
    %410 = vector.shape_cast %409 : vector<16xf32> to vector<16x1xf32>
    %411 = vector.broadcast %410 : vector<16x1xf32> to vector<16x16xf32>
    %412 = arith.subf %408, %411 : vector<16x16xf32>
    %413 = math.exp %412 : vector<16x16xf32>
    %cst_242 = arith.constant dense<0.000000e+00> : vector<16xf32>
    %414 = vector.multi_reduction <add>, %413, %cst_242 [1] : vector<16x16xf32> to vector<16xf32>
    %415 = vector.shape_cast %414 : vector<16xf32> to vector<16x1xf32>
    %416 = tpu.reciprocal %415 {approx = true} : vector<16x1xf32> -> vector<16x1xf32>
    %417 = vector.broadcast %416 : vector<16x1xf32> to vector<16x16xf32>
    %418 = arith.mulf %413, %417 : vector<16x16xf32>
    %cst_243 = arith.constant dense<0.000000e+00> : vector<16x8xf32>
    %419 = tpu.matmul %418, %404, %cst_243 {dimension_numbers = #tpu.dot_dimension_numbers<[1], [0], [0], [1], [0, 0, 1, 1], [], []>} : vector<16x16xf32>, vector<16x8xf32>, vector<16x8xf32> -> vector<16x8xf32>
    %420 = vector.extract_strided_slice %381 {offsets = [0, 16], sizes = [16, 8], strides = [1, 1]} : vector<16x32xf32> to vector<16x8xf32>
    %421 = vector.extract_strided_slice %382 {offsets = [0, 16], sizes = [16, 8], strides = [1, 1]} : vector<16x32xf32> to vector<16x8xf32>
    %422 = vector.extract_strided_slice %383 {offsets = [0, 16], sizes = [16, 8], strides = [1, 1]} : vector<16x32xf32> to vector<16x8xf32>
    %cst_244 = arith.constant dense<0.000000e+00> : vector<16x16xf32>
    %423 = tpu.matmul %420, %421, %cst_244 {dimension_numbers = #tpu.dot_dimension_numbers<[1], [1], [0], [0], [0, 0, 1, 0], [], []>} : vector<16x8xf32>, vector<16x8xf32>, vector<16x16xf32> -> vector<16x16xf32>
    %cst_245 = arith.constant 0.353553385 : f32
    %424 = vector.broadcast %cst_245 : f32 to vector<16x16xf32>
    %425 = arith.mulf %423, %424 : vector<16x16xf32>
    %426 = arith.addf %425, %72 : vector<16x16xf32>
    %cst_246 = arith.constant dense<0xFF800000> : vector<16xf32>
    %427 = vector.multi_reduction <maximumf>, %426, %cst_246 [1] : vector<16x16xf32> to vector<16xf32>
    %428 = vector.shape_cast %427 : vector<16xf32> to vector<16x1xf32>
    %429 = vector.broadcast %428 : vector<16x1xf32> to vector<16x16xf32>
    %430 = arith.subf %426, %429 : vector<16x16xf32>
    %431 = math.exp %430 : vector<16x16xf32>
    %cst_247 = arith.constant dense<0.000000e+00> : vector<16xf32>
    %432 = vector.multi_reduction <add>, %431, %cst_247 [1] : vector<16x16xf32> to vector<16xf32>
    %433 = vector.shape_cast %432 : vector<16xf32> to vector<16x1xf32>
    %434 = tpu.reciprocal %433 {approx = true} : vector<16x1xf32> -> vector<16x1xf32>
    %435 = vector.broadcast %434 : vector<16x1xf32> to vector<16x16xf32>
    %436 = arith.mulf %431, %435 : vector<16x16xf32>
    %cst_248 = arith.constant dense<0.000000e+00> : vector<16x8xf32>
    %437 = tpu.matmul %436, %422, %cst_248 {dimension_numbers = #tpu.dot_dimension_numbers<[1], [0], [0], [1], [0, 0, 1, 1], [], []>} : vector<16x16xf32>, vector<16x8xf32>, vector<16x8xf32> -> vector<16x8xf32>
    %438 = vector.extract_strided_slice %381 {offsets = [0, 24], sizes = [16, 8], strides = [1, 1]} : vector<16x32xf32> to vector<16x8xf32>
    %439 = vector.extract_strided_slice %382 {offsets = [0, 24], sizes = [16, 8], strides = [1, 1]} : vector<16x32xf32> to vector<16x8xf32>
    %440 = vector.extract_strided_slice %383 {offsets = [0, 24], sizes = [16, 8], strides = [1, 1]} : vector<16x32xf32> to vector<16x8xf32>
    %cst_249 = arith.constant dense<0.000000e+00> : vector<16x16xf32>
    %441 = tpu.matmul %438, %439, %cst_249 {dimension_numbers = #tpu.dot_dimension_numbers<[1], [1], [0], [0], [0, 0, 1, 0], [], []>} : vector<16x8xf32>, vector<16x8xf32>, vector<16x16xf32> -> vector<16x16xf32>
    %cst_250 = arith.constant 0.353553385 : f32
    %442 = vector.broadcast %cst_250 : f32 to vector<16x16xf32>
    %443 = arith.mulf %441, %442 : vector<16x16xf32>
    %444 = arith.addf %443, %72 : vector<16x16xf32>
    %cst_251 = arith.constant dense<0xFF800000> : vector<16xf32>
    %445 = vector.multi_reduction <maximumf>, %444, %cst_251 [1] : vector<16x16xf32> to vector<16xf32>
    %446 = vector.shape_cast %445 : vector<16xf32> to vector<16x1xf32>
    %447 = vector.broadcast %446 : vector<16x1xf32> to vector<16x16xf32>
    %448 = arith.subf %444, %447 : vector<16x16xf32>
    %449 = math.exp %448 : vector<16x16xf32>
    %cst_252 = arith.constant dense<0.000000e+00> : vector<16xf32>
    %450 = vector.multi_reduction <add>, %449, %cst_252 [1] : vector<16x16xf32> to vector<16xf32>
    %451 = vector.shape_cast %450 : vector<16xf32> to vector<16x1xf32>
    %452 = tpu.reciprocal %451 {approx = true} : vector<16x1xf32> -> vector<16x1xf32>
    %453 = vector.broadcast %452 : vector<16x1xf32> to vector<16x16xf32>
    %454 = arith.mulf %449, %453 : vector<16x16xf32>
    %cst_253 = arith.constant dense<0.000000e+00> : vector<16x8xf32>
    %455 = tpu.matmul %454, %440, %cst_253 {dimension_numbers = #tpu.dot_dimension_numbers<[1], [0], [0], [1], [0, 0, 1, 1], [], []>} : vector<16x16xf32>, vector<16x8xf32>, vector<16x8xf32> -> vector<16x8xf32>
    %456 = tpu.concatenate %401, %419, %437, %455 in 1 : vector<16x8xf32>, vector<16x8xf32>, vector<16x8xf32>, vector<16x8xf32> -> vector<16x32xf32>
    %cst_254 = arith.constant dense<0.000000e+00> : vector<16x32xf32>
    %457 = tpu.matmul %456, %20, %cst_254 {dimension_numbers = #tpu.dot_dimension_numbers<[1], [0], [0], [1], [0, 0, 1, 1], [], []>} : vector<16x32xf32>, vector<32x32xf32>, vector<16x32xf32> -> vector<16x32xf32>
    %458 = vector.broadcast %18 : vector<1x32xf32> to vector<16x32xf32>
    %459 = arith.addf %457, %458 : vector<16x32xf32>
    %460 = arith.addf %377, %459 : vector<16x32xf32>
    %cst_255 = arith.constant dense<0.000000e+00> : vector<16xf32>
    %461 = vector.multi_reduction <add>, %460, %cst_255 [1] : vector<16x32xf32> to vector<16xf32>
    %462 = vector.shape_cast %461 : vector<16xf32> to vector<16x1xf32>
    %cst_256 = arith.constant 3.200000e+01 : f32
    %463 = vector.broadcast %cst_256 : f32 to vector<16x1xf32>
    %464 = arith.divf %462, %463 : vector<16x1xf32>
    %465 = vector.broadcast %464 : vector<16x1xf32> to vector<16x32xf32>
    %466 = arith.subf %460, %465 : vector<16x32xf32>
    %467 = arith.mulf %466, %466 : vector<16x32xf32>
    %cst_257 = arith.constant dense<0.000000e+00> : vector<16xf32>
    %468 = vector.multi_reduction <add>, %467, %cst_257 [1] : vector<16x32xf32> to vector<16xf32>
    %469 = vector.shape_cast %468 : vector<16xf32> to vector<16x1xf32>
    %cst_258 = arith.constant 3.200000e+01 : f32
    %470 = vector.broadcast %cst_258 : f32 to vector<16x1xf32>
    %471 = arith.divf %469, %470 : vector<16x1xf32>
    %cst_259 = arith.constant 9.99999974E-6 : f32
    %472 = vector.broadcast %cst_259 : f32 to vector<16x1xf32>
    %473 = arith.addf %471, %472 : vector<16x1xf32>
    %474 = math.rsqrt %473 : vector<16x1xf32>
    %475 = vector.broadcast %474 : vector<16x1xf32> to vector<16x32xf32>
    %476 = arith.mulf %466, %475 : vector<16x32xf32>
    %477 = vector.broadcast %13 : vector<1x32xf32> to vector<16x32xf32>
    %478 = arith.mulf %476, %477 : vector<16x32xf32>
    %479 = vector.broadcast %12 : vector<1x32xf32> to vector<16x32xf32>
    %480 = arith.addf %478, %479 : vector<16x32xf32>
    %cst_260 = arith.constant dense<0.000000e+00> : vector<16x32xf32>
    %481 = tpu.matmul %480, %7, %cst_260 {dimension_numbers = #tpu.dot_dimension_numbers<[1], [0], [0], [1], [0, 0, 1, 1], [], []>} : vector<16x32xf32>, vector<32x32xf32>, vector<16x32xf32> -> vector<16x32xf32>
    %482 = vector.broadcast %4 : vector<1x32xf32> to vector<16x32xf32>
    %483 = arith.addf %481, %482 : vector<16x32xf32>
    %cst_261 = arith.constant dense<0.000000e+00> : vector<16x64xf32>
    %484 = tpu.matmul %367, %5, %cst_261 {dimension_numbers = #tpu.dot_dimension_numbers<[1], [0], [0], [1], [0, 0, 1, 1], [], []>} : vector<16x32xf32>, vector<32x64xf32>, vector<16x64xf32> -> vector<16x64xf32>
    %485 = vector.broadcast %2 : vector<1x64xf32> to vector<16x64xf32>
    %486 = arith.addf %484, %485 : vector<16x64xf32>
    %487 = vector.extract_strided_slice %486 {offsets = [0, 0], sizes = [16, 32], strides = [1, 1]} : vector<16x64xf32> to vector<16x32xf32>
    %488 = vector.extract_strided_slice %486 {offsets = [0, 32], sizes = [16, 32], strides = [1, 1]} : vector<16x64xf32> to vector<16x32xf32>
    %489 = vector.extract_strided_slice %483 {offsets = [0, 0], sizes = [16, 8], strides = [1, 1]} : vector<16x32xf32> to vector<16x8xf32>
    %490 = vector.extract_strided_slice %487 {offsets = [0, 0], sizes = [16, 8], strides = [1, 1]} : vector<16x32xf32> to vector<16x8xf32>
    %491 = vector.extract_strided_slice %488 {offsets = [0, 0], sizes = [16, 8], strides = [1, 1]} : vector<16x32xf32> to vector<16x8xf32>
    %cst_262 = arith.constant dense<0.000000e+00> : vector<16x16xf32>
    %492 = tpu.matmul %489, %490, %cst_262 {dimension_numbers = #tpu.dot_dimension_numbers<[1], [1], [0], [0], [0, 0, 1, 0], [], []>} : vector<16x8xf32>, vector<16x8xf32>, vector<16x16xf32> -> vector<16x16xf32>
    %cst_263 = arith.constant 0.353553385 : f32
    %493 = vector.broadcast %cst_263 : f32 to vector<16x16xf32>
    %494 = arith.mulf %492, %493 : vector<16x16xf32>
    %495 = arith.addf %494, %73 : vector<16x16xf32>
    %cst_264 = arith.constant dense<0xFF800000> : vector<16xf32>
    %496 = vector.multi_reduction <maximumf>, %495, %cst_264 [1] : vector<16x16xf32> to vector<16xf32>
    %497 = vector.shape_cast %496 : vector<16xf32> to vector<16x1xf32>
    %498 = vector.broadcast %497 : vector<16x1xf32> to vector<16x16xf32>
    %499 = arith.subf %495, %498 : vector<16x16xf32>
    %500 = math.exp %499 : vector<16x16xf32>
    %cst_265 = arith.constant dense<0.000000e+00> : vector<16xf32>
    %501 = vector.multi_reduction <add>, %500, %cst_265 [1] : vector<16x16xf32> to vector<16xf32>
    %502 = vector.shape_cast %501 : vector<16xf32> to vector<16x1xf32>
    %503 = tpu.reciprocal %502 {approx = true} : vector<16x1xf32> -> vector<16x1xf32>
    %504 = vector.broadcast %503 : vector<16x1xf32> to vector<16x16xf32>
    %505 = arith.mulf %500, %504 : vector<16x16xf32>
    %cst_266 = arith.constant dense<0.000000e+00> : vector<16x8xf32>
    %506 = tpu.matmul %505, %491, %cst_266 {dimension_numbers = #tpu.dot_dimension_numbers<[1], [0], [0], [1], [0, 0, 1, 1], [], []>} : vector<16x16xf32>, vector<16x8xf32>, vector<16x8xf32> -> vector<16x8xf32>
    %507 = vector.extract_strided_slice %483 {offsets = [0, 8], sizes = [16, 8], strides = [1, 1]} : vector<16x32xf32> to vector<16x8xf32>
    %508 = vector.extract_strided_slice %487 {offsets = [0, 8], sizes = [16, 8], strides = [1, 1]} : vector<16x32xf32> to vector<16x8xf32>
    %509 = vector.extract_strided_slice %488 {offsets = [0, 8], sizes = [16, 8], strides = [1, 1]} : vector<16x32xf32> to vector<16x8xf32>
    %cst_267 = arith.constant dense<0.000000e+00> : vector<16x16xf32>
    %510 = tpu.matmul %507, %508, %cst_267 {dimension_numbers = #tpu.dot_dimension_numbers<[1], [1], [0], [0], [0, 0, 1, 0], [], []>} : vector<16x8xf32>, vector<16x8xf32>, vector<16x16xf32> -> vector<16x16xf32>
    %cst_268 = arith.constant 0.353553385 : f32
    %511 = vector.broadcast %cst_268 : f32 to vector<16x16xf32>
    %512 = arith.mulf %510, %511 : vector<16x16xf32>
    %513 = arith.addf %512, %73 : vector<16x16xf32>
    %cst_269 = arith.constant dense<0xFF800000> : vector<16xf32>
    %514 = vector.multi_reduction <maximumf>, %513, %cst_269 [1] : vector<16x16xf32> to vector<16xf32>
    %515 = vector.shape_cast %514 : vector<16xf32> to vector<16x1xf32>
    %516 = vector.broadcast %515 : vector<16x1xf32> to vector<16x16xf32>
    %517 = arith.subf %513, %516 : vector<16x16xf32>
    %518 = math.exp %517 : vector<16x16xf32>
    %cst_270 = arith.constant dense<0.000000e+00> : vector<16xf32>
    %519 = vector.multi_reduction <add>, %518, %cst_270 [1] : vector<16x16xf32> to vector<16xf32>
    %520 = vector.shape_cast %519 : vector<16xf32> to vector<16x1xf32>
    %521 = tpu.reciprocal %520 {approx = true} : vector<16x1xf32> -> vector<16x1xf32>
    %522 = vector.broadcast %521 : vector<16x1xf32> to vector<16x16xf32>
    %523 = arith.mulf %518, %522 : vector<16x16xf32>
    %cst_271 = arith.constant dense<0.000000e+00> : vector<16x8xf32>
    %524 = tpu.matmul %523, %509, %cst_271 {dimension_numbers = #tpu.dot_dimension_numbers<[1], [0], [0], [1], [0, 0, 1, 1], [], []>} : vector<16x16xf32>, vector<16x8xf32>, vector<16x8xf32> -> vector<16x8xf32>
    %525 = vector.extract_strided_slice %483 {offsets = [0, 16], sizes = [16, 8], strides = [1, 1]} : vector<16x32xf32> to vector<16x8xf32>
    %526 = vector.extract_strided_slice %487 {offsets = [0, 16], sizes = [16, 8], strides = [1, 1]} : vector<16x32xf32> to vector<16x8xf32>
    %527 = vector.extract_strided_slice %488 {offsets = [0, 16], sizes = [16, 8], strides = [1, 1]} : vector<16x32xf32> to vector<16x8xf32>
    %cst_272 = arith.constant dense<0.000000e+00> : vector<16x16xf32>
    %528 = tpu.matmul %525, %526, %cst_272 {dimension_numbers = #tpu.dot_dimension_numbers<[1], [1], [0], [0], [0, 0, 1, 0], [], []>} : vector<16x8xf32>, vector<16x8xf32>, vector<16x16xf32> -> vector<16x16xf32>
    %cst_273 = arith.constant 0.353553385 : f32
    %529 = vector.broadcast %cst_273 : f32 to vector<16x16xf32>
    %530 = arith.mulf %528, %529 : vector<16x16xf32>
    %531 = arith.addf %530, %73 : vector<16x16xf32>
    %cst_274 = arith.constant dense<0xFF800000> : vector<16xf32>
    %532 = vector.multi_reduction <maximumf>, %531, %cst_274 [1] : vector<16x16xf32> to vector<16xf32>
    %533 = vector.shape_cast %532 : vector<16xf32> to vector<16x1xf32>
    %534 = vector.broadcast %533 : vector<16x1xf32> to vector<16x16xf32>
    %535 = arith.subf %531, %534 : vector<16x16xf32>
    %536 = math.exp %535 : vector<16x16xf32>
    %cst_275 = arith.constant dense<0.000000e+00> : vector<16xf32>
    %537 = vector.multi_reduction <add>, %536, %cst_275 [1] : vector<16x16xf32> to vector<16xf32>
    %538 = vector.shape_cast %537 : vector<16xf32> to vector<16x1xf32>
    %539 = tpu.reciprocal %538 {approx = true} : vector<16x1xf32> -> vector<16x1xf32>
    %540 = vector.broadcast %539 : vector<16x1xf32> to vector<16x16xf32>
    %541 = arith.mulf %536, %540 : vector<16x16xf32>
    %cst_276 = arith.constant dense<0.000000e+00> : vector<16x8xf32>
    %542 = tpu.matmul %541, %527, %cst_276 {dimension_numbers = #tpu.dot_dimension_numbers<[1], [0], [0], [1], [0, 0, 1, 1], [], []>} : vector<16x16xf32>, vector<16x8xf32>, vector<16x8xf32> -> vector<16x8xf32>
    %543 = vector.extract_strided_slice %483 {offsets = [0, 24], sizes = [16, 8], strides = [1, 1]} : vector<16x32xf32> to vector<16x8xf32>
    %544 = vector.extract_strided_slice %487 {offsets = [0, 24], sizes = [16, 8], strides = [1, 1]} : vector<16x32xf32> to vector<16x8xf32>
    %545 = vector.extract_strided_slice %488 {offsets = [0, 24], sizes = [16, 8], strides = [1, 1]} : vector<16x32xf32> to vector<16x8xf32>
    %cst_277 = arith.constant dense<0.000000e+00> : vector<16x16xf32>
    %546 = tpu.matmul %543, %544, %cst_277 {dimension_numbers = #tpu.dot_dimension_numbers<[1], [1], [0], [0], [0, 0, 1, 0], [], []>} : vector<16x8xf32>, vector<16x8xf32>, vector<16x16xf32> -> vector<16x16xf32>
    %cst_278 = arith.constant 0.353553385 : f32
    %547 = vector.broadcast %cst_278 : f32 to vector<16x16xf32>
    %548 = arith.mulf %546, %547 : vector<16x16xf32>
    %549 = arith.addf %548, %73 : vector<16x16xf32>
    %cst_279 = arith.constant dense<0xFF800000> : vector<16xf32>
    %550 = vector.multi_reduction <maximumf>, %549, %cst_279 [1] : vector<16x16xf32> to vector<16xf32>
    %551 = vector.shape_cast %550 : vector<16xf32> to vector<16x1xf32>
    %552 = vector.broadcast %551 : vector<16x1xf32> to vector<16x16xf32>
    %553 = arith.subf %549, %552 : vector<16x16xf32>
    %554 = math.exp %553 : vector<16x16xf32>
    %cst_280 = arith.constant dense<0.000000e+00> : vector<16xf32>
    %555 = vector.multi_reduction <add>, %554, %cst_280 [1] : vector<16x16xf32> to vector<16xf32>
    %556 = vector.shape_cast %555 : vector<16xf32> to vector<16x1xf32>
    %557 = tpu.reciprocal %556 {approx = true} : vector<16x1xf32> -> vector<16x1xf32>
    %558 = vector.broadcast %557 : vector<16x1xf32> to vector<16x16xf32>
    %559 = arith.mulf %554, %558 : vector<16x16xf32>
    %cst_281 = arith.constant dense<0.000000e+00> : vector<16x8xf32>
    %560 = tpu.matmul %559, %545, %cst_281 {dimension_numbers = #tpu.dot_dimension_numbers<[1], [0], [0], [1], [0, 0, 1, 1], [], []>} : vector<16x16xf32>, vector<16x8xf32>, vector<16x8xf32> -> vector<16x8xf32>
    %561 = tpu.concatenate %506, %524, %542, %560 in 1 : vector<16x8xf32>, vector<16x8xf32>, vector<16x8xf32>, vector<16x8xf32> -> vector<16x32xf32>
    %cst_282 = arith.constant dense<0.000000e+00> : vector<16x32xf32>
    %562 = tpu.matmul %561, %6, %cst_282 {dimension_numbers = #tpu.dot_dimension_numbers<[1], [0], [0], [1], [0, 0, 1, 1], [], []>} : vector<16x32xf32>, vector<32x32xf32>, vector<16x32xf32> -> vector<16x32xf32>
    %563 = vector.broadcast %3 : vector<1x32xf32> to vector<16x32xf32>
    %564 = arith.addf %562, %563 : vector<16x32xf32>
    %565 = arith.addf %480, %564 : vector<16x32xf32>
    %cst_283 = arith.constant dense<0.000000e+00> : vector<16xf32>
    %566 = vector.multi_reduction <add>, %565, %cst_283 [1] : vector<16x32xf32> to vector<16xf32>
    %567 = vector.shape_cast %566 : vector<16xf32> to vector<16x1xf32>
    %cst_284 = arith.constant 3.200000e+01 : f32
    %568 = vector.broadcast %cst_284 : f32 to vector<16x1xf32>
    %569 = arith.divf %567, %568 : vector<16x1xf32>
    %570 = vector.broadcast %569 : vector<16x1xf32> to vector<16x32xf32>
    %571 = arith.subf %565, %570 : vector<16x32xf32>
    %572 = arith.mulf %571, %571 : vector<16x32xf32>
    %cst_285 = arith.constant dense<0.000000e+00> : vector<16xf32>
    %573 = vector.multi_reduction <add>, %572, %cst_285 [1] : vector<16x32xf32> to vector<16xf32>
    %574 = vector.shape_cast %573 : vector<16xf32> to vector<16x1xf32>
    %cst_286 = arith.constant 3.200000e+01 : f32
    %575 = vector.broadcast %cst_286 : f32 to vector<16x1xf32>
    %576 = arith.divf %574, %575 : vector<16x1xf32>
    %cst_287 = arith.constant 9.99999974E-6 : f32
    %577 = vector.broadcast %cst_287 : f32 to vector<16x1xf32>
    %578 = arith.addf %576, %577 : vector<16x1xf32>
    %579 = math.rsqrt %578 : vector<16x1xf32>
    %580 = vector.broadcast %579 : vector<16x1xf32> to vector<16x32xf32>
    %581 = arith.mulf %571, %580 : vector<16x32xf32>
    %582 = vector.broadcast %15 : vector<1x32xf32> to vector<16x32xf32>
    %583 = arith.mulf %581, %582 : vector<16x32xf32>
    %584 = vector.broadcast %14 : vector<1x32xf32> to vector<16x32xf32>
    %585 = arith.addf %583, %584 : vector<16x32xf32>
    %cst_288 = arith.constant dense<0.000000e+00> : vector<16x64xf32>
    %586 = tpu.matmul %585, %10, %cst_288 {dimension_numbers = #tpu.dot_dimension_numbers<[1], [0], [0], [1], [0, 0, 1, 1], [], []>} : vector<16x32xf32>, vector<32x64xf32>, vector<16x64xf32> -> vector<16x64xf32>
    %587 = vector.broadcast %8 : vector<1x64xf32> to vector<16x64xf32>
    %588 = arith.addf %586, %587 : vector<16x64xf32>
    %cst_289 = arith.constant 0.000000e+00 : f32
    %589 = vector.broadcast %cst_289 : f32 to vector<16x64xf32>
    %590 = arith.maximumf %588, %589 : vector<16x64xf32>
    %cst_290 = arith.constant dense<0.000000e+00> : vector<16x32xf32>
    %591 = tpu.matmul %590, %11, %cst_290 {dimension_numbers = #tpu.dot_dimension_numbers<[1], [0], [0], [1], [0, 0, 1, 1], [], []>} : vector<16x64xf32>, vector<64x32xf32>, vector<16x32xf32> -> vector<16x32xf32>
    %592 = vector.broadcast %9 : vector<1x32xf32> to vector<16x32xf32>
    %593 = arith.addf %591, %592 : vector<16x32xf32>
    %594 = arith.addf %585, %593 : vector<16x32xf32>
    %cst_291 = arith.constant dense<0.000000e+00> : vector<16xf32>
    %595 = vector.multi_reduction <add>, %594, %cst_291 [1] : vector<16x32xf32> to vector<16xf32>
    %596 = vector.shape_cast %595 : vector<16xf32> to vector<16x1xf32>
    %cst_292 = arith.constant 3.200000e+01 : f32
    %597 = vector.broadcast %cst_292 : f32 to vector<16x1xf32>
    %598 = arith.divf %596, %597 : vector<16x1xf32>
    %599 = vector.broadcast %598 : vector<16x1xf32> to vector<16x32xf32>
    %600 = arith.subf %594, %599 : vector<16x32xf32>
    %601 = arith.mulf %600, %600 : vector<16x32xf32>
    %cst_293 = arith.constant dense<0.000000e+00> : vector<16xf32>
    %602 = vector.multi_reduction <add>, %601, %cst_293 [1] : vector<16x32xf32> to vector<16xf32>
    %603 = vector.shape_cast %602 : vector<16xf32> to vector<16x1xf32>
    %cst_294 = arith.constant 3.200000e+01 : f32
    %604 = vector.broadcast %cst_294 : f32 to vector<16x1xf32>
    %605 = arith.divf %603, %604 : vector<16x1xf32>
    %cst_295 = arith.constant 9.99999974E-6 : f32
    %606 = vector.broadcast %cst_295 : f32 to vector<16x1xf32>
    %607 = arith.addf %605, %606 : vector<16x1xf32>
    %608 = math.rsqrt %607 : vector<16x1xf32>
    %609 = vector.broadcast %608 : vector<16x1xf32> to vector<16x32xf32>
    %610 = arith.mulf %600, %609 : vector<16x32xf32>
    %611 = vector.broadcast %17 : vector<1x32xf32> to vector<16x32xf32>
    %612 = arith.mulf %610, %611 : vector<16x32xf32>
    %613 = vector.broadcast %16 : vector<1x32xf32> to vector<16x32xf32>
    %614 = arith.addf %612, %613 : vector<16x32xf32>
    %cst_296 = arith.constant dense<0.000000e+00> : vector<16x96xf32>
    %615 = tpu.matmul %614, %41, %cst_296 {dimension_numbers = #tpu.dot_dimension_numbers<[1], [0], [0], [1], [0, 0, 1, 1], [], []>} : vector<16x32xf32>, vector<32x96xf32>, vector<16x96xf32> -> vector<16x96xf32>
    %616 = vector.broadcast %39 : vector<1x96xf32> to vector<16x96xf32>
    %617 = arith.addf %615, %616 : vector<16x96xf32>
    %618 = vector.extract_strided_slice %617 {offsets = [0, 0], sizes = [16, 32], strides = [1, 1]} : vector<16x96xf32> to vector<16x32xf32>
    %619 = vector.extract_strided_slice %617 {offsets = [0, 32], sizes = [16, 32], strides = [1, 1]} : vector<16x96xf32> to vector<16x32xf32>
    %620 = vector.extract_strided_slice %617 {offsets = [0, 64], sizes = [16, 32], strides = [1, 1]} : vector<16x96xf32> to vector<16x32xf32>
    %621 = vector.extract_strided_slice %618 {offsets = [0, 0], sizes = [16, 8], strides = [1, 1]} : vector<16x32xf32> to vector<16x8xf32>
    %622 = vector.extract_strided_slice %619 {offsets = [0, 0], sizes = [16, 8], strides = [1, 1]} : vector<16x32xf32> to vector<16x8xf32>
    %623 = vector.extract_strided_slice %620 {offsets = [0, 0], sizes = [16, 8], strides = [1, 1]} : vector<16x32xf32> to vector<16x8xf32>
    %cst_297 = arith.constant dense<0.000000e+00> : vector<16x16xf32>
    %624 = tpu.matmul %621, %622, %cst_297 {dimension_numbers = #tpu.dot_dimension_numbers<[1], [1], [0], [0], [0, 0, 1, 0], [], []>} : vector<16x8xf32>, vector<16x8xf32>, vector<16x16xf32> -> vector<16x16xf32>
    %cst_298 = arith.constant 0.353553385 : f32
    %625 = vector.broadcast %cst_298 : f32 to vector<16x16xf32>
    %626 = arith.mulf %624, %625 : vector<16x16xf32>
    %627 = arith.addf %626, %72 : vector<16x16xf32>
    %cst_299 = arith.constant dense<0xFF800000> : vector<16xf32>
    %628 = vector.multi_reduction <maximumf>, %627, %cst_299 [1] : vector<16x16xf32> to vector<16xf32>
    %629 = vector.shape_cast %628 : vector<16xf32> to vector<16x1xf32>
    %630 = vector.broadcast %629 : vector<16x1xf32> to vector<16x16xf32>
    %631 = arith.subf %627, %630 : vector<16x16xf32>
    %632 = math.exp %631 : vector<16x16xf32>
    %cst_300 = arith.constant dense<0.000000e+00> : vector<16xf32>
    %633 = vector.multi_reduction <add>, %632, %cst_300 [1] : vector<16x16xf32> to vector<16xf32>
    %634 = vector.shape_cast %633 : vector<16xf32> to vector<16x1xf32>
    %635 = tpu.reciprocal %634 {approx = true} : vector<16x1xf32> -> vector<16x1xf32>
    %636 = vector.broadcast %635 : vector<16x1xf32> to vector<16x16xf32>
    %637 = arith.mulf %632, %636 : vector<16x16xf32>
    %cst_301 = arith.constant dense<0.000000e+00> : vector<16x8xf32>
    %638 = tpu.matmul %637, %623, %cst_301 {dimension_numbers = #tpu.dot_dimension_numbers<[1], [0], [0], [1], [0, 0, 1, 1], [], []>} : vector<16x16xf32>, vector<16x8xf32>, vector<16x8xf32> -> vector<16x8xf32>
    %639 = vector.extract_strided_slice %618 {offsets = [0, 8], sizes = [16, 8], strides = [1, 1]} : vector<16x32xf32> to vector<16x8xf32>
    %640 = vector.extract_strided_slice %619 {offsets = [0, 8], sizes = [16, 8], strides = [1, 1]} : vector<16x32xf32> to vector<16x8xf32>
    %641 = vector.extract_strided_slice %620 {offsets = [0, 8], sizes = [16, 8], strides = [1, 1]} : vector<16x32xf32> to vector<16x8xf32>
    %cst_302 = arith.constant dense<0.000000e+00> : vector<16x16xf32>
    %642 = tpu.matmul %639, %640, %cst_302 {dimension_numbers = #tpu.dot_dimension_numbers<[1], [1], [0], [0], [0, 0, 1, 0], [], []>} : vector<16x8xf32>, vector<16x8xf32>, vector<16x16xf32> -> vector<16x16xf32>
    %cst_303 = arith.constant 0.353553385 : f32
    %643 = vector.broadcast %cst_303 : f32 to vector<16x16xf32>
    %644 = arith.mulf %642, %643 : vector<16x16xf32>
    %645 = arith.addf %644, %72 : vector<16x16xf32>
    %cst_304 = arith.constant dense<0xFF800000> : vector<16xf32>
    %646 = vector.multi_reduction <maximumf>, %645, %cst_304 [1] : vector<16x16xf32> to vector<16xf32>
    %647 = vector.shape_cast %646 : vector<16xf32> to vector<16x1xf32>
    %648 = vector.broadcast %647 : vector<16x1xf32> to vector<16x16xf32>
    %649 = arith.subf %645, %648 : vector<16x16xf32>
    %650 = math.exp %649 : vector<16x16xf32>
    %cst_305 = arith.constant dense<0.000000e+00> : vector<16xf32>
    %651 = vector.multi_reduction <add>, %650, %cst_305 [1] : vector<16x16xf32> to vector<16xf32>
    %652 = vector.shape_cast %651 : vector<16xf32> to vector<16x1xf32>
    %653 = tpu.reciprocal %652 {approx = true} : vector<16x1xf32> -> vector<16x1xf32>
    %654 = vector.broadcast %653 : vector<16x1xf32> to vector<16x16xf32>
    %655 = arith.mulf %650, %654 : vector<16x16xf32>
    %cst_306 = arith.constant dense<0.000000e+00> : vector<16x8xf32>
    %656 = tpu.matmul %655, %641, %cst_306 {dimension_numbers = #tpu.dot_dimension_numbers<[1], [0], [0], [1], [0, 0, 1, 1], [], []>} : vector<16x16xf32>, vector<16x8xf32>, vector<16x8xf32> -> vector<16x8xf32>
    %657 = vector.extract_strided_slice %618 {offsets = [0, 16], sizes = [16, 8], strides = [1, 1]} : vector<16x32xf32> to vector<16x8xf32>
    %658 = vector.extract_strided_slice %619 {offsets = [0, 16], sizes = [16, 8], strides = [1, 1]} : vector<16x32xf32> to vector<16x8xf32>
    %659 = vector.extract_strided_slice %620 {offsets = [0, 16], sizes = [16, 8], strides = [1, 1]} : vector<16x32xf32> to vector<16x8xf32>
    %cst_307 = arith.constant dense<0.000000e+00> : vector<16x16xf32>
    %660 = tpu.matmul %657, %658, %cst_307 {dimension_numbers = #tpu.dot_dimension_numbers<[1], [1], [0], [0], [0, 0, 1, 0], [], []>} : vector<16x8xf32>, vector<16x8xf32>, vector<16x16xf32> -> vector<16x16xf32>
    %cst_308 = arith.constant 0.353553385 : f32
    %661 = vector.broadcast %cst_308 : f32 to vector<16x16xf32>
    %662 = arith.mulf %660, %661 : vector<16x16xf32>
    %663 = arith.addf %662, %72 : vector<16x16xf32>
    %cst_309 = arith.constant dense<0xFF800000> : vector<16xf32>
    %664 = vector.multi_reduction <maximumf>, %663, %cst_309 [1] : vector<16x16xf32> to vector<16xf32>
    %665 = vector.shape_cast %664 : vector<16xf32> to vector<16x1xf32>
    %666 = vector.broadcast %665 : vector<16x1xf32> to vector<16x16xf32>
    %667 = arith.subf %663, %666 : vector<16x16xf32>
    %668 = math.exp %667 : vector<16x16xf32>
    %cst_310 = arith.constant dense<0.000000e+00> : vector<16xf32>
    %669 = vector.multi_reduction <add>, %668, %cst_310 [1] : vector<16x16xf32> to vector<16xf32>
    %670 = vector.shape_cast %669 : vector<16xf32> to vector<16x1xf32>
    %671 = tpu.reciprocal %670 {approx = true} : vector<16x1xf32> -> vector<16x1xf32>
    %672 = vector.broadcast %671 : vector<16x1xf32> to vector<16x16xf32>
    %673 = arith.mulf %668, %672 : vector<16x16xf32>
    %cst_311 = arith.constant dense<0.000000e+00> : vector<16x8xf32>
    %674 = tpu.matmul %673, %659, %cst_311 {dimension_numbers = #tpu.dot_dimension_numbers<[1], [0], [0], [1], [0, 0, 1, 1], [], []>} : vector<16x16xf32>, vector<16x8xf32>, vector<16x8xf32> -> vector<16x8xf32>
    %675 = vector.extract_strided_slice %618 {offsets = [0, 24], sizes = [16, 8], strides = [1, 1]} : vector<16x32xf32> to vector<16x8xf32>
    %676 = vector.extract_strided_slice %619 {offsets = [0, 24], sizes = [16, 8], strides = [1, 1]} : vector<16x32xf32> to vector<16x8xf32>
    %677 = vector.extract_strided_slice %620 {offsets = [0, 24], sizes = [16, 8], strides = [1, 1]} : vector<16x32xf32> to vector<16x8xf32>
    %cst_312 = arith.constant dense<0.000000e+00> : vector<16x16xf32>
    %678 = tpu.matmul %675, %676, %cst_312 {dimension_numbers = #tpu.dot_dimension_numbers<[1], [1], [0], [0], [0, 0, 1, 0], [], []>} : vector<16x8xf32>, vector<16x8xf32>, vector<16x16xf32> -> vector<16x16xf32>
    %cst_313 = arith.constant 0.353553385 : f32
    %679 = vector.broadcast %cst_313 : f32 to vector<16x16xf32>
    %680 = arith.mulf %678, %679 : vector<16x16xf32>
    %681 = arith.addf %680, %72 : vector<16x16xf32>
    %cst_314 = arith.constant dense<0xFF800000> : vector<16xf32>
    %682 = vector.multi_reduction <maximumf>, %681, %cst_314 [1] : vector<16x16xf32> to vector<16xf32>
    %683 = vector.shape_cast %682 : vector<16xf32> to vector<16x1xf32>
    %684 = vector.broadcast %683 : vector<16x1xf32> to vector<16x16xf32>
    %685 = arith.subf %681, %684 : vector<16x16xf32>
    %686 = math.exp %685 : vector<16x16xf32>
    %cst_315 = arith.constant dense<0.000000e+00> : vector<16xf32>
    %687 = vector.multi_reduction <add>, %686, %cst_315 [1] : vector<16x16xf32> to vector<16xf32>
    %688 = vector.shape_cast %687 : vector<16xf32> to vector<16x1xf32>
    %689 = tpu.reciprocal %688 {approx = true} : vector<16x1xf32> -> vector<16x1xf32>
    %690 = vector.broadcast %689 : vector<16x1xf32> to vector<16x16xf32>
    %691 = arith.mulf %686, %690 : vector<16x16xf32>
    %cst_316 = arith.constant dense<0.000000e+00> : vector<16x8xf32>
    %692 = tpu.matmul %691, %677, %cst_316 {dimension_numbers = #tpu.dot_dimension_numbers<[1], [0], [0], [1], [0, 0, 1, 1], [], []>} : vector<16x16xf32>, vector<16x8xf32>, vector<16x8xf32> -> vector<16x8xf32>
    %693 = tpu.concatenate %638, %656, %674, %692 in 1 : vector<16x8xf32>, vector<16x8xf32>, vector<16x8xf32>, vector<16x8xf32> -> vector<16x32xf32>
    %cst_317 = arith.constant dense<0.000000e+00> : vector<16x32xf32>
    %694 = tpu.matmul %693, %40, %cst_317 {dimension_numbers = #tpu.dot_dimension_numbers<[1], [0], [0], [1], [0, 0, 1, 1], [], []>} : vector<16x32xf32>, vector<32x32xf32>, vector<16x32xf32> -> vector<16x32xf32>
    %695 = vector.broadcast %38 : vector<1x32xf32> to vector<16x32xf32>
    %696 = arith.addf %694, %695 : vector<16x32xf32>
    %697 = arith.addf %614, %696 : vector<16x32xf32>
    %cst_318 = arith.constant dense<0.000000e+00> : vector<16xf32>
    %698 = vector.multi_reduction <add>, %697, %cst_318 [1] : vector<16x32xf32> to vector<16xf32>
    %699 = vector.shape_cast %698 : vector<16xf32> to vector<16x1xf32>
    %cst_319 = arith.constant 3.200000e+01 : f32
    %700 = vector.broadcast %cst_319 : f32 to vector<16x1xf32>
    %701 = arith.divf %699, %700 : vector<16x1xf32>
    %702 = vector.broadcast %701 : vector<16x1xf32> to vector<16x32xf32>
    %703 = arith.subf %697, %702 : vector<16x32xf32>
    %704 = arith.mulf %703, %703 : vector<16x32xf32>
    %cst_320 = arith.constant dense<0.000000e+00> : vector<16xf32>
    %705 = vector.multi_reduction <add>, %704, %cst_320 [1] : vector<16x32xf32> to vector<16xf32>
    %706 = vector.shape_cast %705 : vector<16xf32> to vector<16x1xf32>
    %cst_321 = arith.constant 3.200000e+01 : f32
    %707 = vector.broadcast %cst_321 : f32 to vector<16x1xf32>
    %708 = arith.divf %706, %707 : vector<16x1xf32>
    %cst_322 = arith.constant 9.99999974E-6 : f32
    %709 = vector.broadcast %cst_322 : f32 to vector<16x1xf32>
    %710 = arith.addf %708, %709 : vector<16x1xf32>
    %711 = math.rsqrt %710 : vector<16x1xf32>
    %712 = vector.broadcast %711 : vector<16x1xf32> to vector<16x32xf32>
    %713 = arith.mulf %703, %712 : vector<16x32xf32>
    %714 = vector.broadcast %33 : vector<1x32xf32> to vector<16x32xf32>
    %715 = arith.mulf %713, %714 : vector<16x32xf32>
    %716 = vector.broadcast %32 : vector<1x32xf32> to vector<16x32xf32>
    %717 = arith.addf %715, %716 : vector<16x32xf32>
    %cst_323 = arith.constant dense<0.000000e+00> : vector<16x32xf32>
    %718 = tpu.matmul %717, %27, %cst_323 {dimension_numbers = #tpu.dot_dimension_numbers<[1], [0], [0], [1], [0, 0, 1, 1], [], []>} : vector<16x32xf32>, vector<32x32xf32>, vector<16x32xf32> -> vector<16x32xf32>
    %719 = vector.broadcast %24 : vector<1x32xf32> to vector<16x32xf32>
    %720 = arith.addf %718, %719 : vector<16x32xf32>
    %cst_324 = arith.constant dense<0.000000e+00> : vector<16x64xf32>
    %721 = tpu.matmul %367, %25, %cst_324 {dimension_numbers = #tpu.dot_dimension_numbers<[1], [0], [0], [1], [0, 0, 1, 1], [], []>} : vector<16x32xf32>, vector<32x64xf32>, vector<16x64xf32> -> vector<16x64xf32>
    %722 = vector.broadcast %22 : vector<1x64xf32> to vector<16x64xf32>
    %723 = arith.addf %721, %722 : vector<16x64xf32>
    %724 = vector.extract_strided_slice %723 {offsets = [0, 0], sizes = [16, 32], strides = [1, 1]} : vector<16x64xf32> to vector<16x32xf32>
    %725 = vector.extract_strided_slice %723 {offsets = [0, 32], sizes = [16, 32], strides = [1, 1]} : vector<16x64xf32> to vector<16x32xf32>
    %726 = vector.extract_strided_slice %720 {offsets = [0, 0], sizes = [16, 8], strides = [1, 1]} : vector<16x32xf32> to vector<16x8xf32>
    %727 = vector.extract_strided_slice %724 {offsets = [0, 0], sizes = [16, 8], strides = [1, 1]} : vector<16x32xf32> to vector<16x8xf32>
    %728 = vector.extract_strided_slice %725 {offsets = [0, 0], sizes = [16, 8], strides = [1, 1]} : vector<16x32xf32> to vector<16x8xf32>
    %cst_325 = arith.constant dense<0.000000e+00> : vector<16x16xf32>
    %729 = tpu.matmul %726, %727, %cst_325 {dimension_numbers = #tpu.dot_dimension_numbers<[1], [1], [0], [0], [0, 0, 1, 0], [], []>} : vector<16x8xf32>, vector<16x8xf32>, vector<16x16xf32> -> vector<16x16xf32>
    %cst_326 = arith.constant 0.353553385 : f32
    %730 = vector.broadcast %cst_326 : f32 to vector<16x16xf32>
    %731 = arith.mulf %729, %730 : vector<16x16xf32>
    %732 = arith.addf %731, %73 : vector<16x16xf32>
    %cst_327 = arith.constant dense<0xFF800000> : vector<16xf32>
    %733 = vector.multi_reduction <maximumf>, %732, %cst_327 [1] : vector<16x16xf32> to vector<16xf32>
    %734 = vector.shape_cast %733 : vector<16xf32> to vector<16x1xf32>
    %735 = vector.broadcast %734 : vector<16x1xf32> to vector<16x16xf32>
    %736 = arith.subf %732, %735 : vector<16x16xf32>
    %737 = math.exp %736 : vector<16x16xf32>
    %cst_328 = arith.constant dense<0.000000e+00> : vector<16xf32>
    %738 = vector.multi_reduction <add>, %737, %cst_328 [1] : vector<16x16xf32> to vector<16xf32>
    %739 = vector.shape_cast %738 : vector<16xf32> to vector<16x1xf32>
    %740 = tpu.reciprocal %739 {approx = true} : vector<16x1xf32> -> vector<16x1xf32>
    %741 = vector.broadcast %740 : vector<16x1xf32> to vector<16x16xf32>
    %742 = arith.mulf %737, %741 : vector<16x16xf32>
    %cst_329 = arith.constant dense<0.000000e+00> : vector<16x8xf32>
    %743 = tpu.matmul %742, %728, %cst_329 {dimension_numbers = #tpu.dot_dimension_numbers<[1], [0], [0], [1], [0, 0, 1, 1], [], []>} : vector<16x16xf32>, vector<16x8xf32>, vector<16x8xf32> -> vector<16x8xf32>
    %744 = vector.extract_strided_slice %720 {offsets = [0, 8], sizes = [16, 8], strides = [1, 1]} : vector<16x32xf32> to vector<16x8xf32>
    %745 = vector.extract_strided_slice %724 {offsets = [0, 8], sizes = [16, 8], strides = [1, 1]} : vector<16x32xf32> to vector<16x8xf32>
    %746 = vector.extract_strided_slice %725 {offsets = [0, 8], sizes = [16, 8], strides = [1, 1]} : vector<16x32xf32> to vector<16x8xf32>
    %cst_330 = arith.constant dense<0.000000e+00> : vector<16x16xf32>
    %747 = tpu.matmul %744, %745, %cst_330 {dimension_numbers = #tpu.dot_dimension_numbers<[1], [1], [0], [0], [0, 0, 1, 0], [], []>} : vector<16x8xf32>, vector<16x8xf32>, vector<16x16xf32> -> vector<16x16xf32>
    %cst_331 = arith.constant 0.353553385 : f32
    %748 = vector.broadcast %cst_331 : f32 to vector<16x16xf32>
    %749 = arith.mulf %747, %748 : vector<16x16xf32>
    %750 = arith.addf %749, %73 : vector<16x16xf32>
    %cst_332 = arith.constant dense<0xFF800000> : vector<16xf32>
    %751 = vector.multi_reduction <maximumf>, %750, %cst_332 [1] : vector<16x16xf32> to vector<16xf32>
    %752 = vector.shape_cast %751 : vector<16xf32> to vector<16x1xf32>
    %753 = vector.broadcast %752 : vector<16x1xf32> to vector<16x16xf32>
    %754 = arith.subf %750, %753 : vector<16x16xf32>
    %755 = math.exp %754 : vector<16x16xf32>
    %cst_333 = arith.constant dense<0.000000e+00> : vector<16xf32>
    %756 = vector.multi_reduction <add>, %755, %cst_333 [1] : vector<16x16xf32> to vector<16xf32>
    %757 = vector.shape_cast %756 : vector<16xf32> to vector<16x1xf32>
    %758 = tpu.reciprocal %757 {approx = true} : vector<16x1xf32> -> vector<16x1xf32>
    %759 = vector.broadcast %758 : vector<16x1xf32> to vector<16x16xf32>
    %760 = arith.mulf %755, %759 : vector<16x16xf32>
    %cst_334 = arith.constant dense<0.000000e+00> : vector<16x8xf32>
    %761 = tpu.matmul %760, %746, %cst_334 {dimension_numbers = #tpu.dot_dimension_numbers<[1], [0], [0], [1], [0, 0, 1, 1], [], []>} : vector<16x16xf32>, vector<16x8xf32>, vector<16x8xf32> -> vector<16x8xf32>
    %762 = vector.extract_strided_slice %720 {offsets = [0, 16], sizes = [16, 8], strides = [1, 1]} : vector<16x32xf32> to vector<16x8xf32>
    %763 = vector.extract_strided_slice %724 {offsets = [0, 16], sizes = [16, 8], strides = [1, 1]} : vector<16x32xf32> to vector<16x8xf32>
    %764 = vector.extract_strided_slice %725 {offsets = [0, 16], sizes = [16, 8], strides = [1, 1]} : vector<16x32xf32> to vector<16x8xf32>
    %cst_335 = arith.constant dense<0.000000e+00> : vector<16x16xf32>
    %765 = tpu.matmul %762, %763, %cst_335 {dimension_numbers = #tpu.dot_dimension_numbers<[1], [1], [0], [0], [0, 0, 1, 0], [], []>} : vector<16x8xf32>, vector<16x8xf32>, vector<16x16xf32> -> vector<16x16xf32>
    %cst_336 = arith.constant 0.353553385 : f32
    %766 = vector.broadcast %cst_336 : f32 to vector<16x16xf32>
    %767 = arith.mulf %765, %766 : vector<16x16xf32>
    %768 = arith.addf %767, %73 : vector<16x16xf32>
    %cst_337 = arith.constant dense<0xFF800000> : vector<16xf32>
    %769 = vector.multi_reduction <maximumf>, %768, %cst_337 [1] : vector<16x16xf32> to vector<16xf32>
    %770 = vector.shape_cast %769 : vector<16xf32> to vector<16x1xf32>
    %771 = vector.broadcast %770 : vector<16x1xf32> to vector<16x16xf32>
    %772 = arith.subf %768, %771 : vector<16x16xf32>
    %773 = math.exp %772 : vector<16x16xf32>
    %cst_338 = arith.constant dense<0.000000e+00> : vector<16xf32>
    %774 = vector.multi_reduction <add>, %773, %cst_338 [1] : vector<16x16xf32> to vector<16xf32>
    %775 = vector.shape_cast %774 : vector<16xf32> to vector<16x1xf32>
    %776 = tpu.reciprocal %775 {approx = true} : vector<16x1xf32> -> vector<16x1xf32>
    %777 = vector.broadcast %776 : vector<16x1xf32> to vector<16x16xf32>
    %778 = arith.mulf %773, %777 : vector<16x16xf32>
    %cst_339 = arith.constant dense<0.000000e+00> : vector<16x8xf32>
    %779 = tpu.matmul %778, %764, %cst_339 {dimension_numbers = #tpu.dot_dimension_numbers<[1], [0], [0], [1], [0, 0, 1, 1], [], []>} : vector<16x16xf32>, vector<16x8xf32>, vector<16x8xf32> -> vector<16x8xf32>
    %780 = vector.extract_strided_slice %720 {offsets = [0, 24], sizes = [16, 8], strides = [1, 1]} : vector<16x32xf32> to vector<16x8xf32>
    %781 = vector.extract_strided_slice %724 {offsets = [0, 24], sizes = [16, 8], strides = [1, 1]} : vector<16x32xf32> to vector<16x8xf32>
    %782 = vector.extract_strided_slice %725 {offsets = [0, 24], sizes = [16, 8], strides = [1, 1]} : vector<16x32xf32> to vector<16x8xf32>
    %cst_340 = arith.constant dense<0.000000e+00> : vector<16x16xf32>
    %783 = tpu.matmul %780, %781, %cst_340 {dimension_numbers = #tpu.dot_dimension_numbers<[1], [1], [0], [0], [0, 0, 1, 0], [], []>} : vector<16x8xf32>, vector<16x8xf32>, vector<16x16xf32> -> vector<16x16xf32>
    %cst_341 = arith.constant 0.353553385 : f32
    %784 = vector.broadcast %cst_341 : f32 to vector<16x16xf32>
    %785 = arith.mulf %783, %784 : vector<16x16xf32>
    %786 = arith.addf %785, %73 : vector<16x16xf32>
    %cst_342 = arith.constant dense<0xFF800000> : vector<16xf32>
    %787 = vector.multi_reduction <maximumf>, %786, %cst_342 [1] : vector<16x16xf32> to vector<16xf32>
    %788 = vector.shape_cast %787 : vector<16xf32> to vector<16x1xf32>
    %789 = vector.broadcast %788 : vector<16x1xf32> to vector<16x16xf32>
    %790 = arith.subf %786, %789 : vector<16x16xf32>
    %791 = math.exp %790 : vector<16x16xf32>
    %cst_343 = arith.constant dense<0.000000e+00> : vector<16xf32>
    %792 = vector.multi_reduction <add>, %791, %cst_343 [1] : vector<16x16xf32> to vector<16xf32>
    %793 = vector.shape_cast %792 : vector<16xf32> to vector<16x1xf32>
    %794 = tpu.reciprocal %793 {approx = true} : vector<16x1xf32> -> vector<16x1xf32>
    %795 = vector.broadcast %794 : vector<16x1xf32> to vector<16x16xf32>
    %796 = arith.mulf %791, %795 : vector<16x16xf32>
    %cst_344 = arith.constant dense<0.000000e+00> : vector<16x8xf32>
    %797 = tpu.matmul %796, %782, %cst_344 {dimension_numbers = #tpu.dot_dimension_numbers<[1], [0], [0], [1], [0, 0, 1, 1], [], []>} : vector<16x16xf32>, vector<16x8xf32>, vector<16x8xf32> -> vector<16x8xf32>
    %798 = tpu.concatenate %743, %761, %779, %797 in 1 : vector<16x8xf32>, vector<16x8xf32>, vector<16x8xf32>, vector<16x8xf32> -> vector<16x32xf32>
    %cst_345 = arith.constant dense<0.000000e+00> : vector<16x32xf32>
    %799 = tpu.matmul %798, %26, %cst_345 {dimension_numbers = #tpu.dot_dimension_numbers<[1], [0], [0], [1], [0, 0, 1, 1], [], []>} : vector<16x32xf32>, vector<32x32xf32>, vector<16x32xf32> -> vector<16x32xf32>
    %800 = vector.broadcast %23 : vector<1x32xf32> to vector<16x32xf32>
    %801 = arith.addf %799, %800 : vector<16x32xf32>
    %802 = arith.addf %717, %801 : vector<16x32xf32>
    %cst_346 = arith.constant dense<0.000000e+00> : vector<16xf32>
    %803 = vector.multi_reduction <add>, %802, %cst_346 [1] : vector<16x32xf32> to vector<16xf32>
    %804 = vector.shape_cast %803 : vector<16xf32> to vector<16x1xf32>
    %cst_347 = arith.constant 3.200000e+01 : f32
    %805 = vector.broadcast %cst_347 : f32 to vector<16x1xf32>
    %806 = arith.divf %804, %805 : vector<16x1xf32>
    %807 = vector.broadcast %806 : vector<16x1xf32> to vector<16x32xf32>
    %808 = arith.subf %802, %807 : vector<16x32xf32>
    %809 = arith.mulf %808, %808 : vector<16x32xf32>
    %cst_348 = arith.constant dense<0.000000e+00> : vector<16xf32>
    %810 = vector.multi_reduction <add>, %809, %cst_348 [1] : vector<16x32xf32> to vector<16xf32>
    %811 = vector.shape_cast %810 : vector<16xf32> to vector<16x1xf32>
    %cst_349 = arith.constant 3.200000e+01 : f32
    %812 = vector.broadcast %cst_349 : f32 to vector<16x1xf32>
    %813 = arith.divf %811, %812 : vector<16x1xf32>
    %cst_350 = arith.constant 9.99999974E-6 : f32
    %814 = vector.broadcast %cst_350 : f32 to vector<16x1xf32>
    %815 = arith.addf %813, %814 : vector<16x1xf32>
    %816 = math.rsqrt %815 : vector<16x1xf32>
    %817 = vector.broadcast %816 : vector<16x1xf32> to vector<16x32xf32>
    %818 = arith.mulf %808, %817 : vector<16x32xf32>
    %819 = vector.broadcast %35 : vector<1x32xf32> to vector<16x32xf32>
    %820 = arith.mulf %818, %819 : vector<16x32xf32>
    %821 = vector.broadcast %34 : vector<1x32xf32> to vector<16x32xf32>
    %822 = arith.addf %820, %821 : vector<16x32xf32>
    %cst_351 = arith.constant dense<0.000000e+00> : vector<16x64xf32>
    %823 = tpu.matmul %822, %30, %cst_351 {dimension_numbers = #tpu.dot_dimension_numbers<[1], [0], [0], [1], [0, 0, 1, 1], [], []>} : vector<16x32xf32>, vector<32x64xf32>, vector<16x64xf32> -> vector<16x64xf32>
    %824 = vector.broadcast %28 : vector<1x64xf32> to vector<16x64xf32>
    %825 = arith.addf %823, %824 : vector<16x64xf32>
    %cst_352 = arith.constant 0.000000e+00 : f32
    %826 = vector.broadcast %cst_352 : f32 to vector<16x64xf32>
    %827 = arith.maximumf %825, %826 : vector<16x64xf32>
    %cst_353 = arith.constant dense<0.000000e+00> : vector<16x32xf32>
    %828 = tpu.matmul %827, %31, %cst_353 {dimension_numbers = #tpu.dot_dimension_numbers<[1], [0], [0], [1], [0, 0, 1, 1], [], []>} : vector<16x64xf32>, vector<64x32xf32>, vector<16x32xf32> -> vector<16x32xf32>
    %829 = vector.broadcast %29 : vector<1x32xf32> to vector<16x32xf32>
    %830 = arith.addf %828, %829 : vector<16x32xf32>
    %831 = arith.addf %822, %830 : vector<16x32xf32>
    %cst_354 = arith.constant dense<0.000000e+00> : vector<16xf32>
    %832 = vector.multi_reduction <add>, %831, %cst_354 [1] : vector<16x32xf32> to vector<16xf32>
    %833 = vector.shape_cast %832 : vector<16xf32> to vector<16x1xf32>
    %cst_355 = arith.constant 3.200000e+01 : f32
    %834 = vector.broadcast %cst_355 : f32 to vector<16x1xf32>
    %835 = arith.divf %833, %834 : vector<16x1xf32>
    %836 = vector.broadcast %835 : vector<16x1xf32> to vector<16x32xf32>
    %837 = arith.subf %831, %836 : vector<16x32xf32>
    %838 = arith.mulf %837, %837 : vector<16x32xf32>
    %cst_356 = arith.constant dense<0.000000e+00> : vector<16xf32>
    %839 = vector.multi_reduction <add>, %838, %cst_356 [1] : vector<16x32xf32> to vector<16xf32>
    %840 = vector.shape_cast %839 : vector<16xf32> to vector<16x1xf32>
    %cst_357 = arith.constant 3.200000e+01 : f32
    %841 = vector.broadcast %cst_357 : f32 to vector<16x1xf32>
    %842 = arith.divf %840, %841 : vector<16x1xf32>
    %cst_358 = arith.constant 9.99999974E-6 : f32
    %843 = vector.broadcast %cst_358 : f32 to vector<16x1xf32>
    %844 = arith.addf %842, %843 : vector<16x1xf32>
    %845 = math.rsqrt %844 : vector<16x1xf32>
    %846 = vector.broadcast %845 : vector<16x1xf32> to vector<16x32xf32>
    %847 = arith.mulf %837, %846 : vector<16x32xf32>
    %848 = vector.broadcast %37 : vector<1x32xf32> to vector<16x32xf32>
    %849 = arith.mulf %847, %848 : vector<16x32xf32>
    %850 = vector.broadcast %36 : vector<1x32xf32> to vector<16x32xf32>
    %851 = arith.addf %849, %850 : vector<16x32xf32>
    %cst_359 = arith.constant dense<0.000000e+00> : vector<16xf32>
    %852 = vector.multi_reduction <add>, %851, %cst_359 [1] : vector<16x32xf32> to vector<16xf32>
    %853 = vector.shape_cast %852 : vector<16xf32> to vector<16x1xf32>
    %cst_360 = arith.constant 3.200000e+01 : f32
    %854 = vector.broadcast %cst_360 : f32 to vector<16x1xf32>
    %855 = arith.divf %853, %854 : vector<16x1xf32>
    %856 = vector.broadcast %855 : vector<16x1xf32> to vector<16x32xf32>
    %857 = arith.subf %851, %856 : vector<16x32xf32>
    %858 = arith.mulf %857, %857 : vector<16x32xf32>
    %cst_361 = arith.constant dense<0.000000e+00> : vector<16xf32>
    %859 = vector.multi_reduction <add>, %858, %cst_361 [1] : vector<16x32xf32> to vector<16xf32>
    %860 = vector.shape_cast %859 : vector<16xf32> to vector<16x1xf32>
    %cst_362 = arith.constant 3.200000e+01 : f32
    %861 = vector.broadcast %cst_362 : f32 to vector<16x1xf32>
    %862 = arith.divf %860, %861 : vector<16x1xf32>
    %cst_363 = arith.constant 9.99999974E-6 : f32
    %863 = vector.broadcast %cst_363 : f32 to vector<16x1xf32>
    %864 = arith.addf %862, %863 : vector<16x1xf32>
    %865 = math.rsqrt %864 : vector<16x1xf32>
    %866 = vector.broadcast %865 : vector<16x1xf32> to vector<16x32xf32>
    %867 = arith.mulf %857, %866 : vector<16x32xf32>
    %868 = vector.broadcast %1 : vector<1x32xf32> to vector<16x32xf32>
    %869 = arith.mulf %867, %868 : vector<16x32xf32>
    %870 = vector.broadcast %0 : vector<1x32xf32> to vector<16x32xf32>
    %871 = arith.addf %869, %870 : vector<16x32xf32>
    %cst_364 = arith.constant dense<0.000000e+00> : vector<16x32xf32>
    %872 = tpu.matmul %871, %70, %cst_364 {dimension_numbers = #tpu.dot_dimension_numbers<[1], [0], [0], [1], [0, 0, 1, 1], [], []>} : vector<16x32xf32>, vector<32x32xf32>, vector<16x32xf32> -> vector<16x32xf32>
    %873 = vector.broadcast %69 : vector<1x32xf32> to vector<16x32xf32>
    %874 = arith.addf %872, %873 : vector<16x32xf32>
    %c0_365 = arith.constant 0 : index
    %c0_366 = arith.constant 0 : index
    %875 = vector.load %arg76[%c0_365, %c0_366] : memref<16x32xf32, #tpu.memory_space<vmem>>, vector<16x32xf32>
    tpu.vector_store %arg76[%c0_365, %c0_366], %874 {strides = array<i32>} : memref<16x32xf32, #tpu.memory_space<vmem>>, vector<16x32xf32>,
    return
  }
}

</mosaic_0001>

<llo_original>
// kernel: tile.13
$region0: #{tile.13}
  #allocation0 [shape = 's32[1]{0}', space=sflag, size = 0x4, scoped, tag = 'scoped memory for tile.13']
  %s0 = inlined_call_operand.vmem [shape: f32[8,8], index: 0, kind: input, shape index: {}]
  %s1 = inlined_call_operand.vmem [shape: f32[2,8,2,8], index: 1, kind: output, shape index: {}]
  // Predicated region
  $region2: #{tile.13} parent=0 // pred_check
    _
  $region3: #{tile.13} parent=0 // pred_check_branch
    %3 = sbr.rel (0) target = $region5
  $region4: #{tile.13} parent=0 // pred_region
    _
  $region5: #{tile.13} parent=0 // pred_fallthru
    _
  %v4 = vld [vmem:[%s0] ss:$0 sm:$0xff]
  %5 = vst [vmem:[%s1] sm:$0x3] %v4
  %s6 = scalar_lea.vmem %s1, 16
  %7 = vst [vmem:[%s6] sm:$0x3] %v4
  %s8 = scalar_lea.vmem %s0, 1
  %v9 = vld [vmem:[%s8] ss:$0 sm:$0xff]
  %s10 = scalar_lea.vmem %s1, 2
  %11 = vst [vmem:[%s10] sm:$0x3] %v9
  %s12 = scalar_lea.vmem %s1, 18
  %13 = vst [vmem:[%s12] sm:$0x3] %v9
  %s14 = scalar_lea.vmem %s0, 2
  %v15 = vld [vmem:[%s14] ss:$0 sm:$0xff]
  %s16 = scalar_lea.vmem %s1, 4
  %17 = vst [vmem:[%s16] sm:$0x3] %v15
  %s18 = scalar_lea.vmem %s1, 20
  %19 = vst [vmem:[%s18] sm:$0x3] %v15
  %s20 = scalar_lea.vmem %s0, 3
  %v21 = vld [vmem:[%s20] ss:$0 sm:$0xff]
  %s22 = scalar_lea.vmem %s1, 6
  %23 = vst [vmem:[%s22] sm:$0x3] %v21
  %s24 = scalar_lea.vmem %s1, 22
  %25 = vst [vmem:[%s24] sm:$0x3] %v21
  %s26 = scalar_lea.vmem %s0, 4
  %v27 = vld [vmem:[%s26] ss:$0 sm:$0xff]
  %s28 = scalar_lea.vmem %s1, 8
  %29 = vst [vmem:[%s28] sm:$0x3] %v27
  %s30 = scalar_lea.vmem %s1, 24
  %31 = vst [vmem:[%s30] sm:$0x3] %v27
  %s32 = scalar_lea.vmem %s0, 5
  %v33 = vld [vmem:[%s32] ss:$0 sm:$0xff]
  %s34 = scalar_lea.vmem %s1, 10
  %35 = vst [vmem:[%s34] sm:$0x3] %v33
  %s36 = scalar_lea.vmem %s1, 26
  %37 = vst [vmem:[%s36] sm:$0x3] %v33
  %s38 = scalar_lea.vmem %s0, 6
  %v39 = vld [vmem:[%s38] ss:$0 sm:$0xff]
  %s40 = scalar_lea.vmem %s1, 12
  %41 = vst [vmem:[%s40] sm:$0x3] %v39
  %s42 = scalar_lea.vmem %s1, 28
  %43 = vst [vmem:[%s42] sm:$0x3] %v39
  %s44 = scalar_lea.vmem %s0, 7
  %v45 = vld [vmem:[%s44] ss:$0 sm:$0xff]
  %s46 = scalar_lea.vmem %s1, 14
  %47 = vst [vmem:[%s46] sm:$0x3] %v45
  %s48 = scalar_lea.vmem %s1, 30
  %49 = vst [vmem:[%s48] sm:$0x3] %v45

// kernel: tile.14
$region0: #{tile.14}
  %s0 = inlined_call_operand.vmem [shape: f32[2,8,2,8], index: 0, kind: input, shape index: {}]
  %s1 = inlined_call_operand.vmem [shape: f32[16,16], index: 1, kind: output, shape index: {}]
  $region1: #{tile.14} parent=0
    #allocation0 [shape = 'u8[65536]{0}', space=vmem, size = 0x10000, scoped, tag = 'scoped mem for input reshape']
    %s3 = sshllo.u32 0, 2
    %s4 = smul.addr 2, 15
    %s5 = scalar_lea.vmem %s0, %s4
    %v6 = vld [vmem:[%s5] sm:%s3]
    %s7 = scalar_lea.vmem [#allocation0], 120
    %8 = vst [vmem:[%s7] sm:%s3] %v6
    %s9 = smul.addr 2, 14
    %s10 = scalar_lea.vmem %s0, %s9
    %v11 = vld [vmem:[%s10] sm:%s3]
    %s12 = scalar_lea.vmem [#allocation0], 112
    %13 = vst [vmem:[%s12] sm:%s3] %v11
    %s14 = smul.addr 2, 13
    %s15 = scalar_lea.vmem %s0, %s14
    %v16 = vld [vmem:[%s15] sm:%s3]
    %s17 = scalar_lea.vmem [#allocation0], 104
    %18 = vst [vmem:[%s17] sm:%s3] %v16
    %s19 = smul.addr 2, 12
    %s20 = scalar_lea.vmem %s0, %s19
    %v21 = vld [vmem:[%s20] sm:%s3]
    %s22 = scalar_lea.vmem [#allocation0], 96
    %23 = vst [vmem:[%s22] sm:%s3] %v21
    %s24 = smul.addr 2, 11
    %s25 = scalar_lea.vmem %s0, %s24
    %v26 = vld [vmem:[%s25] sm:%s3]
    %s27 = scalar_lea.vmem [#allocation0], 88
    %28 = vst [vmem:[%s27] sm:%s3] %v26
    %s29 = smul.addr 2, 10
    %s30 = scalar_lea.vmem %s0, %s29
    %v31 = vld [vmem:[%s30] sm:%s3]
    %s32 = scalar_lea.vmem [#allocation0], 80
    %33 = vst [vmem:[%s32] sm:%s3] %v31
    %s34 = smul.addr 2, 9
    %s35 = scalar_lea.vmem %s0, %s34
    %v36 = vld [vmem:[%s35] sm:%s3]
    %s37 = scalar_lea.vmem [#allocation0], 72
    %38 = vst [vmem:[%s37] sm:%s3] %v36
    %s39 = smul.addr 2, 8
    %s40 = scalar_lea.vmem %s0, %s39
    %v41 = vld [vmem:[%s40] sm:%s3]
    %s42 = scalar_lea.vmem [#allocation0], 64
    %43 = vst [vmem:[%s42] sm:%s3] %v41
    %s44 = smul.addr 2, 7
    %s45 = scalar_lea.vmem %s0, %s44
    %v46 = vld [vmem:[%s45] sm:%s3]
    %s47 = scalar_lea.vmem [#allocation0], 56
    %48 = vst [vmem:[%s47] sm:%s3] %v46
    %s49 = smul.addr 2, 6
    %s50 = scalar_lea.vmem %s0, %s49
    %v51 = vld [vmem:[%s50] sm:%s3]
    %s52 = scalar_lea.vmem [#allocation0], 48
    %53 = vst [vmem:[%s52] sm:%s3] %v51
    %s54 = smul.addr 2, 5
    %s55 = scalar_lea.vmem %s0, %s54
    %v56 = vld [vmem:[%s55] sm:%s3]
    %s57 = scalar_lea.vmem [#allocation0], 40
    %58 = vst [vmem:[%s57] sm:%s3] %v56
    %s59 = smul.addr 2, 4
    %s60 = scalar_lea.vmem %s0, %s59
    %v61 = vld [vmem:[%s60] sm:%s3]
    %s62 = scalar_lea.vmem [#allocation0], 32
    %63 = vst [vmem:[%s62] sm:%s3] %v61
    %s64 = smul.addr 2, 3
    %s65 = scalar_lea.vmem %s0, %s64
    %v66 = vld [vmem:[%s65] sm:%s3]
    %s67 = scalar_lea.vmem [#allocation0], 24
    %68 = vst [vmem:[%s67] sm:%s3] %v66
    %s69 = smul.addr 2, 2
    %s70 = scalar_lea.vmem %s0, %s69
    %v71 = vld [vmem:[%s70] sm:%s3]
    %s72 = scalar_lea.vmem [#allocation0], 16
    %73 = vst [vmem:[%s72] sm:%s3] %v71
    %s74 = scalar_lea.vmem %s0, 2
    %v75 = vld [vmem:[%s74] sm:%s3]
    %s76 = scalar_lea.vmem [#allocation0], 8
    %77 = vst [vmem:[%s76] sm:%s3] %v75
    %v78 = vld [vmem:[%s0] sm:%s3]
    %79 = vst [vmem:[#allocation0] sm:%s3] %v78
    %v80 = vld [vmem:[#allocation0] ss:$8 sm:$0xf]
    %v81 = vld [vmem:[#allocation0] ss:$8 sm:$0xf0]
    %vm82 = vcmask 1047556
    %v83 = vsel %vm82, %v81, %v80
    %vm84 = vcmask 64512
    %85 = vst.msk [vmem:[%s1] sm:$0xff] %vm84, %v83
    %s86 = scalar_lea.vmem [#allocation0], 64
    %v87 = vld [vmem:[%s86] ss:$8 sm:$0xf]
    %s88 = scalar_lea.vmem [#allocation0], 64
    %v89 = vld [vmem:[%s88] ss:$8 sm:$0xf0]
    %vm90 = vcmask 1047556
    %v91 = vsel %vm90, %v89, %v87
    %vm92 = vcmask 64512
    %s93 = scalar_lea.vmem %s1, 8
    %94 = vst.msk [vmem:[%s93] sm:$0xff] %vm92, %v91
    %s95 = scalar_lea.vmem [#allocation0], 1
    %v96 = vld [vmem:[%s95] ss:$8 sm:$0xf]
    %s97 = scalar_lea.vmem [#allocation0], 1
    %v98 = vld [vmem:[%s97] ss:$8 sm:$0xf0]
    %vm99 = vcmask 1047556
    %v100 = vsel %vm99, %v98, %v96
    %101 = vrot.lane.b32.xlu0 %v100, 8
    %v102 = vpop.permute.xlu0 %101
    %vm103 = vcmask 130112
    %104 = vst.msk [vmem:[%s1] sm:$0xff] %vm103, %v102
    %s105 = scalar_lea.vmem [#allocation0], 65
    %v106 = vld [vmem:[%s105] ss:$8 sm:$0xf]
    %s107 = scalar_lea.vmem [#allocation0], 65
    %v108 = vld [vmem:[%s107] ss:$8 sm:$0xf0]
    %vm109 = vcmask 1047556
    %v110 = vsel %vm109, %v108, %v106
    %111 = vrot.lane.b32.xlu0 %v110, 8
    %v112 = vpop.permute.xlu0 %111
    %vm113 = vcmask 130112
    %s114 = scalar_lea.vmem %s1, 8
    %115 = vst.msk [vmem:[%s114] sm:$0xff] %vm113, %v112

// kernel: transformer_forward.1
$region0: #{transformer_forward.1}
  #allocation0 [shape = 'u32[]', space=smem, size = 0x4, offset = 0x4, fixed_abs, tag = 'smem constant byte address 0x4 - core index']
  #allocation1 [shape = 'u32[144,128]{1,0:T(1,128)}', space=vmem, size = 0x12000, scoped, tag = 'internal scratch']
  %s0 = inlined_call_operand.smem [shape: u32[77], index: -1, kind: input, shape index: {}]
  %s1 = sld [smem:[%s0]]
  %s2 = scalar_lea.smem %s0, 1
  %s3 = sld [smem:[%s2]]
  %s4 = scalar_lea.smem %s0, 2
  %s5 = sld [smem:[%s4]]
  %s6 = scalar_lea.smem %s0, 3
  %s7 = sld [smem:[%s6]]
  %s8 = scalar_lea.smem %s0, 4
  %s9 = sld [smem:[%s8]]
  %s10 = scalar_lea.smem %s0, 5
  %s11 = sld [smem:[%s10]]
  %s12 = scalar_lea.smem %s0, 6
  %s13 = sld [smem:[%s12]]
  %s14 = scalar_lea.smem %s0, 7
  %s15 = sld [smem:[%s14]]
  %s16 = scalar_lea.smem %s0, 8
  %s17 = sld [smem:[%s16]]
  %s18 = scalar_lea.smem %s0, 9
  %s19 = sld [smem:[%s18]]
  %s20 = scalar_lea.smem %s0, 10
  %s21 = sld [smem:[%s20]]
  %s22 = scalar_lea.smem %s0, 11
  %s23 = sld [smem:[%s22]]
  %s24 = scalar_lea.smem %s0, 12
  %s25 = sld [smem:[%s24]]
  %s26 = scalar_lea.smem %s0, 13
  %s27 = sld [smem:[%s26]]
  %s28 = scalar_lea.smem %s0, 14
  %s29 = sld [smem:[%s28]]
  %s30 = scalar_lea.smem %s0, 15
  %s31 = sld [smem:[%s30]]
  %s32 = scalar_lea.smem %s0, 16
  %s33 = sld [smem:[%s32]]
  %s34 = scalar_lea.smem %s0, 17
  %s35 = sld [smem:[%s34]]
  %s36 = scalar_lea.smem %s0, 18
  %s37 = sld [smem:[%s36]]
  %s38 = scalar_lea.smem %s0, 19
  %s39 = sld [smem:[%s38]]
  %s40 = scalar_lea.smem %s0, 20
  %s41 = sld [smem:[%s40]]
  %s42 = scalar_lea.smem %s0, 21
  %s43 = sld [smem:[%s42]]
  %s44 = scalar_lea.smem %s0, 22
  %s45 = sld [smem:[%s44]]
  %s46 = scalar_lea.smem %s0, 23
  %s47 = sld [smem:[%s46]]
  %s48 = scalar_lea.smem %s0, 24
  %s49 = sld [smem:[%s48]]
  %s50 = scalar_lea.smem %s0, 25
  %s51 = sld [smem:[%s50]]
  %s52 = scalar_lea.smem %s0, 26
  %s53 = sld [smem:[%s52]]
  %s54 = scalar_lea.smem %s0, 27
  %s55 = sld [smem:[%s54]]
  %s56 = scalar_lea.smem %s0, 28
  %s57 = sld [smem:[%s56]]
  %s58 = scalar_lea.smem %s0, 29
  %s59 = sld [smem:[%s58]]
  %s60 = scalar_lea.smem %s0, 30
  %s61 = sld [smem:[%s60]]
  %s62 = scalar_lea.smem %s0, 31
  %s63 = sld [smem:[%s62]]
  %s64 = scalar_lea.smem %s0, 32
  %s65 = sld [smem:[%s64]]
  %s66 = scalar_lea.smem %s0, 33
  %s67 = sld [smem:[%s66]]
  %s68 = scalar_lea.smem %s0, 34
  %s69 = sld [smem:[%s68]]
  %s70 = scalar_lea.smem %s0, 35
  %s71 = sld [smem:[%s70]]
  %s72 = scalar_lea.smem %s0, 36
  %s73 = sld [smem:[%s72]]
  %s74 = scalar_lea.smem %s0, 37
  %s75 = sld [smem:[%s74]]
  %s76 = scalar_lea.smem %s0, 38
  %s77 = sld [smem:[%s76]]
  %s78 = scalar_lea.smem %s0, 39
  %s79 = sld [smem:[%s78]]
  %s80 = scalar_lea.smem %s0, 40
  %s81 = sld [smem:[%s80]]
  %s82 = scalar_lea.smem %s0, 41
  %s83 = sld [smem:[%s82]]
  %s84 = scalar_lea.smem %s0, 42
  %s85 = sld [smem:[%s84]]
  %s86 = scalar_lea.smem %s0, 43
  %s87 = sld [smem:[%s86]]
  %s88 = scalar_lea.smem %s0, 44
  %s89 = sld [smem:[%s88]]
  %s90 = scalar_lea.smem %s0, 45
  %s91 = sld [smem:[%s90]]
  %s92 = scalar_lea.smem %s0, 46
  %s93 = sld [smem:[%s92]]
  %s94 = scalar_lea.smem %s0, 47
  %s95 = sld [smem:[%s94]]
  %s96 = scalar_lea.smem %s0, 48
  %s97 = sld [smem:[%s96]]
  %s98 = scalar_lea.smem %s0, 49
  %s99 = sld [smem:[%s98]]
  %s100 = scalar_lea.smem %s0, 50
  %s101 = sld [smem:[%s100]]
  %s102 = scalar_lea.smem %s0, 51
  %s103 = sld [smem:[%s102]]
  %s104 = scalar_lea.smem %s0, 52
  %s105 = sld [smem:[%s104]]
  %s106 = scalar_lea.smem %s0, 53
  %s107 = sld [smem:[%s106]]
  %s108 = scalar_lea.smem %s0, 54
  %s109 = sld [smem:[%s108]]
  %s110 = scalar_lea.smem %s0, 55
  %s111 = sld [smem:[%s110]]
  %s112 = scalar_lea.smem %s0, 56
  %s113 = sld [smem:[%s112]]
  %s114 = scalar_lea.smem %s0, 57
  %s115 = sld [smem:[%s114]]
  %s116 = scalar_lea.smem %s0, 58
  %s117 = sld [smem:[%s116]]
  %s118 = scalar_lea.smem %s0, 59
  %s119 = sld [smem:[%s118]]
  %s120 = scalar_lea.smem %s0, 60
  %s121 = sld [smem:[%s120]]
  %s122 = scalar_lea.smem %s0, 61
  %s123 = sld [smem:[%s122]]
  %s124 = scalar_lea.smem %s0, 62
  %s125 = sld [smem:[%s124]]
  %s126 = scalar_lea.smem %s0, 63
  %s127 = sld [smem:[%s126]]
  %s128 = scalar_lea.smem %s0, 64
  %s129 = sld [smem:[%s128]]
  %s130 = scalar_lea.smem %s0, 65
  %s131 = sld [smem:[%s130]]
  %s132 = scalar_lea.smem %s0, 66
  %s133 = sld [smem:[%s132]]
  %s134 = scalar_lea.smem %s0, 67
  %s135 = sld [smem:[%s134]]
  %s136 = scalar_lea.smem %s0, 68
  %s137 = sld [smem:[%s136]]
  %s138 = scalar_lea.smem %s0, 69
  %s139 = sld [smem:[%s138]]
  %s140 = scalar_lea.smem %s0, 70
  %s141 = sld [smem:[%s140]]
  %s142 = scalar_lea.smem %s0, 71
  %s143 = sld [smem:[%s142]]
  %s144 = scalar_lea.smem %s0, 72
  %s145 = sld [smem:[%s144]]
  %s146 = scalar_lea.smem %s0, 73
  %s147 = sld [smem:[%s146]]
  %s148 = scalar_lea.smem %s0, 74
  %s149 = sld [smem:[%s148]]
  %s150 = scalar_lea.smem %s0, 75
  %s151 = sld [smem:[%s150]]
  %s152 = scalar_lea.smem %s0, 76
  %s153 = sld [smem:[%s152]]
  %s154 = sld [smem:[#allocation0]]
  $region454: #{transformer_forward.1} parent=0
    _
  %s156 = ssub.s32 1, %s154
  %s157 = scalar_select 0, %s156, %s154
  $region1: #{transformer_forward.1} parent=0
    #allocation2 [shape = 'u8[512]{0}', space=vmem, size = 0x400, scoped, tag = 'input window, operand 5, single buffered']
    #allocation3 [shape = 's32[1]{0}', space=sflag, size = 0x4, scoped, tag = 'scoped memory for transformer_forward.1']
    #allocation4 [shape = 's32[1]{0}', space=sflag, size = 0x4, scoped, tag = 'scoped memory for transformer_forward.1']
    #allocation5 [shape = 'u8[512]{0}', space=vmem, size = 0x400, scoped, tag = 'input window, operand 6, single buffered']
    #allocation6 [shape = 's32[1]{0}', space=sflag, size = 0x4, scoped, tag = 'scoped memory for transformer_forward.1']
    #allocation7 [shape = 'u8[512]{0}', space=vmem, size = 0x400, scoped, tag = 'input window, operand 7, single buffered']
    #allocation8 [shape = 'u8[512]{0}', space=vmem, size = 0x400, scoped, tag = 'input window, operand 8, single buffered']
    #allocation9 [shape = 's32[1]{0}', space=sflag, size = 0x4, scoped, tag = 'scoped memory for transformer_forward.1']
    #allocation10 [shape = 'u8[512]{0}', space=vmem, size = 0x400, scoped, tag = 'input window, operand 9, single buffered']
    #allocation11 [shape = 'u8[512]{0}', space=vmem, size = 0x400, scoped, tag = 'input window, operand 13, single buffered']
    #allocation12 [shape = 's32[1]{0}', space=sflag, size = 0x4, scoped, tag = 'scoped memory for transformer_forward.1']
    #allocation13 [shape = 'u8[512]{0}', space=vmem, size = 0x400, scoped, tag = 'input window, operand 14, single buffered']
    #allocation14 [shape = 'u8[512]{0}', space=vmem, size = 0x400, scoped, tag = 'input window, operand 17, single buffered']
    #allocation15 [shape = 's32[1]{0}', space=sflag, size = 0x4, scoped, tag = 'scoped memory for transformer_forward.1']
    #allocation16 [shape = 'u8[512]{0}', space=vmem, size = 0x400, scoped, tag = 'input window, operand 18, single buffered']
    #allocation17 [shape = 'u8[512]{0}', space=vmem, size = 0x400, scoped, tag = 'input window, operand 19, single buffered']
    #allocation18 [shape = 's32[1]{0}', space=sflag, size = 0x4, scoped, tag = 'scoped memory for transformer_forward.1']
    #allocation19 [shape = 'u8[512]{0}', space=vmem, size = 0x400, scoped, tag = 'input window, operand 20, single buffered']
    #allocation20 [shape = 'u8[512]{0}', space=vmem, size = 0x400, scoped, tag = 'input window, operand 21, single buffered']
    #allocation21 [shape = 's32[1]{0}', space=sflag, size = 0x4, scoped, tag = 'scoped memory for transformer_forward.1']
    #allocation22 [shape = 'u8[512]{0}', space=vmem, size = 0x400, scoped, tag = 'input window, operand 22, single buffered']
    #allocation23 [shape = 'u8[512]{0}', space=vmem, size = 0x400, scoped, tag = 'input window, operand 23, single buffered']
    #allocation24 [shape = 's32[1]{0}', space=sflag, size = 0x4, scoped, tag = 'scoped memory for transformer_forward.1']
    #allocation25 [shape = 'u8[512]{0}', space=vmem, size = 0x400, scoped, tag = 'input window, operand 24, single buffered']
    #allocation26 [shape = 'u8[512]{0}', space=vmem, size = 0x400, scoped, tag = 'input window, operand 27, single buffered']
    #allocation27 [shape = 's32[1]{0}', space=sflag, size = 0x4, scoped, tag = 'scoped memory for transformer_forward.1']
    #allocation28 [shape = 'u8[512]{0}', space=vmem, size = 0x400, scoped, tag = 'input window, operand 48, single buffered']
    #allocation29 [shape = 'u8[512]{0}', space=vmem, size = 0x400, scoped, tag = 'input window, operand 49, single buffered']
    #allocation30 [shape = 's32[1]{0}', space=sflag, size = 0x4, scoped, tag = 'scoped memory for transformer_forward.1']
    #allocation31 [shape = 'u8[512]{0}', space=vmem, size = 0x400, scoped, tag = 'input window, operand 50, single buffered']
    #allocation32 [shape = 'u8[512]{0}', space=vmem, size = 0x400, scoped, tag = 'input window, operand 51, single buffered']
    #allocation33 [shape = 's32[1]{0}', space=sflag, size = 0x4, scoped, tag = 'scoped memory for transformer_forward.1']
    #allocation34 [shape = 'u8[512]{0}', space=vmem, size = 0x400, scoped, tag = 'input window, operand 54, single buffered']
    #allocation35 [shape = 'u8[512]{0}', space=vmem, size = 0x400, scoped, tag = 'input window, operand 55, single buffered']
    #allocation36 [shape = 's32[1]{0}', space=sflag, size = 0x4, scoped, tag = 'scoped memory for transformer_forward.1']
    #allocation37 [shape = 'u8[512]{0}', space=vmem, size = 0x400, scoped, tag = 'input window, operand 58, single buffered']
    #allocation38 [shape = 'u8[512]{0}', space=vmem, size = 0x400, scoped, tag = 'input window, operand 59, single buffered']
    #allocation39 [shape = 's32[1]{0}', space=sflag, size = 0x4, scoped, tag = 'scoped memory for transformer_forward.1']
    #allocation40 [shape = 'u8[512]{0}', space=vmem, size = 0x400, scoped, tag = 'input window, operand 60, single buffered']
    #allocation41 [shape = 'u8[512]{0}', space=vmem, size = 0x400, scoped, tag = 'input window, operand 61, single buffered']
    #allocation42 [shape = 's32[1]{0}', space=sflag, size = 0x4, scoped, tag = 'scoped memory for transformer_forward.1']
    #allocation43 [shape = 'u8[512]{0}', space=vmem, size = 0x400, scoped, tag = 'input window, operand 62, single buffered']
    #allocation44 [shape = 'u8[512]{0}', space=vmem, size = 0x400, scoped, tag = 'input window, operand 63, single buffered']
    #allocation45 [shape = 's32[1]{0}', space=sflag, size = 0x4, scoped, tag = 'scoped memory for transformer_forward.1']
    #allocation46 [shape = 'u8[512]{0}', space=vmem, size = 0x400, scoped, tag = 'input window, operand 66, single buffered']
    #allocation47 [shape = 'u8[512]{0}', space=vmem, size = 0x400, scoped, tag = 'input window, operand 67, single buffered']
    #allocation48 [shape = 's32[1]{0}', space=sflag, size = 0x4, scoped, tag = 'scoped memory for transformer_forward.1']
    #allocation49 [shape = 'u8[512]{0}', space=vmem, size = 0x400, scoped, tag = 'input window, operand 70, single buffered']
    #allocation50 [shape = 'u8[512]{0}', space=vmem, size = 0x400, scoped, tag = 'input window, operand 71, single buffered']
    #allocation51 [shape = 's32[1]{0}', space=sflag, size = 0x4, scoped, tag = 'scoped memory for transformer_forward.1']
    #allocation52 [shape = 'u8[512]{0}', space=vmem, size = 0x400, scoped, tag = 'input window, operand 72, single buffered']
    #allocation53 [shape = 'u8[512]{0}', space=vmem, size = 0x400, scoped, tag = 'input window, operand 73, single buffered']
    #allocation54 [shape = 's32[1]{0}', space=sflag, size = 0x4, scoped, tag = 'scoped memory for transformer_forward.1']
    #allocation55 [shape = 'u8[512]{0}', space=vmem, size = 0x400, scoped, tag = 'input window, operand 74, single buffered']
    #allocation56 [shape = 'u8[8192]{0}', space=vmem, size = 0x2000, scoped, tag = 'output window, operand 0, single buffered']
    %158 = vsyncpa [#allocation3], 0
    %159 = vsyncpa [#allocation6], 0
    %160 = vsyncpa [#allocation9], 0
    %161 = vsyncpa [#allocation12], 0
    %162 = vsyncpa [#allocation15], 0
    %163 = vsyncpa [#allocation18], 0
    %164 = vsyncpa [#allocation21], 0
    %165 = vsyncpa [#allocation24], 0
    %166 = vsyncpa [#allocation27], 0
    %167 = vsyncpa [#allocation30], 0
    %168 = vsyncpa [#allocation33], 0
    %169 = vsyncpa [#allocation36], 0
    %170 = vsyncpa [#allocation39], 0
    %171 = vsyncpa [#allocation42], 0
    %172 = vsyncpa [#allocation45], 0
    %173 = vsyncpa [#allocation48], 0
    %174 = vsyncpa [#allocation51], 0
    %175 = vsyncpa [#allocation54], 0
    %176 = vsyncpa [#allocation4], 0
    // Predicated region
    $region2: #{transformer_forward.1} parent=1 // pred_check
      _
    $region3: #{transformer_forward.1} parent=1 // pred_check_branch
      %178 = sbr.rel (0) target = $region5
    $region4: #{transformer_forward.1} parent=1 // pred_region
      _
    $region5: #{transformer_forward.1} parent=1 // pred_fallthru
      _
    // Predicated region
    $region6: #{transformer_forward.1} parent=1 // pred_check
      _
    $region7: #{transformer_forward.1} parent=1 // pred_check_branch
      %180 = sbr.rel (0) target = $region9
    $region8: #{transformer_forward.1} parent=1 // pred_region
      _
    $region9: #{transformer_forward.1} parent=1 // pred_fallthru
      _
    // Predicated region
    $region10: #{transformer_forward.1} parent=1 // pred_check
      _
    $region11: #{transformer_forward.1} parent=1 // pred_check_branch
      %182 = sbr.rel (0) target = $region13
    $region12: #{transformer_forward.1} parent=1 // pred_region
      _
    $region13: #{transformer_forward.1} parent=1 // pred_fallthru
      _
    // Predicated region
    $region14: #{transformer_forward.1} parent=1 // pred_check
      _
    $region15: #{transformer_forward.1} parent=1 // pred_check_branch
      %184 = sbr.rel (0) target = $region17
    $region16: #{transformer_forward.1} parent=1 // pred_region
      _
    $region17: #{transformer_forward.1} parent=1 // pred_fallthru
      _
    // Predicated region
    $region18: #{transformer_forward.1} parent=1 // pred_check
      _
    $region19: #{transformer_forward.1} parent=1 // pred_check_branch
      %186 = sbr.rel (0) target = $region21
    $region20: #{transformer_forward.1} parent=1 // pred_region
      _
    $region21: #{transformer_forward.1} parent=1 // pred_fallthru
      _
    // Predicated region
    $region22: #{transformer_forward.1} parent=1 // pred_check
      _
    $region23: #{transformer_forward.1} parent=1 // pred_check_branch
      %188 = sbr.rel (0) target = $region25
    $region24: #{transformer_forward.1} parent=1 // pred_region
      %s190 = ssub.s32 16, 16
      %191 = vsyncadd [#allocation3], %s190
      %s193 = sshll.u32 [#allocation2], 4
      %s194 = int_to_ptr.vmem [resolvable:$true] %s193
      %196 = dma.hbm_to_vmem [thread:$0]  %s11, 16, %s194, [#allocation3]
    $region25: #{transformer_forward.1} parent=1 // pred_fallthru
      _
    // Predicated region
    $region26: #{transformer_forward.1} parent=1 // pred_check
      _
    $region27: #{transformer_forward.1} parent=1 // pred_check_branch
      %198 = sbr.rel (0) target = $region29
    $region28: #{transformer_forward.1} parent=1 // pred_region
      %s200 = ssub.s32 16, 16
      %201 = vsyncadd [#allocation6], %s200
      %s203 = sshll.u32 [#allocation5], 4
      %s204 = int_to_ptr.vmem [resolvable:$true] %s203
      %206 = dma.hbm_to_vmem [thread:$0]  %s13, 16, %s204, [#allocation6]
    $region29: #{transformer_forward.1} parent=1 // pred_fallthru
      _
    // Predicated region
    $region30: #{transformer_forward.1} parent=1 // pred_check
      _
    $region31: #{transformer_forward.1} parent=1 // pred_check_branch
      %208 = sbr.rel (0) target = $region33
    $region32: #{transformer_forward.1} parent=1 // pred_region
      %s210 = ssub.s32 16, 16
      %211 = vsyncadd [#allocation6], %s210
      %s213 = sshll.u32 [#allocation7], 4
      %s214 = int_to_ptr.vmem [resolvable:$true] %s213
      %216 = dma.hbm_to_vmem [thread:$0]  %s15, 16, %s214, [#allocation6]
    $region33: #{transformer_forward.1} parent=1 // pred_fallthru
      _
    // Predicated region
    $region34: #{transformer_forward.1} parent=1 // pred_check
      _
    $region35: #{transformer_forward.1} parent=1 // pred_check_branch
      %218 = sbr.rel (0) target = $region37
    $region36: #{transformer_forward.1} parent=1 // pred_region
      %s220 = ssub.s32 16, 16
      %221 = vsyncadd [#allocation9], %s220
      %s223 = sshll.u32 [#allocation8], 4
      %s224 = int_to_ptr.vmem [resolvable:$true] %s223
      %226 = dma.hbm_to_vmem [thread:$0]  %s17, 16, %s224, [#allocation9]
    $region37: #{transformer_forward.1} parent=1 // pred_fallthru
      _
    // Predicated region
    $region38: #{transformer_forward.1} parent=1 // pred_check
      _
    $region39: #{transformer_forward.1} parent=1 // pred_check_branch
      %228 = sbr.rel (0) target = $region41
    $region40: #{transformer_forward.1} parent=1 // pred_region
      %s230 = ssub.s32 16, 16
      %231 = vsyncadd [#allocation9], %s230
      %s233 = sshll.u32 [#allocation10], 4
      %s234 = int_to_ptr.vmem [resolvable:$true] %s233
      %236 = dma.hbm_to_vmem [thread:$0]  %s19, 16, %s234, [#allocation9]
    $region41: #{transformer_forward.1} parent=1 // pred_fallthru
      _
    // Predicated region
    $region42: #{transformer_forward.1} parent=1 // pred_check
      _
    $region43: #{transformer_forward.1} parent=1 // pred_check_branch
      %238 = sbr.rel (0) target = $region45
    $region44: #{transformer_forward.1} parent=1 // pred_region
      _
    $region45: #{transformer_forward.1} parent=1 // pred_fallthru
      _
    // Predicated region
    $region46: #{transformer_forward.1} parent=1 // pred_check
      _
    $region47: #{transformer_forward.1} parent=1 // pred_check_branch
      %240 = sbr.rel (0) target = $region49
    $region48: #{transformer_forward.1} parent=1 // pred_region
      _
    $region49: #{transformer_forward.1} parent=1 // pred_fallthru
      _
    // Predicated region
    $region50: #{transformer_forward.1} parent=1 // pred_check
      _
    $region51: #{transformer_forward.1} parent=1 // pred_check_branch
      %242 = sbr.rel (0) target = $region53
    $region52: #{transformer_forward.1} parent=1 // pred_region
      _
    $region53: #{transformer_forward.1} parent=1 // pred_fallthru
      _
    // Predicated region
    $region54: #{transformer_forward.1} parent=1 // pred_check
      _
    $region55: #{transformer_forward.1} parent=1 // pred_check_branch
      %244 = sbr.rel (0) target = $region57
    $region56: #{transformer_forward.1} parent=1 // pred_region
      %s246 = ssub.s32 16, 16
      %247 = vsyncadd [#allocation12], %s246
      %s249 = sshll.u32 [#allocation11], 4
      %s250 = int_to_ptr.vmem [resolvable:$true] %s249
      %252 = dma.hbm_to_vmem [thread:$0]  %s27, 16, %s250, [#allocation12]
    $region57: #{transformer_forward.1} parent=1 // pred_fallthru
      _
    // Predicated region
    $region58: #{transformer_forward.1} parent=1 // pred_check
      _
    $region59: #{transformer_forward.1} parent=1 // pred_check_branch
      %254 = sbr.rel (0) target = $region61
    $region60: #{transformer_forward.1} parent=1 // pred_region
      %s256 = ssub.s32 16, 16
      %257 = vsyncadd [#allocation12], %s256
      %s259 = sshll.u32 [#allocation13], 4
      %s260 = int_to_ptr.vmem [resolvable:$true] %s259
      %262 = dma.hbm_to_vmem [thread:$0]  %s29, 16, %s260, [#allocation12]
    $region61: #{transformer_forward.1} parent=1 // pred_fallthru
      _
    // Predicated region
    $region62: #{transformer_forward.1} parent=1 // pred_check
      _
    $region63: #{transformer_forward.1} parent=1 // pred_check_branch
      %264 = sbr.rel (0) target = $region65
    $region64: #{transformer_forward.1} parent=1 // pred_region
      _
    $region65: #{transformer_forward.1} parent=1 // pred_fallthru
      _
    // Predicated region
    $region66: #{transformer_forward.1} parent=1 // pred_check
      _
    $region67: #{transformer_forward.1} parent=1 // pred_check_branch
      %266 = sbr.rel (0) target = $region69
    $region68: #{transformer_forward.1} parent=1 // pred_region
      _
    $region69: #{transformer_forward.1} parent=1 // pred_fallthru
      _
    // Predicated region
    $region70: #{transformer_forward.1} parent=1 // pred_check
      _
    $region71: #{transformer_forward.1} parent=1 // pred_check_branch
      %268 = sbr.rel (0) target = $region73
    $region72: #{transformer_forward.1} parent=1 // pred_region
      %s270 = ssub.s32 16, 16
      %271 = vsyncadd [#allocation15], %s270
      %s273 = sshll.u32 [#allocation14], 4
      %s274 = int_to_ptr.vmem [resolvable:$true] %s273
      %276 = dma.hbm_to_vmem [thread:$0]  %s35, 16, %s274, [#allocation15]
    $region73: #{transformer_forward.1} parent=1 // pred_fallthru
      _
    // Predicated region
    $region74: #{transformer_forward.1} parent=1 // pred_check
      _
    $region75: #{transformer_forward.1} parent=1 // pred_check_branch
      %278 = sbr.rel (0) target = $region77
    $region76: #{transformer_forward.1} parent=1 // pred_region
      %s280 = ssub.s32 16, 16
      %281 = vsyncadd [#allocation15], %s280
      %s283 = sshll.u32 [#allocation16], 4
      %s284 = int_to_ptr.vmem [resolvable:$true] %s283
      %286 = dma.hbm_to_vmem [thread:$0]  %s37, 16, %s284, [#allocation15]
    $region77: #{transformer_forward.1} parent=1 // pred_fallthru
      _
    // Predicated region
    $region78: #{transformer_forward.1} parent=1 // pred_check
      _
    $region79: #{transformer_forward.1} parent=1 // pred_check_branch
      %288 = sbr.rel (0) target = $region81
    $region80: #{transformer_forward.1} parent=1 // pred_region
      %s290 = ssub.s32 16, 16
      %291 = vsyncadd [#allocation18], %s290
      %s293 = sshll.u32 [#allocation17], 4
      %s294 = int_to_ptr.vmem [resolvable:$true] %s293
      %296 = dma.hbm_to_vmem [thread:$0]  %s39, 16, %s294, [#allocation18]
    $region81: #{transformer_forward.1} parent=1 // pred_fallthru
      _
    // Predicated region
    $region82: #{transformer_forward.1} parent=1 // pred_check
      _
    $region83: #{transformer_forward.1} parent=1 // pred_check_branch
      %298 = sbr.rel (0) target = $region85
    $region84: #{transformer_forward.1} parent=1 // pred_region
      %s300 = ssub.s32 16, 16
      %301 = vsyncadd [#allocation18], %s300
      %s303 = sshll.u32 [#allocation19], 4
      %s304 = int_to_ptr.vmem [resolvable:$true] %s303
      %306 = dma.hbm_to_vmem [thread:$0]  %s41, 16, %s304, [#allocation18]
    $region85: #{transformer_forward.1} parent=1 // pred_fallthru
      _
    // Predicated region
    $region86: #{transformer_forward.1} parent=1 // pred_check
      _
    $region87: #{transformer_forward.1} parent=1 // pred_check_branch
      %308 = sbr.rel (0) target = $region89
    $region88: #{transformer_forward.1} parent=1 // pred_region
      %s310 = ssub.s32 16, 16
      %311 = vsyncadd [#allocation21], %s310
      %s313 = sshll.u32 [#allocation20], 4
      %s314 = int_to_ptr.vmem [resolvable:$true] %s313
      %316 = dma.hbm_to_vmem [thread:$0]  %s43, 16, %s314, [#allocation21]
    $region89: #{transformer_forward.1} parent=1 // pred_fallthru
      _
    // Predicated region
    $region90: #{transformer_forward.1} parent=1 // pred_check
      _
    $region91: #{transformer_forward.1} parent=1 // pred_check_branch
      %318 = sbr.rel (0) target = $region93
    $region92: #{transformer_forward.1} parent=1 // pred_region
      %s320 = ssub.s32 16, 16
      %321 = vsyncadd [#allocation21], %s320
      %s323 = sshll.u32 [#allocation22], 4
      %s324 = int_to_ptr.vmem [resolvable:$true] %s323
      %326 = dma.hbm_to_vmem [thread:$0]  %s45, 16, %s324, [#allocation21]
    $region93: #{transformer_forward.1} parent=1 // pred_fallthru
      _
    // Predicated region
    $region94: #{transformer_forward.1} parent=1 // pred_check
      _
    $region95: #{transformer_forward.1} parent=1 // pred_check_branch
      %328 = sbr.rel (0) target = $region97
    $region96: #{transformer_forward.1} parent=1 // pred_region
      %s330 = ssub.s32 16, 16
      %331 = vsyncadd [#allocation24], %s330
      %s333 = sshll.u32 [#allocation23], 4
      %s334 = int_to_ptr.vmem [resolvable:$true] %s333
      %336 = dma.hbm_to_vmem [thread:$0]  %s47, 16, %s334, [#allocation24]
    $region97: #{transformer_forward.1} parent=1 // pred_fallthru
      _
    // Predicated region
    $region98: #{transformer_forward.1} parent=1 // pred_check
      _
    $region99: #{transformer_forward.1} parent=1 // pred_check_branch
      %338 = sbr.rel (0) target = $region101
    $region100: #{transformer_forward.1} parent=1 // pred_region
      %s340 = ssub.s32 16, 16
      %341 = vsyncadd [#allocation24], %s340
      %s343 = sshll.u32 [#allocation25], 4
      %s344 = int_to_ptr.vmem [resolvable:$true] %s343
      %346 = dma.hbm_to_vmem [thread:$0]  %s49, 16, %s344, [#allocation24]
    $region101: #{transformer_forward.1} parent=1 // pred_fallthru
      _
    // Predicated region
    $region102: #{transformer_forward.1} parent=1 // pred_check
      _
    $region103: #{transformer_forward.1} parent=1 // pred_check_branch
      %348 = sbr.rel (0) target = $region105
    $region104: #{transformer_forward.1} parent=1 // pred_region
      _
    $region105: #{transformer_forward.1} parent=1 // pred_fallthru
      _
    // Predicated region
    $region106: #{transformer_forward.1} parent=1 // pred_check
      _
    $region107: #{transformer_forward.1} parent=1 // pred_check_branch
      %350 = sbr.rel (0) target = $region109
    $region108: #{transformer_forward.1} parent=1 // pred_region
      _
    $region109: #{transformer_forward.1} parent=1 // pred_fallthru
      _
    // Predicated region
    $region110: #{transformer_forward.1} parent=1 // pred_check
      _
    $region111: #{transformer_forward.1} parent=1 // pred_check_branch
      %352 = sbr.rel (0) target = $region113
    $region112: #{transformer_forward.1} parent=1 // pred_region
      %s354 = ssub.s32 16, 16
      %355 = vsyncadd [#allocation27], %s354
      %s357 = sshll.u32 [#allocation26], 4
      %s358 = int_to_ptr.vmem [resolvable:$true] %s357
      %360 = dma.hbm_to_vmem [thread:$0]  %s55, 16, %s358, [#allocation27]
    $region113: #{transformer_forward.1} parent=1 // pred_fallthru
      _
    // Predicated region
    $region114: #{transformer_forward.1} parent=1 // pred_check
      _
    $region115: #{transformer_forward.1} parent=1 // pred_check_branch
      %362 = sbr.rel (0) target = $region117
    $region116: #{transformer_forward.1} parent=1 // pred_region
      _
    $region117: #{transformer_forward.1} parent=1 // pred_fallthru
      _
    // Predicated region
    $region118: #{transformer_forward.1} parent=1 // pred_check
      _
    $region119: #{transformer_forward.1} parent=1 // pred_check_branch
      %364 = sbr.rel (0) target = $region121
    $region120: #{transformer_forward.1} parent=1 // pred_region
      _
    $region121: #{transformer_forward.1} parent=1 // pred_fallthru
      _
    // Predicated region
    $region122: #{transformer_forward.1} parent=1 // pred_check
      _
    $region123: #{transformer_forward.1} parent=1 // pred_check_branch
      %366 = sbr.rel (0) target = $region125
    $region124: #{transformer_forward.1} parent=1 // pred_region
      _
    $region125: #{transformer_forward.1} parent=1 // pred_fallthru
      _
    // Predicated region
    $region126: #{transformer_forward.1} parent=1 // pred_check
      _
    $region127: #{transformer_forward.1} parent=1 // pred_check_branch
      %368 = sbr.rel (0) target = $region129
    $region128: #{transformer_forward.1} parent=1 // pred_region
      _
    $region129: #{transformer_forward.1} parent=1 // pred_fallthru
      _
    // Predicated region
    $region130: #{transformer_forward.1} parent=1 // pred_check
      _
    $region131: #{transformer_forward.1} parent=1 // pred_check_branch
      %370 = sbr.rel (0) target = $region133
    $region132: #{transformer_forward.1} parent=1 // pred_region
      _
    $region133: #{transformer_forward.1} parent=1 // pred_fallthru
      _
    // Predicated region
    $region134: #{transformer_forward.1} parent=1 // pred_check
      _
    $region135: #{transformer_forward.1} parent=1 // pred_check_branch
      %372 = sbr.rel (0) target = $region137
    $region136: #{transformer_forward.1} parent=1 // pred_region
      _
    $region137: #{transformer_forward.1} parent=1 // pred_fallthru
      _
    // Predicated region
    $region138: #{transformer_forward.1} parent=1 // pred_check
      _
    $region139: #{transformer_forward.1} parent=1 // pred_check_branch
      %374 = sbr.rel (0) target = $region141
    $region140: #{transformer_forward.1} parent=1 // pred_region
      _
    $region141: #{transformer_forward.1} parent=1 // pred_fallthru
      _
    // Predicated region
    $region142: #{transformer_forward.1} parent=1 // pred_check
      _
    $region143: #{transformer_forward.1} parent=1 // pred_check_branch
      %376 = sbr.rel (0) target = $region145
    $region144: #{transformer_forward.1} parent=1 // pred_region
      _
    $region145: #{transformer_forward.1} parent=1 // pred_fallthru
      _
    // Predicated region
    $region146: #{transformer_forward.1} parent=1 // pred_check
      _
    $region147: #{transformer_forward.1} parent=1 // pred_check_branch
      %378 = sbr.rel (0) target = $region149
    $region148: #{transformer_forward.1} parent=1 // pred_region
      _
    $region149: #{transformer_forward.1} parent=1 // pred_fallthru
      _
    // Predicated region
    $region150: #{transformer_forward.1} parent=1 // pred_check
      _
    $region151: #{transformer_forward.1} parent=1 // pred_check_branch
      %380 = sbr.rel (0) target = $region153
    $region152: #{transformer_forward.1} parent=1 // pred_region
      _
    $region153: #{transformer_forward.1} parent=1 // pred_fallthru
      _
    // Predicated region
    $region154: #{transformer_forward.1} parent=1 // pred_check
      _
    $region155: #{transformer_forward.1} parent=1 // pred_check_branch
      %382 = sbr.rel (0) target = $region157
    $region156: #{transformer_forward.1} parent=1 // pred_region
      _
    $region157: #{transformer_forward.1} parent=1 // pred_fallthru
      _
    // Predicated region
    $region158: #{transformer_forward.1} parent=1 // pred_check
      _
    $region159: #{transformer_forward.1} parent=1 // pred_check_branch
      %384 = sbr.rel (0) target = $region161
    $region160: #{transformer_forward.1} parent=1 // pred_region
      _
    $region161: #{transformer_forward.1} parent=1 // pred_fallthru
      _
    // Predicated region
    $region162: #{transformer_forward.1} parent=1 // pred_check
      _
    $region163: #{transformer_forward.1} parent=1 // pred_check_branch
      %386 = sbr.rel (0) target = $region165
    $region164: #{transformer_forward.1} parent=1 // pred_region
      _
    $region165: #{transformer_forward.1} parent=1 // pred_fallthru
      _
    // Predicated region
    $region166: #{transformer_forward.1} parent=1 // pred_check
      _
    $region167: #{transformer_forward.1} parent=1 // pred_check_branch
      %388 = sbr.rel (0) target = $region169
    $region168: #{transformer_forward.1} parent=1 // pred_region
      _
    $region169: #{transformer_forward.1} parent=1 // pred_fallthru
      _
    // Predicated region
    $region170: #{transformer_forward.1} parent=1 // pred_check
      _
    $region171: #{transformer_forward.1} parent=1 // pred_check_branch
      %390 = sbr.rel (0) target = $region173
    $region172: #{transformer_forward.1} parent=1 // pred_region
      _
    $region173: #{transformer_forward.1} parent=1 // pred_fallthru
      _
    // Predicated region
    $region174: #{transformer_forward.1} parent=1 // pred_check
      _
    $region175: #{transformer_forward.1} parent=1 // pred_check_branch
      %392 = sbr.rel (0) target = $region177
    $region176: #{transformer_forward.1} parent=1 // pred_region
      _
    $region177: #{transformer_forward.1} parent=1 // pred_fallthru
      _
    // Predicated region
    $region178: #{transformer_forward.1} parent=1 // pred_check
      _
    $region179: #{transformer_forward.1} parent=1 // pred_check_branch
      %394 = sbr.rel (0) target = $region181
    $region180: #{transformer_forward.1} parent=1 // pred_region
      _
    $region181: #{transformer_forward.1} parent=1 // pred_fallthru
      _
    // Predicated region
    $region182: #{transformer_forward.1} parent=1 // pred_check
      _
    $region183: #{transformer_forward.1} parent=1 // pred_check_branch
      %396 = sbr.rel (0) target = $region185
    $region184: #{transformer_forward.1} parent=1 // pred_region
      _
    $region185: #{transformer_forward.1} parent=1 // pred_fallthru
      _
    // Predicated region
    $region186: #{transformer_forward.1} parent=1 // pred_check
      _
    $region187: #{transformer_forward.1} parent=1 // pred_check_branch
      %398 = sbr.rel (0) target = $region189
    $region188: #{transformer_forward.1} parent=1 // pred_region
      _
    $region189: #{transformer_forward.1} parent=1 // pred_fallthru
      _
    // Predicated region
    $region190: #{transformer_forward.1} parent=1 // pred_check
      _
    $region191: #{transformer_forward.1} parent=1 // pred_check_branch
      %400 = sbr.rel (0) target = $region193
    $region192: #{transformer_forward.1} parent=1 // pred_region
      _
    $region193: #{transformer_forward.1} parent=1 // pred_fallthru
      _
    // Predicated region
    $region194: #{transformer_forward.1} parent=1 // pred_check
      _
    $region195: #{transformer_forward.1} parent=1 // pred_check_branch
      %402 = sbr.rel (0) target = $region197
    $region196: #{transformer_forward.1} parent=1 // pred_region
      %s404 = ssub.s32 16, 16
      %405 = vsyncadd [#allocation27], %s404
      %s407 = sshll.u32 [#allocation28], 4
      %s408 = int_to_ptr.vmem [resolvable:$true] %s407
      %410 = dma.hbm_to_vmem [thread:$0]  %s97, 16, %s408, [#allocation27]
    $region197: #{transformer_forward.1} parent=1 // pred_fallthru
      _
    // Predicated region
    $region198: #{transformer_forward.1} parent=1 // pred_check
      _
    $region199: #{transformer_forward.1} parent=1 // pred_check_branch
      %412 = sbr.rel (0) target = $region201
    $region200: #{transformer_forward.1} parent=1 // pred_region
      %s414 = ssub.s32 16, 16
      %415 = vsyncadd [#allocation30], %s414
      %s417 = sshll.u32 [#allocation29], 4
      %s418 = int_to_ptr.vmem [resolvable:$true] %s417
      %420 = dma.hbm_to_vmem [thread:$0]  %s99, 16, %s418, [#allocation30]
    $region201: #{transformer_forward.1} parent=1 // pred_fallthru
      _
    // Predicated region
    $region202: #{transformer_forward.1} parent=1 // pred_check
      _
    $region203: #{transformer_forward.1} parent=1 // pred_check_branch
      %422 = sbr.rel (0) target = $region205
    $region204: #{transformer_forward.1} parent=1 // pred_region
      %s424 = ssub.s32 16, 16
      %425 = vsyncadd [#allocation30], %s424
      %s427 = sshll.u32 [#allocation31], 4
      %s428 = int_to_ptr.vmem [resolvable:$true] %s427
      %430 = dma.hbm_to_vmem [thread:$0]  %s101, 16, %s428, [#allocation30]
    $region205: #{transformer_forward.1} parent=1 // pred_fallthru
      _
    // Predicated region
    $region206: #{transformer_forward.1} parent=1 // pred_check
      _
    $region207: #{transformer_forward.1} parent=1 // pred_check_branch
      %432 = sbr.rel (0) target = $region209
    $region208: #{transformer_forward.1} parent=1 // pred_region
      %s434 = ssub.s32 16, 16
      %435 = vsyncadd [#allocation33], %s434
      %s437 = sshll.u32 [#allocation32], 4
      %s438 = int_to_ptr.vmem [resolvable:$true] %s437
      %440 = dma.hbm_to_vmem [thread:$0]  %s103, 16, %s438, [#allocation33]
    $region209: #{transformer_forward.1} parent=1 // pred_fallthru
      _
    // Predicated region
    $region210: #{transformer_forward.1} parent=1 // pred_check
      _
    $region211: #{transformer_forward.1} parent=1 // pred_check_branch
      %442 = sbr.rel (0) target = $region213
    $region212: #{transformer_forward.1} parent=1 // pred_region
      _
    $region213: #{transformer_forward.1} parent=1 // pred_fallthru
      _
    // Predicated region
    $region214: #{transformer_forward.1} parent=1 // pred_check
      _
    $region215: #{transformer_forward.1} parent=1 // pred_check_branch
      %444 = sbr.rel (0) target = $region217
    $region216: #{transformer_forward.1} parent=1 // pred_region
      _
    $region217: #{transformer_forward.1} parent=1 // pred_fallthru
      _
    // Predicated region
    $region218: #{transformer_forward.1} parent=1 // pred_check
      _
    $region219: #{transformer_forward.1} parent=1 // pred_check_branch
      %446 = sbr.rel (0) target = $region221
    $region220: #{transformer_forward.1} parent=1 // pred_region
      %s448 = ssub.s32 16, 16
      %449 = vsyncadd [#allocation33], %s448
      %s451 = sshll.u32 [#allocation34], 4
      %s452 = int_to_ptr.vmem [resolvable:$true] %s451
      %454 = dma.hbm_to_vmem [thread:$0]  %s109, 16, %s452, [#allocation33]
    $region221: #{transformer_forward.1} parent=1 // pred_fallthru
      _
    // Predicated region
    $region222: #{transformer_forward.1} parent=1 // pred_check
      _
    $region223: #{transformer_forward.1} parent=1 // pred_check_branch
      %456 = sbr.rel (0) target = $region225
    $region224: #{transformer_forward.1} parent=1 // pred_region
      %s458 = ssub.s32 16, 16
      %459 = vsyncadd [#allocation36], %s458
      %s461 = sshll.u32 [#allocation35], 4
      %s462 = int_to_ptr.vmem [resolvable:$true] %s461
      %464 = dma.hbm_to_vmem [thread:$0]  %s111, 16, %s462, [#allocation36]
    $region225: #{transformer_forward.1} parent=1 // pred_fallthru
      _
    // Predicated region
    $region226: #{transformer_forward.1} parent=1 // pred_check
      _
    $region227: #{transformer_forward.1} parent=1 // pred_check_branch
      %466 = sbr.rel (0) target = $region229
    $region228: #{transformer_forward.1} parent=1 // pred_region
      _
    $region229: #{transformer_forward.1} parent=1 // pred_fallthru
      _
    // Predicated region
    $region230: #{transformer_forward.1} parent=1 // pred_check
      _
    $region231: #{transformer_forward.1} parent=1 // pred_check_branch
      %468 = sbr.rel (0) target = $region233
    $region232: #{transformer_forward.1} parent=1 // pred_region
      _
    $region233: #{transformer_forward.1} parent=1 // pred_fallthru
      _
    // Predicated region
    $region234: #{transformer_forward.1} parent=1 // pred_check
      _
    $region235: #{transformer_forward.1} parent=1 // pred_check_branch
      %470 = sbr.rel (0) target = $region237
    $region236: #{transformer_forward.1} parent=1 // pred_region
      %s472 = ssub.s32 16, 16
      %473 = vsyncadd [#allocation36], %s472
      %s475 = sshll.u32 [#allocation37], 4
      %s476 = int_to_ptr.vmem [resolvable:$true] %s475
      %478 = dma.hbm_to_vmem [thread:$0]  %s117, 16, %s476, [#allocation36]
    $region237: #{transformer_forward.1} parent=1 // pred_fallthru
      _
    // Predicated region
    $region238: #{transformer_forward.1} parent=1 // pred_check
      _
    $region239: #{transformer_forward.1} parent=1 // pred_check_branch
      %480 = sbr.rel (0) target = $region241
    $region240: #{transformer_forward.1} parent=1 // pred_region
      %s482 = ssub.s32 16, 16
      %483 = vsyncadd [#allocation39], %s482
      %s485 = sshll.u32 [#allocation38], 4
      %s486 = int_to_ptr.vmem [resolvable:$true] %s485
      %488 = dma.hbm_to_vmem [thread:$0]  %s119, 16, %s486, [#allocation39]
    $region241: #{transformer_forward.1} parent=1 // pred_fallthru
      _
    // Predicated region
    $region242: #{transformer_forward.1} parent=1 // pred_check
      _
    $region243: #{transformer_forward.1} parent=1 // pred_check_branch
      %490 = sbr.rel (0) target = $region245
    $region244: #{transformer_forward.1} parent=1 // pred_region
      %s492 = ssub.s32 16, 16
      %493 = vsyncadd [#allocation39], %s492
      %s495 = sshll.u32 [#allocation40], 4
      %s496 = int_to_ptr.vmem [resolvable:$true] %s495
      %498 = dma.hbm_to_vmem [thread:$0]  %s121, 16, %s496, [#allocation39]
    $region245: #{transformer_forward.1} parent=1 // pred_fallthru
      _
    // Predicated region
    $region246: #{transformer_forward.1} parent=1 // pred_check
      _
    $region247: #{transformer_forward.1} parent=1 // pred_check_branch
      %500 = sbr.rel (0) target = $region249
    $region248: #{transformer_forward.1} parent=1 // pred_region
      %s502 = ssub.s32 16, 16
      %503 = vsyncadd [#allocation42], %s502
      %s505 = sshll.u32 [#allocation41], 4
      %s506 = int_to_ptr.vmem [resolvable:$true] %s505
      %508 = dma.hbm_to_vmem [thread:$0]  %s123, 16, %s506, [#allocation42]
    $region249: #{transformer_forward.1} parent=1 // pred_fallthru
      _
    // Predicated region
    $region250: #{transformer_forward.1} parent=1 // pred_check
      _
    $region251: #{transformer_forward.1} parent=1 // pred_check_branch
      %510 = sbr.rel (0) target = $region253
    $region252: #{transformer_forward.1} parent=1 // pred_region
      %s512 = ssub.s32 16, 16
      %513 = vsyncadd [#allocation42], %s512
      %s515 = sshll.u32 [#allocation43], 4
      %s516 = int_to_ptr.vmem [resolvable:$true] %s515
      %518 = dma.hbm_to_vmem [thread:$0]  %s125, 16, %s516, [#allocation42]
    $region253: #{transformer_forward.1} parent=1 // pred_fallthru
      _
    // Predicated region
    $region254: #{transformer_forward.1} parent=1 // pred_check
      _
    $region255: #{transformer_forward.1} parent=1 // pred_check_branch
      %520 = sbr.rel (0) target = $region257
    $region256: #{transformer_forward.1} parent=1 // pred_region
      %s522 = ssub.s32 16, 16
      %523 = vsyncadd [#allocation45], %s522
      %s525 = sshll.u32 [#allocation44], 4
      %s526 = int_to_ptr.vmem [resolvable:$true] %s525
      %528 = dma.hbm_to_vmem [thread:$0]  %s127, 16, %s526, [#allocation45]
    $region257: #{transformer_forward.1} parent=1 // pred_fallthru
      _
    // Predicated region
    $region258: #{transformer_forward.1} parent=1 // pred_check
      _
    $region259: #{transformer_forward.1} parent=1 // pred_check_branch
      %530 = sbr.rel (0) target = $region261
    $region260: #{transformer_forward.1} parent=1 // pred_region
      _
    $region261: #{transformer_forward.1} parent=1 // pred_fallthru
      _
    // Predicated region
    $region262: #{transformer_forward.1} parent=1 // pred_check
      _
    $region263: #{transformer_forward.1} parent=1 // pred_check_branch
      %532 = sbr.rel (0) target = $region265
    $region264: #{transformer_forward.1} parent=1 // pred_region
      _
    $region265: #{transformer_forward.1} parent=1 // pred_fallthru
      _
    // Predicated region
    $region266: #{transformer_forward.1} parent=1 // pred_check
      _
    $region267: #{transformer_forward.1} parent=1 // pred_check_branch
      %534 = sbr.rel (0) target = $region269
    $region268: #{transformer_forward.1} parent=1 // pred_region
      %s536 = ssub.s32 16, 16
      %537 = vsyncadd [#allocation45], %s536
      %s539 = sshll.u32 [#allocation46], 4
      %s540 = int_to_ptr.vmem [resolvable:$true] %s539
      %542 = dma.hbm_to_vmem [thread:$0]  %s133, 16, %s540, [#allocation45]
    $region269: #{transformer_forward.1} parent=1 // pred_fallthru
      _
    // Predicated region
    $region270: #{transformer_forward.1} parent=1 // pred_check
      _
    $region271: #{transformer_forward.1} parent=1 // pred_check_branch
      %544 = sbr.rel (0) target = $region273
    $region272: #{transformer_forward.1} parent=1 // pred_region
      %s546 = ssub.s32 16, 16
      %547 = vsyncadd [#allocation48], %s546
      %s549 = sshll.u32 [#allocation47], 4
      %s550 = int_to_ptr.vmem [resolvable:$true] %s549
      %552 = dma.hbm_to_vmem [thread:$0]  %s135, 16, %s550, [#allocation48]
    $region273: #{transformer_forward.1} parent=1 // pred_fallthru
      _
    // Predicated region
    $region274: #{transformer_forward.1} parent=1 // pred_check
      _
    $region275: #{transformer_forward.1} parent=1 // pred_check_branch
      %554 = sbr.rel (0) target = $region277
    $region276: #{transformer_forward.1} parent=1 // pred_region
      _
    $region277: #{transformer_forward.1} parent=1 // pred_fallthru
      _
    // Predicated region
    $region278: #{transformer_forward.1} parent=1 // pred_check
      _
    $region279: #{transformer_forward.1} parent=1 // pred_check_branch
      %556 = sbr.rel (0) target = $region281
    $region280: #{transformer_forward.1} parent=1 // pred_region
      _
    $region281: #{transformer_forward.1} parent=1 // pred_fallthru
      _
    // Predicated region
    $region282: #{transformer_forward.1} parent=1 // pred_check
      _
    $region283: #{transformer_forward.1} parent=1 // pred_check_branch
      %558 = sbr.rel (0) target = $region285
    $region284: #{transformer_forward.1} parent=1 // pred_region
      %s560 = ssub.s32 16, 16
      %561 = vsyncadd [#allocation48], %s560
      %s563 = sshll.u32 [#allocation49], 4
      %s564 = int_to_ptr.vmem [resolvable:$true] %s563
      %566 = dma.hbm_to_vmem [thread:$0]  %s141, 16, %s564, [#allocation48]
    $region285: #{transformer_forward.1} parent=1 // pred_fallthru
      _
    // Predicated region
    $region286: #{transformer_forward.1} parent=1 // pred_check
      _
    $region287: #{transformer_forward.1} parent=1 // pred_check_branch
      %568 = sbr.rel (0) target = $region289
    $region288: #{transformer_forward.1} parent=1 // pred_region
      %s570 = ssub.s32 16, 16
      %571 = vsyncadd [#allocation51], %s570
      %s573 = sshll.u32 [#allocation50], 4
      %s574 = int_to_ptr.vmem [resolvable:$true] %s573
      %576 = dma.hbm_to_vmem [thread:$0]  %s143, 16, %s574, [#allocation51]
    $region289: #{transformer_forward.1} parent=1 // pred_fallthru
      _
    // Predicated region
    $region290: #{transformer_forward.1} parent=1 // pred_check
      _
    $region291: #{transformer_forward.1} parent=1 // pred_check_branch
      %578 = sbr.rel (0) target = $region293
    $region292: #{transformer_forward.1} parent=1 // pred_region
      %s580 = ssub.s32 16, 16
      %581 = vsyncadd [#allocation51], %s580
      %s583 = sshll.u32 [#allocation52], 4
      %s584 = int_to_ptr.vmem [resolvable:$true] %s583
      %586 = dma.hbm_to_vmem [thread:$0]  %s145, 16, %s584, [#allocation51]
    $region293: #{transformer_forward.1} parent=1 // pred_fallthru
      _
    // Predicated region
    $region294: #{transformer_forward.1} parent=1 // pred_check
      _
    $region295: #{transformer_forward.1} parent=1 // pred_check_branch
      %588 = sbr.rel (0) target = $region297
    $region296: #{transformer_forward.1} parent=1 // pred_region
      %s590 = ssub.s32 16, 16
      %591 = vsyncadd [#allocation54], %s590
      %s593 = sshll.u32 [#allocation53], 4
      %s594 = int_to_ptr.vmem [resolvable:$true] %s593
      %596 = dma.hbm_to_vmem [thread:$0]  %s147, 16, %s594, [#allocation54]
    $region297: #{transformer_forward.1} parent=1 // pred_fallthru
      _
    // Predicated region
    $region298: #{transformer_forward.1} parent=1 // pred_check
      _
    $region299: #{transformer_forward.1} parent=1 // pred_check_branch
      %598 = sbr.rel (0) target = $region301
    $region300: #{transformer_forward.1} parent=1 // pred_region
      %s600 = ssub.s32 16, 16
      %601 = vsyncadd [#allocation54], %s600
      %s603 = sshll.u32 [#allocation55], 4
      %s604 = int_to_ptr.vmem [resolvable:$true] %s603
      %606 = dma.hbm_to_vmem [thread:$0]  %s149, 16, %s604, [#allocation54]
    $region301: #{transformer_forward.1} parent=1 // pred_fallthru
      _
    // Predicated region
    $region302: #{transformer_forward.1} parent=1 // pred_check
      _
    $region303: #{transformer_forward.1} parent=1 // pred_check_branch
      %608 = sbr.rel (0) target = $region305
    $region304: #{transformer_forward.1} parent=1 // pred_region
      _
    $region305: #{transformer_forward.1} parent=1 // pred_fallthru
      _
    // Predicated region
    $region306: #{transformer_forward.1} parent=1 // pred_check
      _
    $region307: #{transformer_forward.1} parent=1 // pred_check_branch
      %610 = sbr.rel (0) target = $region309
    $region308: #{transformer_forward.1} parent=1 // pred_region
      %611 = dma.done [#allocation3], 16
    $region309: #{transformer_forward.1} parent=1 // pred_fallthru
      _
    // Predicated region
    $region310: #{transformer_forward.1} parent=1 // pred_check
      _
    $region311: #{transformer_forward.1} parent=1 // pred_check_branch
      %613 = sbr.rel (0) target = $region313
    $region312: #{transformer_forward.1} parent=1 // pred_region
      %614 = dma.done [#allocation6], 16
    $region313: #{transformer_forward.1} parent=1 // pred_fallthru
      _
    // Predicated region
    $region314: #{transformer_forward.1} parent=1 // pred_check
      _
    $region315: #{transformer_forward.1} parent=1 // pred_check_branch
      %616 = sbr.rel (0) target = $region317
    $region316: #{transformer_forward.1} parent=1 // pred_region
      %617 = dma.done [#allocation6], 16
    $region317: #{transformer_forward.1} parent=1 // pred_fallthru
      _
    // Predicated region
    $region318: #{transformer_forward.1} parent=1 // pred_check
      _
    $region319: #{transformer_forward.1} parent=1 // pred_check_branch
      %619 = sbr.rel (0) target = $region321
    $region320: #{transformer_forward.1} parent=1 // pred_region
      %620 = dma.done [#allocation9], 16
    $region321: #{transformer_forward.1} parent=1 // pred_fallthru
      _
    // Predicated region
    $region322: #{transformer_forward.1} parent=1 // pred_check
      _
    $region323: #{transformer_forward.1} parent=1 // pred_check_branch
      %622 = sbr.rel (0) target = $region325
    $region324: #{transformer_forward.1} parent=1 // pred_region
      %623 = dma.done [#allocation9], 16
    $region325: #{transformer_forward.1} parent=1 // pred_fallthru
      _
    // Predicated region
    $region326: #{transformer_forward.1} parent=1 // pred_check
      _
    $region327: #{transformer_forward.1} parent=1 // pred_check_branch
      %625 = sbr.rel (0) target = $region329
    $region328: #{transformer_forward.1} parent=1 // pred_region
      %626 = dma.done [#allocation12], 16
    $region329: #{transformer_forward.1} parent=1 // pred_fallthru
      _
    // Predicated region
    $region330: #{transformer_forward.1} parent=1 // pred_check
      _
    $region331: #{transformer_forward.1} parent=1 // pred_check_branch
      %628 = sbr.rel (0) target = $region333
    $region332: #{transformer_forward.1} parent=1 // pred_region
      %629 = dma.done [#allocation12], 16
    $region333: #{transformer_forward.1} parent=1 // pred_fallthru
      _
    // Predicated region
    $region334: #{transformer_forward.1} parent=1 // pred_check
      _
    $region335: #{transformer_forward.1} parent=1 // pred_check_branch
      %631 = sbr.rel (0) target = $region337
    $region336: #{transformer_forward.1} parent=1 // pred_region
      %632 = dma.done [#allocation15], 16
    $region337: #{transformer_forward.1} parent=1 // pred_fallthru
      _
    // Predicated region
    $region338: #{transformer_forward.1} parent=1 // pred_check
      _
    $region339: #{transformer_forward.1} parent=1 // pred_check_branch
      %634 = sbr.rel (0) target = $region341
    $region340: #{transformer_forward.1} parent=1 // pred_region
      %635 = dma.done [#allocation15], 16
    $region341: #{transformer_forward.1} parent=1 // pred_fallthru
      _
    // Predicated region
    $region342: #{transformer_forward.1} parent=1 // pred_check
      _
    $region343: #{transformer_forward.1} parent=1 // pred_check_branch
      %637 = sbr.rel (0) target = $region345
    $region344: #{transformer_forward.1} parent=1 // pred_region
      %638 = dma.done [#allocation18], 16
    $region345: #{transformer_forward.1} parent=1 // pred_fallthru
      _
    // Predicated region
    $region346: #{transformer_forward.1} parent=1 // pred_check
      _
    $region347: #{transformer_forward.1} parent=1 // pred_check_branch
      %640 = sbr.rel (0) target = $region349
    $region348: #{transformer_forward.1} parent=1 // pred_region
      %641 = dma.done [#allocation18], 16
    $region349: #{transformer_forward.1} parent=1 // pred_fallthru
      _
    // Predicated region
    $region350: #{transformer_forward.1} parent=1 // pred_check
      _
    $region351: #{transformer_forward.1} parent=1 // pred_check_branch
      %643 = sbr.rel (0) target = $region353
    $region352: #{transformer_forward.1} parent=1 // pred_region
      %644 = dma.done [#allocation21], 16
    $region353: #{transformer_forward.1} parent=1 // pred_fallthru
      _
    // Predicated region
    $region354: #{transformer_forward.1} parent=1 // pred_check
      _
    $region355: #{transformer_forward.1} parent=1 // pred_check_branch
      %646 = sbr.rel (0) target = $region357
    $region356: #{transformer_forward.1} parent=1 // pred_region
      %647 = dma.done [#allocation21], 16
    $region357: #{transformer_forward.1} parent=1 // pred_fallthru
      _
    // Predicated region
    $region358: #{transformer_forward.1} parent=1 // pred_check
      _
    $region359: #{transformer_forward.1} parent=1 // pred_check_branch
      %649 = sbr.rel (0) target = $region361
    $region360: #{transformer_forward.1} parent=1 // pred_region
      %650 = dma.done [#allocation24], 16
    $region361: #{transformer_forward.1} parent=1 // pred_fallthru
      _
    // Predicated region
    $region362: #{transformer_forward.1} parent=1 // pred_check
      _
    $region363: #{transformer_forward.1} parent=1 // pred_check_branch
      %652 = sbr.rel (0) target = $region365
    $region364: #{transformer_forward.1} parent=1 // pred_region
      %653 = dma.done [#allocation24], 16
    $region365: #{transformer_forward.1} parent=1 // pred_fallthru
      _
    // Predicated region
    $region366: #{transformer_forward.1} parent=1 // pred_check
      _
    $region367: #{transformer_forward.1} parent=1 // pred_check_branch
      %655 = sbr.rel (0) target = $region369
    $region368: #{transformer_forward.1} parent=1 // pred_region
      %656 = dma.done [#allocation27], 16
    $region369: #{transformer_forward.1} parent=1 // pred_fallthru
      _
    // Predicated region
    $region370: #{transformer_forward.1} parent=1 // pred_check
      _
    $region371: #{transformer_forward.1} parent=1 // pred_check_branch
      %658 = sbr.rel (0) target = $region373
    $region372: #{transformer_forward.1} parent=1 // pred_region
      %659 = dma.done [#allocation27], 16
    $region373: #{transformer_forward.1} parent=1 // pred_fallthru
      _
    // Predicated region
    $region374: #{transformer_forward.1} parent=1 // pred_check
      _
    $region375: #{transformer_forward.1} parent=1 // pred_check_branch
      %661 = sbr.rel (0) target = $region377
    $region376: #{transformer_forward.1} parent=1 // pred_region
      %662 = dma.done [#allocation30], 16
    $region377: #{transformer_forward.1} parent=1 // pred_fallthru
      _
    // Predicated region
    $region378: #{transformer_forward.1} parent=1 // pred_check
      _
    $region379: #{transformer_forward.1} parent=1 // pred_check_branch
      %664 = sbr.rel (0) target = $region381
    $region380: #{transformer_forward.1} parent=1 // pred_region
      %665 = dma.done [#allocation30], 16
    $region381: #{transformer_forward.1} parent=1 // pred_fallthru
      _
    // Predicated region
    $region382: #{transformer_forward.1} parent=1 // pred_check
      _
    $region383: #{transformer_forward.1} parent=1 // pred_check_branch
      %667 = sbr.rel (0) target = $region385
    $region384: #{transformer_forward.1} parent=1 // pred_region
      %668 = dma.done [#allocation33], 16
    $region385: #{transformer_forward.1} parent=1 // pred_fallthru
      _
    // Predicated region
    $region386: #{transformer_forward.1} parent=1 // pred_check
      _
    $region387: #{transformer_forward.1} parent=1 // pred_check_branch
      %670 = sbr.rel (0) target = $region389
    $region388: #{transformer_forward.1} parent=1 // pred_region
      %671 = dma.done [#allocation33], 16
    $region389: #{transformer_forward.1} parent=1 // pred_fallthru
      _
    // Predicated region
    $region390: #{transformer_forward.1} parent=1 // pred_check
      _
    $region391: #{transformer_forward.1} parent=1 // pred_check_branch
      %673 = sbr.rel (0) target = $region393
    $region392: #{transformer_forward.1} parent=1 // pred_region
      %674 = dma.done [#allocation36], 16
    $region393: #{transformer_forward.1} parent=1 // pred_fallthru
      _
    // Predicated region
    $region394: #{transformer_forward.1} parent=1 // pred_check
      _
    $region395: #{transformer_forward.1} parent=1 // pred_check_branch
      %676 = sbr.rel (0) target = $region397
    $region396: #{transformer_forward.1} parent=1 // pred_region
      %677 = dma.done [#allocation36], 16
    $region397: #{transformer_forward.1} parent=1 // pred_fallthru
      _
    // Predicated region
    $region398: #{transformer_forward.1} parent=1 // pred_check
      _
    $region399: #{transformer_forward.1} parent=1 // pred_check_branch
      %679 = sbr.rel (0) target = $region401
    $region400: #{transformer_forward.1} parent=1 // pred_region
      %680 = dma.done [#allocation39], 16
    $region401: #{transformer_forward.1} parent=1 // pred_fallthru
      _
    // Predicated region
    $region402: #{transformer_forward.1} parent=1 // pred_check
      _
    $region403: #{transformer_forward.1} parent=1 // pred_check_branch
      %682 = sbr.rel (0) target = $region405
    $region404: #{transformer_forward.1} parent=1 // pred_region
      %683 = dma.done [#allocation39], 16
    $region405: #{transformer_forward.1} parent=1 // pred_fallthru
      _
    // Predicated region
    $region406: #{transformer_forward.1} parent=1 // pred_check
      _
    $region407: #{transformer_forward.1} parent=1 // pred_check_branch
      %685 = sbr.rel (0) target = $region409
    $region408: #{transformer_forward.1} parent=1 // pred_region
      %686 = dma.done [#allocation42], 16
    $region409: #{transformer_forward.1} parent=1 // pred_fallthru
      _
    // Predicated region
    $region410: #{transformer_forward.1} parent=1 // pred_check
      _
    $region411: #{transformer_forward.1} parent=1 // pred_check_branch
      %688 = sbr.rel (0) target = $region413
    $region412: #{transformer_forward.1} parent=1 // pred_region
      %689 = dma.done [#allocation42], 16
    $region413: #{transformer_forward.1} parent=1 // pred_fallthru
      _
    // Predicated region
    $region414: #{transformer_forward.1} parent=1 // pred_check
      _
    $region415: #{transformer_forward.1} parent=1 // pred_check_branch
      %691 = sbr.rel (0) target = $region417
    $region416: #{transformer_forward.1} parent=1 // pred_region
      %692 = dma.done [#allocation45], 16
    $region417: #{transformer_forward.1} parent=1 // pred_fallthru
      _
    // Predicated region
    $region418: #{transformer_forward.1} parent=1 // pred_check
      _
    $region419: #{transformer_forward.1} parent=1 // pred_check_branch
      %694 = sbr.rel (0) target = $region421
    $region420: #{transformer_forward.1} parent=1 // pred_region
      %695 = dma.done [#allocation45], 16
    $region421: #{transformer_forward.1} parent=1 // pred_fallthru
      _
    // Predicated region
    $region422: #{transformer_forward.1} parent=1 // pred_check
      _
    $region423: #{transformer_forward.1} parent=1 // pred_check_branch
      %697 = sbr.rel (0) target = $region425
    $region424: #{transformer_forward.1} parent=1 // pred_region
      %698 = dma.done [#allocation48], 16
    $region425: #{transformer_forward.1} parent=1 // pred_fallthru
      _
    // Predicated region
    $region426: #{transformer_forward.1} parent=1 // pred_check
      _
    $region427: #{transformer_forward.1} parent=1 // pred_check_branch
      %700 = sbr.rel (0) target = $region429
    $region428: #{transformer_forward.1} parent=1 // pred_region
      %701 = dma.done [#allocation48], 16
    $region429: #{transformer_forward.1} parent=1 // pred_fallthru
      _
    // Predicated region
    $region430: #{transformer_forward.1} parent=1 // pred_check
      _
    $region431: #{transformer_forward.1} parent=1 // pred_check_branch
      %703 = sbr.rel (0) target = $region433
    $region432: #{transformer_forward.1} parent=1 // pred_region
      %704 = dma.done [#allocation51], 16
    $region433: #{transformer_forward.1} parent=1 // pred_fallthru
      _
    // Predicated region
    $region434: #{transformer_forward.1} parent=1 // pred_check
      _
    $region435: #{transformer_forward.1} parent=1 // pred_check_branch
      %706 = sbr.rel (0) target = $region437
    $region436: #{transformer_forward.1} parent=1 // pred_region
      %707 = dma.done [#allocation51], 16
    $region437: #{transformer_forward.1} parent=1 // pred_fallthru
      _
    // Predicated region
    $region438: #{transformer_forward.1} parent=1 // pred_check
      _
    $region439: #{transformer_forward.1} parent=1 // pred_check_branch
      %709 = sbr.rel (0) target = $region441
    $region440: #{transformer_forward.1} parent=1 // pred_region
      %710 = dma.done [#allocation54], 16
    $region441: #{transformer_forward.1} parent=1 // pred_fallthru
      _
    // Predicated region
    $region442: #{transformer_forward.1} parent=1 // pred_check
      _
    $region443: #{transformer_forward.1} parent=1 // pred_check_branch
      %712 = sbr.rel (0) target = $region445
    $region444: #{transformer_forward.1} parent=1 // pred_region
      %713 = dma.done [#allocation54], 16
    $region445: #{transformer_forward.1} parent=1 // pred_fallthru
      _
    %v714 = vld [vmem:[#allocation2] sm:$0x1]
    %v715 = vld [vmem:[#allocation5] sm:$0x1]
    %v716 = vld [vmem:[#allocation7] sm:$0x1]
    %v717 = vld [vmem:[#allocation8] sm:$0x1]
    %v718 = vld [vmem:[#allocation10] sm:$0x1]
    %v719 = vld [vmem:[%s21] sm:$0xff]
    %v720 = vld [vmem:[%s21 + $0x8] sm:$0xff]
    %v721 = vld [vmem:[%s21 + $0x10] sm:$0xff]
    %v722 = vld [vmem:[%s21 + $0x18] sm:$0xff]
    %v723 = vld [vmem:[%s23] sm:$0xff]
    %v724 = vld [vmem:[%s23 + $0x8] sm:$0xff]
    %v725 = vld [vmem:[%s23 + $0x10] sm:$0xff]
    %v726 = vld [vmem:[%s23 + $0x18] sm:$0xff]
    %v727 = vld [vmem:[%s25] sm:$0xff]
    %v728 = vld [vmem:[%s25 + $0x8] sm:$0xff]
    %v729 = vld [vmem:[%s25 + $0x10] sm:$0xff]
    %v730 = vld [vmem:[%s25 + $0x18] sm:$0xff]
    %v731 = vld [vmem:[#allocation11] sm:$0x1]
    %v732 = vld [vmem:[#allocation13] sm:$0x1]
    %v733 = vld [vmem:[%s31] sm:$0xff]
    %v734 = vld [vmem:[%s31 + $0x8] sm:$0xff]
    %v735 = vld [vmem:[%s31 + $0x10] sm:$0xff]
    %v736 = vld [vmem:[%s31 + $0x18] sm:$0xff]
    %v737 = vld [vmem:[%s33] sm:$0xff]
    %v738 = vld [vmem:[%s33 + $0x8] sm:$0xff]
    %v739 = vld [vmem:[%s33 + $0x10] sm:$0xff]
    %v740 = vld [vmem:[%s33 + $0x18] sm:$0xff]
    %v741 = vld [vmem:[%s33 + $0x20] sm:$0xff]
    %v742 = vld [vmem:[%s33 + $0x28] sm:$0xff]
    %v743 = vld [vmem:[%s33 + $0x30] sm:$0xff]
    %v744 = vld [vmem:[%s33 + $0x38] sm:$0xff]
    %v745 = vld [vmem:[#allocation14] sm:$0x1]
    %v746 = vld [vmem:[#allocation16] sm:$0x1]
    %v747 = vld [vmem:[#allocation17] sm:$0x1]
    %v748 = vld [vmem:[#allocation19] sm:$0x1]
    %v749 = vld [vmem:[#allocation20] sm:$0x1]
    %v750 = vld [vmem:[#allocation22] sm:$0x1]
    %v751 = vld [vmem:[#allocation23] sm:$0x1]
    %v752 = vld [vmem:[#allocation25] sm:$0x1]
    %v753 = vld [vmem:[%s51] sm:$0xff]
    %v754 = vld [vmem:[%s51 + $0x8] sm:$0xff]
    %v755 = vld [vmem:[%s51 + $0x10] sm:$0xff]
    %v756 = vld [vmem:[%s51 + $0x18] sm:$0xff]
    %v757 = vld [vmem:[%s53] sm:$0xff]
    %v758 = vld [vmem:[%s53 + $0x8] sm:$0xff]
    %v759 = vld [vmem:[%s53 + $0x10] sm:$0xff]
    %v760 = vld [vmem:[%s53 + $0x18] sm:$0xff]
    %v761 = vld [vmem:[#allocation26] sm:$0x1]
    %v762 = vld [vmem:[%s57] sm:$0x1]
    %v763 = vld [vmem:[%s59] sm:$0x1]
    %v764 = vld [vmem:[%s61] sm:$0xff]
    %v765 = vld [vmem:[%s61 + $0x8] sm:$0xff]
    %v766 = vld [vmem:[%s61 + $0x10] sm:$0xff]
    %v767 = vld [vmem:[%s61 + $0x18] sm:$0xff]
    %v768 = vld [vmem:[%s63] sm:$0xff]
    %v769 = vld [vmem:[%s63 + $0x8] sm:$0xff]
    %v770 = vld [vmem:[%s63 + $0x10] sm:$0xff]
    %v771 = vld [vmem:[%s63 + $0x18] sm:$0xff]
    %v772 = vld [vmem:[%s65] sm:$0xff]
    %v773 = vld [vmem:[%s65 + $0x8] sm:$0xff]
    %v774 = vld [vmem:[%s65 + $0x10] sm:$0xff]
    %v775 = vld [vmem:[%s65 + $0x18] sm:$0xff]
    %v776 = vld [vmem:[%s67] sm:$0x1]
    %v777 = vld [vmem:[%s69] sm:$0x1]
    %v778 = vld [vmem:[%s71] sm:$0xff]
    %v779 = vld [vmem:[%s71 + $0x8] sm:$0xff]
    %v780 = vld [vmem:[%s71 + $0x10] sm:$0xff]
    %v781 = vld [vmem:[%s71 + $0x18] sm:$0xff]
    %v782 = vld [vmem:[%s73] sm:$0xff]
    %v783 = vld [vmem:[%s73 + $0x8] sm:$0xff]
    %v784 = vld [vmem:[%s73 + $0x10] sm:$0xff]
    %v785 = vld [vmem:[%s73 + $0x18] sm:$0xff]
    %v786 = vld [vmem:[%s73 + $0x20] sm:$0xff]
    %v787 = vld [vmem:[%s73 + $0x28] sm:$0xff]
    %v788 = vld [vmem:[%s73 + $0x30] sm:$0xff]
    %v789 = vld [vmem:[%s73 + $0x38] sm:$0xff]
    %v790 = vld [vmem:[%s75] sm:$0x1]
    %v791 = vld [vmem:[%s77] sm:$0x1]
    %v792 = vld [vmem:[%s79] sm:$0x1]
    %v793 = vld [vmem:[%s81] sm:$0x1]
    %v794 = vld [vmem:[%s83] sm:$0x1]
    %v795 = vld [vmem:[%s85] sm:$0x1]
    %v796 = vld [vmem:[%s87] sm:$0x1]
    %v797 = vld [vmem:[%s89] sm:$0x1]
    %v798 = vld [vmem:[%s91] sm:$0xff]
    %v799 = vld [vmem:[%s91 + $0x8] sm:$0xff]
    %v800 = vld [vmem:[%s91 + $0x10] sm:$0xff]
    %v801 = vld [vmem:[%s91 + $0x18] sm:$0xff]
    %v802 = vld [vmem:[%s93] sm:$0xff]
    %v803 = vld [vmem:[%s93 + $0x8] sm:$0xff]
    %v804 = vld [vmem:[%s93 + $0x10] sm:$0xff]
    %v805 = vld [vmem:[%s93 + $0x18] sm:$0xff]
    %v806 = vld [vmem:[%s95] sm:$0xff]
    %v807 = vld [vmem:[%s95 + $0x8] sm:$0xff]
    %v808 = vld [vmem:[#allocation28] sm:$0x1]
    %v809 = vld [vmem:[#allocation29] sm:$0x1]
    %v810 = vld [vmem:[#allocation31] sm:$0x1]
    %v811 = vld [vmem:[#allocation32] sm:$0x1]
    %v812 = vld [vmem:[%s105] sm:$0xff]
    %v813 = vld [vmem:[%s105 + $0x8] sm:$0xff]
    %v814 = vld [vmem:[%s105 + $0x10] sm:$0xff]
    %v815 = vld [vmem:[%s105 + $0x18] sm:$0xff]
    %v816 = vld [vmem:[%s107] sm:$0xff]
    %v817 = vld [vmem:[%s107 + $0x8] sm:$0xff]
    %v818 = vld [vmem:[%s107 + $0x10] sm:$0xff]
    %v819 = vld [vmem:[%s107 + $0x18] sm:$0xff]
    %v820 = vld [vmem:[#allocation34] sm:$0x1]
    %v821 = vld [vmem:[#allocation35] sm:$0x1]
    %v822 = vld [vmem:[%s113] sm:$0xff]
    %v823 = vld [vmem:[%s113 + $0x8] sm:$0xff]
    %v824 = vld [vmem:[%s113 + $0x10] sm:$0xff]
    %v825 = vld [vmem:[%s113 + $0x18] sm:$0xff]
    %v826 = vld [vmem:[%s115] sm:$0xff]
    %v827 = vld [vmem:[%s115 + $0x8] sm:$0xff]
    %v828 = vld [vmem:[%s115 + $0x10] sm:$0xff]
    %v829 = vld [vmem:[%s115 + $0x18] sm:$0xff]
    %v830 = vld [vmem:[%s115 + $0x20] sm:$0xff]
    %v831 = vld [vmem:[%s115 + $0x28] sm:$0xff]
    %v832 = vld [vmem:[%s115 + $0x30] sm:$0xff]
    %v833 = vld [vmem:[%s115 + $0x38] sm:$0xff]
    %v834 = vld [vmem:[#allocation37] sm:$0x1]
    %v835 = vld [vmem:[#allocation38] sm:$0x1]
    %v836 = vld [vmem:[#allocation40] sm:$0x1]
    %v837 = vld [vmem:[#allocation41] sm:$0x1]
    %v838 = vld [vmem:[#allocation43] sm:$0x1]
    %v839 = vld [vmem:[#allocation44] sm:$0x1]
    %v840 = vld [vmem:[%s129] sm:$0xff]
    %v841 = vld [vmem:[%s129 + $0x8] sm:$0xff]
    %v842 = vld [vmem:[%s129 + $0x10] sm:$0xff]
    %v843 = vld [vmem:[%s129 + $0x18] sm:$0xff]
    %v844 = vld [vmem:[%s131] sm:$0xff]
    %v845 = vld [vmem:[%s131 + $0x8] sm:$0xff]
    %v846 = vld [vmem:[%s131 + $0x10] sm:$0xff]
    %v847 = vld [vmem:[%s131 + $0x18] sm:$0xff]
    %v848 = vld [vmem:[#allocation46] sm:$0x1]
    %v849 = vld [vmem:[#allocation47] sm:$0x1]
    %v850 = vld [vmem:[%s137] sm:$0xff]
    %v851 = vld [vmem:[%s137 + $0x8] sm:$0xff]
    %v852 = vld [vmem:[%s137 + $0x10] sm:$0xff]
    %v853 = vld [vmem:[%s137 + $0x18] sm:$0xff]
    %v854 = vld [vmem:[%s139] sm:$0xff]
    %v855 = vld [vmem:[%s139 + $0x8] sm:$0xff]
    %v856 = vld [vmem:[%s139 + $0x10] sm:$0xff]
    %v857 = vld [vmem:[%s139 + $0x18] sm:$0xff]
    %v858 = vld [vmem:[%s139 + $0x20] sm:$0xff]
    %v859 = vld [vmem:[%s139 + $0x28] sm:$0xff]
    %v860 = vld [vmem:[%s139 + $0x30] sm:$0xff]
    %v861 = vld [vmem:[%s139 + $0x38] sm:$0xff]
    %v862 = vld [vmem:[#allocation49] sm:$0x1]
    %v863 = vld [vmem:[#allocation50] sm:$0x1]
    %v864 = vld [vmem:[#allocation52] sm:$0x1]
    %v865 = vld [vmem:[#allocation53] sm:$0x1]
    %v866 = vld [vmem:[#allocation55] sm:$0x1]
    %v867 = vld [vmem:[%s151] sm:$0xff]
    %v868 = vld [vmem:[%s151 + $0x8] sm:$0xff]
    %v869 = vld [vmem:[%s151 + $0x10] sm:$0xff]
    %v870 = vld [vmem:[%s151 + $0x18] sm:$0xff]
    %v871 = vld [vmem:[%s5] sm:$0xff]
    %v872 = vld [vmem:[%s5 + $0x8] sm:$0xff]
    %v873 = vld [vmem:[%s7] sm:$0xff]
    %v874 = vld [vmem:[%s7 + $0x8] sm:$0xff]
    %v875 = vld [vmem:[%s9] sm:$0xff]
    %v876 = vld [vmem:[%s9 + $0x8] sm:$0xff]
    %v877 = vld [vmem:[%s1] sm:$0xff]
    %v878 = vld [vmem:[%s1 + $0x8] sm:$0xff]
    %v879 = vlaneseq
    %v880 = vand.u32 %v879, 127
    %881 = vset.pattern.permute.xlu0 0
    %882 = vperm.xlu0 %881, %v877
    %v883 = vpop.permute.xlu0 %882
    %884 = vset.pattern.permute.xlu0 0
    %885 = vperm.xlu0 %884, %v878
    %v886 = vpop.permute.xlu0 %885
    %vm887 = vcmp.eq.s32.totalorder %v883, %v880
    %vm888 = vcmp.eq.s32.totalorder %v886, %v880
    %v889 = vsel %vm887, 1.0, 0.0
    %v890 = vsel %vm888, 1.0, 0.0
    %vm891 = vcmask 130048
    %v893 = vsel %vm891, %v889, 0
    %v896 = vsel %vm891, %v890, 0
    %898 = vmatprep.subr.mxu0 0.0
    %899 = vmatpush1.msra.mxu0 %v806
    %900 = vmatprep.subr.mxu0 0.0
    %901 = vmatpush1.msra.mxu0 %v807
    %902 = vmatprep.subr.mxu0 0.0
    %903 = vmatpush1.msra.mxu0 0.0
    %904 = vmatprep.subr.mxu0 0.0
    %905 = vmatpush1.msra.mxu0 0.0
    %906 = vmatprep.subr.mxu0 0.0
    %907 = vmatpush1.msra.mxu0 0.0
    %908 = vmatprep.subr.mxu0 0.0
    %909 = vmatpush1.msra.mxu0 0.0
    %910 = vmatprep.subr.mxu0 0.0
    %911 = vmatpush1.msra.mxu0 0.0
    %912 = vmatprep.subr.mxu0 0.0
    %913 = vmatpush1.msra.mxu0 0.0
    %914 = vmatprep.subr.mxu0 0.0
    %915 = vmatpush1.msra.mxu0 0.0
    %916 = vmatprep.subr.mxu0 0.0
    %917 = vmatpush1.msra.mxu0 0.0
    %918 = vmatprep.subr.mxu0 0.0
    %919 = vmatpush1.msra.mxu0 0.0
    %920 = vmatprep.subr.mxu0 0.0
    %921 = vmatpush1.msra.mxu0 0.0
    %922 = vmatprep.subr.mxu0 0.0
    %923 = vmatpush1.msra.mxu0 0.0
    %924 = vmatprep.subr.mxu0 0.0
    %925 = vmatpush1.msra.mxu0 0.0
    %926 = vmatprep.subr.mxu0 0.0
    %927 = vmatpush1.msra.mxu0 0.0
    %928 = vmatprep.subr.mxu0 0.0
    %929 = vmatpush1.msra.mxu0 0.0
    %930 = vmatprep.subr.mxu0 0.0
    %931 = vmatpush1.msra.mxu0 0.0
    %932 = vmatprep.subr.mxu0 0.0
    %933 = vmatpush1.msra.mxu0 0.0
    %934 = vmatprep.subr.mxu0 0.0
    %935 = vmatpush1.msra.mxu0 0.0
    %936 = vmatprep.subr.mxu0 0.0
    %937 = vmatpush1.msra.mxu0 0.0
    %938 = vmatprep.subr.mxu0 0.0
    %939 = vmatpush1.msra.mxu0 0.0
    %940 = vmatprep.subr.mxu0 0.0
    %941 = vmatpush1.msra.mxu0 0.0
    %942 = vmatprep.subr.mxu0 0.0
    %943 = vmatpush1.msra.mxu0 0.0
    %944 = vmatprep.subr.mxu0 0.0
    %945 = vmatpush1.msra.mxu0 0.0
    %946 = vmatprep.subr.mxu0 0.0
    %947 = vmatpush1.msra.mxu0 0.0
    %948 = vmatprep.subr.mxu0 0.0
    %949 = vmatpush1.msra.mxu0 0.0
    %950 = vmatprep.subr.mxu0 0.0
    %951 = vmatpush1.msra.mxu0 0.0
    %952 = vmatprep.subr.mxu0 0.0
    %953 = vmatpush1.msra.mxu0 0.0
    %954 = vmatprep.subr.mxu0 0.0
    %955 = vmatpush1.msra.mxu0 0.0
    %956 = vmatprep.subr.mxu0 0.0
    %957 = vmatpush1.msra.mxu0 0.0
    %958 = vmatprep.subr.mxu0 0.0
    %959 = vmatpush1.msra.mxu0 0.0
    %960 = vmatprep.subr.mxu0 0.0
    %961 = vmatpush1.msra.mxu0 0.0
    %962 = vmatprep.mubr.f32.mxu0 0.0
    %963 = vmatmul.mubr.f32.gmra.mrb[0].mxu0 %v893
    %v964 = vpop.f32.mrb[0].mxu0
    %v965 = vadd.f32 0.0, %v964
    %v966 = vpop.f32.mrb[0].mxu0
    %967 = vmatprep.mubr.f32.mxu0 0.0
    %968 = vmatmul.mubr.f32.gmra.mrb[0].mxu0 %v896
    %v969 = vpop.f32.mrb[0].mxu0
    %v970 = vadd.f32 0.0, %v969
    %v971 = vpop.f32.mrb[0].mxu0
    %972 = vdwg.mxu0
    %v973 = vmul.f32 %v965, 5.656854
    %v974 = vmul.f32 %v970, 5.656854
    %v976 = vlaneseq
    %v977 = vshrl.u32 %v976, 7
    %v978 = vsub.s32 0, %v977
    %v979 = vrot.slane %v811, %v978
    %vm981 = vcmask 261120
    %v983 = vsel %vm981, %v973, 0
    %v986 = vsel %vm981, %v974, 0
    %988 = vmatprep.subr.mxu0 0.0
    %989 = vmatpush1.msra.mxu0 %v816
    %990 = vmatprep.subr.mxu0 0.0
    %991 = vmatpush1.msra.mxu0 %v817
    %992 = vmatprep.subr.mxu0 0.0
    %993 = vmatpush1.msra.mxu0 %v818
    %994 = vmatprep.subr.mxu0 0.0
    %995 = vmatpush1.msra.mxu0 %v819
    %996 = vmatprep.subr.mxu0 0.0
    %997 = vmatpush1.msra.mxu0 0.0
    %998 = vmatprep.subr.mxu0 0.0
    %999 = vmatpush1.msra.mxu0 0.0
    %1000 = vmatprep.subr.mxu0 0.0
    %1001 = vmatpush1.msra.mxu0 0.0
    %1002 = vmatprep.subr.mxu0 0.0
    %1003 = vmatpush1.msra.mxu0 0.0
    %1004 = vmatprep.subr.mxu0 0.0
    %1005 = vmatpush1.msra.mxu0 0.0
    %1006 = vmatprep.subr.mxu0 0.0
    %1007 = vmatpush1.msra.mxu0 0.0
    %1008 = vmatprep.subr.mxu0 0.0
    %1009 = vmatpush1.msra.mxu0 0.0
    %1010 = vmatprep.subr.mxu0 0.0
    %1011 = vmatpush1.msra.mxu0 0.0
    %1012 = vmatprep.subr.mxu0 0.0
    %1013 = vmatpush1.msra.mxu0 0.0
    %1014 = vmatprep.subr.mxu0 0.0
    %1015 = vmatpush1.msra.mxu0 0.0
    %1016 = vmatprep.subr.mxu0 0.0
    %1017 = vmatpush1.msra.mxu0 0.0
    %1018 = vmatprep.subr.mxu0 0.0
    %1019 = vmatpush1.msra.mxu0 0.0
    %1020 = vmatprep.subr.mxu0 0.0
    %1021 = vmatpush1.msra.mxu0 0.0
    %1022 = vmatprep.subr.mxu0 0.0
    %1023 = vmatpush1.msra.mxu0 0.0
    %1024 = vmatprep.subr.mxu0 0.0
    %1025 = vmatpush1.msra.mxu0 0.0
    %1026 = vmatprep.subr.mxu0 0.0
    %1027 = vmatpush1.msra.mxu0 0.0
    %1028 = vmatprep.subr.mxu0 0.0
    %1029 = vmatpush1.msra.mxu0 0.0
    %1030 = vmatprep.subr.mxu0 0.0
    %1031 = vmatpush1.msra.mxu0 0.0
    %1032 = vmatprep.subr.mxu0 0.0
    %1033 = vmatpush1.msra.mxu0 0.0
    %1034 = vmatprep.subr.mxu0 0.0
    %1035 = vmatpush1.msra.mxu0 0.0
    %1036 = vmatprep.subr.mxu0 0.0
    %1037 = vmatpush1.msra.mxu0 0.0
    %1038 = vmatprep.subr.mxu0 0.0
    %1039 = vmatpush1.msra.mxu0 0.0
    %1040 = vmatprep.subr.mxu0 0.0
    %1041 = vmatpush1.msra.mxu0 0.0
    %1042 = vmatprep.subr.mxu0 0.0
    %1043 = vmatpush1.msra.mxu0 0.0
    %1044 = vmatprep.subr.mxu0 0.0
    %1045 = vmatpush1.msra.mxu0 0.0
    %1046 = vmatprep.subr.mxu0 0.0
    %1047 = vmatpush1.msra.mxu0 0.0
    %1048 = vmatprep.subr.mxu0 0.0
    %1049 = vmatpush1.msra.mxu0 0.0
    %1050 = vmatprep.subr.mxu0 0.0
    %1051 = vmatpush1.msra.mxu0 0.0
    %1052 = vmatprep.mubr.f32.mxu0 0.0
    %1053 = vmatmul.mubr.f32.gmra.mrb[0].mxu0 %v983
    %v1054 = vpop.f32.mrb[0].mxu0
    %v1055 = vadd.f32 %v979, %v1054
    %v1056 = vpop.f32.mrb[0].mxu0
    %1057 = vmatprep.mubr.f32.mxu0 0.0
    %1058 = vmatmul.mubr.f32.gmra.mrb[0].mxu0 %v986
    %v1059 = vpop.f32.mrb[0].mxu0
    %v1060 = vadd.f32 %v979, %v1059
    %v1061 = vpop.f32.mrb[0].mxu0
    %1062 = vdwg.mxu0
    %1065 = vrot.lane.b32.xlu0 %v1055, 96
    %v1066 = vpop.permute.xlu0 %1065
    %1067 = vrot.lane.b32.xlu0 %v1060, 96
    %v1068 = vpop.permute.xlu0 %1067
    %vm1069 = vcmask 64512
    %v1070 = vsel %vm1069, %v1055, 0
    %v1072 = vsel %vm1069, %v1060, 0
    %v1074 = vsel %vm1069, %v1066, 0
    %v1076 = vsel %vm1069, %v1068, 0
    %1078 = vmatprep.subr.mxu0 0.0
    %1079 = vmatpush1.xpose.msra.mxu0 %v1074
    %1080 = vmatprep.subr.mxu0 0.0
    %1081 = vmatpush1.xpose.msra.mxu0 %v1076
    %1082 = vmatprep.subr.mxu0 0.0
    %1083 = vmatpush1.xpose.msra.mxu0 0.0
    %1084 = vmatprep.subr.mxu0 0.0
    %1085 = vmatpush1.xpose.msra.mxu0 0.0
    %1086 = vmatprep.subr.mxu0 0.0
    %1087 = vmatpush1.xpose.msra.mxu0 0.0
    %1088 = vmatprep.subr.mxu0 0.0
    %1089 = vmatpush1.xpose.msra.mxu0 0.0
    %1090 = vmatprep.subr.mxu0 0.0
    %1091 = vmatpush1.xpose.msra.mxu0 0.0
    %1092 = vmatprep.subr.mxu0 0.0
    %1093 = vmatpush1.xpose.msra.mxu0 0.0
    %1094 = vmatprep.subr.mxu0 0.0
    %1095 = vmatpush1.xpose.msra.mxu0 0.0
    %1096 = vmatprep.subr.mxu0 0.0
    %1097 = vmatpush1.xpose.msra.mxu0 0.0
    %1098 = vmatprep.subr.mxu0 0.0
    %1099 = vmatpush1.xpose.msra.mxu0 0.0
    %1100 = vmatprep.subr.mxu0 0.0
    %1101 = vmatpush1.xpose.msra.mxu0 0.0
    %1102 = vmatprep.subr.mxu0 0.0
    %1103 = vmatpush1.xpose.msra.mxu0 0.0
    %1104 = vmatprep.subr.mxu0 0.0
    %1105 = vmatpush1.xpose.msra.mxu0 0.0
    %1106 = vmatprep.subr.mxu0 0.0
    %1107 = vmatpush1.xpose.msra.mxu0 0.0
    %1108 = vmatprep.subr.mxu0 0.0
    %1109 = vmatpush1.xpose.msra.mxu0 0.0
    %1110 = vmatprep.subr.mxu0 0.0
    %1111 = vmatpush1.xpose.msra.mxu0 0.0
    %1112 = vmatprep.subr.mxu0 0.0
    %1113 = vmatpush1.xpose.msra.mxu0 0.0
    %1114 = vmatprep.subr.mxu0 0.0
    %1115 = vmatpush1.xpose.msra.mxu0 0.0
    %1116 = vmatprep.subr.mxu0 0.0
    %1117 = vmatpush1.xpose.msra.mxu0 0.0
    %1118 = vmatprep.subr.mxu0 0.0
    %1119 = vmatpush1.xpose.msra.mxu0 0.0
    %1120 = vmatprep.subr.mxu0 0.0
    %1121 = vmatpush1.xpose.msra.mxu0 0.0
    %1122 = vmatprep.subr.mxu0 0.0
    %1123 = vmatpush1.xpose.msra.mxu0 0.0
    %1124 = vmatprep.subr.mxu0 0.0
    %1125 = vmatpush1.xpose.msra.mxu0 0.0
    %1126 = vmatprep.subr.mxu0 0.0
    %1127 = vmatpush1.xpose.msra.mxu0 0.0
    %1128 = vmatprep.subr.mxu0 0.0
    %1129 = vmatpush1.xpose.msra.mxu0 0.0
    %1130 = vmatprep.subr.mxu0 0.0
    %1131 = vmatpush1.xpose.msra.mxu0 0.0
    %1132 = vmatprep.subr.mxu0 0.0
    %1133 = vmatpush1.xpose.msra.mxu0 0.0
    %1134 = vmatprep.subr.mxu0 0.0
    %1135 = vmatpush1.xpose.msra.mxu0 0.0
    %1136 = vmatprep.subr.mxu0 0.0
    %1137 = vmatpush1.xpose.msra.mxu0 0.0
    %1138 = vmatprep.subr.mxu0 0.0
    %1139 = vmatpush1.xpose.msra.mxu0 0.0
    %1140 = vmatprep.subr.mxu0 0.0
    %1141 = vmatpush1.xpose.msra.mxu0 0.0
    %1142 = vmatprep.mubr.f32.mxu0 0.0
    %1143 = vmatmul.mubr.f32.gmra.mrb[0].mxu0 %v1070
    %v1144 = vpop.f32.mrb[0].mxu0
    %v1145 = vadd.f32 0.0, %v1144
    %v1146 = vpop.f32.mrb[0].mxu0
    %1147 = vmatprep.mubr.f32.mxu0 0.0
    %1148 = vmatmul.mubr.f32.gmra.mrb[0].mxu0 %v1072
    %v1149 = vpop.f32.mrb[0].mxu0
    %v1150 = vadd.f32 0.0, %v1149
    %v1151 = vpop.f32.mrb[0].mxu0
    %1152 = vdwg.mxu0
    %v1153 = vmul.f32 %v1145, 0.35355338
    %v1154 = vmul.f32 %v1150, 0.35355338
    %v1155 = vadd.f32 %v1153, %v871
    %v1156 = vadd.f32 %v1154, %v872
    %v1157 = vsel %vm891, %v1155, -inf
    %1158 = vmax.xlane.f32.xlu0 %v1157
    %v1159 = vpop.xlane.xlu0 %1158
    %v1160 = vsel %vm891, %v1156, -inf
    %1161 = vmax.xlane.f32.xlu0 %v1160
    %v1162 = vpop.xlane.xlu0 %1161
    %v1163 = vsub.f32 %v1155, %v1159
    %v1164 = vsub.f32 %v1156, %v1162
    %v1165 = vmul.f32 %v1163, 1.442695
    %v1166 = vpow.pop %v1165
    %v1167 = vmul.f32 %v1164, 1.442695
    %v1168 = vpow.pop %v1167
    %v1169 = vsel %vm891, %v1166, 0.0
    %1170 = vadd.xlane.f32.xlu0 %v1169
    %v1171 = vpop.xlane.xlu0 %1170
    %v1172 = vsel %vm891, %v1168, 0.0
    %1173 = vadd.xlane.f32.xlu0 %v1172
    %v1174 = vpop.xlane.xlu0 %1173
    %v1175 = vrcp.pop %v1171
    %v1176 = vrcp.pop %v1174
    %v1177 = vmul.f32 %v1166, %v1175
    %v1178 = vmul.f32 %v1168, %v1176
    %1179 = vrot.lane.b32.xlu0 %v1055, 64
    %v1180 = vpop.permute.xlu0 %1179
    %1181 = vrot.lane.b32.xlu0 %v1060, 64
    %v1182 = vpop.permute.xlu0 %1181
    %v1186 = vsel %vm891, %v1177, 0
    %v1189 = vsel %vm891, %v1178, 0
    %1191 = vmatprep.subr.mxu0 0.0
    %1192 = vmatpush1.msra.mxu0 %v1180
    %1193 = vmatprep.subr.mxu0 0.0
    %1194 = vmatpush1.msra.mxu0 %v1182
    %1195 = vmatprep.subr.mxu0 0.0
    %1196 = vmatpush1.msra.mxu0 0.0
    %1197 = vmatprep.subr.mxu0 0.0
    %1198 = vmatpush1.msra.mxu0 0.0
    %1199 = vmatprep.subr.mxu0 0.0
    %1200 = vmatpush1.msra.mxu0 0.0
    %1201 = vmatprep.subr.mxu0 0.0
    %1202 = vmatpush1.msra.mxu0 0.0
    %1203 = vmatprep.subr.mxu0 0.0
    %1204 = vmatpush1.msra.mxu0 0.0
    %1205 = vmatprep.subr.mxu0 0.0
    %1206 = vmatpush1.msra.mxu0 0.0
    %1207 = vmatprep.subr.mxu0 0.0
    %1208 = vmatpush1.msra.mxu0 0.0
    %1209 = vmatprep.subr.mxu0 0.0
    %1210 = vmatpush1.msra.mxu0 0.0
    %1211 = vmatprep.subr.mxu0 0.0
    %1212 = vmatpush1.msra.mxu0 0.0
    %1213 = vmatprep.subr.mxu0 0.0
    %1214 = vmatpush1.msra.mxu0 0.0
    %1215 = vmatprep.subr.mxu0 0.0
    %1216 = vmatpush1.msra.mxu0 0.0
    %1217 = vmatprep.subr.mxu0 0.0
    %1218 = vmatpush1.msra.mxu0 0.0
    %1219 = vmatprep.subr.mxu0 0.0
    %1220 = vmatpush1.msra.mxu0 0.0
    %1221 = vmatprep.subr.mxu0 0.0
    %1222 = vmatpush1.msra.mxu0 0.0
    %1223 = vmatprep.subr.mxu0 0.0
    %1224 = vmatpush1.msra.mxu0 0.0
    %1225 = vmatprep.subr.mxu0 0.0
    %1226 = vmatpush1.msra.mxu0 0.0
    %1227 = vmatprep.subr.mxu0 0.0
    %1228 = vmatpush1.msra.mxu0 0.0
    %1229 = vmatprep.subr.mxu0 0.0
    %1230 = vmatpush1.msra.mxu0 0.0
    %1231 = vmatprep.subr.mxu0 0.0
    %1232 = vmatpush1.msra.mxu0 0.0
    %1233 = vmatprep.subr.mxu0 0.0
    %1234 = vmatpush1.msra.mxu0 0.0
    %1235 = vmatprep.subr.mxu0 0.0
    %1236 = vmatpush1.msra.mxu0 0.0
    %1237 = vmatprep.subr.mxu0 0.0
    %1238 = vmatpush1.msra.mxu0 0.0
    %1239 = vmatprep.subr.mxu0 0.0
    %1240 = vmatpush1.msra.mxu0 0.0
    %1241 = vmatprep.subr.mxu0 0.0
    %1242 = vmatpush1.msra.mxu0 0.0
    %1243 = vmatprep.subr.mxu0 0.0
    %1244 = vmatpush1.msra.mxu0 0.0
    %1245 = vmatprep.subr.mxu0 0.0
    %1246 = vmatpush1.msra.mxu0 0.0
    %1247 = vmatprep.subr.mxu0 0.0
    %1248 = vmatpush1.msra.mxu0 0.0
    %1249 = vmatprep.subr.mxu0 0.0
    %1250 = vmatpush1.msra.mxu0 0.0
    %1251 = vmatprep.subr.mxu0 0.0
    %1252 = vmatpush1.msra.mxu0 0.0
    %1253 = vmatprep.subr.mxu0 0.0
    %1254 = vmatpush1.msra.mxu0 0.0
    %1255 = vmatprep.mubr.f32.mxu0 0.0
    %1256 = vmatmul.mubr.f32.gmra.mrb[0].mxu0 %v1186
    %v1257 = vpop.f32.mrb[0].mxu0
    %v1258 = vadd.f32 0.0, %v1257
    %v1259 = vpop.f32.mrb[0].mxu0
    %1260 = vmatprep.mubr.f32.mxu0 0.0
    %1261 = vmatmul.mubr.f32.gmra.mrb[0].mxu0 %v1189
    %v1262 = vpop.f32.mrb[0].mxu0
    %v1263 = vadd.f32 0.0, %v1262
    %v1264 = vpop.f32.mrb[0].mxu0
    %1265 = vdwg.mxu0
    %1266 = vrot.lane.b32.xlu0 %v1055, 120
    %v1267 = vpop.permute.xlu0 %1266
    %1268 = vrot.lane.b32.xlu0 %v1060, 120
    %v1269 = vpop.permute.xlu0 %1268
    %1270 = vrot.lane.b32.xlu0 %v1055, 88
    %v1271 = vpop.permute.xlu0 %1270
    %1272 = vrot.lane.b32.xlu0 %v1060, 88
    %v1273 = vpop.permute.xlu0 %1272
    %v1274 = vsel %vm1069, %v1267, 0
    %v1276 = vsel %vm1069, %v1269, 0
    %v1278 = vsel %vm1069, %v1271, 0
    %v1280 = vsel %vm1069, %v1273, 0
    %1282 = vmatprep.subr.mxu0 0.0
    %1283 = vmatpush1.xpose.msra.mxu0 %v1278
    %1284 = vmatprep.subr.mxu0 0.0
    %1285 = vmatpush1.xpose.msra.mxu0 %v1280
    %1286 = vmatprep.subr.mxu0 0.0
    %1287 = vmatpush1.xpose.msra.mxu0 0.0
    %1288 = vmatprep.subr.mxu0 0.0
    %1289 = vmatpush1.xpose.msra.mxu0 0.0
    %1290 = vmatprep.subr.mxu0 0.0
    %1291 = vmatpush1.xpose.msra.mxu0 0.0
    %1292 = vmatprep.subr.mxu0 0.0
    %1293 = vmatpush1.xpose.msra.mxu0 0.0
    %1294 = vmatprep.subr.mxu0 0.0
    %1295 = vmatpush1.xpose.msra.mxu0 0.0
    %1296 = vmatprep.subr.mxu0 0.0
    %1297 = vmatpush1.xpose.msra.mxu0 0.0
    %1298 = vmatprep.subr.mxu0 0.0
    %1299 = vmatpush1.xpose.msra.mxu0 0.0
    %1300 = vmatprep.subr.mxu0 0.0
    %1301 = vmatpush1.xpose.msra.mxu0 0.0
    %1302 = vmatprep.subr.mxu0 0.0
    %1303 = vmatpush1.xpose.msra.mxu0 0.0
    %1304 = vmatprep.subr.mxu0 0.0
    %1305 = vmatpush1.xpose.msra.mxu0 0.0
    %1306 = vmatprep.subr.mxu0 0.0
    %1307 = vmatpush1.xpose.msra.mxu0 0.0
    %1308 = vmatprep.subr.mxu0 0.0
    %1309 = vmatpush1.xpose.msra.mxu0 0.0
    %1310 = vmatprep.subr.mxu0 0.0
    %1311 = vmatpush1.xpose.msra.mxu0 0.0
    %1312 = vmatprep.subr.mxu0 0.0
    %1313 = vmatpush1.xpose.msra.mxu0 0.0
    %1314 = vmatprep.subr.mxu0 0.0
    %1315 = vmatpush1.xpose.msra.mxu0 0.0
    %1316 = vmatprep.subr.mxu0 0.0
    %1317 = vmatpush1.xpose.msra.mxu0 0.0
    %1318 = vmatprep.subr.mxu0 0.0
    %1319 = vmatpush1.xpose.msra.mxu0 0.0
    %1320 = vmatprep.subr.mxu0 0.0
    %1321 = vmatpush1.xpose.msra.mxu0 0.0
    %1322 = vmatprep.subr.mxu0 0.0
    %1323 = vmatpush1.xpose.msra.mxu0 0.0
    %1324 = vmatprep.subr.mxu0 0.0
    %1325 = vmatpush1.xpose.msra.mxu0 0.0
    %1326 = vmatprep.subr.mxu0 0.0
    %1327 = vmatpush1.xpose.msra.mxu0 0.0
    %1328 = vmatprep.subr.mxu0 0.0
    %1329 = vmatpush1.xpose.msra.mxu0 0.0
    %1330 = vmatprep.subr.mxu0 0.0
    %1331 = vmatpush1.xpose.msra.mxu0 0.0
    %1332 = vmatprep.subr.mxu0 0.0
    %1333 = vmatpush1.xpose.msra.mxu0 0.0
    %1334 = vmatprep.subr.mxu0 0.0
    %1335 = vmatpush1.xpose.msra.mxu0 0.0
    %1336 = vmatprep.subr.mxu0 0.0
    %1337 = vmatpush1.xpose.msra.mxu0 0.0
    %1338 = vmatprep.subr.mxu0 0.0
    %1339 = vmatpush1.xpose.msra.mxu0 0.0
    %1340 = vmatprep.subr.mxu0 0.0
    %1341 = vmatpush1.xpose.msra.mxu0 0.0
    %1342 = vmatprep.subr.mxu0 0.0
    %1343 = vmatpush1.xpose.msra.mxu0 0.0
    %1344 = vmatprep.subr.mxu0 0.0
    %1345 = vmatpush1.xpose.msra.mxu0 0.0
    %1346 = vmatprep.mubr.f32.mxu0 0.0
    %1347 = vmatmul.mubr.f32.gmra.mrb[0].mxu0 %v1274
    %v1348 = vpop.f32.mrb[0].mxu0
    %v1349 = vadd.f32 0.0, %v1348
    %v1350 = vpop.f32.mrb[0].mxu0
    %1351 = vmatprep.mubr.f32.mxu0 0.0
    %1352 = vmatmul.mubr.f32.gmra.mrb[0].mxu0 %v1276
    %v1353 = vpop.f32.mrb[0].mxu0
    %v1354 = vadd.f32 0.0, %v1353
    %v1355 = vpop.f32.mrb[0].mxu0
    %1356 = vdwg.mxu0
    %v1357 = vmul.f32 %v1349, 0.35355338
    %v1358 = vmul.f32 %v1354, 0.35355338
    %v1359 = vadd.f32 %v1357, %v871
    %v1360 = vadd.f32 %v1358, %v872
    %v1361 = vsel %vm891, %v1359, -inf
    %1362 = vmax.xlane.f32.xlu0 %v1361
    %v1363 = vpop.xlane.xlu0 %1362
    %v1364 = vsel %vm891, %v1360, -inf
    %1365 = vmax.xlane.f32.xlu0 %v1364
    %v1366 = vpop.xlane.xlu0 %1365
    %v1367 = vsub.f32 %v1359, %v1363
    %v1368 = vsub.f32 %v1360, %v1366
    %v1369 = vmul.f32 %v1367, 1.442695
    %v1370 = vpow.pop %v1369
    %v1371 = vmul.f32 %v1368, 1.442695
    %v1372 = vpow.pop %v1371
    %v1373 = vsel %vm891, %v1370, 0.0
    %1374 = vadd.xlane.f32.xlu0 %v1373
    %v1375 = vpop.xlane.xlu0 %1374
    %v1376 = vsel %vm891, %v1372, 0.0
    %1377 = vadd.xlane.f32.xlu0 %v1376
    %v1378 = vpop.xlane.xlu0 %1377
    %v1379 = vrcp.pop %v1375
    %v1380 = vrcp.pop %v1378
    %v1381 = vmul.f32 %v1370, %v1379
    %v1382 = vmul.f32 %v1372, %v1380
    %1383 = vrot.lane.b32.xlu0 %v1055, 56
    %v1384 = vpop.permute.xlu0 %1383
    %1385 = vrot.lane.b32.xlu0 %v1060, 56
    %v1386 = vpop.permute.xlu0 %1385
    %v1390 = vsel %vm891, %v1381, 0
    %v1393 = vsel %vm891, %v1382, 0
    %1395 = vmatprep.subr.mxu0 0.0
    %1396 = vmatpush1.msra.mxu0 %v1384
    %1397 = vmatprep.subr.mxu0 0.0
    %1398 = vmatpush1.msra.mxu0 %v1386
    %1399 = vmatprep.subr.mxu0 0.0
    %1400 = vmatpush1.msra.mxu0 0.0
    %1401 = vmatprep.subr.mxu0 0.0
    %1402 = vmatpush1.msra.mxu0 0.0
    %1403 = vmatprep.subr.mxu0 0.0
    %1404 = vmatpush1.msra.mxu0 0.0
    %1405 = vmatprep.subr.mxu0 0.0
    %1406 = vmatpush1.msra.mxu0 0.0
    %1407 = vmatprep.subr.mxu0 0.0
    %1408 = vmatpush1.msra.mxu0 0.0
    %1409 = vmatprep.subr.mxu0 0.0
    %1410 = vmatpush1.msra.mxu0 0.0
    %1411 = vmatprep.subr.mxu0 0.0
    %1412 = vmatpush1.msra.mxu0 0.0
    %1413 = vmatprep.subr.mxu0 0.0
    %1414 = vmatpush1.msra.mxu0 0.0
    %1415 = vmatprep.subr.mxu0 0.0
    %1416 = vmatpush1.msra.mxu0 0.0
    %1417 = vmatprep.subr.mxu0 0.0
    %1418 = vmatpush1.msra.mxu0 0.0
    %1419 = vmatprep.subr.mxu0 0.0
    %1420 = vmatpush1.msra.mxu0 0.0
    %1421 = vmatprep.subr.mxu0 0.0
    %1422 = vmatpush1.msra.mxu0 0.0
    %1423 = vmatprep.subr.mxu0 0.0
    %1424 = vmatpush1.msra.mxu0 0.0
    %1425 = vmatprep.subr.mxu0 0.0
    %1426 = vmatpush1.msra.mxu0 0.0
    %1427 = vmatprep.subr.mxu0 0.0
    %1428 = vmatpush1.msra.mxu0 0.0
    %1429 = vmatprep.subr.mxu0 0.0
    %1430 = vmatpush1.msra.mxu0 0.0
    %1431 = vmatprep.subr.mxu0 0.0
    %1432 = vmatpush1.msra.mxu0 0.0
    %1433 = vmatprep.subr.mxu0 0.0
    %1434 = vmatpush1.msra.mxu0 0.0
    %1435 = vmatprep.subr.mxu0 0.0
    %1436 = vmatpush1.msra.mxu0 0.0
    %1437 = vmatprep.subr.mxu0 0.0
    %1438 = vmatpush1.msra.mxu0 0.0
    %1439 = vmatprep.subr.mxu0 0.0
    %1440 = vmatpush1.msra.mxu0 0.0
    %1441 = vmatprep.subr.mxu0 0.0
    %1442 = vmatpush1.msra.mxu0 0.0
    %1443 = vmatprep.subr.mxu0 0.0
    %1444 = vmatpush1.msra.mxu0 0.0
    %1445 = vmatprep.subr.mxu0 0.0
    %1446 = vmatpush1.msra.mxu0 0.0
    %1447 = vmatprep.subr.mxu0 0.0
    %1448 = vmatpush1.msra.mxu0 0.0
    %1449 = vmatprep.subr.mxu0 0.0
    %1450 = vmatpush1.msra.mxu0 0.0
    %1451 = vmatprep.subr.mxu0 0.0
    %1452 = vmatpush1.msra.mxu0 0.0
    %1453 = vmatprep.subr.mxu0 0.0
    %1454 = vmatpush1.msra.mxu0 0.0
    %1455 = vmatprep.subr.mxu0 0.0
    %1456 = vmatpush1.msra.mxu0 0.0
    %1457 = vmatprep.subr.mxu0 0.0
    %1458 = vmatpush1.msra.mxu0 0.0
    %1459 = vmatprep.mubr.f32.mxu0 0.0
    %1460 = vmatmul.mubr.f32.gmra.mrb[0].mxu0 %v1390
    %v1461 = vpop.f32.mrb[0].mxu0
    %v1462 = vadd.f32 0.0, %v1461
    %v1463 = vpop.f32.mrb[0].mxu0
    %1464 = vmatprep.mubr.f32.mxu0 0.0
    %1465 = vmatmul.mubr.f32.gmra.mrb[0].mxu0 %v1393
    %v1466 = vpop.f32.mrb[0].mxu0
    %v1467 = vadd.f32 0.0, %v1466
    %v1468 = vpop.f32.mrb[0].mxu0
    %1469 = vdwg.mxu0
    %1470 = vrot.lane.b32.xlu0 %v1055, 112
    %v1471 = vpop.permute.xlu0 %1470
    %1472 = vrot.lane.b32.xlu0 %v1060, 112
    %v1473 = vpop.permute.xlu0 %1472
    %1474 = vrot.lane.b32.xlu0 %v1055, 80
    %v1475 = vpop.permute.xlu0 %1474
    %1476 = vrot.lane.b32.xlu0 %v1060, 80
    %v1477 = vpop.permute.xlu0 %1476
    %v1478 = vsel %vm1069, %v1471, 0
    %v1480 = vsel %vm1069, %v1473, 0
    %v1482 = vsel %vm1069, %v1475, 0
    %v1484 = vsel %vm1069, %v1477, 0
    %1486 = vmatprep.subr.mxu0 0.0
    %1487 = vmatpush1.xpose.msra.mxu0 %v1482
    %1488 = vmatprep.subr.mxu0 0.0
    %1489 = vmatpush1.xpose.msra.mxu0 %v1484
    %1490 = vmatprep.subr.mxu0 0.0
    %1491 = vmatpush1.xpose.msra.mxu0 0.0
    %1492 = vmatprep.subr.mxu0 0.0
    %1493 = vmatpush1.xpose.msra.mxu0 0.0
    %1494 = vmatprep.subr.mxu0 0.0
    %1495 = vmatpush1.xpose.msra.mxu0 0.0
    %1496 = vmatprep.subr.mxu0 0.0
    %1497 = vmatpush1.xpose.msra.mxu0 0.0
    %1498 = vmatprep.subr.mxu0 0.0
    %1499 = vmatpush1.xpose.msra.mxu0 0.0
    %1500 = vmatprep.subr.mxu0 0.0
    %1501 = vmatpush1.xpose.msra.mxu0 0.0
    %1502 = vmatprep.subr.mxu0 0.0
    %1503 = vmatpush1.xpose.msra.mxu0 0.0
    %1504 = vmatprep.subr.mxu0 0.0
    %1505 = vmatpush1.xpose.msra.mxu0 0.0
    %1506 = vmatprep.subr.mxu0 0.0
    %1507 = vmatpush1.xpose.msra.mxu0 0.0
    %1508 = vmatprep.subr.mxu0 0.0
    %1509 = vmatpush1.xpose.msra.mxu0 0.0
    %1510 = vmatprep.subr.mxu0 0.0
    %1511 = vmatpush1.xpose.msra.mxu0 0.0
    %1512 = vmatprep.subr.mxu0 0.0
    %1513 = vmatpush1.xpose.msra.mxu0 0.0
    %1514 = vmatprep.subr.mxu0 0.0
    %1515 = vmatpush1.xpose.msra.mxu0 0.0
    %1516 = vmatprep.subr.mxu0 0.0
    %1517 = vmatpush1.xpose.msra.mxu0 0.0
    %1518 = vmatprep.subr.mxu0 0.0
    %1519 = vmatpush1.xpose.msra.mxu0 0.0
    %1520 = vmatprep.subr.mxu0 0.0
    %1521 = vmatpush1.xpose.msra.mxu0 0.0
    %1522 = vmatprep.subr.mxu0 0.0
    %1523 = vmatpush1.xpose.msra.mxu0 0.0
    %1524 = vmatprep.subr.mxu0 0.0
    %1525 = vmatpush1.xpose.msra.mxu0 0.0
    %1526 = vmatprep.subr.mxu0 0.0
    %1527 = vmatpush1.xpose.msra.mxu0 0.0
    %1528 = vmatprep.subr.mxu0 0.0
    %1529 = vmatpush1.xpose.msra.mxu0 0.0
    %1530 = vmatprep.subr.mxu0 0.0
    %1531 = vmatpush1.xpose.msra.mxu0 0.0
    %1532 = vmatprep.subr.mxu0 0.0
    %1533 = vmatpush1.xpose.msra.mxu0 0.0
    %1534 = vmatprep.subr.mxu0 0.0
    %1535 = vmatpush1.xpose.msra.mxu0 0.0
    %1536 = vmatprep.subr.mxu0 0.0
    %1537 = vmatpush1.xpose.msra.mxu0 0.0
    %1538 = vmatprep.subr.mxu0 0.0
    %1539 = vmatpush1.xpose.msra.mxu0 0.0
    %1540 = vmatprep.subr.mxu0 0.0
    %1541 = vmatpush1.xpose.msra.mxu0 0.0
    %1542 = vmatprep.subr.mxu0 0.0
    %1543 = vmatpush1.xpose.msra.mxu0 0.0
    %1544 = vmatprep.subr.mxu0 0.0
    %1545 = vmatpush1.xpose.msra.mxu0 0.0
    %1546 = vmatprep.subr.mxu0 0.0
    %1547 = vmatpush1.xpose.msra.mxu0 0.0
    %1548 = vmatprep.subr.mxu0 0.0
    %1549 = vmatpush1.xpose.msra.mxu0 0.0
    %1550 = vmatprep.mubr.f32.mxu0 0.0
    %1551 = vmatmul.mubr.f32.gmra.mrb[0].mxu0 %v1478
    %v1552 = vpop.f32.mrb[0].mxu0
    %v1553 = vadd.f32 0.0, %v1552
    %v1554 = vpop.f32.mrb[0].mxu0
    %1555 = vmatprep.mubr.f32.mxu0 0.0
    %1556 = vmatmul.mubr.f32.gmra.mrb[0].mxu0 %v1480
    %v1557 = vpop.f32.mrb[0].mxu0
    %v1558 = vadd.f32 0.0, %v1557
    %v1559 = vpop.f32.mrb[0].mxu0
    %1560 = vdwg.mxu0
    %v1561 = vmul.f32 %v1553, 0.35355338
    %v1562 = vmul.f32 %v1558, 0.35355338
    %v1563 = vadd.f32 %v1561, %v871
    %v1564 = vadd.f32 %v1562, %v872
    %v1565 = vsel %vm891, %v1563, -inf
    %1566 = vmax.xlane.f32.xlu0 %v1565
    %v1567 = vpop.xlane.xlu0 %1566
    %v1568 = vsel %vm891, %v1564, -inf
    %1569 = vmax.xlane.f32.xlu0 %v1568
    %v1570 = vpop.xlane.xlu0 %1569
    %v1571 = vsub.f32 %v1563, %v1567
    %v1572 = vsub.f32 %v1564, %v1570
    %v1573 = vmul.f32 %v1571, 1.442695
    %v1574 = vpow.pop %v1573
    %v1575 = vmul.f32 %v1572, 1.442695
    %v1576 = vpow.pop %v1575
    %v1577 = vsel %vm891, %v1574, 0.0
    %1578 = vadd.xlane.f32.xlu0 %v1577
    %v1579 = vpop.xlane.xlu0 %1578
    %v1580 = vsel %vm891, %v1576, 0.0
    %1581 = vadd.xlane.f32.xlu0 %v1580
    %v1582 = vpop.xlane.xlu0 %1581
    %v1583 = vrcp.pop %v1579
    %v1584 = vrcp.pop %v1582
    %v1585 = vmul.f32 %v1574, %v1583
    %v1586 = vmul.f32 %v1576, %v1584
    %1587 = vrot.lane.b32.xlu0 %v1055, 48
    %v1588 = vpop.permute.xlu0 %1587
    %1589 = vrot.lane.b32.xlu0 %v1060, 48
    %v1590 = vpop.permute.xlu0 %1589
    %v1594 = vsel %vm891, %v1585, 0
    %v1597 = vsel %vm891, %v1586, 0
    %1599 = vmatprep.subr.mxu0 0.0
    %1600 = vmatpush1.msra.mxu0 %v1588
    %1601 = vmatprep.subr.mxu0 0.0
    %1602 = vmatpush1.msra.mxu0 %v1590
    %1603 = vmatprep.subr.mxu0 0.0
    %1604 = vmatpush1.msra.mxu0 0.0
    %1605 = vmatprep.subr.mxu0 0.0
    %1606 = vmatpush1.msra.mxu0 0.0
    %1607 = vmatprep.subr.mxu0 0.0
    %1608 = vmatpush1.msra.mxu0 0.0
    %1609 = vmatprep.subr.mxu0 0.0
    %1610 = vmatpush1.msra.mxu0 0.0
    %1611 = vmatprep.subr.mxu0 0.0
    %1612 = vmatpush1.msra.mxu0 0.0
    %1613 = vmatprep.subr.mxu0 0.0
    %1614 = vmatpush1.msra.mxu0 0.0
    %1615 = vmatprep.subr.mxu0 0.0
    %1616 = vmatpush1.msra.mxu0 0.0
    %1617 = vmatprep.subr.mxu0 0.0
    %1618 = vmatpush1.msra.mxu0 0.0
    %1619 = vmatprep.subr.mxu0 0.0
    %1620 = vmatpush1.msra.mxu0 0.0
    %1621 = vmatprep.subr.mxu0 0.0
    %1622 = vmatpush1.msra.mxu0 0.0
    %1623 = vmatprep.subr.mxu0 0.0
    %1624 = vmatpush1.msra.mxu0 0.0
    %1625 = vmatprep.subr.mxu0 0.0
    %1626 = vmatpush1.msra.mxu0 0.0
    %1627 = vmatprep.subr.mxu0 0.0
    %1628 = vmatpush1.msra.mxu0 0.0
    %1629 = vmatprep.subr.mxu0 0.0
    %1630 = vmatpush1.msra.mxu0 0.0
    %1631 = vmatprep.subr.mxu0 0.0
    %1632 = vmatpush1.msra.mxu0 0.0
    %1633 = vmatprep.subr.mxu0 0.0
    %1634 = vmatpush1.msra.mxu0 0.0
    %1635 = vmatprep.subr.mxu0 0.0
    %1636 = vmatpush1.msra.mxu0 0.0
    %1637 = vmatprep.subr.mxu0 0.0
    %1638 = vmatpush1.msra.mxu0 0.0
    %1639 = vmatprep.subr.mxu0 0.0
    %1640 = vmatpush1.msra.mxu0 0.0
    %1641 = vmatprep.subr.mxu0 0.0
    %1642 = vmatpush1.msra.mxu0 0.0
    %1643 = vmatprep.subr.mxu0 0.0
    %1644 = vmatpush1.msra.mxu0 0.0
    %1645 = vmatprep.subr.mxu0 0.0
    %1646 = vmatpush1.msra.mxu0 0.0
    %1647 = vmatprep.subr.mxu0 0.0
    %1648 = vmatpush1.msra.mxu0 0.0
    %1649 = vmatprep.subr.mxu0 0.0
    %1650 = vmatpush1.msra.mxu0 0.0
    %1651 = vmatprep.subr.mxu0 0.0
    %1652 = vmatpush1.msra.mxu0 0.0
    %1653 = vmatprep.subr.mxu0 0.0
    %1654 = vmatpush1.msra.mxu0 0.0
    %1655 = vmatprep.subr.mxu0 0.0
    %1656 = vmatpush1.msra.mxu0 0.0
    %1657 = vmatprep.subr.mxu0 0.0
    %1658 = vmatpush1.msra.mxu0 0.0
    %1659 = vmatprep.subr.mxu0 0.0
    %1660 = vmatpush1.msra.mxu0 0.0
    %1661 = vmatprep.subr.mxu0 0.0
    %1662 = vmatpush1.msra.mxu0 0.0
    %1663 = vmatprep.mubr.f32.mxu0 0.0
    %1664 = vmatmul.mubr.f32.gmra.mrb[0].mxu0 %v1594
    %v1665 = vpop.f32.mrb[0].mxu0
    %v1666 = vadd.f32 0.0, %v1665
    %v1667 = vpop.f32.mrb[0].mxu0
    %1668 = vmatprep.mubr.f32.mxu0 0.0
    %1669 = vmatmul.mubr.f32.gmra.mrb[0].mxu0 %v1597
    %v1670 = vpop.f32.mrb[0].mxu0
    %v1671 = vadd.f32 0.0, %v1670
    %v1672 = vpop.f32.mrb[0].mxu0
    %1673 = vdwg.mxu0
    %1674 = vrot.lane.b32.xlu0 %v1055, 104
    %v1675 = vpop.permute.xlu0 %1674
    %1676 = vrot.lane.b32.xlu0 %v1060, 104
    %v1677 = vpop.permute.xlu0 %1676
    %1678 = vrot.lane.b32.xlu0 %v1055, 72
    %v1679 = vpop.permute.xlu0 %1678
    %1680 = vrot.lane.b32.xlu0 %v1060, 72
    %v1681 = vpop.permute.xlu0 %1680
    %v1682 = vsel %vm1069, %v1675, 0
    %v1684 = vsel %vm1069, %v1677, 0
    %v1686 = vsel %vm1069, %v1679, 0
    %v1688 = vsel %vm1069, %v1681, 0
    %1690 = vmatprep.subr.mxu0 0.0
    %1691 = vmatpush1.xpose.msra.mxu0 %v1686
    %1692 = vmatprep.subr.mxu0 0.0
    %1693 = vmatpush1.xpose.msra.mxu0 %v1688
    %1694 = vmatprep.subr.mxu0 0.0
    %1695 = vmatpush1.xpose.msra.mxu0 0.0
    %1696 = vmatprep.subr.mxu0 0.0
    %1697 = vmatpush1.xpose.msra.mxu0 0.0
    %1698 = vmatprep.subr.mxu0 0.0
    %1699 = vmatpush1.xpose.msra.mxu0 0.0
    %1700 = vmatprep.subr.mxu0 0.0
    %1701 = vmatpush1.xpose.msra.mxu0 0.0
    %1702 = vmatprep.subr.mxu0 0.0
    %1703 = vmatpush1.xpose.msra.mxu0 0.0
    %1704 = vmatprep.subr.mxu0 0.0
    %1705 = vmatpush1.xpose.msra.mxu0 0.0
    %1706 = vmatprep.subr.mxu0 0.0
    %1707 = vmatpush1.xpose.msra.mxu0 0.0
    %1708 = vmatprep.subr.mxu0 0.0
    %1709 = vmatpush1.xpose.msra.mxu0 0.0
    %1710 = vmatprep.subr.mxu0 0.0
    %1711 = vmatpush1.xpose.msra.mxu0 0.0
    %1712 = vmatprep.subr.mxu0 0.0
    %1713 = vmatpush1.xpose.msra.mxu0 0.0
    %1714 = vmatprep.subr.mxu0 0.0
    %1715 = vmatpush1.xpose.msra.mxu0 0.0
    %1716 = vmatprep.subr.mxu0 0.0
    %1717 = vmatpush1.xpose.msra.mxu0 0.0
    %1718 = vmatprep.subr.mxu0 0.0
    %1719 = vmatpush1.xpose.msra.mxu0 0.0
    %1720 = vmatprep.subr.mxu0 0.0
    %1721 = vmatpush1.xpose.msra.mxu0 0.0
    %1722 = vmatprep.subr.mxu0 0.0
    %1723 = vmatpush1.xpose.msra.mxu0 0.0
    %1724 = vmatprep.subr.mxu0 0.0
    %1725 = vmatpush1.xpose.msra.mxu0 0.0
    %1726 = vmatprep.subr.mxu0 0.0
    %1727 = vmatpush1.xpose.msra.mxu0 0.0
    %1728 = vmatprep.subr.mxu0 0.0
    %1729 = vmatpush1.xpose.msra.mxu0 0.0
    %1730 = vmatprep.subr.mxu0 0.0
    %1731 = vmatpush1.xpose.msra.mxu0 0.0
    %1732 = vmatprep.subr.mxu0 0.0
    %1733 = vmatpush1.xpose.msra.mxu0 0.0
    %1734 = vmatprep.subr.mxu0 0.0
    %1735 = vmatpush1.xpose.msra.mxu0 0.0
    %1736 = vmatprep.subr.mxu0 0.0
    %1737 = vmatpush1.xpose.msra.mxu0 0.0
    %1738 = vmatprep.subr.mxu0 0.0
    %1739 = vmatpush1.xpose.msra.mxu0 0.0
    %1740 = vmatprep.subr.mxu0 0.0
    %1741 = vmatpush1.xpose.msra.mxu0 0.0
    %1742 = vmatprep.subr.mxu0 0.0
    %1743 = vmatpush1.xpose.msra.mxu0 0.0
    %1744 = vmatprep.subr.mxu0 0.0
    %1745 = vmatpush1.xpose.msra.mxu0 0.0
    %1746 = vmatprep.subr.mxu0 0.0
    %1747 = vmatpush1.xpose.msra.mxu0 0.0
    %1748 = vmatprep.subr.mxu0 0.0
    %1749 = vmatpush1.xpose.msra.mxu0 0.0
    %1750 = vmatprep.subr.mxu0 0.0
    %1751 = vmatpush1.xpose.msra.mxu0 0.0
    %1752 = vmatprep.subr.mxu0 0.0
    %1753 = vmatpush1.xpose.msra.mxu0 0.0
    %1754 = vmatprep.mubr.f32.mxu0 0.0
    %1755 = vmatmul.mubr.f32.gmra.mrb[0].mxu0 %v1682
    %v1756 = vpop.f32.mrb[0].mxu0
    %v1757 = vadd.f32 0.0, %v1756
    %v1758 = vpop.f32.mrb[0].mxu0
    %1759 = vmatprep.mubr.f32.mxu0 0.0
    %1760 = vmatmul.mubr.f32.gmra.mrb[0].mxu0 %v1684
    %v1761 = vpop.f32.mrb[0].mxu0
    %v1762 = vadd.f32 0.0, %v1761
    %v1763 = vpop.f32.mrb[0].mxu0
    %1764 = vdwg.mxu0
    %v1765 = vmul.f32 %v1757, 0.35355338
    %v1766 = vmul.f32 %v1762, 0.35355338
    %v1767 = vadd.f32 %v1765, %v871
    %v1768 = vadd.f32 %v1766, %v872
    %v1769 = vsel %vm891, %v1767, -inf
    %1770 = vmax.xlane.f32.xlu0 %v1769
    %v1771 = vpop.xlane.xlu0 %1770
    %v1772 = vsel %vm891, %v1768, -inf
    %1773 = vmax.xlane.f32.xlu0 %v1772
    %v1774 = vpop.xlane.xlu0 %1773
    %v1775 = vsub.f32 %v1767, %v1771
    %v1776 = vsub.f32 %v1768, %v1774
    %v1777 = vmul.f32 %v1775, 1.442695
    %v1778 = vpow.pop %v1777
    %v1779 = vmul.f32 %v1776, 1.442695
    %v1780 = vpow.pop %v1779
    %v1781 = vsel %vm891, %v1778, 0.0
    %1782 = vadd.xlane.f32.xlu0 %v1781
    %v1783 = vpop.xlane.xlu0 %1782
    %v1784 = vsel %vm891, %v1780, 0.0
    %1785 = vadd.xlane.f32.xlu0 %v1784
    %v1786 = vpop.xlane.xlu0 %1785
    %v1787 = vrcp.pop %v1783
    %v1788 = vrcp.pop %v1786
    %v1789 = vmul.f32 %v1778, %v1787
    %v1790 = vmul.f32 %v1780, %v1788
    %1791 = vrot.lane.b32.xlu0 %v1055, 40
    %v1792 = vpop.permute.xlu0 %1791
    %1793 = vrot.lane.b32.xlu0 %v1060, 40
    %v1794 = vpop.permute.xlu0 %1793
    %v1798 = vsel %vm891, %v1789, 0
    %v1801 = vsel %vm891, %v1790, 0
    %1803 = vmatprep.subr.mxu0 0.0
    %1804 = vmatpush1.msra.mxu0 %v1792
    %1805 = vmatprep.subr.mxu0 0.0
    %1806 = vmatpush1.msra.mxu0 %v1794
    %1807 = vmatprep.subr.mxu0 0.0
    %1808 = vmatpush1.msra.mxu0 0.0
    %1809 = vmatprep.subr.mxu0 0.0
    %1810 = vmatpush1.msra.mxu0 0.0
    %1811 = vmatprep.subr.mxu0 0.0
    %1812 = vmatpush1.msra.mxu0 0.0
    %1813 = vmatprep.subr.mxu0 0.0
    %1814 = vmatpush1.msra.mxu0 0.0
    %1815 = vmatprep.subr.mxu0 0.0
    %1816 = vmatpush1.msra.mxu0 0.0
    %1817 = vmatprep.subr.mxu0 0.0
    %1818 = vmatpush1.msra.mxu0 0.0
    %1819 = vmatprep.subr.mxu0 0.0
    %1820 = vmatpush1.msra.mxu0 0.0
    %1821 = vmatprep.subr.mxu0 0.0
    %1822 = vmatpush1.msra.mxu0 0.0
    %1823 = vmatprep.subr.mxu0 0.0
    %1824 = vmatpush1.msra.mxu0 0.0
    %1825 = vmatprep.subr.mxu0 0.0
    %1826 = vmatpush1.msra.mxu0 0.0
    %1827 = vmatprep.subr.mxu0 0.0
    %1828 = vmatpush1.msra.mxu0 0.0
    %1829 = vmatprep.subr.mxu0 0.0
    %1830 = vmatpush1.msra.mxu0 0.0
    %1831 = vmatprep.subr.mxu0 0.0
    %1832 = vmatpush1.msra.mxu0 0.0
    %1833 = vmatprep.subr.mxu0 0.0
    %1834 = vmatpush1.msra.mxu0 0.0
    %1835 = vmatprep.subr.mxu0 0.0
    %1836 = vmatpush1.msra.mxu0 0.0
    %1837 = vmatprep.subr.mxu0 0.0
    %1838 = vmatpush1.msra.mxu0 0.0
    %1839 = vmatprep.subr.mxu0 0.0
    %1840 = vmatpush1.msra.mxu0 0.0
    %1841 = vmatprep.subr.mxu0 0.0
    %1842 = vmatpush1.msra.mxu0 0.0
    %1843 = vmatprep.subr.mxu0 0.0
    %1844 = vmatpush1.msra.mxu0 0.0
    %1845 = vmatprep.subr.mxu0 0.0
    %1846 = vmatpush1.msra.mxu0 0.0
    %1847 = vmatprep.subr.mxu0 0.0
    %1848 = vmatpush1.msra.mxu0 0.0
    %1849 = vmatprep.subr.mxu0 0.0
    %1850 = vmatpush1.msra.mxu0 0.0
    %1851 = vmatprep.subr.mxu0 0.0
    %1852 = vmatpush1.msra.mxu0 0.0
    %1853 = vmatprep.subr.mxu0 0.0
    %1854 = vmatpush1.msra.mxu0 0.0
    %1855 = vmatprep.subr.mxu0 0.0
    %1856 = vmatpush1.msra.mxu0 0.0
    %1857 = vmatprep.subr.mxu0 0.0
    %1858 = vmatpush1.msra.mxu0 0.0
    %1859 = vmatprep.subr.mxu0 0.0
    %1860 = vmatpush1.msra.mxu0 0.0
    %1861 = vmatprep.subr.mxu0 0.0
    %1862 = vmatpush1.msra.mxu0 0.0
    %1863 = vmatprep.subr.mxu0 0.0
    %1864 = vmatpush1.msra.mxu0 0.0
    %1865 = vmatprep.subr.mxu0 0.0
    %1866 = vmatpush1.msra.mxu0 0.0
    %1867 = vmatprep.mubr.f32.mxu0 0.0
    %1868 = vmatmul.mubr.f32.gmra.mrb[0].mxu0 %v1798
    %v1869 = vpop.f32.mrb[0].mxu0
    %v1870 = vadd.f32 0.0, %v1869
    %v1871 = vpop.f32.mrb[0].mxu0
    %1872 = vmatprep.mubr.f32.mxu0 0.0
    %1873 = vmatmul.mubr.f32.gmra.mrb[0].mxu0 %v1801
    %v1874 = vpop.f32.mrb[0].mxu0
    %v1875 = vadd.f32 0.0, %v1874
    %v1876 = vpop.f32.mrb[0].mxu0
    %1877 = vdwg.mxu0
    %1880 = vrot.lane.b32.xlu0 %v1462, 8
    %v1881 = vpop.permute.xlu0 %1880
    %1882 = vrot.lane.b32.xlu0 %v1467, 8
    %v1883 = vpop.permute.xlu0 %1882
    %1888 = vrot.lane.b32.xlu0 %v1666, 16
    %v1889 = vpop.permute.xlu0 %1888
    %1890 = vrot.lane.b32.xlu0 %v1671, 16
    %v1891 = vpop.permute.xlu0 %1890
    %1896 = vrot.lane.b32.xlu0 %v1870, 24
    %v1897 = vpop.permute.xlu0 %1896
    %1898 = vrot.lane.b32.xlu0 %v1875, 24
    %v1899 = vpop.permute.xlu0 %1898
    %v1902 = vsel %vm1069, %v1258, %v1881
    %v1903 = vsel %vm1069, %v1263, %v1883
    %v1904 = vsel %vm891, %v1902, %v1889
    %v1905 = vsel %vm891, %v1903, %v1891
    %vm1906 = vcmask 195584
    %v1907 = vsel %vm1906, %v1904, %v1897
    %v1908 = vsel %vm1906, %v1905, %v1899
    %v1910 = vlaneseq
    %v1911 = vshrl.u32 %v1910, 7
    %v1912 = vsub.s32 0, %v1911
    %v1913 = vrot.slane %v810, %v1912
    %v1916 = vsel %vm981, %v1907, 0
    %v1919 = vsel %vm981, %v1908, 0
    %1921 = vmatprep.subr.mxu0 0.0
    %1922 = vmatpush1.msra.mxu0 %v812
    %1923 = vmatprep.subr.mxu0 0.0
    %1924 = vmatpush1.msra.mxu0 %v813
    %1925 = vmatprep.subr.mxu0 0.0
    %1926 = vmatpush1.msra.mxu0 %v814
    %1927 = vmatprep.subr.mxu0 0.0
    %1928 = vmatpush1.msra.mxu0 %v815
    %1929 = vmatprep.subr.mxu0 0.0
    %1930 = vmatpush1.msra.mxu0 0.0
    %1931 = vmatprep.subr.mxu0 0.0
    %1932 = vmatpush1.msra.mxu0 0.0
    %1933 = vmatprep.subr.mxu0 0.0
    %1934 = vmatpush1.msra.mxu0 0.0
    %1935 = vmatprep.subr.mxu0 0.0
    %1936 = vmatpush1.msra.mxu0 0.0
    %1937 = vmatprep.subr.mxu0 0.0
    %1938 = vmatpush1.msra.mxu0 0.0
    %1939 = vmatprep.subr.mxu0 0.0
    %1940 = vmatpush1.msra.mxu0 0.0
    %1941 = vmatprep.subr.mxu0 0.0
    %1942 = vmatpush1.msra.mxu0 0.0
    %1943 = vmatprep.subr.mxu0 0.0
    %1944 = vmatpush1.msra.mxu0 0.0
    %1945 = vmatprep.subr.mxu0 0.0
    %1946 = vmatpush1.msra.mxu0 0.0
    %1947 = vmatprep.subr.mxu0 0.0
    %1948 = vmatpush1.msra.mxu0 0.0
    %1949 = vmatprep.subr.mxu0 0.0
    %1950 = vmatpush1.msra.mxu0 0.0
    %1951 = vmatprep.subr.mxu0 0.0
    %1952 = vmatpush1.msra.mxu0 0.0
    %1953 = vmatprep.subr.mxu0 0.0
    %1954 = vmatpush1.msra.mxu0 0.0
    %1955 = vmatprep.subr.mxu0 0.0
    %1956 = vmatpush1.msra.mxu0 0.0
    %1957 = vmatprep.subr.mxu0 0.0
    %1958 = vmatpush1.msra.mxu0 0.0
    %1959 = vmatprep.subr.mxu0 0.0
    %1960 = vmatpush1.msra.mxu0 0.0
    %1961 = vmatprep.subr.mxu0 0.0
    %1962 = vmatpush1.msra.mxu0 0.0
    %1963 = vmatprep.subr.mxu0 0.0
    %1964 = vmatpush1.msra.mxu0 0.0
    %1965 = vmatprep.subr.mxu0 0.0
    %1966 = vmatpush1.msra.mxu0 0.0
    %1967 = vmatprep.subr.mxu0 0.0
    %1968 = vmatpush1.msra.mxu0 0.0
    %1969 = vmatprep.subr.mxu0 0.0
    %1970 = vmatpush1.msra.mxu0 0.0
    %1971 = vmatprep.subr.mxu0 0.0
    %1972 = vmatpush1.msra.mxu0 0.0
    %1973 = vmatprep.subr.mxu0 0.0
    %1974 = vmatpush1.msra.mxu0 0.0
    %1975 = vmatprep.subr.mxu0 0.0
    %1976 = vmatpush1.msra.mxu0 0.0
    %1977 = vmatprep.subr.mxu0 0.0
    %1978 = vmatpush1.msra.mxu0 0.0
    %1979 = vmatprep.subr.mxu0 0.0
    %1980 = vmatpush1.msra.mxu0 0.0
    %1981 = vmatprep.subr.mxu0 0.0
    %1982 = vmatpush1.msra.mxu0 0.0
    %1983 = vmatprep.subr.mxu0 0.0
    %1984 = vmatpush1.msra.mxu0 0.0
    %1985 = vmatprep.mubr.f32.mxu0 0.0
    %1986 = vmatmul.mubr.f32.gmra.mrb[0].mxu0 %v1916
    %v1987 = vpop.f32.mrb[0].mxu0
    %v1988 = vadd.f32 %v1913, %v1987
    %v1989 = vpop.f32.mrb[0].mxu0
    %1990 = vmatprep.mubr.f32.mxu0 0.0
    %1991 = vmatmul.mubr.f32.gmra.mrb[0].mxu0 %v1919
    %v1992 = vpop.f32.mrb[0].mxu0
    %v1993 = vadd.f32 %v1913, %v1992
    %v1994 = vpop.f32.mrb[0].mxu0
    %1995 = vdwg.mxu0
    %v1996 = vadd.f32 %v973, %v1988
    %v1997 = vadd.f32 %v974, %v1993
    %v1998 = vsel %vm981, %v1996, 0.0
    %1999 = vadd.xlane.f32.xlu0 %v1998
    %v2000 = vpop.xlane.xlu0 %1999
    %v2001 = vsel %vm981, %v1997, 0.0
    %2002 = vadd.xlane.f32.xlu0 %v2001
    %v2003 = vpop.xlane.xlu0 %2002
    %v2004 = vrcp.pop 32.0
    %v2005 = vmul.f32 %v2000, %v2004
    %v2006 = vmul.f32 %v2003, %v2004
    %v2007 = vsub.f32 %v1996, %v2005
    %v2008 = vsub.f32 %v1997, %v2006
    %v2009 = vmul.f32 %v2007, %v2007
    %v2010 = vmul.f32 %v2008, %v2008
    %v2011 = vsel %vm981, %v2009, 0.0
    %2012 = vadd.xlane.f32.xlu0 %v2011
    %v2013 = vpop.xlane.xlu0 %2012
    %v2014 = vsel %vm981, %v2010, 0.0
    %2015 = vadd.xlane.f32.xlu0 %v2014
    %v2016 = vpop.xlane.xlu0 %2015
    %v2017 = vmul.f32 %v2013, %v2004
    %v2018 = vmul.f32 %v2016, %v2004
    %v2019 = vadd.f32 %v2017, 1e-05
    %v2020 = vadd.f32 %v2018, 1e-05
    %v2021 = vrsqrt.pop %v2019
    %v2022 = vrsqrt.pop %v2020
    %v2023 = vmul.f32 %v2007, %v2021
    %v2024 = vmul.f32 %v2008, %v2022
    %v2026 = vlaneseq
    %v2027 = vshrl.u32 %v2026, 7
    %v2028 = vsub.s32 0, %v2027
    %v2029 = vrot.slane %v835, %v2028
    %v2031 = vmul.f32 %v2023, %v2029
    %v2032 = vmul.f32 %v2024, %v2029
    %v2034 = vlaneseq
    %v2035 = vshrl.u32 %v2034, 7
    %v2036 = vsub.s32 0, %v2035
    %v2037 = vrot.slane %v834, %v2036
    %v2039 = vadd.f32 %v2031, %v2037
    %v2040 = vadd.f32 %v2032, %v2037
    %v2042 = vlaneseq
    %v2043 = vshrl.u32 %v2042, 7
    %v2044 = vsub.s32 0, %v2043
    %v2045 = vrot.slane %v820, %v2044
    %v2048 = vsel %vm981, %v2039, 0
    %v2051 = vsel %vm981, %v2040, 0
    %2053 = vmatprep.subr.mxu0 0.0
    %2054 = vmatpush1.msra.mxu0 %v822
    %2055 = vmatprep.subr.mxu0 0.0
    %2056 = vmatpush1.msra.mxu0 %v823
    %2057 = vmatprep.subr.mxu0 0.0
    %2058 = vmatpush1.msra.mxu0 %v824
    %2059 = vmatprep.subr.mxu0 0.0
    %2060 = vmatpush1.msra.mxu0 %v825
    %2061 = vmatprep.subr.mxu0 0.0
    %2062 = vmatpush1.msra.mxu0 0.0
    %2063 = vmatprep.subr.mxu0 0.0
    %2064 = vmatpush1.msra.mxu0 0.0
    %2065 = vmatprep.subr.mxu0 0.0
    %2066 = vmatpush1.msra.mxu0 0.0
    %2067 = vmatprep.subr.mxu0 0.0
    %2068 = vmatpush1.msra.mxu0 0.0
    %2069 = vmatprep.subr.mxu0 0.0
    %2070 = vmatpush1.msra.mxu0 0.0
    %2071 = vmatprep.subr.mxu0 0.0
    %2072 = vmatpush1.msra.mxu0 0.0
    %2073 = vmatprep.subr.mxu0 0.0
    %2074 = vmatpush1.msra.mxu0 0.0
    %2075 = vmatprep.subr.mxu0 0.0
    %2076 = vmatpush1.msra.mxu0 0.0
    %2077 = vmatprep.subr.mxu0 0.0
    %2078 = vmatpush1.msra.mxu0 0.0
    %2079 = vmatprep.subr.mxu0 0.0
    %2080 = vmatpush1.msra.mxu0 0.0
    %2081 = vmatprep.subr.mxu0 0.0
    %2082 = vmatpush1.msra.mxu0 0.0
    %2083 = vmatprep.subr.mxu0 0.0
    %2084 = vmatpush1.msra.mxu0 0.0
    %2085 = vmatprep.subr.mxu0 0.0
    %2086 = vmatpush1.msra.mxu0 0.0
    %2087 = vmatprep.subr.mxu0 0.0
    %2088 = vmatpush1.msra.mxu0 0.0
    %2089 = vmatprep.subr.mxu0 0.0
    %2090 = vmatpush1.msra.mxu0 0.0
    %2091 = vmatprep.subr.mxu0 0.0
    %2092 = vmatpush1.msra.mxu0 0.0
    %2093 = vmatprep.subr.mxu0 0.0
    %2094 = vmatpush1.msra.mxu0 0.0
    %2095 = vmatprep.subr.mxu0 0.0
    %2096 = vmatpush1.msra.mxu0 0.0
    %2097 = vmatprep.subr.mxu0 0.0
    %2098 = vmatpush1.msra.mxu0 0.0
    %2099 = vmatprep.subr.mxu0 0.0
    %2100 = vmatpush1.msra.mxu0 0.0
    %2101 = vmatprep.subr.mxu0 0.0
    %2102 = vmatpush1.msra.mxu0 0.0
    %2103 = vmatprep.subr.mxu0 0.0
    %2104 = vmatpush1.msra.mxu0 0.0
    %2105 = vmatprep.subr.mxu0 0.0
    %2106 = vmatpush1.msra.mxu0 0.0
    %2107 = vmatprep.subr.mxu0 0.0
    %2108 = vmatpush1.msra.mxu0 0.0
    %2109 = vmatprep.subr.mxu0 0.0
    %2110 = vmatpush1.msra.mxu0 0.0
    %2111 = vmatprep.subr.mxu0 0.0
    %2112 = vmatpush1.msra.mxu0 0.0
    %2113 = vmatprep.subr.mxu0 0.0
    %2114 = vmatpush1.msra.mxu0 0.0
    %2115 = vmatprep.subr.mxu0 0.0
    %2116 = vmatpush1.msra.mxu0 0.0
    %2117 = vmatprep.mubr.f32.mxu0 0.0
    %2118 = vmatmul.mubr.f32.gmra.mrb[0].mxu0 %v2048
    %v2119 = vpop.f32.mrb[0].mxu0
    %v2120 = vadd.f32 %v2045, %v2119
    %v2121 = vpop.f32.mrb[0].mxu0
    %2122 = vmatprep.mubr.f32.mxu0 0.0
    %2123 = vmatmul.mubr.f32.gmra.mrb[0].mxu0 %v2051
    %v2124 = vpop.f32.mrb[0].mxu0
    %v2125 = vadd.f32 %v2045, %v2124
    %v2126 = vpop.f32.mrb[0].mxu0
    %2127 = vdwg.mxu0
    %v2128 = vmax.f32 %v2120, 0.0
    %v2129 = vmax.f32 %v2125, 0.0
    %v2131 = vlaneseq
    %v2132 = vshrl.u32 %v2131, 7
    %v2133 = vsub.s32 0, %v2132
    %v2134 = vrot.slane %v821, %v2133
    %vm2136 = vcmask 523264
    %v2138 = vsel %vm2136, %v2128, 0
    %v2141 = vsel %vm2136, %v2129, 0
    %2143 = vmatprep.subr.mxu0 0.0
    %2144 = vmatpush1.msra.mxu0 %v826
    %2145 = vmatprep.subr.mxu0 0.0
    %2146 = vmatpush1.msra.mxu0 %v827
    %2147 = vmatprep.subr.mxu0 0.0
    %2148 = vmatpush1.msra.mxu0 %v828
    %2149 = vmatprep.subr.mxu0 0.0
    %2150 = vmatpush1.msra.mxu0 %v829
    %2151 = vmatprep.subr.mxu0 0.0
    %2152 = vmatpush1.msra.mxu0 %v830
    %2153 = vmatprep.subr.mxu0 0.0
    %2154 = vmatpush1.msra.mxu0 %v831
    %2155 = vmatprep.subr.mxu0 0.0
    %2156 = vmatpush1.msra.mxu0 %v832
    %2157 = vmatprep.subr.mxu0 0.0
    %2158 = vmatpush1.msra.mxu0 %v833
    %2159 = vmatprep.subr.mxu0 0.0
    %2160 = vmatpush1.msra.mxu0 0.0
    %2161 = vmatprep.subr.mxu0 0.0
    %2162 = vmatpush1.msra.mxu0 0.0
    %2163 = vmatprep.subr.mxu0 0.0
    %2164 = vmatpush1.msra.mxu0 0.0
    %2165 = vmatprep.subr.mxu0 0.0
    %2166 = vmatpush1.msra.mxu0 0.0
    %2167 = vmatprep.subr.mxu0 0.0
    %2168 = vmatpush1.msra.mxu0 0.0
    %2169 = vmatprep.subr.mxu0 0.0
    %2170 = vmatpush1.msra.mxu0 0.0
    %2171 = vmatprep.subr.mxu0 0.0
    %2172 = vmatpush1.msra.mxu0 0.0
    %2173 = vmatprep.subr.mxu0 0.0
    %2174 = vmatpush1.msra.mxu0 0.0
    %2175 = vmatprep.subr.mxu0 0.0
    %2176 = vmatpush1.msra.mxu0 0.0
    %2177 = vmatprep.subr.mxu0 0.0
    %2178 = vmatpush1.msra.mxu0 0.0
    %2179 = vmatprep.subr.mxu0 0.0
    %2180 = vmatpush1.msra.mxu0 0.0
    %2181 = vmatprep.subr.mxu0 0.0
    %2182 = vmatpush1.msra.mxu0 0.0
    %2183 = vmatprep.subr.mxu0 0.0
    %2184 = vmatpush1.msra.mxu0 0.0
    %2185 = vmatprep.subr.mxu0 0.0
    %2186 = vmatpush1.msra.mxu0 0.0
    %2187 = vmatprep.subr.mxu0 0.0
    %2188 = vmatpush1.msra.mxu0 0.0
    %2189 = vmatprep.subr.mxu0 0.0
    %2190 = vmatpush1.msra.mxu0 0.0
    %2191 = vmatprep.subr.mxu0 0.0
    %2192 = vmatpush1.msra.mxu0 0.0
    %2193 = vmatprep.subr.mxu0 0.0
    %2194 = vmatpush1.msra.mxu0 0.0
    %2195 = vmatprep.subr.mxu0 0.0
    %2196 = vmatpush1.msra.mxu0 0.0
    %2197 = vmatprep.subr.mxu0 0.0
    %2198 = vmatpush1.msra.mxu0 0.0
    %2199 = vmatprep.subr.mxu0 0.0
    %2200 = vmatpush1.msra.mxu0 0.0
    %2201 = vmatprep.subr.mxu0 0.0
    %2202 = vmatpush1.msra.mxu0 0.0
    %2203 = vmatprep.subr.mxu0 0.0
    %2204 = vmatpush1.msra.mxu0 0.0
    %2205 = vmatprep.subr.mxu0 0.0
    %2206 = vmatpush1.msra.mxu0 0.0
    %2207 = vmatprep.mubr.f32.mxu0 0.0
    %2208 = vmatmul.mubr.f32.gmra.mrb[0].mxu0 %v2138
    %v2209 = vpop.f32.mrb[0].mxu0
    %v2210 = vadd.f32 %v2134, %v2209
    %v2211 = vpop.f32.mrb[0].mxu0
    %2212 = vmatprep.mubr.f32.mxu0 0.0
    %2213 = vmatmul.mubr.f32.gmra.mrb[0].mxu0 %v2141
    %v2214 = vpop.f32.mrb[0].mxu0
    %v2215 = vadd.f32 %v2134, %v2214
    %v2216 = vpop.f32.mrb[0].mxu0
    %2217 = vdwg.mxu0
    %v2218 = vadd.f32 %v2039, %v2210
    %v2219 = vadd.f32 %v2040, %v2215
    %v2220 = vsel %vm981, %v2218, 0.0
    %2221 = vadd.xlane.f32.xlu0 %v2220
    %v2222 = vpop.xlane.xlu0 %2221
    %v2223 = vsel %vm981, %v2219, 0.0
    %2224 = vadd.xlane.f32.xlu0 %v2223
    %v2225 = vpop.xlane.xlu0 %2224
    %v2226 = vmul.f32 %v2222, %v2004
    %v2227 = vmul.f32 %v2225, %v2004
    %v2228 = vsub.f32 %v2218, %v2226
    %v2229 = vsub.f32 %v2219, %v2227
    %v2230 = vmul.f32 %v2228, %v2228
    %v2231 = vmul.f32 %v2229, %v2229
    %v2232 = vsel %vm981, %v2230, 0.0
    %2233 = vadd.xlane.f32.xlu0 %v2232
    %v2234 = vpop.xlane.xlu0 %2233
    %v2235 = vsel %vm981, %v2231, 0.0
    %2236 = vadd.xlane.f32.xlu0 %v2235
    %v2237 = vpop.xlane.xlu0 %2236
    %v2238 = vmul.f32 %v2234, %v2004
    %v2239 = vmul.f32 %v2237, %v2004
    %v2240 = vadd.f32 %v2238, 1e-05
    %v2241 = vadd.f32 %v2239, 1e-05
    %v2242 = vrsqrt.pop %v2240
    %v2243 = vrsqrt.pop %v2241
    %v2244 = vmul.f32 %v2228, %v2242
    %v2245 = vmul.f32 %v2229, %v2243
    %v2247 = vlaneseq
    %v2248 = vshrl.u32 %v2247, 7
    %v2249 = vsub.s32 0, %v2248
    %v2250 = vrot.slane %v837, %v2249
    %v2252 = vmul.f32 %v2244, %v2250
    %v2253 = vmul.f32 %v2245, %v2250
    %v2255 = vlaneseq
    %v2256 = vshrl.u32 %v2255, 7
    %v2257 = vsub.s32 0, %v2256
    %v2258 = vrot.slane %v836, %v2257
    %v2260 = vadd.f32 %v2252, %v2258
    %v2261 = vadd.f32 %v2253, %v2258
    %v2263 = vlaneseq
    %v2264 = vshrl.u32 %v2263, 7
    %v2265 = vsub.s32 0, %v2264
    %v2266 = vrot.slane %v839, %v2265
    %v2269 = vsel %vm981, %v2260, 0
    %v2272 = vsel %vm981, %v2261, 0
    %2274 = vmatprep.subr.mxu0 0.0
    %2275 = vmatpush1.msra.mxu0 %v844
    %2276 = vmatprep.subr.mxu0 0.0
    %2277 = vmatpush1.msra.mxu0 %v845
    %2278 = vmatprep.subr.mxu0 0.0
    %2279 = vmatpush1.msra.mxu0 %v846
    %2280 = vmatprep.subr.mxu0 0.0
    %2281 = vmatpush1.msra.mxu0 %v847
    %2282 = vmatprep.subr.mxu0 0.0
    %2283 = vmatpush1.msra.mxu0 0.0
    %2284 = vmatprep.subr.mxu0 0.0
    %2285 = vmatpush1.msra.mxu0 0.0
    %2286 = vmatprep.subr.mxu0 0.0
    %2287 = vmatpush1.msra.mxu0 0.0
    %2288 = vmatprep.subr.mxu0 0.0
    %2289 = vmatpush1.msra.mxu0 0.0
    %2290 = vmatprep.subr.mxu0 0.0
    %2291 = vmatpush1.msra.mxu0 0.0
    %2292 = vmatprep.subr.mxu0 0.0
    %2293 = vmatpush1.msra.mxu0 0.0
    %2294 = vmatprep.subr.mxu0 0.0
    %2295 = vmatpush1.msra.mxu0 0.0
    %2296 = vmatprep.subr.mxu0 0.0
    %2297 = vmatpush1.msra.mxu0 0.0
    %2298 = vmatprep.subr.mxu0 0.0
    %2299 = vmatpush1.msra.mxu0 0.0
    %2300 = vmatprep.subr.mxu0 0.0
    %2301 = vmatpush1.msra.mxu0 0.0
    %2302 = vmatprep.subr.mxu0 0.0
    %2303 = vmatpush1.msra.mxu0 0.0
    %2304 = vmatprep.subr.mxu0 0.0
    %2305 = vmatpush1.msra.mxu0 0.0
    %2306 = vmatprep.subr.mxu0 0.0
    %2307 = vmatpush1.msra.mxu0 0.0
    %2308 = vmatprep.subr.mxu0 0.0
    %2309 = vmatpush1.msra.mxu0 0.0
    %2310 = vmatprep.subr.mxu0 0.0
    %2311 = vmatpush1.msra.mxu0 0.0
    %2312 = vmatprep.subr.mxu0 0.0
    %2313 = vmatpush1.msra.mxu0 0.0
    %2314 = vmatprep.subr.mxu0 0.0
    %2315 = vmatpush1.msra.mxu0 0.0
    %2316 = vmatprep.subr.mxu0 0.0
    %2317 = vmatpush1.msra.mxu0 0.0
    %2318 = vmatprep.subr.mxu0 0.0
    %2319 = vmatpush1.msra.mxu0 0.0
    %2320 = vmatprep.subr.mxu0 0.0
    %2321 = vmatpush1.msra.mxu0 0.0
    %2322 = vmatprep.subr.mxu0 0.0
    %2323 = vmatpush1.msra.mxu0 0.0
    %2324 = vmatprep.subr.mxu0 0.0
    %2325 = vmatpush1.msra.mxu0 0.0
    %2326 = vmatprep.subr.mxu0 0.0
    %2327 = vmatpush1.msra.mxu0 0.0
    %2328 = vmatprep.subr.mxu0 0.0
    %2329 = vmatpush1.msra.mxu0 0.0
    %2330 = vmatprep.subr.mxu0 0.0
    %2331 = vmatpush1.msra.mxu0 0.0
    %2332 = vmatprep.subr.mxu0 0.0
    %2333 = vmatpush1.msra.mxu0 0.0
    %2334 = vmatprep.subr.mxu0 0.0
    %2335 = vmatpush1.msra.mxu0 0.0
    %2336 = vmatprep.subr.mxu0 0.0
    %2337 = vmatpush1.msra.mxu0 0.0
    %2338 = vmatprep.mubr.f32.mxu0 0.0
    %2339 = vmatmul.mubr.f32.gmra.mrb[0].mxu0 %v2269
    %v2340 = vpop.f32.mrb[0].mxu0
    %v2341 = vadd.f32 %v2266, %v2340
    %v2342 = vpop.f32.mrb[0].mxu0
    %2343 = vmatprep.mubr.f32.mxu0 0.0
    %2344 = vmatmul.mubr.f32.gmra.mrb[0].mxu0 %v2272
    %v2345 = vpop.f32.mrb[0].mxu0
    %v2346 = vadd.f32 %v2266, %v2345
    %v2347 = vpop.f32.mrb[0].mxu0
    %2348 = vdwg.mxu0
    %2351 = vrot.lane.b32.xlu0 %v2341, 96
    %v2352 = vpop.permute.xlu0 %2351
    %2353 = vrot.lane.b32.xlu0 %v2346, 96
    %v2354 = vpop.permute.xlu0 %2353
    %v2355 = vsel %vm1069, %v2341, 0
    %v2357 = vsel %vm1069, %v2346, 0
    %v2359 = vsel %vm1069, %v2352, 0
    %v2361 = vsel %vm1069, %v2354, 0
    %2363 = vmatprep.subr.mxu0 0.0
    %2364 = vmatpush1.xpose.msra.mxu0 %v2359
    %2365 = vmatprep.subr.mxu0 0.0
    %2366 = vmatpush1.xpose.msra.mxu0 %v2361
    %2367 = vmatprep.subr.mxu0 0.0
    %2368 = vmatpush1.xpose.msra.mxu0 0.0
    %2369 = vmatprep.subr.mxu0 0.0
    %2370 = vmatpush1.xpose.msra.mxu0 0.0
    %2371 = vmatprep.subr.mxu0 0.0
    %2372 = vmatpush1.xpose.msra.mxu0 0.0
    %2373 = vmatprep.subr.mxu0 0.0
    %2374 = vmatpush1.xpose.msra.mxu0 0.0
    %2375 = vmatprep.subr.mxu0 0.0
    %2376 = vmatpush1.xpose.msra.mxu0 0.0
    %2377 = vmatprep.subr.mxu0 0.0
    %2378 = vmatpush1.xpose.msra.mxu0 0.0
    %2379 = vmatprep.subr.mxu0 0.0
    %2380 = vmatpush1.xpose.msra.mxu0 0.0
    %2381 = vmatprep.subr.mxu0 0.0
    %2382 = vmatpush1.xpose.msra.mxu0 0.0
    %2383 = vmatprep.subr.mxu0 0.0
    %2384 = vmatpush1.xpose.msra.mxu0 0.0
    %2385 = vmatprep.subr.mxu0 0.0
    %2386 = vmatpush1.xpose.msra.mxu0 0.0
    %2387 = vmatprep.subr.mxu0 0.0
    %2388 = vmatpush1.xpose.msra.mxu0 0.0
    %2389 = vmatprep.subr.mxu0 0.0
    %2390 = vmatpush1.xpose.msra.mxu0 0.0
    %2391 = vmatprep.subr.mxu0 0.0
    %2392 = vmatpush1.xpose.msra.mxu0 0.0
    %2393 = vmatprep.subr.mxu0 0.0
    %2394 = vmatpush1.xpose.msra.mxu0 0.0
    %2395 = vmatprep.subr.mxu0 0.0
    %2396 = vmatpush1.xpose.msra.mxu0 0.0
    %2397 = vmatprep.subr.mxu0 0.0
    %2398 = vmatpush1.xpose.msra.mxu0 0.0
    %2399 = vmatprep.subr.mxu0 0.0
    %2400 = vmatpush1.xpose.msra.mxu0 0.0
    %2401 = vmatprep.subr.mxu0 0.0
    %2402 = vmatpush1.xpose.msra.mxu0 0.0
    %2403 = vmatprep.subr.mxu0 0.0
    %2404 = vmatpush1.xpose.msra.mxu0 0.0
    %2405 = vmatprep.subr.mxu0 0.0
    %2406 = vmatpush1.xpose.msra.mxu0 0.0
    %2407 = vmatprep.subr.mxu0 0.0
    %2408 = vmatpush1.xpose.msra.mxu0 0.0
    %2409 = vmatprep.subr.mxu0 0.0
    %2410 = vmatpush1.xpose.msra.mxu0 0.0
    %2411 = vmatprep.subr.mxu0 0.0
    %2412 = vmatpush1.xpose.msra.mxu0 0.0
    %2413 = vmatprep.subr.mxu0 0.0
    %2414 = vmatpush1.xpose.msra.mxu0 0.0
    %2415 = vmatprep.subr.mxu0 0.0
    %2416 = vmatpush1.xpose.msra.mxu0 0.0
    %2417 = vmatprep.subr.mxu0 0.0
    %2418 = vmatpush1.xpose.msra.mxu0 0.0
    %2419 = vmatprep.subr.mxu0 0.0
    %2420 = vmatpush1.xpose.msra.mxu0 0.0
    %2421 = vmatprep.subr.mxu0 0.0
    %2422 = vmatpush1.xpose.msra.mxu0 0.0
    %2423 = vmatprep.subr.mxu0 0.0
    %2424 = vmatpush1.xpose.msra.mxu0 0.0
    %2425 = vmatprep.subr.mxu0 0.0
    %2426 = vmatpush1.xpose.msra.mxu0 0.0
    %2427 = vmatprep.mubr.f32.mxu0 0.0
    %2428 = vmatmul.mubr.f32.gmra.mrb[0].mxu0 %v2355
    %v2429 = vpop.f32.mrb[0].mxu0
    %v2430 = vadd.f32 0.0, %v2429
    %v2431 = vpop.f32.mrb[0].mxu0
    %2432 = vmatprep.mubr.f32.mxu0 0.0
    %2433 = vmatmul.mubr.f32.gmra.mrb[0].mxu0 %v2357
    %v2434 = vpop.f32.mrb[0].mxu0
    %v2435 = vadd.f32 0.0, %v2434
    %v2436 = vpop.f32.mrb[0].mxu0
    %2437 = vdwg.mxu0
    %v2438 = vmul.f32 %v2430, 0.35355338
    %v2439 = vmul.f32 %v2435, 0.35355338
    %v2440 = vadd.f32 %v2438, %v871
    %v2441 = vadd.f32 %v2439, %v872
    %v2442 = vsel %vm891, %v2440, -inf
    %2443 = vmax.xlane.f32.xlu0 %v2442
    %v2444 = vpop.xlane.xlu0 %2443
    %v2445 = vsel %vm891, %v2441, -inf
    %2446 = vmax.xlane.f32.xlu0 %v2445
    %v2447 = vpop.xlane.xlu0 %2446
    %v2448 = vsub.f32 %v2440, %v2444
    %v2449 = vsub.f32 %v2441, %v2447
    %v2450 = vmul.f32 %v2448, 1.442695
    %v2451 = vpow.pop %v2450
    %v2452 = vmul.f32 %v2449, 1.442695
    %v2453 = vpow.pop %v2452
    %v2454 = vsel %vm891, %v2451, 0.0
    %2455 = vadd.xlane.f32.xlu0 %v2454
    %v2456 = vpop.xlane.xlu0 %2455
    %v2457 = vsel %vm891, %v2453, 0.0
    %2458 = vadd.xlane.f32.xlu0 %v2457
    %v2459 = vpop.xlane.xlu0 %2458
    %v2460 = vrcp.pop %v2456
    %v2461 = vrcp.pop %v2459
    %v2462 = vmul.f32 %v2451, %v2460
    %v2463 = vmul.f32 %v2453, %v2461
    %2464 = vrot.lane.b32.xlu0 %v2341, 64
    %v2465 = vpop.permute.xlu0 %2464
    %2466 = vrot.lane.b32.xlu0 %v2346, 64
    %v2467 = vpop.permute.xlu0 %2466
    %v2471 = vsel %vm891, %v2462, 0
    %v2474 = vsel %vm891, %v2463, 0
    %2476 = vmatprep.subr.mxu0 0.0
    %2477 = vmatpush1.msra.mxu0 %v2465
    %2478 = vmatprep.subr.mxu0 0.0
    %2479 = vmatpush1.msra.mxu0 %v2467
    %2480 = vmatprep.subr.mxu0 0.0
    %2481 = vmatpush1.msra.mxu0 0.0
    %2482 = vmatprep.subr.mxu0 0.0
    %2483 = vmatpush1.msra.mxu0 0.0
    %2484 = vmatprep.subr.mxu0 0.0
    %2485 = vmatpush1.msra.mxu0 0.0
    %2486 = vmatprep.subr.mxu0 0.0
    %2487 = vmatpush1.msra.mxu0 0.0
    %2488 = vmatprep.subr.mxu0 0.0
    %2489 = vmatpush1.msra.mxu0 0.0
    %2490 = vmatprep.subr.mxu0 0.0
    %2491 = vmatpush1.msra.mxu0 0.0
    %2492 = vmatprep.subr.mxu0 0.0
    %2493 = vmatpush1.msra.mxu0 0.0
    %2494 = vmatprep.subr.mxu0 0.0
    %2495 = vmatpush1.msra.mxu0 0.0
    %2496 = vmatprep.subr.mxu0 0.0
    %2497 = vmatpush1.msra.mxu0 0.0
    %2498 = vmatprep.subr.mxu0 0.0
    %2499 = vmatpush1.msra.mxu0 0.0
    %2500 = vmatprep.subr.mxu0 0.0
    %2501 = vmatpush1.msra.mxu0 0.0
    %2502 = vmatprep.subr.mxu0 0.0
    %2503 = vmatpush1.msra.mxu0 0.0
    %2504 = vmatprep.subr.mxu0 0.0
    %2505 = vmatpush1.msra.mxu0 0.0
    %2506 = vmatprep.subr.mxu0 0.0
    %2507 = vmatpush1.msra.mxu0 0.0
    %2508 = vmatprep.subr.mxu0 0.0
    %2509 = vmatpush1.msra.mxu0 0.0
    %2510 = vmatprep.subr.mxu0 0.0
    %2511 = vmatpush1.msra.mxu0 0.0
    %2512 = vmatprep.subr.mxu0 0.0
    %2513 = vmatpush1.msra.mxu0 0.0
    %2514 = vmatprep.subr.mxu0 0.0
    %2515 = vmatpush1.msra.mxu0 0.0
    %2516 = vmatprep.subr.mxu0 0.0
    %2517 = vmatpush1.msra.mxu0 0.0
    %2518 = vmatprep.subr.mxu0 0.0
    %2519 = vmatpush1.msra.mxu0 0.0
    %2520 = vmatprep.subr.mxu0 0.0
    %2521 = vmatpush1.msra.mxu0 0.0
    %2522 = vmatprep.subr.mxu0 0.0
    %2523 = vmatpush1.msra.mxu0 0.0
    %2524 = vmatprep.subr.mxu0 0.0
    %2525 = vmatpush1.msra.mxu0 0.0
    %2526 = vmatprep.subr.mxu0 0.0
    %2527 = vmatpush1.msra.mxu0 0.0
    %2528 = vmatprep.subr.mxu0 0.0
    %2529 = vmatpush1.msra.mxu0 0.0
    %2530 = vmatprep.subr.mxu0 0.0
    %2531 = vmatpush1.msra.mxu0 0.0
    %2532 = vmatprep.subr.mxu0 0.0
    %2533 = vmatpush1.msra.mxu0 0.0
    %2534 = vmatprep.subr.mxu0 0.0
    %2535 = vmatpush1.msra.mxu0 0.0
    %2536 = vmatprep.subr.mxu0 0.0
    %2537 = vmatpush1.msra.mxu0 0.0
    %2538 = vmatprep.subr.mxu0 0.0
    %2539 = vmatpush1.msra.mxu0 0.0
    %2540 = vmatprep.mubr.f32.mxu0 0.0
    %2541 = vmatmul.mubr.f32.gmra.mrb[0].mxu0 %v2471
    %v2542 = vpop.f32.mrb[0].mxu0
    %v2543 = vadd.f32 0.0, %v2542
    %v2544 = vpop.f32.mrb[0].mxu0
    %2545 = vmatprep.mubr.f32.mxu0 0.0
    %2546 = vmatmul.mubr.f32.gmra.mrb[0].mxu0 %v2474
    %v2547 = vpop.f32.mrb[0].mxu0
    %v2548 = vadd.f32 0.0, %v2547
    %v2549 = vpop.f32.mrb[0].mxu0
    %2550 = vdwg.mxu0
    %2551 = vrot.lane.b32.xlu0 %v2341, 120
    %v2552 = vpop.permute.xlu0 %2551
    %2553 = vrot.lane.b32.xlu0 %v2346, 120
    %v2554 = vpop.permute.xlu0 %2553
    %2555 = vrot.lane.b32.xlu0 %v2341, 88
    %v2556 = vpop.permute.xlu0 %2555
    %2557 = vrot.lane.b32.xlu0 %v2346, 88
    %v2558 = vpop.permute.xlu0 %2557
    %v2559 = vsel %vm1069, %v2552, 0
    %v2561 = vsel %vm1069, %v2554, 0
    %v2563 = vsel %vm1069, %v2556, 0
    %v2565 = vsel %vm1069, %v2558, 0
    %2567 = vmatprep.subr.mxu0 0.0
    %2568 = vmatpush1.xpose.msra.mxu0 %v2563
    %2569 = vmatprep.subr.mxu0 0.0
    %2570 = vmatpush1.xpose.msra.mxu0 %v2565
    %2571 = vmatprep.subr.mxu0 0.0
    %2572 = vmatpush1.xpose.msra.mxu0 0.0
    %2573 = vmatprep.subr.mxu0 0.0
    %2574 = vmatpush1.xpose.msra.mxu0 0.0
    %2575 = vmatprep.subr.mxu0 0.0
    %2576 = vmatpush1.xpose.msra.mxu0 0.0
    %2577 = vmatprep.subr.mxu0 0.0
    %2578 = vmatpush1.xpose.msra.mxu0 0.0
    %2579 = vmatprep.subr.mxu0 0.0
    %2580 = vmatpush1.xpose.msra.mxu0 0.0
    %2581 = vmatprep.subr.mxu0 0.0
    %2582 = vmatpush1.xpose.msra.mxu0 0.0
    %2583 = vmatprep.subr.mxu0 0.0
    %2584 = vmatpush1.xpose.msra.mxu0 0.0
    %2585 = vmatprep.subr.mxu0 0.0
    %2586 = vmatpush1.xpose.msra.mxu0 0.0
    %2587 = vmatprep.subr.mxu0 0.0
    %2588 = vmatpush1.xpose.msra.mxu0 0.0
    %2589 = vmatprep.subr.mxu0 0.0
    %2590 = vmatpush1.xpose.msra.mxu0 0.0
    %2591 = vmatprep.subr.mxu0 0.0
    %2592 = vmatpush1.xpose.msra.mxu0 0.0
    %2593 = vmatprep.subr.mxu0 0.0
    %2594 = vmatpush1.xpose.msra.mxu0 0.0
    %2595 = vmatprep.subr.mxu0 0.0
    %2596 = vmatpush1.xpose.msra.mxu0 0.0
    %2597 = vmatprep.subr.mxu0 0.0
    %2598 = vmatpush1.xpose.msra.mxu0 0.0
    %2599 = vmatprep.subr.mxu0 0.0
    %2600 = vmatpush1.xpose.msra.mxu0 0.0
    %2601 = vmatprep.subr.mxu0 0.0
    %2602 = vmatpush1.xpose.msra.mxu0 0.0
    %2603 = vmatprep.subr.mxu0 0.0
    %2604 = vmatpush1.xpose.msra.mxu0 0.0
    %2605 = vmatprep.subr.mxu0 0.0
    %2606 = vmatpush1.xpose.msra.mxu0 0.0
    %2607 = vmatprep.subr.mxu0 0.0
    %2608 = vmatpush1.xpose.msra.mxu0 0.0
    %2609 = vmatprep.subr.mxu0 0.0
    %2610 = vmatpush1.xpose.msra.mxu0 0.0
    %2611 = vmatprep.subr.mxu0 0.0
    %2612 = vmatpush1.xpose.msra.mxu0 0.0
    %2613 = vmatprep.subr.mxu0 0.0
    %2614 = vmatpush1.xpose.msra.mxu0 0.0
    %2615 = vmatprep.subr.mxu0 0.0
    %2616 = vmatpush1.xpose.msra.mxu0 0.0
    %2617 = vmatprep.subr.mxu0 0.0
    %2618 = vmatpush1.xpose.msra.mxu0 0.0
    %2619 = vmatprep.subr.mxu0 0.0
    %2620 = vmatpush1.xpose.msra.mxu0 0.0
    %2621 = vmatprep.subr.mxu0 0.0
    %2622 = vmatpush1.xpose.msra.mxu0 0.0
    %2623 = vmatprep.subr.mxu0 0.0
    %2624 = vmatpush1.xpose.msra.mxu0 0.0
    %2625 = vmatprep.subr.mxu0 0.0
    %2626 = vmatpush1.xpose.msra.mxu0 0.0
    %2627 = vmatprep.subr.mxu0 0.0
    %2628 = vmatpush1.xpose.msra.mxu0 0.0
    %2629 = vmatprep.subr.mxu0 0.0
    %2630 = vmatpush1.xpose.msra.mxu0 0.0
    %2631 = vmatprep.mubr.f32.mxu0 0.0
    %2632 = vmatmul.mubr.f32.gmra.mrb[0].mxu0 %v2559
    %v2633 = vpop.f32.mrb[0].mxu0
    %v2634 = vadd.f32 0.0, %v2633
    %v2635 = vpop.f32.mrb[0].mxu0
    %2636 = vmatprep.mubr.f32.mxu0 0.0
    %2637 = vmatmul.mubr.f32.gmra.mrb[0].mxu0 %v2561
    %v2638 = vpop.f32.mrb[0].mxu0
    %v2639 = vadd.f32 0.0, %v2638
    %v2640 = vpop.f32.mrb[0].mxu0
    %2641 = vdwg.mxu0
    %v2642 = vmul.f32 %v2634, 0.35355338
    %v2643 = vmul.f32 %v2639, 0.35355338
    %v2644 = vadd.f32 %v2642, %v871
    %v2645 = vadd.f32 %v2643, %v872
    %v2646 = vsel %vm891, %v2644, -inf
    %2647 = vmax.xlane.f32.xlu0 %v2646
    %v2648 = vpop.xlane.xlu0 %2647
    %v2649 = vsel %vm891, %v2645, -inf
    %2650 = vmax.xlane.f32.xlu0 %v2649
    %v2651 = vpop.xlane.xlu0 %2650
    %v2652 = vsub.f32 %v2644, %v2648
    %v2653 = vsub.f32 %v2645, %v2651
    %v2654 = vmul.f32 %v2652, 1.442695
    %v2655 = vpow.pop %v2654
    %v2656 = vmul.f32 %v2653, 1.442695
    %v2657 = vpow.pop %v2656
    %v2658 = vsel %vm891, %v2655, 0.0
    %2659 = vadd.xlane.f32.xlu0 %v2658
    %v2660 = vpop.xlane.xlu0 %2659
    %v2661 = vsel %vm891, %v2657, 0.0
    %2662 = vadd.xlane.f32.xlu0 %v2661
    %v2663 = vpop.xlane.xlu0 %2662
    %v2664 = vrcp.pop %v2660
    %v2665 = vrcp.pop %v2663
    %v2666 = vmul.f32 %v2655, %v2664
    %v2667 = vmul.f32 %v2657, %v2665
    %2668 = vrot.lane.b32.xlu0 %v2341, 56
    %v2669 = vpop.permute.xlu0 %2668
    %2670 = vrot.lane.b32.xlu0 %v2346, 56
    %v2671 = vpop.permute.xlu0 %2670
    %v2675 = vsel %vm891, %v2666, 0
    %v2678 = vsel %vm891, %v2667, 0
    %2680 = vmatprep.subr.mxu0 0.0
    %2681 = vmatpush1.msra.mxu0 %v2669
    %2682 = vmatprep.subr.mxu0 0.0
    %2683 = vmatpush1.msra.mxu0 %v2671
    %2684 = vmatprep.subr.mxu0 0.0
    %2685 = vmatpush1.msra.mxu0 0.0
    %2686 = vmatprep.subr.mxu0 0.0
    %2687 = vmatpush1.msra.mxu0 0.0
    %2688 = vmatprep.subr.mxu0 0.0
    %2689 = vmatpush1.msra.mxu0 0.0
    %2690 = vmatprep.subr.mxu0 0.0
    %2691 = vmatpush1.msra.mxu0 0.0
    %2692 = vmatprep.subr.mxu0 0.0
    %2693 = vmatpush1.msra.mxu0 0.0
    %2694 = vmatprep.subr.mxu0 0.0
    %2695 = vmatpush1.msra.mxu0 0.0
    %2696 = vmatprep.subr.mxu0 0.0
    %2697 = vmatpush1.msra.mxu0 0.0
    %2698 = vmatprep.subr.mxu0 0.0
    %2699 = vmatpush1.msra.mxu0 0.0
    %2700 = vmatprep.subr.mxu0 0.0
    %2701 = vmatpush1.msra.mxu0 0.0
    %2702 = vmatprep.subr.mxu0 0.0
    %2703 = vmatpush1.msra.mxu0 0.0
    %2704 = vmatprep.subr.mxu0 0.0
    %2705 = vmatpush1.msra.mxu0 0.0
    %2706 = vmatprep.subr.mxu0 0.0
    %2707 = vmatpush1.msra.mxu0 0.0
    %2708 = vmatprep.subr.mxu0 0.0
    %2709 = vmatpush1.msra.mxu0 0.0
    %2710 = vmatprep.subr.mxu0 0.0
    %2711 = vmatpush1.msra.mxu0 0.0
    %2712 = vmatprep.subr.mxu0 0.0
    %2713 = vmatpush1.msra.mxu0 0.0
    %2714 = vmatprep.subr.mxu0 0.0
    %2715 = vmatpush1.msra.mxu0 0.0
    %2716 = vmatprep.subr.mxu0 0.0
    %2717 = vmatpush1.msra.mxu0 0.0
    %2718 = vmatprep.subr.mxu0 0.0
    %2719 = vmatpush1.msra.mxu0 0.0
    %2720 = vmatprep.subr.mxu0 0.0
    %2721 = vmatpush1.msra.mxu0 0.0
    %2722 = vmatprep.subr.mxu0 0.0
    %2723 = vmatpush1.msra.mxu0 0.0
    %2724 = vmatprep.subr.mxu0 0.0
    %2725 = vmatpush1.msra.mxu0 0.0
    %2726 = vmatprep.subr.mxu0 0.0
    %2727 = vmatpush1.msra.mxu0 0.0
    %2728 = vmatprep.subr.mxu0 0.0
    %2729 = vmatpush1.msra.mxu0 0.0
    %2730 = vmatprep.subr.mxu0 0.0
    %2731 = vmatpush1.msra.mxu0 0.0
    %2732 = vmatprep.subr.mxu0 0.0
    %2733 = vmatpush1.msra.mxu0 0.0
    %2734 = vmatprep.subr.mxu0 0.0
    %2735 = vmatpush1.msra.mxu0 0.0
    %2736 = vmatprep.subr.mxu0 0.0
    %2737 = vmatpush1.msra.mxu0 0.0
    %2738 = vmatprep.subr.mxu0 0.0
    %2739 = vmatpush1.msra.mxu0 0.0
    %2740 = vmatprep.subr.mxu0 0.0
    %2741 = vmatpush1.msra.mxu0 0.0
    %2742 = vmatprep.subr.mxu0 0.0
    %2743 = vmatpush1.msra.mxu0 0.0
    %2744 = vmatprep.mubr.f32.mxu0 0.0
    %2745 = vmatmul.mubr.f32.gmra.mrb[0].mxu0 %v2675
    %v2746 = vpop.f32.mrb[0].mxu0
    %v2747 = vadd.f32 0.0, %v2746
    %v2748 = vpop.f32.mrb[0].mxu0
    %2749 = vmatprep.mubr.f32.mxu0 0.0
    %2750 = vmatmul.mubr.f32.gmra.mrb[0].mxu0 %v2678
    %v2751 = vpop.f32.mrb[0].mxu0
    %v2752 = vadd.f32 0.0, %v2751
    %v2753 = vpop.f32.mrb[0].mxu0
    %2754 = vdwg.mxu0
    %2755 = vrot.lane.b32.xlu0 %v2341, 112
    %v2756 = vpop.permute.xlu0 %2755
    %2757 = vrot.lane.b32.xlu0 %v2346, 112
    %v2758 = vpop.permute.xlu0 %2757
    %2759 = vrot.lane.b32.xlu0 %v2341, 80
    %v2760 = vpop.permute.xlu0 %2759
    %2761 = vrot.lane.b32.xlu0 %v2346, 80
    %v2762 = vpop.permute.xlu0 %2761
    %v2763 = vsel %vm1069, %v2756, 0
    %v2765 = vsel %vm1069, %v2758, 0
    %v2767 = vsel %vm1069, %v2760, 0
    %v2769 = vsel %vm1069, %v2762, 0
    %2771 = vmatprep.subr.mxu0 0.0
    %2772 = vmatpush1.xpose.msra.mxu0 %v2767
    %2773 = vmatprep.subr.mxu0 0.0
    %2774 = vmatpush1.xpose.msra.mxu0 %v2769
    %2775 = vmatprep.subr.mxu0 0.0
    %2776 = vmatpush1.xpose.msra.mxu0 0.0
    %2777 = vmatprep.subr.mxu0 0.0
    %2778 = vmatpush1.xpose.msra.mxu0 0.0
    %2779 = vmatprep.subr.mxu0 0.0
    %2780 = vmatpush1.xpose.msra.mxu0 0.0
    %2781 = vmatprep.subr.mxu0 0.0
    %2782 = vmatpush1.xpose.msra.mxu0 0.0
    %2783 = vmatprep.subr.mxu0 0.0
    %2784 = vmatpush1.xpose.msra.mxu0 0.0
    %2785 = vmatprep.subr.mxu0 0.0
    %2786 = vmatpush1.xpose.msra.mxu0 0.0
    %2787 = vmatprep.subr.mxu0 0.0
    %2788 = vmatpush1.xpose.msra.mxu0 0.0
    %2789 = vmatprep.subr.mxu0 0.0
    %2790 = vmatpush1.xpose.msra.mxu0 0.0
    %2791 = vmatprep.subr.mxu0 0.0
    %2792 = vmatpush1.xpose.msra.mxu0 0.0
    %2793 = vmatprep.subr.mxu0 0.0
    %2794 = vmatpush1.xpose.msra.mxu0 0.0
    %2795 = vmatprep.subr.mxu0 0.0
    %2796 = vmatpush1.xpose.msra.mxu0 0.0
    %2797 = vmatprep.subr.mxu0 0.0
    %2798 = vmatpush1.xpose.msra.mxu0 0.0
    %2799 = vmatprep.subr.mxu0 0.0
    %2800 = vmatpush1.xpose.msra.mxu0 0.0
    %2801 = vmatprep.subr.mxu0 0.0
    %2802 = vmatpush1.xpose.msra.mxu0 0.0
    %2803 = vmatprep.subr.mxu0 0.0
    %2804 = vmatpush1.xpose.msra.mxu0 0.0
    %2805 = vmatprep.subr.mxu0 0.0
    %2806 = vmatpush1.xpose.msra.mxu0 0.0
    %2807 = vmatprep.subr.mxu0 0.0
    %2808 = vmatpush1.xpose.msra.mxu0 0.0
    %2809 = vmatprep.subr.mxu0 0.0
    %2810 = vmatpush1.xpose.msra.mxu0 0.0
    %2811 = vmatprep.subr.mxu0 0.0
    %2812 = vmatpush1.xpose.msra.mxu0 0.0
    %2813 = vmatprep.subr.mxu0 0.0
    %2814 = vmatpush1.xpose.msra.mxu0 0.0
    %2815 = vmatprep.subr.mxu0 0.0
    %2816 = vmatpush1.xpose.msra.mxu0 0.0
    %2817 = vmatprep.subr.mxu0 0.0
    %2818 = vmatpush1.xpose.msra.mxu0 0.0
    %2819 = vmatprep.subr.mxu0 0.0
    %2820 = vmatpush1.xpose.msra.mxu0 0.0
    %2821 = vmatprep.subr.mxu0 0.0
    %2822 = vmatpush1.xpose.msra.mxu0 0.0
    %2823 = vmatprep.subr.mxu0 0.0
    %2824 = vmatpush1.xpose.msra.mxu0 0.0
    %2825 = vmatprep.subr.mxu0 0.0
    %2826 = vmatpush1.xpose.msra.mxu0 0.0
    %2827 = vmatprep.subr.mxu0 0.0
    %2828 = vmatpush1.xpose.msra.mxu0 0.0
    %2829 = vmatprep.subr.mxu0 0.0
    %2830 = vmatpush1.xpose.msra.mxu0 0.0
    %2831 = vmatprep.subr.mxu0 0.0
    %2832 = vmatpush1.xpose.msra.mxu0 0.0
    %2833 = vmatprep.subr.mxu0 0.0
    %2834 = vmatpush1.xpose.msra.mxu0 0.0
    %2835 = vmatprep.mubr.f32.mxu0 0.0
    %2836 = vmatmul.mubr.f32.gmra.mrb[0].mxu0 %v2763
    %v2837 = vpop.f32.mrb[0].mxu0
    %v2838 = vadd.f32 0.0, %v2837
    %v2839 = vpop.f32.mrb[0].mxu0
    %2840 = vmatprep.mubr.f32.mxu0 0.0
    %2841 = vmatmul.mubr.f32.gmra.mrb[0].mxu0 %v2765
    %v2842 = vpop.f32.mrb[0].mxu0
    %v2843 = vadd.f32 0.0, %v2842
    %v2844 = vpop.f32.mrb[0].mxu0
    %2845 = vdwg.mxu0
    %v2846 = vmul.f32 %v2838, 0.35355338
    %v2847 = vmul.f32 %v2843, 0.35355338
    %v2848 = vadd.f32 %v2846, %v871
    %v2849 = vadd.f32 %v2847, %v872
    %v2850 = vsel %vm891, %v2848, -inf
    %2851 = vmax.xlane.f32.xlu0 %v2850
    %v2852 = vpop.xlane.xlu0 %2851
    %v2853 = vsel %vm891, %v2849, -inf
    %2854 = vmax.xlane.f32.xlu0 %v2853
    %v2855 = vpop.xlane.xlu0 %2854
    %v2856 = vsub.f32 %v2848, %v2852
    %v2857 = vsub.f32 %v2849, %v2855
    %v2858 = vmul.f32 %v2856, 1.442695
    %v2859 = vpow.pop %v2858
    %v2860 = vmul.f32 %v2857, 1.442695
    %v2861 = vpow.pop %v2860
    %v2862 = vsel %vm891, %v2859, 0.0
    %2863 = vadd.xlane.f32.xlu0 %v2862
    %v2864 = vpop.xlane.xlu0 %2863
    %v2865 = vsel %vm891, %v2861, 0.0
    %2866 = vadd.xlane.f32.xlu0 %v2865
    %v2867 = vpop.xlane.xlu0 %2866
    %v2868 = vrcp.pop %v2864
    %v2869 = vrcp.pop %v2867
    %v2870 = vmul.f32 %v2859, %v2868
    %v2871 = vmul.f32 %v2861, %v2869
    %2872 = vrot.lane.b32.xlu0 %v2341, 48
    %v2873 = vpop.permute.xlu0 %2872
    %2874 = vrot.lane.b32.xlu0 %v2346, 48
    %v2875 = vpop.permute.xlu0 %2874
    %v2879 = vsel %vm891, %v2870, 0
    %v2882 = vsel %vm891, %v2871, 0
    %2884 = vmatprep.subr.mxu0 0.0
    %2885 = vmatpush1.msra.mxu0 %v2873
    %2886 = vmatprep.subr.mxu0 0.0
    %2887 = vmatpush1.msra.mxu0 %v2875
    %2888 = vmatprep.subr.mxu0 0.0
    %2889 = vmatpush1.msra.mxu0 0.0
    %2890 = vmatprep.subr.mxu0 0.0
    %2891 = vmatpush1.msra.mxu0 0.0
    %2892 = vmatprep.subr.mxu0 0.0
    %2893 = vmatpush1.msra.mxu0 0.0
    %2894 = vmatprep.subr.mxu0 0.0
    %2895 = vmatpush1.msra.mxu0 0.0
    %2896 = vmatprep.subr.mxu0 0.0
    %2897 = vmatpush1.msra.mxu0 0.0
    %2898 = vmatprep.subr.mxu0 0.0
    %2899 = vmatpush1.msra.mxu0 0.0
    %2900 = vmatprep.subr.mxu0 0.0
    %2901 = vmatpush1.msra.mxu0 0.0
    %2902 = vmatprep.subr.mxu0 0.0
    %2903 = vmatpush1.msra.mxu0 0.0
    %2904 = vmatprep.subr.mxu0 0.0
    %2905 = vmatpush1.msra.mxu0 0.0
    %2906 = vmatprep.subr.mxu0 0.0
    %2907 = vmatpush1.msra.mxu0 0.0
    %2908 = vmatprep.subr.mxu0 0.0
    %2909 = vmatpush1.msra.mxu0 0.0
    %2910 = vmatprep.subr.mxu0 0.0
    %2911 = vmatpush1.msra.mxu0 0.0
    %2912 = vmatprep.subr.mxu0 0.0
    %2913 = vmatpush1.msra.mxu0 0.0
    %2914 = vmatprep.subr.mxu0 0.0
    %2915 = vmatpush1.msra.mxu0 0.0
    %2916 = vmatprep.subr.mxu0 0.0
    %2917 = vmatpush1.msra.mxu0 0.0
    %2918 = vmatprep.subr.mxu0 0.0
    %2919 = vmatpush1.msra.mxu0 0.0
    %2920 = vmatprep.subr.mxu0 0.0
    %2921 = vmatpush1.msra.mxu0 0.0
    %2922 = vmatprep.subr.mxu0 0.0
    %2923 = vmatpush1.msra.mxu0 0.0
    %2924 = vmatprep.subr.mxu0 0.0
    %2925 = vmatpush1.msra.mxu0 0.0
    %2926 = vmatprep.subr.mxu0 0.0
    %2927 = vmatpush1.msra.mxu0 0.0
    %2928 = vmatprep.subr.mxu0 0.0
    %2929 = vmatpush1.msra.mxu0 0.0
    %2930 = vmatprep.subr.mxu0 0.0
    %2931 = vmatpush1.msra.mxu0 0.0
    %2932 = vmatprep.subr.mxu0 0.0
    %2933 = vmatpush1.msra.mxu0 0.0
    %2934 = vmatprep.subr.mxu0 0.0
    %2935 = vmatpush1.msra.mxu0 0.0
    %2936 = vmatprep.subr.mxu0 0.0
    %2937 = vmatpush1.msra.mxu0 0.0
    %2938 = vmatprep.subr.mxu0 0.0
    %2939 = vmatpush1.msra.mxu0 0.0
    %2940 = vmatprep.subr.mxu0 0.0
    %2941 = vmatpush1.msra.mxu0 0.0
    %2942 = vmatprep.subr.mxu0 0.0
    %2943 = vmatpush1.msra.mxu0 0.0
    %2944 = vmatprep.subr.mxu0 0.0
    %2945 = vmatpush1.msra.mxu0 0.0
    %2946 = vmatprep.subr.mxu0 0.0
    %2947 = vmatpush1.msra.mxu0 0.0
    %2948 = vmatprep.mubr.f32.mxu0 0.0
    %2949 = vmatmul.mubr.f32.gmra.mrb[0].mxu0 %v2879
    %v2950 = vpop.f32.mrb[0].mxu0
    %v2951 = vadd.f32 0.0, %v2950
    %v2952 = vpop.f32.mrb[0].mxu0
    %2953 = vmatprep.mubr.f32.mxu0 0.0
    %2954 = vmatmul.mubr.f32.gmra.mrb[0].mxu0 %v2882
    %v2955 = vpop.f32.mrb[0].mxu0
    %v2956 = vadd.f32 0.0, %v2955
    %v2957 = vpop.f32.mrb[0].mxu0
    %2958 = vdwg.mxu0
    %2959 = vrot.lane.b32.xlu0 %v2341, 104
    %v2960 = vpop.permute.xlu0 %2959
    %2961 = vrot.lane.b32.xlu0 %v2346, 104
    %v2962 = vpop.permute.xlu0 %2961
    %2963 = vrot.lane.b32.xlu0 %v2341, 72
    %v2964 = vpop.permute.xlu0 %2963
    %2965 = vrot.lane.b32.xlu0 %v2346, 72
    %v2966 = vpop.permute.xlu0 %2965
    %v2967 = vsel %vm1069, %v2960, 0
    %v2969 = vsel %vm1069, %v2962, 0
    %v2971 = vsel %vm1069, %v2964, 0
    %v2973 = vsel %vm1069, %v2966, 0
    %2975 = vmatprep.subr.mxu0 0.0
    %2976 = vmatpush1.xpose.msra.mxu0 %v2971
    %2977 = vmatprep.subr.mxu0 0.0
    %2978 = vmatpush1.xpose.msra.mxu0 %v2973
    %2979 = vmatprep.subr.mxu0 0.0
    %2980 = vmatpush1.xpose.msra.mxu0 0.0
    %2981 = vmatprep.subr.mxu0 0.0
    %2982 = vmatpush1.xpose.msra.mxu0 0.0
    %2983 = vmatprep.subr.mxu0 0.0
    %2984 = vmatpush1.xpose.msra.mxu0 0.0
    %2985 = vmatprep.subr.mxu0 0.0
    %2986 = vmatpush1.xpose.msra.mxu0 0.0
    %2987 = vmatprep.subr.mxu0 0.0
    %2988 = vmatpush1.xpose.msra.mxu0 0.0
    %2989 = vmatprep.subr.mxu0 0.0
    %2990 = vmatpush1.xpose.msra.mxu0 0.0
    %2991 = vmatprep.subr.mxu0 0.0
    %2992 = vmatpush1.xpose.msra.mxu0 0.0
    %2993 = vmatprep.subr.mxu0 0.0
    %2994 = vmatpush1.xpose.msra.mxu0 0.0
    %2995 = vmatprep.subr.mxu0 0.0
    %2996 = vmatpush1.xpose.msra.mxu0 0.0
    %2997 = vmatprep.subr.mxu0 0.0
    %2998 = vmatpush1.xpose.msra.mxu0 0.0
    %2999 = vmatprep.subr.mxu0 0.0
    %3000 = vmatpush1.xpose.msra.mxu0 0.0
    %3001 = vmatprep.subr.mxu0 0.0
    %3002 = vmatpush1.xpose.msra.mxu0 0.0
    %3003 = vmatprep.subr.mxu0 0.0
    %3004 = vmatpush1.xpose.msra.mxu0 0.0
    %3005 = vmatprep.subr.mxu0 0.0
    %3006 = vmatpush1.xpose.msra.mxu0 0.0
    %3007 = vmatprep.subr.mxu0 0.0
    %3008 = vmatpush1.xpose.msra.mxu0 0.0
    %3009 = vmatprep.subr.mxu0 0.0
    %3010 = vmatpush1.xpose.msra.mxu0 0.0
    %3011 = vmatprep.subr.mxu0 0.0
    %3012 = vmatpush1.xpose.msra.mxu0 0.0
    %3013 = vmatprep.subr.mxu0 0.0
    %3014 = vmatpush1.xpose.msra.mxu0 0.0
    %3015 = vmatprep.subr.mxu0 0.0
    %3016 = vmatpush1.xpose.msra.mxu0 0.0
    %3017 = vmatprep.subr.mxu0 0.0
    %3018 = vmatpush1.xpose.msra.mxu0 0.0
    %3019 = vmatprep.subr.mxu0 0.0
    %3020 = vmatpush1.xpose.msra.mxu0 0.0
    %3021 = vmatprep.subr.mxu0 0.0
    %3022 = vmatpush1.xpose.msra.mxu0 0.0
    %3023 = vmatprep.subr.mxu0 0.0
    %3024 = vmatpush1.xpose.msra.mxu0 0.0
    %3025 = vmatprep.subr.mxu0 0.0
    %3026 = vmatpush1.xpose.msra.mxu0 0.0
    %3027 = vmatprep.subr.mxu0 0.0
    %3028 = vmatpush1.xpose.msra.mxu0 0.0
    %3029 = vmatprep.subr.mxu0 0.0
    %3030 = vmatpush1.xpose.msra.mxu0 0.0
    %3031 = vmatprep.subr.mxu0 0.0
    %3032 = vmatpush1.xpose.msra.mxu0 0.0
    %3033 = vmatprep.subr.mxu0 0.0
    %3034 = vmatpush1.xpose.msra.mxu0 0.0
    %3035 = vmatprep.subr.mxu0 0.0
    %3036 = vmatpush1.xpose.msra.mxu0 0.0
    %3037 = vmatprep.subr.mxu0 0.0
    %3038 = vmatpush1.xpose.msra.mxu0 0.0
    %3039 = vmatprep.mubr.f32.mxu0 0.0
    %3040 = vmatmul.mubr.f32.gmra.mrb[0].mxu0 %v2967
    %v3041 = vpop.f32.mrb[0].mxu0
    %v3042 = vadd.f32 0.0, %v3041
    %v3043 = vpop.f32.mrb[0].mxu0
    %3044 = vmatprep.mubr.f32.mxu0 0.0
    %3045 = vmatmul.mubr.f32.gmra.mrb[0].mxu0 %v2969
    %v3046 = vpop.f32.mrb[0].mxu0
    %v3047 = vadd.f32 0.0, %v3046
    %v3048 = vpop.f32.mrb[0].mxu0
    %3049 = vdwg.mxu0
    %v3050 = vmul.f32 %v3042, 0.35355338
    %v3051 = vmul.f32 %v3047, 0.35355338
    %v3052 = vadd.f32 %v3050, %v871
    %v3053 = vadd.f32 %v3051, %v872
    %v3054 = vsel %vm891, %v3052, -inf
    %3055 = vmax.xlane.f32.xlu0 %v3054
    %v3056 = vpop.xlane.xlu0 %3055
    %v3057 = vsel %vm891, %v3053, -inf
    %3058 = vmax.xlane.f32.xlu0 %v3057
    %v3059 = vpop.xlane.xlu0 %3058
    %v3060 = vsub.f32 %v3052, %v3056
    %v3061 = vsub.f32 %v3053, %v3059
    %v3062 = vmul.f32 %v3060, 1.442695
    %v3063 = vpow.pop %v3062
    %v3064 = vmul.f32 %v3061, 1.442695
    %v3065 = vpow.pop %v3064
    %v3066 = vsel %vm891, %v3063, 0.0
    %3067 = vadd.xlane.f32.xlu0 %v3066
    %v3068 = vpop.xlane.xlu0 %3067
    %v3069 = vsel %vm891, %v3065, 0.0
    %3070 = vadd.xlane.f32.xlu0 %v3069
    %v3071 = vpop.xlane.xlu0 %3070
    %v3072 = vrcp.pop %v3068
    %v3073 = vrcp.pop %v3071
    %v3074 = vmul.f32 %v3063, %v3072
    %v3075 = vmul.f32 %v3065, %v3073
    %3076 = vrot.lane.b32.xlu0 %v2341, 40
    %v3077 = vpop.permute.xlu0 %3076
    %3078 = vrot.lane.b32.xlu0 %v2346, 40
    %v3079 = vpop.permute.xlu0 %3078
    %v3083 = vsel %vm891, %v3074, 0
    %v3086 = vsel %vm891, %v3075, 0
    %3088 = vmatprep.subr.mxu0 0.0
    %3089 = vmatpush1.msra.mxu0 %v3077
    %3090 = vmatprep.subr.mxu0 0.0
    %3091 = vmatpush1.msra.mxu0 %v3079
    %3092 = vmatprep.subr.mxu0 0.0
    %3093 = vmatpush1.msra.mxu0 0.0
    %3094 = vmatprep.subr.mxu0 0.0
    %3095 = vmatpush1.msra.mxu0 0.0
    %3096 = vmatprep.subr.mxu0 0.0
    %3097 = vmatpush1.msra.mxu0 0.0
    %3098 = vmatprep.subr.mxu0 0.0
    %3099 = vmatpush1.msra.mxu0 0.0
    %3100 = vmatprep.subr.mxu0 0.0
    %3101 = vmatpush1.msra.mxu0 0.0
    %3102 = vmatprep.subr.mxu0 0.0
    %3103 = vmatpush1.msra.mxu0 0.0
    %3104 = vmatprep.subr.mxu0 0.0
    %3105 = vmatpush1.msra.mxu0 0.0
    %3106 = vmatprep.subr.mxu0 0.0
    %3107 = vmatpush1.msra.mxu0 0.0
    %3108 = vmatprep.subr.mxu0 0.0
    %3109 = vmatpush1.msra.mxu0 0.0
    %3110 = vmatprep.subr.mxu0 0.0
    %3111 = vmatpush1.msra.mxu0 0.0
    %3112 = vmatprep.subr.mxu0 0.0
    %3113 = vmatpush1.msra.mxu0 0.0
    %3114 = vmatprep.subr.mxu0 0.0
    %3115 = vmatpush1.msra.mxu0 0.0
    %3116 = vmatprep.subr.mxu0 0.0
    %3117 = vmatpush1.msra.mxu0 0.0
    %3118 = vmatprep.subr.mxu0 0.0
    %3119 = vmatpush1.msra.mxu0 0.0
    %3120 = vmatprep.subr.mxu0 0.0
    %3121 = vmatpush1.msra.mxu0 0.0
    %3122 = vmatprep.subr.mxu0 0.0
    %3123 = vmatpush1.msra.mxu0 0.0
    %3124 = vmatprep.subr.mxu0 0.0
    %3125 = vmatpush1.msra.mxu0 0.0
    %3126 = vmatprep.subr.mxu0 0.0
    %3127 = vmatpush1.msra.mxu0 0.0
    %3128 = vmatprep.subr.mxu0 0.0
    %3129 = vmatpush1.msra.mxu0 0.0
    %3130 = vmatprep.subr.mxu0 0.0
    %3131 = vmatpush1.msra.mxu0 0.0
    %3132 = vmatprep.subr.mxu0 0.0
    %3133 = vmatpush1.msra.mxu0 0.0
    %3134 = vmatprep.subr.mxu0 0.0
    %3135 = vmatpush1.msra.mxu0 0.0
    %3136 = vmatprep.subr.mxu0 0.0
    %3137 = vmatpush1.msra.mxu0 0.0
    %3138 = vmatprep.subr.mxu0 0.0
    %3139 = vmatpush1.msra.mxu0 0.0
    %3140 = vmatprep.subr.mxu0 0.0
    %3141 = vmatpush1.msra.mxu0 0.0
    %3142 = vmatprep.subr.mxu0 0.0
    %3143 = vmatpush1.msra.mxu0 0.0
    %3144 = vmatprep.subr.mxu0 0.0
    %3145 = vmatpush1.msra.mxu0 0.0
    %3146 = vmatprep.subr.mxu0 0.0
    %3147 = vmatpush1.msra.mxu0 0.0
    %3148 = vmatprep.subr.mxu0 0.0
    %3149 = vmatpush1.msra.mxu0 0.0
    %3150 = vmatprep.subr.mxu0 0.0
    %3151 = vmatpush1.msra.mxu0 0.0
    %3152 = vmatprep.mubr.f32.mxu0 0.0
    %3153 = vmatmul.mubr.f32.gmra.mrb[0].mxu0 %v3083
    %v3154 = vpop.f32.mrb[0].mxu0
    %v3155 = vadd.f32 0.0, %v3154
    %v3156 = vpop.f32.mrb[0].mxu0
    %3157 = vmatprep.mubr.f32.mxu0 0.0
    %3158 = vmatmul.mubr.f32.gmra.mrb[0].mxu0 %v3086
    %v3159 = vpop.f32.mrb[0].mxu0
    %v3160 = vadd.f32 0.0, %v3159
    %v3161 = vpop.f32.mrb[0].mxu0
    %3162 = vdwg.mxu0
    %3165 = vrot.lane.b32.xlu0 %v2747, 8
    %v3166 = vpop.permute.xlu0 %3165
    %3167 = vrot.lane.b32.xlu0 %v2752, 8
    %v3168 = vpop.permute.xlu0 %3167
    %3173 = vrot.lane.b32.xlu0 %v2951, 16
    %v3174 = vpop.permute.xlu0 %3173
    %3175 = vrot.lane.b32.xlu0 %v2956, 16
    %v3176 = vpop.permute.xlu0 %3175
    %3181 = vrot.lane.b32.xlu0 %v3155, 24
    %v3182 = vpop.permute.xlu0 %3181
    %3183 = vrot.lane.b32.xlu0 %v3160, 24
    %v3184 = vpop.permute.xlu0 %3183
    %v3187 = vsel %vm1069, %v2543, %v3166
    %v3188 = vsel %vm1069, %v2548, %v3168
    %v3189 = vsel %vm891, %v3187, %v3174
    %v3190 = vsel %vm891, %v3188, %v3176
    %v3191 = vsel %vm1906, %v3189, %v3182
    %v3192 = vsel %vm1906, %v3190, %v3184
    %v3194 = vlaneseq
    %v3195 = vshrl.u32 %v3194, 7
    %v3196 = vsub.s32 0, %v3195
    %v3197 = vrot.slane %v838, %v3196
    %v3200 = vsel %vm981, %v3191, 0
    %v3203 = vsel %vm981, %v3192, 0
    %3205 = vmatprep.subr.mxu0 0.0
    %3206 = vmatpush1.msra.mxu0 %v840
    %3207 = vmatprep.subr.mxu0 0.0
    %3208 = vmatpush1.msra.mxu0 %v841
    %3209 = vmatprep.subr.mxu0 0.0
    %3210 = vmatpush1.msra.mxu0 %v842
    %3211 = vmatprep.subr.mxu0 0.0
    %3212 = vmatpush1.msra.mxu0 %v843
    %3213 = vmatprep.subr.mxu0 0.0
    %3214 = vmatpush1.msra.mxu0 0.0
    %3215 = vmatprep.subr.mxu0 0.0
    %3216 = vmatpush1.msra.mxu0 0.0
    %3217 = vmatprep.subr.mxu0 0.0
    %3218 = vmatpush1.msra.mxu0 0.0
    %3219 = vmatprep.subr.mxu0 0.0
    %3220 = vmatpush1.msra.mxu0 0.0
    %3221 = vmatprep.subr.mxu0 0.0
    %3222 = vmatpush1.msra.mxu0 0.0
    %3223 = vmatprep.subr.mxu0 0.0
    %3224 = vmatpush1.msra.mxu0 0.0
    %3225 = vmatprep.subr.mxu0 0.0
    %3226 = vmatpush1.msra.mxu0 0.0
    %3227 = vmatprep.subr.mxu0 0.0
    %3228 = vmatpush1.msra.mxu0 0.0
    %3229 = vmatprep.subr.mxu0 0.0
    %3230 = vmatpush1.msra.mxu0 0.0
    %3231 = vmatprep.subr.mxu0 0.0
    %3232 = vmatpush1.msra.mxu0 0.0
    %3233 = vmatprep.subr.mxu0 0.0
    %3234 = vmatpush1.msra.mxu0 0.0
    %3235 = vmatprep.subr.mxu0 0.0
    %3236 = vmatpush1.msra.mxu0 0.0
    %3237 = vmatprep.subr.mxu0 0.0
    %3238 = vmatpush1.msra.mxu0 0.0
    %3239 = vmatprep.subr.mxu0 0.0
    %3240 = vmatpush1.msra.mxu0 0.0
    %3241 = vmatprep.subr.mxu0 0.0
    %3242 = vmatpush1.msra.mxu0 0.0
    %3243 = vmatprep.subr.mxu0 0.0
    %3244 = vmatpush1.msra.mxu0 0.0
    %3245 = vmatprep.subr.mxu0 0.0
    %3246 = vmatpush1.msra.mxu0 0.0
    %3247 = vmatprep.subr.mxu0 0.0
    %3248 = vmatpush1.msra.mxu0 0.0
    %3249 = vmatprep.subr.mxu0 0.0
    %3250 = vmatpush1.msra.mxu0 0.0
    %3251 = vmatprep.subr.mxu0 0.0
    %3252 = vmatpush1.msra.mxu0 0.0
    %3253 = vmatprep.subr.mxu0 0.0
    %3254 = vmatpush1.msra.mxu0 0.0
    %3255 = vmatprep.subr.mxu0 0.0
    %3256 = vmatpush1.msra.mxu0 0.0
    %3257 = vmatprep.subr.mxu0 0.0
    %3258 = vmatpush1.msra.mxu0 0.0
    %3259 = vmatprep.subr.mxu0 0.0
    %3260 = vmatpush1.msra.mxu0 0.0
    %3261 = vmatprep.subr.mxu0 0.0
    %3262 = vmatpush1.msra.mxu0 0.0
    %3263 = vmatprep.subr.mxu0 0.0
    %3264 = vmatpush1.msra.mxu0 0.0
    %3265 = vmatprep.subr.mxu0 0.0
    %3266 = vmatpush1.msra.mxu0 0.0
    %3267 = vmatprep.subr.mxu0 0.0
    %3268 = vmatpush1.msra.mxu0 0.0
    %3269 = vmatprep.mubr.f32.mxu0 0.0
    %3270 = vmatmul.mubr.f32.gmra.mrb[0].mxu0 %v3200
    %v3271 = vpop.f32.mrb[0].mxu0
    %v3272 = vadd.f32 %v3197, %v3271
    %v3273 = vpop.f32.mrb[0].mxu0
    %3274 = vmatprep.mubr.f32.mxu0 0.0
    %3275 = vmatmul.mubr.f32.gmra.mrb[0].mxu0 %v3203
    %v3276 = vpop.f32.mrb[0].mxu0
    %v3277 = vadd.f32 %v3197, %v3276
    %v3278 = vpop.f32.mrb[0].mxu0
    %3279 = vdwg.mxu0
    %v3280 = vadd.f32 %v2260, %v3272
    %v3281 = vadd.f32 %v2261, %v3277
    %v3282 = vsel %vm981, %v3280, 0.0
    %3283 = vadd.xlane.f32.xlu0 %v3282
    %v3284 = vpop.xlane.xlu0 %3283
    %v3285 = vsel %vm981, %v3281, 0.0
    %3286 = vadd.xlane.f32.xlu0 %v3285
    %v3287 = vpop.xlane.xlu0 %3286
    %v3288 = vmul.f32 %v3284, %v2004
    %v3289 = vmul.f32 %v3287, %v2004
    %v3290 = vsub.f32 %v3280, %v3288
    %v3291 = vsub.f32 %v3281, %v3289
    %v3292 = vmul.f32 %v3290, %v3290
    %v3293 = vmul.f32 %v3291, %v3291
    %v3294 = vsel %vm981, %v3292, 0.0
    %3295 = vadd.xlane.f32.xlu0 %v3294
    %v3296 = vpop.xlane.xlu0 %3295
    %v3297 = vsel %vm981, %v3293, 0.0
    %3298 = vadd.xlane.f32.xlu0 %v3297
    %v3299 = vpop.xlane.xlu0 %3298
    %v3300 = vmul.f32 %v3296, %v2004
    %v3301 = vmul.f32 %v3299, %v2004
    %v3302 = vadd.f32 %v3300, 1e-05
    %v3303 = vadd.f32 %v3301, 1e-05
    %v3304 = vrsqrt.pop %v3302
    %v3305 = vrsqrt.pop %v3303
    %v3306 = vmul.f32 %v3290, %v3304
    %v3307 = vmul.f32 %v3291, %v3305
    %v3309 = vlaneseq
    %v3310 = vshrl.u32 %v3309, 7
    %v3311 = vsub.s32 0, %v3310
    %v3312 = vrot.slane %v863, %v3311
    %v3314 = vmul.f32 %v3306, %v3312
    %v3315 = vmul.f32 %v3307, %v3312
    %v3317 = vlaneseq
    %v3318 = vshrl.u32 %v3317, 7
    %v3319 = vsub.s32 0, %v3318
    %v3320 = vrot.slane %v862, %v3319
    %v3322 = vadd.f32 %v3314, %v3320
    %v3323 = vadd.f32 %v3315, %v3320
    %v3325 = vlaneseq
    %v3326 = vshrl.u32 %v3325, 7
    %v3327 = vsub.s32 0, %v3326
    %v3328 = vrot.slane %v848, %v3327
    %v3331 = vsel %vm981, %v3322, 0
    %v3334 = vsel %vm981, %v3323, 0
    %3336 = vmatprep.subr.mxu0 0.0
    %3337 = vmatpush1.msra.mxu0 %v850
    %3338 = vmatprep.subr.mxu0 0.0
    %3339 = vmatpush1.msra.mxu0 %v851
    %3340 = vmatprep.subr.mxu0 0.0
    %3341 = vmatpush1.msra.mxu0 %v852
    %3342 = vmatprep.subr.mxu0 0.0
    %3343 = vmatpush1.msra.mxu0 %v853
    %3344 = vmatprep.subr.mxu0 0.0
    %3345 = vmatpush1.msra.mxu0 0.0
    %3346 = vmatprep.subr.mxu0 0.0
    %3347 = vmatpush1.msra.mxu0 0.0
    %3348 = vmatprep.subr.mxu0 0.0
    %3349 = vmatpush1.msra.mxu0 0.0
    %3350 = vmatprep.subr.mxu0 0.0
    %3351 = vmatpush1.msra.mxu0 0.0
    %3352 = vmatprep.subr.mxu0 0.0
    %3353 = vmatpush1.msra.mxu0 0.0
    %3354 = vmatprep.subr.mxu0 0.0
    %3355 = vmatpush1.msra.mxu0 0.0
    %3356 = vmatprep.subr.mxu0 0.0
    %3357 = vmatpush1.msra.mxu0 0.0
    %3358 = vmatprep.subr.mxu0 0.0
    %3359 = vmatpush1.msra.mxu0 0.0
    %3360 = vmatprep.subr.mxu0 0.0
    %3361 = vmatpush1.msra.mxu0 0.0
    %3362 = vmatprep.subr.mxu0 0.0
    %3363 = vmatpush1.msra.mxu0 0.0
    %3364 = vmatprep.subr.mxu0 0.0
    %3365 = vmatpush1.msra.mxu0 0.0
    %3366 = vmatprep.subr.mxu0 0.0
    %3367 = vmatpush1.msra.mxu0 0.0
    %3368 = vmatprep.subr.mxu0 0.0
    %3369 = vmatpush1.msra.mxu0 0.0
    %3370 = vmatprep.subr.mxu0 0.0
    %3371 = vmatpush1.msra.mxu0 0.0
    %3372 = vmatprep.subr.mxu0 0.0
    %3373 = vmatpush1.msra.mxu0 0.0
    %3374 = vmatprep.subr.mxu0 0.0
    %3375 = vmatpush1.msra.mxu0 0.0
    %3376 = vmatprep.subr.mxu0 0.0
    %3377 = vmatpush1.msra.mxu0 0.0
    %3378 = vmatprep.subr.mxu0 0.0
    %3379 = vmatpush1.msra.mxu0 0.0
    %3380 = vmatprep.subr.mxu0 0.0
    %3381 = vmatpush1.msra.mxu0 0.0
    %3382 = vmatprep.subr.mxu0 0.0
    %3383 = vmatpush1.msra.mxu0 0.0
    %3384 = vmatprep.subr.mxu0 0.0
    %3385 = vmatpush1.msra.mxu0 0.0
    %3386 = vmatprep.subr.mxu0 0.0
    %3387 = vmatpush1.msra.mxu0 0.0
    %3388 = vmatprep.subr.mxu0 0.0
    %3389 = vmatpush1.msra.mxu0 0.0
    %3390 = vmatprep.subr.mxu0 0.0
    %3391 = vmatpush1.msra.mxu0 0.0
    %3392 = vmatprep.subr.mxu0 0.0
    %3393 = vmatpush1.msra.mxu0 0.0
    %3394 = vmatprep.subr.mxu0 0.0
    %3395 = vmatpush1.msra.mxu0 0.0
    %3396 = vmatprep.subr.mxu0 0.0
    %3397 = vmatpush1.msra.mxu0 0.0
    %3398 = vmatprep.subr.mxu0 0.0
    %3399 = vmatpush1.msra.mxu0 0.0
    %3400 = vmatprep.mubr.f32.mxu0 0.0
    %3401 = vmatmul.mubr.f32.gmra.mrb[0].mxu0 %v3331
    %v3402 = vpop.f32.mrb[0].mxu0
    %v3403 = vadd.f32 %v3328, %v3402
    %v3404 = vpop.f32.mrb[0].mxu0
    %3405 = vmatprep.mubr.f32.mxu0 0.0
    %3406 = vmatmul.mubr.f32.gmra.mrb[0].mxu0 %v3334
    %v3407 = vpop.f32.mrb[0].mxu0
    %v3408 = vadd.f32 %v3328, %v3407
    %v3409 = vpop.f32.mrb[0].mxu0
    %3410 = vdwg.mxu0
    %v3411 = vmax.f32 %v3403, 0.0
    %v3412 = vmax.f32 %v3408, 0.0
    %v3414 = vlaneseq
    %v3415 = vshrl.u32 %v3414, 7
    %v3416 = vsub.s32 0, %v3415
    %v3417 = vrot.slane %v849, %v3416
    %v3420 = vsel %vm2136, %v3411, 0
    %v3423 = vsel %vm2136, %v3412, 0
    %3425 = vmatprep.subr.mxu0 0.0
    %3426 = vmatpush1.msra.mxu0 %v854
    %3427 = vmatprep.subr.mxu0 0.0
    %3428 = vmatpush1.msra.mxu0 %v855
    %3429 = vmatprep.subr.mxu0 0.0
    %3430 = vmatpush1.msra.mxu0 %v856
    %3431 = vmatprep.subr.mxu0 0.0
    %3432 = vmatpush1.msra.mxu0 %v857
    %3433 = vmatprep.subr.mxu0 0.0
    %3434 = vmatpush1.msra.mxu0 %v858
    %3435 = vmatprep.subr.mxu0 0.0
    %3436 = vmatpush1.msra.mxu0 %v859
    %3437 = vmatprep.subr.mxu0 0.0
    %3438 = vmatpush1.msra.mxu0 %v860
    %3439 = vmatprep.subr.mxu0 0.0
    %3440 = vmatpush1.msra.mxu0 %v861
    %3441 = vmatprep.subr.mxu0 0.0
    %3442 = vmatpush1.msra.mxu0 0.0
    %3443 = vmatprep.subr.mxu0 0.0
    %3444 = vmatpush1.msra.mxu0 0.0
    %3445 = vmatprep.subr.mxu0 0.0
    %3446 = vmatpush1.msra.mxu0 0.0
    %3447 = vmatprep.subr.mxu0 0.0
    %3448 = vmatpush1.msra.mxu0 0.0
    %3449 = vmatprep.subr.mxu0 0.0
    %3450 = vmatpush1.msra.mxu0 0.0
    %3451 = vmatprep.subr.mxu0 0.0
    %3452 = vmatpush1.msra.mxu0 0.0
    %3453 = vmatprep.subr.mxu0 0.0
    %3454 = vmatpush1.msra.mxu0 0.0
    %3455 = vmatprep.subr.mxu0 0.0
    %3456 = vmatpush1.msra.mxu0 0.0
    %3457 = vmatprep.subr.mxu0 0.0
    %3458 = vmatpush1.msra.mxu0 0.0
    %3459 = vmatprep.subr.mxu0 0.0
    %3460 = vmatpush1.msra.mxu0 0.0
    %3461 = vmatprep.subr.mxu0 0.0
    %3462 = vmatpush1.msra.mxu0 0.0
    %3463 = vmatprep.subr.mxu0 0.0
    %3464 = vmatpush1.msra.mxu0 0.0
    %3465 = vmatprep.subr.mxu0 0.0
    %3466 = vmatpush1.msra.mxu0 0.0
    %3467 = vmatprep.subr.mxu0 0.0
    %3468 = vmatpush1.msra.mxu0 0.0
    %3469 = vmatprep.subr.mxu0 0.0
    %3470 = vmatpush1.msra.mxu0 0.0
    %3471 = vmatprep.subr.mxu0 0.0
    %3472 = vmatpush1.msra.mxu0 0.0
    %3473 = vmatprep.subr.mxu0 0.0
    %3474 = vmatpush1.msra.mxu0 0.0
    %3475 = vmatprep.subr.mxu0 0.0
    %3476 = vmatpush1.msra.mxu0 0.0
    %3477 = vmatprep.subr.mxu0 0.0
    %3478 = vmatpush1.msra.mxu0 0.0
    %3479 = vmatprep.subr.mxu0 0.0
    %3480 = vmatpush1.msra.mxu0 0.0
    %3481 = vmatprep.subr.mxu0 0.0
    %3482 = vmatpush1.msra.mxu0 0.0
    %3483 = vmatprep.subr.mxu0 0.0
    %3484 = vmatpush1.msra.mxu0 0.0
    %3485 = vmatprep.subr.mxu0 0.0
    %3486 = vmatpush1.msra.mxu0 0.0
    %3487 = vmatprep.subr.mxu0 0.0
    %3488 = vmatpush1.msra.mxu0 0.0
    %3489 = vmatprep.mubr.f32.mxu0 0.0
    %3490 = vmatmul.mubr.f32.gmra.mrb[0].mxu0 %v3420
    %v3491 = vpop.f32.mrb[0].mxu0
    %v3492 = vadd.f32 %v3417, %v3491
    %v3493 = vpop.f32.mrb[0].mxu0
    %3494 = vmatprep.mubr.f32.mxu0 0.0
    %3495 = vmatmul.mubr.f32.gmra.mrb[0].mxu0 %v3423
    %v3496 = vpop.f32.mrb[0].mxu0
    %v3497 = vadd.f32 %v3417, %v3496
    %v3498 = vpop.f32.mrb[0].mxu0
    %3499 = vdwg.mxu0
    %v3500 = vadd.f32 %v3322, %v3492
    %v3501 = vadd.f32 %v3323, %v3497
    %v3502 = vsel %vm981, %v3500, 0.0
    %3503 = vadd.xlane.f32.xlu0 %v3502
    %v3504 = vpop.xlane.xlu0 %3503
    %v3505 = vsel %vm981, %v3501, 0.0
    %3506 = vadd.xlane.f32.xlu0 %v3505
    %v3507 = vpop.xlane.xlu0 %3506
    %v3508 = vmul.f32 %v3504, %v2004
    %v3509 = vmul.f32 %v3507, %v2004
    %v3510 = vsub.f32 %v3500, %v3508
    %v3511 = vsub.f32 %v3501, %v3509
    %v3512 = vmul.f32 %v3510, %v3510
    %v3513 = vmul.f32 %v3511, %v3511
    %v3514 = vsel %vm981, %v3512, 0.0
    %3515 = vadd.xlane.f32.xlu0 %v3514
    %v3516 = vpop.xlane.xlu0 %3515
    %v3517 = vsel %vm981, %v3513, 0.0
    %3518 = vadd.xlane.f32.xlu0 %v3517
    %v3519 = vpop.xlane.xlu0 %3518
    %v3520 = vmul.f32 %v3516, %v2004
    %v3521 = vmul.f32 %v3519, %v2004
    %v3522 = vadd.f32 %v3520, 1e-05
    %v3523 = vadd.f32 %v3521, 1e-05
    %v3524 = vrsqrt.pop %v3522
    %v3525 = vrsqrt.pop %v3523
    %v3526 = vmul.f32 %v3510, %v3524
    %v3527 = vmul.f32 %v3511, %v3525
    %v3529 = vlaneseq
    %v3530 = vshrl.u32 %v3529, 7
    %v3531 = vsub.s32 0, %v3530
    %v3532 = vrot.slane %v865, %v3531
    %v3534 = vmul.f32 %v3526, %v3532
    %v3535 = vmul.f32 %v3527, %v3532
    %v3537 = vlaneseq
    %v3538 = vshrl.u32 %v3537, 7
    %v3539 = vsub.s32 0, %v3538
    %v3540 = vrot.slane %v864, %v3539
    %v3542 = vadd.f32 %v3534, %v3540
    %v3543 = vadd.f32 %v3535, %v3540
    %v3544 = vsel %vm981, %v3542, 0.0
    %3545 = vadd.xlane.f32.xlu0 %v3544
    %v3546 = vpop.xlane.xlu0 %3545
    %v3547 = vsel %vm981, %v3543, 0.0
    %3548 = vadd.xlane.f32.xlu0 %v3547
    %v3549 = vpop.xlane.xlu0 %3548
    %v3550 = vmul.f32 %v3546, %v2004
    %v3551 = vmul.f32 %v3549, %v2004
    %v3552 = vsub.f32 %v3542, %v3550
    %v3553 = vsub.f32 %v3543, %v3551
    %v3554 = vmul.f32 %v3552, %v3552
    %v3555 = vmul.f32 %v3553, %v3553
    %v3556 = vsel %vm981, %v3554, 0.0
    %3557 = vadd.xlane.f32.xlu0 %v3556
    %v3558 = vpop.xlane.xlu0 %3557
    %v3559 = vsel %vm981, %v3555, 0.0
    %3560 = vadd.xlane.f32.xlu0 %v3559
    %v3561 = vpop.xlane.xlu0 %3560
    %v3562 = vmul.f32 %v3558, %v2004
    %v3563 = vmul.f32 %v3561, %v2004
    %v3564 = vadd.f32 %v3562, 1e-05
    %v3565 = vadd.f32 %v3563, 1e-05
    %v3566 = vrsqrt.pop %v3564
    %v3567 = vrsqrt.pop %v3565
    %v3568 = vmul.f32 %v3552, %v3566
    %v3569 = vmul.f32 %v3553, %v3567
    %v3571 = vlaneseq
    %v3572 = vshrl.u32 %v3571, 7
    %v3573 = vsub.s32 0, %v3572
    %v3574 = vrot.slane %v809, %v3573
    %v3576 = vmul.f32 %v3568, %v3574
    %v3577 = vmul.f32 %v3569, %v3574
    %v3579 = vlaneseq
    %v3580 = vshrl.u32 %v3579, 7
    %v3581 = vsub.s32 0, %v3580
    %v3582 = vrot.slane %v808, %v3581
    %v3584 = vadd.f32 %v3576, %v3582
    %v3585 = vadd.f32 %v3577, %v3582
    %v3586 = vld [vmem:[%s3] sm:$0xff]
    %v3587 = vld [vmem:[%s3 + $0x8] sm:$0xff]
    %3588 = vset.pattern.permute.xlu0 0
    %3589 = vperm.xlu0 %3588, %v3586
    %v3590 = vpop.permute.xlu0 %3589
    %3591 = vset.pattern.permute.xlu0 0
    %3592 = vperm.xlu0 %3591, %v3587
    %v3593 = vpop.permute.xlu0 %3592
    %vm3594 = vcmp.eq.s32.totalorder %v3590, %v880
    %vm3595 = vcmp.eq.s32.totalorder %v3593, %v880
    %v3596 = vsel %vm3594, 1.0, 0.0
    %v3597 = vsel %vm3595, 1.0, 0.0
    %v3599 = vsel %vm891, %v3596, 0
    %v3602 = vsel %vm891, %v3597, 0
    %3604 = vmatprep.subr.mxu0 0.0
    %3605 = vmatpush1.msra.mxu0 %v806
    %3606 = vmatprep.subr.mxu0 0.0
    %3607 = vmatpush1.msra.mxu0 %v807
    %3608 = vmatprep.subr.mxu0 0.0
    %3609 = vmatpush1.msra.mxu0 0.0
    %3610 = vmatprep.subr.mxu0 0.0
    %3611 = vmatpush1.msra.mxu0 0.0
    %3612 = vmatprep.subr.mxu0 0.0
    %3613 = vmatpush1.msra.mxu0 0.0
    %3614 = vmatprep.subr.mxu0 0.0
    %3615 = vmatpush1.msra.mxu0 0.0
    %3616 = vmatprep.subr.mxu0 0.0
    %3617 = vmatpush1.msra.mxu0 0.0
    %3618 = vmatprep.subr.mxu0 0.0
    %3619 = vmatpush1.msra.mxu0 0.0
    %3620 = vmatprep.subr.mxu0 0.0
    %3621 = vmatpush1.msra.mxu0 0.0
    %3622 = vmatprep.subr.mxu0 0.0
    %3623 = vmatpush1.msra.mxu0 0.0
    %3624 = vmatprep.subr.mxu0 0.0
    %3625 = vmatpush1.msra.mxu0 0.0
    %3626 = vmatprep.subr.mxu0 0.0
    %3627 = vmatpush1.msra.mxu0 0.0
    %3628 = vmatprep.subr.mxu0 0.0
    %3629 = vmatpush1.msra.mxu0 0.0
    %3630 = vmatprep.subr.mxu0 0.0
    %3631 = vmatpush1.msra.mxu0 0.0
    %3632 = vmatprep.subr.mxu0 0.0
    %3633 = vmatpush1.msra.mxu0 0.0
    %3634 = vmatprep.subr.mxu0 0.0
    %3635 = vmatpush1.msra.mxu0 0.0
    %3636 = vmatprep.subr.mxu0 0.0
    %3637 = vmatpush1.msra.mxu0 0.0
    %3638 = vmatprep.subr.mxu0 0.0
    %3639 = vmatpush1.msra.mxu0 0.0
    %3640 = vmatprep.subr.mxu0 0.0
    %3641 = vmatpush1.msra.mxu0 0.0
    %3642 = vmatprep.subr.mxu0 0.0
    %3643 = vmatpush1.msra.mxu0 0.0
    %3644 = vmatprep.subr.mxu0 0.0
    %3645 = vmatpush1.msra.mxu0 0.0
    %3646 = vmatprep.subr.mxu0 0.0
    %3647 = vmatpush1.msra.mxu0 0.0
    %3648 = vmatprep.subr.mxu0 0.0
    %3649 = vmatpush1.msra.mxu0 0.0
    %3650 = vmatprep.subr.mxu0 0.0
    %3651 = vmatpush1.msra.mxu0 0.0
    %3652 = vmatprep.subr.mxu0 0.0
    %3653 = vmatpush1.msra.mxu0 0.0
    %3654 = vmatprep.subr.mxu0 0.0
    %3655 = vmatpush1.msra.mxu0 0.0
    %3656 = vmatprep.subr.mxu0 0.0
    %3657 = vmatpush1.msra.mxu0 0.0
    %3658 = vmatprep.subr.mxu0 0.0
    %3659 = vmatpush1.msra.mxu0 0.0
    %3660 = vmatprep.subr.mxu0 0.0
    %3661 = vmatpush1.msra.mxu0 0.0
    %3662 = vmatprep.subr.mxu0 0.0
    %3663 = vmatpush1.msra.mxu0 0.0
    %3664 = vmatprep.subr.mxu0 0.0
    %3665 = vmatpush1.msra.mxu0 0.0
    %3666 = vmatprep.subr.mxu0 0.0
    %3667 = vmatpush1.msra.mxu0 0.0
    %3668 = vmatprep.mubr.f32.mxu0 0.0
    %3669 = vmatmul.mubr.f32.gmra.mrb[0].mxu0 %v3599
    %v3670 = vpop.f32.mrb[0].mxu0
    %v3671 = vadd.f32 0.0, %v3670
    %v3672 = vpop.f32.mrb[0].mxu0
    %3673 = vmatprep.mubr.f32.mxu0 0.0
    %3674 = vmatmul.mubr.f32.gmra.mrb[0].mxu0 %v3602
    %v3675 = vpop.f32.mrb[0].mxu0
    %v3676 = vadd.f32 0.0, %v3675
    %v3677 = vpop.f32.mrb[0].mxu0
    %3678 = vdwg.mxu0
    %v3679 = vmul.f32 %v3671, 5.656854
    %v3680 = vmul.f32 %v3676, 5.656854
    %v3682 = vlaneseq
    %v3683 = vshrl.u32 %v3682, 7
    %v3684 = vsub.s32 0, %v3683
    %v3685 = vrot.slane %v752, %v3684
    %v3688 = vsel %vm981, %v3679, 0
    %v3691 = vsel %vm981, %v3680, 0
    %3693 = vmatprep.subr.mxu0 0.0
    %3694 = vmatpush1.msra.mxu0 %v757
    %3695 = vmatprep.subr.mxu0 0.0
    %3696 = vmatpush1.msra.mxu0 %v758
    %3697 = vmatprep.subr.mxu0 0.0
    %3698 = vmatpush1.msra.mxu0 %v759
    %3699 = vmatprep.subr.mxu0 0.0
    %3700 = vmatpush1.msra.mxu0 %v760
    %3701 = vmatprep.subr.mxu0 0.0
    %3702 = vmatpush1.msra.mxu0 0.0
    %3703 = vmatprep.subr.mxu0 0.0
    %3704 = vmatpush1.msra.mxu0 0.0
    %3705 = vmatprep.subr.mxu0 0.0
    %3706 = vmatpush1.msra.mxu0 0.0
    %3707 = vmatprep.subr.mxu0 0.0
    %3708 = vmatpush1.msra.mxu0 0.0
    %3709 = vmatprep.subr.mxu0 0.0
    %3710 = vmatpush1.msra.mxu0 0.0
    %3711 = vmatprep.subr.mxu0 0.0
    %3712 = vmatpush1.msra.mxu0 0.0
    %3713 = vmatprep.subr.mxu0 0.0
    %3714 = vmatpush1.msra.mxu0 0.0
    %3715 = vmatprep.subr.mxu0 0.0
    %3716 = vmatpush1.msra.mxu0 0.0
    %3717 = vmatprep.subr.mxu0 0.0
    %3718 = vmatpush1.msra.mxu0 0.0
    %3719 = vmatprep.subr.mxu0 0.0
    %3720 = vmatpush1.msra.mxu0 0.0
    %3721 = vmatprep.subr.mxu0 0.0
    %3722 = vmatpush1.msra.mxu0 0.0
    %3723 = vmatprep.subr.mxu0 0.0
    %3724 = vmatpush1.msra.mxu0 0.0
    %3725 = vmatprep.subr.mxu0 0.0
    %3726 = vmatpush1.msra.mxu0 0.0
    %3727 = vmatprep.subr.mxu0 0.0
    %3728 = vmatpush1.msra.mxu0 0.0
    %3729 = vmatprep.subr.mxu0 0.0
    %3730 = vmatpush1.msra.mxu0 0.0
    %3731 = vmatprep.subr.mxu0 0.0
    %3732 = vmatpush1.msra.mxu0 0.0
    %3733 = vmatprep.subr.mxu0 0.0
    %3734 = vmatpush1.msra.mxu0 0.0
    %3735 = vmatprep.subr.mxu0 0.0
    %3736 = vmatpush1.msra.mxu0 0.0
    %3737 = vmatprep.subr.mxu0 0.0
    %3738 = vmatpush1.msra.mxu0 0.0
    %3739 = vmatprep.subr.mxu0 0.0
    %3740 = vmatpush1.msra.mxu0 0.0
    %3741 = vmatprep.subr.mxu0 0.0
    %3742 = vmatpush1.msra.mxu0 0.0
    %3743 = vmatprep.subr.mxu0 0.0
    %3744 = vmatpush1.msra.mxu0 0.0
    %3745 = vmatprep.subr.mxu0 0.0
    %3746 = vmatpush1.msra.mxu0 0.0
    %3747 = vmatprep.subr.mxu0 0.0
    %3748 = vmatpush1.msra.mxu0 0.0
    %3749 = vmatprep.subr.mxu0 0.0
    %3750 = vmatpush1.msra.mxu0 0.0
    %3751 = vmatprep.subr.mxu0 0.0
    %3752 = vmatpush1.msra.mxu0 0.0
    %3753 = vmatprep.subr.mxu0 0.0
    %3754 = vmatpush1.msra.mxu0 0.0
    %3755 = vmatprep.subr.mxu0 0.0
    %3756 = vmatpush1.msra.mxu0 0.0
    %3757 = vmatprep.mubr.f32.mxu0 0.0
    %3758 = vmatmul.mubr.f32.gmra.mrb[0].mxu0 %v3688
    %v3759 = vpop.f32.mrb[0].mxu0
    %v3760 = vadd.f32 %v3685, %v3759
    %v3761 = vpop.f32.mrb[0].mxu0
    %3762 = vmatprep.mubr.f32.mxu0 0.0
    %3763 = vmatmul.mubr.f32.gmra.mrb[0].mxu0 %v3691
    %v3764 = vpop.f32.mrb[0].mxu0
    %v3765 = vadd.f32 %v3685, %v3764
    %v3766 = vpop.f32.mrb[0].mxu0
    %3767 = vdwg.mxu0
    %3770 = vrot.lane.b32.xlu0 %v3760, 96
    %v3771 = vpop.permute.xlu0 %3770
    %3772 = vrot.lane.b32.xlu0 %v3765, 96
    %v3773 = vpop.permute.xlu0 %3772
    %v3774 = vsel %vm1069, %v3760, 0
    %v3776 = vsel %vm1069, %v3765, 0
    %v3778 = vsel %vm1069, %v3771, 0
    %v3780 = vsel %vm1069, %v3773, 0
    %3782 = vmatprep.subr.mxu0 0.0
    %3783 = vmatpush1.xpose.msra.mxu0 %v3778
    %3784 = vmatprep.subr.mxu0 0.0
    %3785 = vmatpush1.xpose.msra.mxu0 %v3780
    %3786 = vmatprep.subr.mxu0 0.0
    %3787 = vmatpush1.xpose.msra.mxu0 0.0
    %3788 = vmatprep.subr.mxu0 0.0
    %3789 = vmatpush1.xpose.msra.mxu0 0.0
    %3790 = vmatprep.subr.mxu0 0.0
    %3791 = vmatpush1.xpose.msra.mxu0 0.0
    %3792 = vmatprep.subr.mxu0 0.0
    %3793 = vmatpush1.xpose.msra.mxu0 0.0
    %3794 = vmatprep.subr.mxu0 0.0
    %3795 = vmatpush1.xpose.msra.mxu0 0.0
    %3796 = vmatprep.subr.mxu0 0.0
    %3797 = vmatpush1.xpose.msra.mxu0 0.0
    %3798 = vmatprep.subr.mxu0 0.0
    %3799 = vmatpush1.xpose.msra.mxu0 0.0
    %3800 = vmatprep.subr.mxu0 0.0
    %3801 = vmatpush1.xpose.msra.mxu0 0.0
    %3802 = vmatprep.subr.mxu0 0.0
    %3803 = vmatpush1.xpose.msra.mxu0 0.0
    %3804 = vmatprep.subr.mxu0 0.0
    %3805 = vmatpush1.xpose.msra.mxu0 0.0
    %3806 = vmatprep.subr.mxu0 0.0
    %3807 = vmatpush1.xpose.msra.mxu0 0.0
    %3808 = vmatprep.subr.mxu0 0.0
    %3809 = vmatpush1.xpose.msra.mxu0 0.0
    %3810 = vmatprep.subr.mxu0 0.0
    %3811 = vmatpush1.xpose.msra.mxu0 0.0
    %3812 = vmatprep.subr.mxu0 0.0
    %3813 = vmatpush1.xpose.msra.mxu0 0.0
    %3814 = vmatprep.subr.mxu0 0.0
    %3815 = vmatpush1.xpose.msra.mxu0 0.0
    %3816 = vmatprep.subr.mxu0 0.0
    %3817 = vmatpush1.xpose.msra.mxu0 0.0
    %3818 = vmatprep.subr.mxu0 0.0
    %3819 = vmatpush1.xpose.msra.mxu0 0.0
    %3820 = vmatprep.subr.mxu0 0.0
    %3821 = vmatpush1.xpose.msra.mxu0 0.0
    %3822 = vmatprep.subr.mxu0 0.0
    %3823 = vmatpush1.xpose.msra.mxu0 0.0
    %3824 = vmatprep.subr.mxu0 0.0
    %3825 = vmatpush1.xpose.msra.mxu0 0.0
    %3826 = vmatprep.subr.mxu0 0.0
    %3827 = vmatpush1.xpose.msra.mxu0 0.0
    %3828 = vmatprep.subr.mxu0 0.0
    %3829 = vmatpush1.xpose.msra.mxu0 0.0
    %3830 = vmatprep.subr.mxu0 0.0
    %3831 = vmatpush1.xpose.msra.mxu0 0.0
    %3832 = vmatprep.subr.mxu0 0.0
    %3833 = vmatpush1.xpose.msra.mxu0 0.0
    %3834 = vmatprep.subr.mxu0 0.0
    %3835 = vmatpush1.xpose.msra.mxu0 0.0
    %3836 = vmatprep.subr.mxu0 0.0
    %3837 = vmatpush1.xpose.msra.mxu0 0.0
    %3838 = vmatprep.subr.mxu0 0.0
    %3839 = vmatpush1.xpose.msra.mxu0 0.0
    %3840 = vmatprep.subr.mxu0 0.0
    %3841 = vmatpush1.xpose.msra.mxu0 0.0
    %3842 = vmatprep.subr.mxu0 0.0
    %3843 = vmatpush1.xpose.msra.mxu0 0.0
    %3844 = vmatprep.subr.mxu0 0.0
    %3845 = vmatpush1.xpose.msra.mxu0 0.0
    %3846 = vmatprep.mubr.f32.mxu0 0.0
    %3847 = vmatmul.mubr.f32.gmra.mrb[0].mxu0 %v3774
    %v3848 = vpop.f32.mrb[0].mxu0
    %v3849 = vadd.f32 0.0, %v3848
    %v3850 = vpop.f32.mrb[0].mxu0
    %3851 = vmatprep.mubr.f32.mxu0 0.0
    %3852 = vmatmul.mubr.f32.gmra.mrb[0].mxu0 %v3776
    %v3853 = vpop.f32.mrb[0].mxu0
    %v3854 = vadd.f32 0.0, %v3853
    %v3855 = vpop.f32.mrb[0].mxu0
    %3856 = vdwg.mxu0
    %v3857 = vmul.f32 %v3849, 0.35355338
    %v3858 = vmul.f32 %v3854, 0.35355338
    %v3859 = vadd.f32 %v3857, %v873
    %v3860 = vadd.f32 %v3858, %v874
    %v3861 = vsel %vm891, %v3859, -inf
    %3862 = vmax.xlane.f32.xlu0 %v3861
    %v3863 = vpop.xlane.xlu0 %3862
    %v3864 = vsel %vm891, %v3860, -inf
    %3865 = vmax.xlane.f32.xlu0 %v3864
    %v3866 = vpop.xlane.xlu0 %3865
    %v3867 = vsub.f32 %v3859, %v3863
    %v3868 = vsub.f32 %v3860, %v3866
    %v3869 = vmul.f32 %v3867, 1.442695
    %v3870 = vpow.pop %v3869
    %v3871 = vmul.f32 %v3868, 1.442695
    %v3872 = vpow.pop %v3871
    %v3873 = vsel %vm891, %v3870, 0.0
    %3874 = vadd.xlane.f32.xlu0 %v3873
    %v3875 = vpop.xlane.xlu0 %3874
    %v3876 = vsel %vm891, %v3872, 0.0
    %3877 = vadd.xlane.f32.xlu0 %v3876
    %v3878 = vpop.xlane.xlu0 %3877
    %v3879 = vrcp.pop %v3875
    %v3880 = vrcp.pop %v3878
    %v3881 = vmul.f32 %v3870, %v3879
    %v3882 = vmul.f32 %v3872, %v3880
    %3883 = vrot.lane.b32.xlu0 %v3760, 64
    %v3884 = vpop.permute.xlu0 %3883
    %3885 = vrot.lane.b32.xlu0 %v3765, 64
    %v3886 = vpop.permute.xlu0 %3885
    %v3890 = vsel %vm891, %v3881, 0
    %v3893 = vsel %vm891, %v3882, 0
    %3895 = vmatprep.subr.mxu0 0.0
    %3896 = vmatpush1.msra.mxu0 %v3884
    %3897 = vmatprep.subr.mxu0 0.0
    %3898 = vmatpush1.msra.mxu0 %v3886
    %3899 = vmatprep.subr.mxu0 0.0
    %3900 = vmatpush1.msra.mxu0 0.0
    %3901 = vmatprep.subr.mxu0 0.0
    %3902 = vmatpush1.msra.mxu0 0.0
    %3903 = vmatprep.subr.mxu0 0.0
    %3904 = vmatpush1.msra.mxu0 0.0
    %3905 = vmatprep.subr.mxu0 0.0
    %3906 = vmatpush1.msra.mxu0 0.0
    %3907 = vmatprep.subr.mxu0 0.0
    %3908 = vmatpush1.msra.mxu0 0.0
    %3909 = vmatprep.subr.mxu0 0.0
    %3910 = vmatpush1.msra.mxu0 0.0
    %3911 = vmatprep.subr.mxu0 0.0
    %3912 = vmatpush1.msra.mxu0 0.0
    %3913 = vmatprep.subr.mxu0 0.0
    %3914 = vmatpush1.msra.mxu0 0.0
    %3915 = vmatprep.subr.mxu0 0.0
    %3916 = vmatpush1.msra.mxu0 0.0
    %3917 = vmatprep.subr.mxu0 0.0
    %3918 = vmatpush1.msra.mxu0 0.0
    %3919 = vmatprep.subr.mxu0 0.0
    %3920 = vmatpush1.msra.mxu0 0.0
    %3921 = vmatprep.subr.mxu0 0.0
    %3922 = vmatpush1.msra.mxu0 0.0
    %3923 = vmatprep.subr.mxu0 0.0
    %3924 = vmatpush1.msra.mxu0 0.0
    %3925 = vmatprep.subr.mxu0 0.0
    %3926 = vmatpush1.msra.mxu0 0.0
    %3927 = vmatprep.subr.mxu0 0.0
    %3928 = vmatpush1.msra.mxu0 0.0
    %3929 = vmatprep.subr.mxu0 0.0
    %3930 = vmatpush1.msra.mxu0 0.0
    %3931 = vmatprep.subr.mxu0 0.0
    %3932 = vmatpush1.msra.mxu0 0.0
    %3933 = vmatprep.subr.mxu0 0.0
    %3934 = vmatpush1.msra.mxu0 0.0
    %3935 = vmatprep.subr.mxu0 0.0
    %3936 = vmatpush1.msra.mxu0 0.0
    %3937 = vmatprep.subr.mxu0 0.0
    %3938 = vmatpush1.msra.mxu0 0.0
    %3939 = vmatprep.subr.mxu0 0.0
    %3940 = vmatpush1.msra.mxu0 0.0
    %3941 = vmatprep.subr.mxu0 0.0
    %3942 = vmatpush1.msra.mxu0 0.0
    %3943 = vmatprep.subr.mxu0 0.0
    %3944 = vmatpush1.msra.mxu0 0.0
    %3945 = vmatprep.subr.mxu0 0.0
    %3946 = vmatpush1.msra.mxu0 0.0
    %3947 = vmatprep.subr.mxu0 0.0
    %3948 = vmatpush1.msra.mxu0 0.0
    %3949 = vmatprep.subr.mxu0 0.0
    %3950 = vmatpush1.msra.mxu0 0.0
    %3951 = vmatprep.subr.mxu0 0.0
    %3952 = vmatpush1.msra.mxu0 0.0
    %3953 = vmatprep.subr.mxu0 0.0
    %3954 = vmatpush1.msra.mxu0 0.0
    %3955 = vmatprep.subr.mxu0 0.0
    %3956 = vmatpush1.msra.mxu0 0.0
    %3957 = vmatprep.subr.mxu0 0.0
    %3958 = vmatpush1.msra.mxu0 0.0
    %3959 = vmatprep.mubr.f32.mxu0 0.0
    %3960 = vmatmul.mubr.f32.gmra.mrb[0].mxu0 %v3890
    %v3961 = vpop.f32.mrb[0].mxu0
    %v3962 = vadd.f32 0.0, %v3961
    %v3963 = vpop.f32.mrb[0].mxu0
    %3964 = vmatprep.mubr.f32.mxu0 0.0
    %3965 = vmatmul.mubr.f32.gmra.mrb[0].mxu0 %v3893
    %v3966 = vpop.f32.mrb[0].mxu0
    %v3967 = vadd.f32 0.0, %v3966
    %v3968 = vpop.f32.mrb[0].mxu0
    %3969 = vdwg.mxu0
    %3970 = vrot.lane.b32.xlu0 %v3760, 120
    %v3971 = vpop.permute.xlu0 %3970
    %3972 = vrot.lane.b32.xlu0 %v3765, 120
    %v3973 = vpop.permute.xlu0 %3972
    %3974 = vrot.lane.b32.xlu0 %v3760, 88
    %v3975 = vpop.permute.xlu0 %3974
    %3976 = vrot.lane.b32.xlu0 %v3765, 88
    %v3977 = vpop.permute.xlu0 %3976
    %v3978 = vsel %vm1069, %v3971, 0
    %v3980 = vsel %vm1069, %v3973, 0
    %v3982 = vsel %vm1069, %v3975, 0
    %v3984 = vsel %vm1069, %v3977, 0
    %3986 = vmatprep.subr.mxu0 0.0
    %3987 = vmatpush1.xpose.msra.mxu0 %v3982
    %3988 = vmatprep.subr.mxu0 0.0
    %3989 = vmatpush1.xpose.msra.mxu0 %v3984
    %3990 = vmatprep.subr.mxu0 0.0
    %3991 = vmatpush1.xpose.msra.mxu0 0.0
    %3992 = vmatprep.subr.mxu0 0.0
    %3993 = vmatpush1.xpose.msra.mxu0 0.0
    %3994 = vmatprep.subr.mxu0 0.0
    %3995 = vmatpush1.xpose.msra.mxu0 0.0
    %3996 = vmatprep.subr.mxu0 0.0
    %3997 = vmatpush1.xpose.msra.mxu0 0.0
    %3998 = vmatprep.subr.mxu0 0.0
    %3999 = vmatpush1.xpose.msra.mxu0 0.0
    %4000 = vmatprep.subr.mxu0 0.0
    %4001 = vmatpush1.xpose.msra.mxu0 0.0
    %4002 = vmatprep.subr.mxu0 0.0
    %4003 = vmatpush1.xpose.msra.mxu0 0.0
    %4004 = vmatprep.subr.mxu0 0.0
    %4005 = vmatpush1.xpose.msra.mxu0 0.0
    %4006 = vmatprep.subr.mxu0 0.0
    %4007 = vmatpush1.xpose.msra.mxu0 0.0
    %4008 = vmatprep.subr.mxu0 0.0
    %4009 = vmatpush1.xpose.msra.mxu0 0.0
    %4010 = vmatprep.subr.mxu0 0.0
    %4011 = vmatpush1.xpose.msra.mxu0 0.0
    %4012 = vmatprep.subr.mxu0 0.0
    %4013 = vmatpush1.xpose.msra.mxu0 0.0
    %4014 = vmatprep.subr.mxu0 0.0
    %4015 = vmatpush1.xpose.msra.mxu0 0.0
    %4016 = vmatprep.subr.mxu0 0.0
    %4017 = vmatpush1.xpose.msra.mxu0 0.0
    %4018 = vmatprep.subr.mxu0 0.0
    %4019 = vmatpush1.xpose.msra.mxu0 0.0
    %4020 = vmatprep.subr.mxu0 0.0
    %4021 = vmatpush1.xpose.msra.mxu0 0.0
    %4022 = vmatprep.subr.mxu0 0.0
    %4023 = vmatpush1.xpose.msra.mxu0 0.0
    %4024 = vmatprep.subr.mxu0 0.0
    %4025 = vmatpush1.xpose.msra.mxu0 0.0
    %4026 = vmatprep.subr.mxu0 0.0
    %4027 = vmatpush1.xpose.msra.mxu0 0.0
    %4028 = vmatprep.subr.mxu0 0.0
    %4029 = vmatpush1.xpose.msra.mxu0 0.0
    %4030 = vmatprep.subr.mxu0 0.0
    %4031 = vmatpush1.xpose.msra.mxu0 0.0
    %4032 = vmatprep.subr.mxu0 0.0
    %4033 = vmatpush1.xpose.msra.mxu0 0.0
    %4034 = vmatprep.subr.mxu0 0.0
    %4035 = vmatpush1.xpose.msra.mxu0 0.0
    %4036 = vmatprep.subr.mxu0 0.0
    %4037 = vmatpush1.xpose.msra.mxu0 0.0
    %4038 = vmatprep.subr.mxu0 0.0
    %4039 = vmatpush1.xpose.msra.mxu0 0.0
    %4040 = vmatprep.subr.mxu0 0.0
    %4041 = vmatpush1.xpose.msra.mxu0 0.0
    %4042 = vmatprep.subr.mxu0 0.0
    %4043 = vmatpush1.xpose.msra.mxu0 0.0
    %4044 = vmatprep.subr.mxu0 0.0
    %4045 = vmatpush1.xpose.msra.mxu0 0.0
    %4046 = vmatprep.subr.mxu0 0.0
    %4047 = vmatpush1.xpose.msra.mxu0 0.0
    %4048 = vmatprep.subr.mxu0 0.0
    %4049 = vmatpush1.xpose.msra.mxu0 0.0
    %4050 = vmatprep.mubr.f32.mxu0 0.0
    %4051 = vmatmul.mubr.f32.gmra.mrb[0].mxu0 %v3978
    %v4052 = vpop.f32.mrb[0].mxu0
    %v4053 = vadd.f32 0.0, %v4052
    %v4054 = vpop.f32.mrb[0].mxu0
    %4055 = vmatprep.mubr.f32.mxu0 0.0
    %4056 = vmatmul.mubr.f32.gmra.mrb[0].mxu0 %v3980
    %v4057 = vpop.f32.mrb[0].mxu0
    %v4058 = vadd.f32 0.0, %v4057
    %v4059 = vpop.f32.mrb[0].mxu0
    %4060 = vdwg.mxu0
    %v4061 = vmul.f32 %v4053, 0.35355338
    %v4062 = vmul.f32 %v4058, 0.35355338
    %v4063 = vadd.f32 %v4061, %v873
    %v4064 = vadd.f32 %v4062, %v874
    %v4065 = vsel %vm891, %v4063, -inf
    %4066 = vmax.xlane.f32.xlu0 %v4065
    %v4067 = vpop.xlane.xlu0 %4066
    %v4068 = vsel %vm891, %v4064, -inf
    %4069 = vmax.xlane.f32.xlu0 %v4068
    %v4070 = vpop.xlane.xlu0 %4069
    %v4071 = vsub.f32 %v4063, %v4067
    %v4072 = vsub.f32 %v4064, %v4070
    %v4073 = vmul.f32 %v4071, 1.442695
    %v4074 = vpow.pop %v4073
    %v4075 = vmul.f32 %v4072, 1.442695
    %v4076 = vpow.pop %v4075
    %v4077 = vsel %vm891, %v4074, 0.0
    %4078 = vadd.xlane.f32.xlu0 %v4077
    %v4079 = vpop.xlane.xlu0 %4078
    %v4080 = vsel %vm891, %v4076, 0.0
    %4081 = vadd.xlane.f32.xlu0 %v4080
    %v4082 = vpop.xlane.xlu0 %4081
    %v4083 = vrcp.pop %v4079
    %v4084 = vrcp.pop %v4082
    %v4085 = vmul.f32 %v4074, %v4083
    %v4086 = vmul.f32 %v4076, %v4084
    %4087 = vrot.lane.b32.xlu0 %v3760, 56
    %v4088 = vpop.permute.xlu0 %4087
    %4089 = vrot.lane.b32.xlu0 %v3765, 56
    %v4090 = vpop.permute.xlu0 %4089
    %v4094 = vsel %vm891, %v4085, 0
    %v4097 = vsel %vm891, %v4086, 0
    %4099 = vmatprep.subr.mxu0 0.0
    %4100 = vmatpush1.msra.mxu0 %v4088
    %4101 = vmatprep.subr.mxu0 0.0
    %4102 = vmatpush1.msra.mxu0 %v4090
    %4103 = vmatprep.subr.mxu0 0.0
    %4104 = vmatpush1.msra.mxu0 0.0
    %4105 = vmatprep.subr.mxu0 0.0
    %4106 = vmatpush1.msra.mxu0 0.0
    %4107 = vmatprep.subr.mxu0 0.0
    %4108 = vmatpush1.msra.mxu0 0.0
    %4109 = vmatprep.subr.mxu0 0.0
    %4110 = vmatpush1.msra.mxu0 0.0
    %4111 = vmatprep.subr.mxu0 0.0
    %4112 = vmatpush1.msra.mxu0 0.0
    %4113 = vmatprep.subr.mxu0 0.0
    %4114 = vmatpush1.msra.mxu0 0.0
    %4115 = vmatprep.subr.mxu0 0.0
    %4116 = vmatpush1.msra.mxu0 0.0
    %4117 = vmatprep.subr.mxu0 0.0
    %4118 = vmatpush1.msra.mxu0 0.0
    %4119 = vmatprep.subr.mxu0 0.0
    %4120 = vmatpush1.msra.mxu0 0.0
    %4121 = vmatprep.subr.mxu0 0.0
    %4122 = vmatpush1.msra.mxu0 0.0
    %4123 = vmatprep.subr.mxu0 0.0
    %4124 = vmatpush1.msra.mxu0 0.0
    %4125 = vmatprep.subr.mxu0 0.0
    %4126 = vmatpush1.msra.mxu0 0.0
    %4127 = vmatprep.subr.mxu0 0.0
    %4128 = vmatpush1.msra.mxu0 0.0
    %4129 = vmatprep.subr.mxu0 0.0
    %4130 = vmatpush1.msra.mxu0 0.0
    %4131 = vmatprep.subr.mxu0 0.0
    %4132 = vmatpush1.msra.mxu0 0.0
    %4133 = vmatprep.subr.mxu0 0.0
    %4134 = vmatpush1.msra.mxu0 0.0
    %4135 = vmatprep.subr.mxu0 0.0
    %4136 = vmatpush1.msra.mxu0 0.0
    %4137 = vmatprep.subr.mxu0 0.0
    %4138 = vmatpush1.msra.mxu0 0.0
    %4139 = vmatprep.subr.mxu0 0.0
    %4140 = vmatpush1.msra.mxu0 0.0
    %4141 = vmatprep.subr.mxu0 0.0
    %4142 = vmatpush1.msra.mxu0 0.0
    %4143 = vmatprep.subr.mxu0 0.0
    %4144 = vmatpush1.msra.mxu0 0.0
    %4145 = vmatprep.subr.mxu0 0.0
    %4146 = vmatpush1.msra.mxu0 0.0
    %4147 = vmatprep.subr.mxu0 0.0
    %4148 = vmatpush1.msra.mxu0 0.0
    %4149 = vmatprep.subr.mxu0 0.0
    %4150 = vmatpush1.msra.mxu0 0.0
    %4151 = vmatprep.subr.mxu0 0.0
    %4152 = vmatpush1.msra.mxu0 0.0
    %4153 = vmatprep.subr.mxu0 0.0
    %4154 = vmatpush1.msra.mxu0 0.0
    %4155 = vmatprep.subr.mxu0 0.0
    %4156 = vmatpush1.msra.mxu0 0.0
    %4157 = vmatprep.subr.mxu0 0.0
    %4158 = vmatpush1.msra.mxu0 0.0
    %4159 = vmatprep.subr.mxu0 0.0
    %4160 = vmatpush1.msra.mxu0 0.0
    %4161 = vmatprep.subr.mxu0 0.0
    %4162 = vmatpush1.msra.mxu0 0.0
    %4163 = vmatprep.mubr.f32.mxu0 0.0
    %4164 = vmatmul.mubr.f32.gmra.mrb[0].mxu0 %v4094
    %v4165 = vpop.f32.mrb[0].mxu0
    %v4166 = vadd.f32 0.0, %v4165
    %v4167 = vpop.f32.mrb[0].mxu0
    %4168 = vmatprep.mubr.f32.mxu0 0.0
    %4169 = vmatmul.mubr.f32.gmra.mrb[0].mxu0 %v4097
    %v4170 = vpop.f32.mrb[0].mxu0
    %v4171 = vadd.f32 0.0, %v4170
    %v4172 = vpop.f32.mrb[0].mxu0
    %4173 = vdwg.mxu0
    %4174 = vrot.lane.b32.xlu0 %v3760, 112
    %v4175 = vpop.permute.xlu0 %4174
    %4176 = vrot.lane.b32.xlu0 %v3765, 112
    %v4177 = vpop.permute.xlu0 %4176
    %4178 = vrot.lane.b32.xlu0 %v3760, 80
    %v4179 = vpop.permute.xlu0 %4178
    %4180 = vrot.lane.b32.xlu0 %v3765, 80
    %v4181 = vpop.permute.xlu0 %4180
    %v4182 = vsel %vm1069, %v4175, 0
    %v4184 = vsel %vm1069, %v4177, 0
    %v4186 = vsel %vm1069, %v4179, 0
    %v4188 = vsel %vm1069, %v4181, 0
    %4190 = vmatprep.subr.mxu0 0.0
    %4191 = vmatpush1.xpose.msra.mxu0 %v4186
    %4192 = vmatprep.subr.mxu0 0.0
    %4193 = vmatpush1.xpose.msra.mxu0 %v4188
    %4194 = vmatprep.subr.mxu0 0.0
    %4195 = vmatpush1.xpose.msra.mxu0 0.0
    %4196 = vmatprep.subr.mxu0 0.0
    %4197 = vmatpush1.xpose.msra.mxu0 0.0
    %4198 = vmatprep.subr.mxu0 0.0
    %4199 = vmatpush1.xpose.msra.mxu0 0.0
    %4200 = vmatprep.subr.mxu0 0.0
    %4201 = vmatpush1.xpose.msra.mxu0 0.0
    %4202 = vmatprep.subr.mxu0 0.0
    %4203 = vmatpush1.xpose.msra.mxu0 0.0
    %4204 = vmatprep.subr.mxu0 0.0
    %4205 = vmatpush1.xpose.msra.mxu0 0.0
    %4206 = vmatprep.subr.mxu0 0.0
    %4207 = vmatpush1.xpose.msra.mxu0 0.0
    %4208 = vmatprep.subr.mxu0 0.0
    %4209 = vmatpush1.xpose.msra.mxu0 0.0
    %4210 = vmatprep.subr.mxu0 0.0
    %4211 = vmatpush1.xpose.msra.mxu0 0.0
    %4212 = vmatprep.subr.mxu0 0.0
    %4213 = vmatpush1.xpose.msra.mxu0 0.0
    %4214 = vmatprep.subr.mxu0 0.0
    %4215 = vmatpush1.xpose.msra.mxu0 0.0
    %4216 = vmatprep.subr.mxu0 0.0
    %4217 = vmatpush1.xpose.msra.mxu0 0.0
    %4218 = vmatprep.subr.mxu0 0.0
    %4219 = vmatpush1.xpose.msra.mxu0 0.0
    %4220 = vmatprep.subr.mxu0 0.0
    %4221 = vmatpush1.xpose.msra.mxu0 0.0
    %4222 = vmatprep.subr.mxu0 0.0
    %4223 = vmatpush1.xpose.msra.mxu0 0.0
    %4224 = vmatprep.subr.mxu0 0.0
    %4225 = vmatpush1.xpose.msra.mxu0 0.0
    %4226 = vmatprep.subr.mxu0 0.0
    %4227 = vmatpush1.xpose.msra.mxu0 0.0
    %4228 = vmatprep.subr.mxu0 0.0
    %4229 = vmatpush1.xpose.msra.mxu0 0.0
    %4230 = vmatprep.subr.mxu0 0.0
    %4231 = vmatpush1.xpose.msra.mxu0 0.0
    %4232 = vmatprep.subr.mxu0 0.0
    %4233 = vmatpush1.xpose.msra.mxu0 0.0
    %4234 = vmatprep.subr.mxu0 0.0
    %4235 = vmatpush1.xpose.msra.mxu0 0.0
    %4236 = vmatprep.subr.mxu0 0.0
    %4237 = vmatpush1.xpose.msra.mxu0 0.0
    %4238 = vmatprep.subr.mxu0 0.0
    %4239 = vmatpush1.xpose.msra.mxu0 0.0
    %4240 = vmatprep.subr.mxu0 0.0
    %4241 = vmatpush1.xpose.msra.mxu0 0.0
    %4242 = vmatprep.subr.mxu0 0.0
    %4243 = vmatpush1.xpose.msra.mxu0 0.0
    %4244 = vmatprep.subr.mxu0 0.0
    %4245 = vmatpush1.xpose.msra.mxu0 0.0
    %4246 = vmatprep.subr.mxu0 0.0
    %4247 = vmatpush1.xpose.msra.mxu0 0.0
    %4248 = vmatprep.subr.mxu0 0.0
    %4249 = vmatpush1.xpose.msra.mxu0 0.0
    %4250 = vmatprep.subr.mxu0 0.0
    %4251 = vmatpush1.xpose.msra.mxu0 0.0
    %4252 = vmatprep.subr.mxu0 0.0
    %4253 = vmatpush1.xpose.msra.mxu0 0.0
    %4254 = vmatprep.mubr.f32.mxu0 0.0
    %4255 = vmatmul.mubr.f32.gmra.mrb[0].mxu0 %v4182
    %v4256 = vpop.f32.mrb[0].mxu0
    %v4257 = vadd.f32 0.0, %v4256
    %v4258 = vpop.f32.mrb[0].mxu0
    %4259 = vmatprep.mubr.f32.mxu0 0.0
    %4260 = vmatmul.mubr.f32.gmra.mrb[0].mxu0 %v4184
    %v4261 = vpop.f32.mrb[0].mxu0
    %v4262 = vadd.f32 0.0, %v4261
    %v4263 = vpop.f32.mrb[0].mxu0
    %4264 = vdwg.mxu0
    %v4265 = vmul.f32 %v4257, 0.35355338
    %v4266 = vmul.f32 %v4262, 0.35355338
    %v4267 = vadd.f32 %v4265, %v873
    %v4268 = vadd.f32 %v4266, %v874
    %v4269 = vsel %vm891, %v4267, -inf
    %4270 = vmax.xlane.f32.xlu0 %v4269
    %v4271 = vpop.xlane.xlu0 %4270
    %v4272 = vsel %vm891, %v4268, -inf
    %4273 = vmax.xlane.f32.xlu0 %v4272
    %v4274 = vpop.xlane.xlu0 %4273
    %v4275 = vsub.f32 %v4267, %v4271
    %v4276 = vsub.f32 %v4268, %v4274
    %v4277 = vmul.f32 %v4275, 1.442695
    %v4278 = vpow.pop %v4277
    %v4279 = vmul.f32 %v4276, 1.442695
    %v4280 = vpow.pop %v4279
    %v4281 = vsel %vm891, %v4278, 0.0
    %4282 = vadd.xlane.f32.xlu0 %v4281
    %v4283 = vpop.xlane.xlu0 %4282
    %v4284 = vsel %vm891, %v4280, 0.0
    %4285 = vadd.xlane.f32.xlu0 %v4284
    %v4286 = vpop.xlane.xlu0 %4285
    %v4287 = vrcp.pop %v4283
    %v4288 = vrcp.pop %v4286
    %v4289 = vmul.f32 %v4278, %v4287
    %v4290 = vmul.f32 %v4280, %v4288
    %4291 = vrot.lane.b32.xlu0 %v3760, 48
    %v4292 = vpop.permute.xlu0 %4291
    %4293 = vrot.lane.b32.xlu0 %v3765, 48
    %v4294 = vpop.permute.xlu0 %4293
    %v4298 = vsel %vm891, %v4289, 0
    %v4301 = vsel %vm891, %v4290, 0
    %4303 = vmatprep.subr.mxu0 0.0
    %4304 = vmatpush1.msra.mxu0 %v4292
    %4305 = vmatprep.subr.mxu0 0.0
    %4306 = vmatpush1.msra.mxu0 %v4294
    %4307 = vmatprep.subr.mxu0 0.0
    %4308 = vmatpush1.msra.mxu0 0.0
    %4309 = vmatprep.subr.mxu0 0.0
    %4310 = vmatpush1.msra.mxu0 0.0
    %4311 = vmatprep.subr.mxu0 0.0
    %4312 = vmatpush1.msra.mxu0 0.0
    %4313 = vmatprep.subr.mxu0 0.0
    %4314 = vmatpush1.msra.mxu0 0.0
    %4315 = vmatprep.subr.mxu0 0.0
    %4316 = vmatpush1.msra.mxu0 0.0
    %4317 = vmatprep.subr.mxu0 0.0
    %4318 = vmatpush1.msra.mxu0 0.0
    %4319 = vmatprep.subr.mxu0 0.0
    %4320 = vmatpush1.msra.mxu0 0.0
    %4321 = vmatprep.subr.mxu0 0.0
    %4322 = vmatpush1.msra.mxu0 0.0
    %4323 = vmatprep.subr.mxu0 0.0
    %4324 = vmatpush1.msra.mxu0 0.0
    %4325 = vmatprep.subr.mxu0 0.0
    %4326 = vmatpush1.msra.mxu0 0.0
    %4327 = vmatprep.subr.mxu0 0.0
    %4328 = vmatpush1.msra.mxu0 0.0
    %4329 = vmatprep.subr.mxu0 0.0
    %4330 = vmatpush1.msra.mxu0 0.0
    %4331 = vmatprep.subr.mxu0 0.0
    %4332 = vmatpush1.msra.mxu0 0.0
    %4333 = vmatprep.subr.mxu0 0.0
    %4334 = vmatpush1.msra.mxu0 0.0
    %4335 = vmatprep.subr.mxu0 0.0
    %4336 = vmatpush1.msra.mxu0 0.0
    %4337 = vmatprep.subr.mxu0 0.0
    %4338 = vmatpush1.msra.mxu0 0.0
    %4339 = vmatprep.subr.mxu0 0.0
    %4340 = vmatpush1.msra.mxu0 0.0
    %4341 = vmatprep.subr.mxu0 0.0
    %4342 = vmatpush1.msra.mxu0 0.0
    %4343 = vmatprep.subr.mxu0 0.0
    %4344 = vmatpush1.msra.mxu0 0.0
    %4345 = vmatprep.subr.mxu0 0.0
    %4346 = vmatpush1.msra.mxu0 0.0
    %4347 = vmatprep.subr.mxu0 0.0
    %4348 = vmatpush1.msra.mxu0 0.0
    %4349 = vmatprep.subr.mxu0 0.0
    %4350 = vmatpush1.msra.mxu0 0.0
    %4351 = vmatprep.subr.mxu0 0.0
    %4352 = vmatpush1.msra.mxu0 0.0
    %4353 = vmatprep.subr.mxu0 0.0
    %4354 = vmatpush1.msra.mxu0 0.0
    %4355 = vmatprep.subr.mxu0 0.0
    %4356 = vmatpush1.msra.mxu0 0.0
    %4357 = vmatprep.subr.mxu0 0.0
    %4358 = vmatpush1.msra.mxu0 0.0
    %4359 = vmatprep.subr.mxu0 0.0
    %4360 = vmatpush1.msra.mxu0 0.0
    %4361 = vmatprep.subr.mxu0 0.0
    %4362 = vmatpush1.msra.mxu0 0.0
    %4363 = vmatprep.subr.mxu0 0.0
    %4364 = vmatpush1.msra.mxu0 0.0
    %4365 = vmatprep.subr.mxu0 0.0
    %4366 = vmatpush1.msra.mxu0 0.0
    %4367 = vmatprep.mubr.f32.mxu0 0.0
    %4368 = vmatmul.mubr.f32.gmra.mrb[0].mxu0 %v4298
    %v4369 = vpop.f32.mrb[0].mxu0
    %v4370 = vadd.f32 0.0, %v4369
    %v4371 = vpop.f32.mrb[0].mxu0
    %4372 = vmatprep.mubr.f32.mxu0 0.0
    %4373 = vmatmul.mubr.f32.gmra.mrb[0].mxu0 %v4301
    %v4374 = vpop.f32.mrb[0].mxu0
    %v4375 = vadd.f32 0.0, %v4374
    %v4376 = vpop.f32.mrb[0].mxu0
    %4377 = vdwg.mxu0
    %4378 = vrot.lane.b32.xlu0 %v3760, 104
    %v4379 = vpop.permute.xlu0 %4378
    %4380 = vrot.lane.b32.xlu0 %v3765, 104
    %v4381 = vpop.permute.xlu0 %4380
    %4382 = vrot.lane.b32.xlu0 %v3760, 72
    %v4383 = vpop.permute.xlu0 %4382
    %4384 = vrot.lane.b32.xlu0 %v3765, 72
    %v4385 = vpop.permute.xlu0 %4384
    %v4386 = vsel %vm1069, %v4379, 0
    %v4388 = vsel %vm1069, %v4381, 0
    %v4390 = vsel %vm1069, %v4383, 0
    %v4392 = vsel %vm1069, %v4385, 0
    %4394 = vmatprep.subr.mxu0 0.0
    %4395 = vmatpush1.xpose.msra.mxu0 %v4390
    %4396 = vmatprep.subr.mxu0 0.0
    %4397 = vmatpush1.xpose.msra.mxu0 %v4392
    %4398 = vmatprep.subr.mxu0 0.0
    %4399 = vmatpush1.xpose.msra.mxu0 0.0
    %4400 = vmatprep.subr.mxu0 0.0
    %4401 = vmatpush1.xpose.msra.mxu0 0.0
    %4402 = vmatprep.subr.mxu0 0.0
    %4403 = vmatpush1.xpose.msra.mxu0 0.0
    %4404 = vmatprep.subr.mxu0 0.0
    %4405 = vmatpush1.xpose.msra.mxu0 0.0
    %4406 = vmatprep.subr.mxu0 0.0
    %4407 = vmatpush1.xpose.msra.mxu0 0.0
    %4408 = vmatprep.subr.mxu0 0.0
    %4409 = vmatpush1.xpose.msra.mxu0 0.0
    %4410 = vmatprep.subr.mxu0 0.0
    %4411 = vmatpush1.xpose.msra.mxu0 0.0
    %4412 = vmatprep.subr.mxu0 0.0
    %4413 = vmatpush1.xpose.msra.mxu0 0.0
    %4414 = vmatprep.subr.mxu0 0.0
    %4415 = vmatpush1.xpose.msra.mxu0 0.0
    %4416 = vmatprep.subr.mxu0 0.0
    %4417 = vmatpush1.xpose.msra.mxu0 0.0
    %4418 = vmatprep.subr.mxu0 0.0
    %4419 = vmatpush1.xpose.msra.mxu0 0.0
    %4420 = vmatprep.subr.mxu0 0.0
    %4421 = vmatpush1.xpose.msra.mxu0 0.0
    %4422 = vmatprep.subr.mxu0 0.0
    %4423 = vmatpush1.xpose.msra.mxu0 0.0
    %4424 = vmatprep.subr.mxu0 0.0
    %4425 = vmatpush1.xpose.msra.mxu0 0.0
    %4426 = vmatprep.subr.mxu0 0.0
    %4427 = vmatpush1.xpose.msra.mxu0 0.0
    %4428 = vmatprep.subr.mxu0 0.0
    %4429 = vmatpush1.xpose.msra.mxu0 0.0
    %4430 = vmatprep.subr.mxu0 0.0
    %4431 = vmatpush1.xpose.msra.mxu0 0.0
    %4432 = vmatprep.subr.mxu0 0.0
    %4433 = vmatpush1.xpose.msra.mxu0 0.0
    %4434 = vmatprep.subr.mxu0 0.0
    %4435 = vmatpush1.xpose.msra.mxu0 0.0
    %4436 = vmatprep.subr.mxu0 0.0
    %4437 = vmatpush1.xpose.msra.mxu0 0.0
    %4438 = vmatprep.subr.mxu0 0.0
    %4439 = vmatpush1.xpose.msra.mxu0 0.0
    %4440 = vmatprep.subr.mxu0 0.0
    %4441 = vmatpush1.xpose.msra.mxu0 0.0
    %4442 = vmatprep.subr.mxu0 0.0
    %4443 = vmatpush1.xpose.msra.mxu0 0.0
    %4444 = vmatprep.subr.mxu0 0.0
    %4445 = vmatpush1.xpose.msra.mxu0 0.0
    %4446 = vmatprep.subr.mxu0 0.0
    %4447 = vmatpush1.xpose.msra.mxu0 0.0
    %4448 = vmatprep.subr.mxu0 0.0
    %4449 = vmatpush1.xpose.msra.mxu0 0.0
    %4450 = vmatprep.subr.mxu0 0.0
    %4451 = vmatpush1.xpose.msra.mxu0 0.0
    %4452 = vmatprep.subr.mxu0 0.0
    %4453 = vmatpush1.xpose.msra.mxu0 0.0
    %4454 = vmatprep.subr.mxu0 0.0
    %4455 = vmatpush1.xpose.msra.mxu0 0.0
    %4456 = vmatprep.subr.mxu0 0.0
    %4457 = vmatpush1.xpose.msra.mxu0 0.0
    %4458 = vmatprep.mubr.f32.mxu0 0.0
    %4459 = vmatmul.mubr.f32.gmra.mrb[0].mxu0 %v4386
    %v4460 = vpop.f32.mrb[0].mxu0
    %v4461 = vadd.f32 0.0, %v4460
    %v4462 = vpop.f32.mrb[0].mxu0
    %4463 = vmatprep.mubr.f32.mxu0 0.0
    %4464 = vmatmul.mubr.f32.gmra.mrb[0].mxu0 %v4388
    %v4465 = vpop.f32.mrb[0].mxu0
    %v4466 = vadd.f32 0.0, %v4465
    %v4467 = vpop.f32.mrb[0].mxu0
    %4468 = vdwg.mxu0
    %v4469 = vmul.f32 %v4461, 0.35355338
    %v4470 = vmul.f32 %v4466, 0.35355338
    %v4471 = vadd.f32 %v4469, %v873
    %v4472 = vadd.f32 %v4470, %v874
    %v4473 = vsel %vm891, %v4471, -inf
    %4474 = vmax.xlane.f32.xlu0 %v4473
    %v4475 = vpop.xlane.xlu0 %4474
    %v4476 = vsel %vm891, %v4472, -inf
    %4477 = vmax.xlane.f32.xlu0 %v4476
    %v4478 = vpop.xlane.xlu0 %4477
    %v4479 = vsub.f32 %v4471, %v4475
    %v4480 = vsub.f32 %v4472, %v4478
    %v4481 = vmul.f32 %v4479, 1.442695
    %v4482 = vpow.pop %v4481
    %v4483 = vmul.f32 %v4480, 1.442695
    %v4484 = vpow.pop %v4483
    %v4485 = vsel %vm891, %v4482, 0.0
    %4486 = vadd.xlane.f32.xlu0 %v4485
    %v4487 = vpop.xlane.xlu0 %4486
    %v4488 = vsel %vm891, %v4484, 0.0
    %4489 = vadd.xlane.f32.xlu0 %v4488
    %v4490 = vpop.xlane.xlu0 %4489
    %v4491 = vrcp.pop %v4487
    %v4492 = vrcp.pop %v4490
    %v4493 = vmul.f32 %v4482, %v4491
    %v4494 = vmul.f32 %v4484, %v4492
    %4495 = vrot.lane.b32.xlu0 %v3760, 40
    %v4496 = vpop.permute.xlu0 %4495
    %4497 = vrot.lane.b32.xlu0 %v3765, 40
    %v4498 = vpop.permute.xlu0 %4497
    %v4502 = vsel %vm891, %v4493, 0
    %v4505 = vsel %vm891, %v4494, 0
    %4507 = vmatprep.subr.mxu0 0.0
    %4508 = vmatpush1.msra.mxu0 %v4496
    %4509 = vmatprep.subr.mxu0 0.0
    %4510 = vmatpush1.msra.mxu0 %v4498
    %4511 = vmatprep.subr.mxu0 0.0
    %4512 = vmatpush1.msra.mxu0 0.0
    %4513 = vmatprep.subr.mxu0 0.0
    %4514 = vmatpush1.msra.mxu0 0.0
    %4515 = vmatprep.subr.mxu0 0.0
    %4516 = vmatpush1.msra.mxu0 0.0
    %4517 = vmatprep.subr.mxu0 0.0
    %4518 = vmatpush1.msra.mxu0 0.0
    %4519 = vmatprep.subr.mxu0 0.0
    %4520 = vmatpush1.msra.mxu0 0.0
    %4521 = vmatprep.subr.mxu0 0.0
    %4522 = vmatpush1.msra.mxu0 0.0
    %4523 = vmatprep.subr.mxu0 0.0
    %4524 = vmatpush1.msra.mxu0 0.0
    %4525 = vmatprep.subr.mxu0 0.0
    %4526 = vmatpush1.msra.mxu0 0.0
    %4527 = vmatprep.subr.mxu0 0.0
    %4528 = vmatpush1.msra.mxu0 0.0
    %4529 = vmatprep.subr.mxu0 0.0
    %4530 = vmatpush1.msra.mxu0 0.0
    %4531 = vmatprep.subr.mxu0 0.0
    %4532 = vmatpush1.msra.mxu0 0.0
    %4533 = vmatprep.subr.mxu0 0.0
    %4534 = vmatpush1.msra.mxu0 0.0
    %4535 = vmatprep.subr.mxu0 0.0
    %4536 = vmatpush1.msra.mxu0 0.0
    %4537 = vmatprep.subr.mxu0 0.0
    %4538 = vmatpush1.msra.mxu0 0.0
    %4539 = vmatprep.subr.mxu0 0.0
    %4540 = vmatpush1.msra.mxu0 0.0
    %4541 = vmatprep.subr.mxu0 0.0
    %4542 = vmatpush1.msra.mxu0 0.0
    %4543 = vmatprep.subr.mxu0 0.0
    %4544 = vmatpush1.msra.mxu0 0.0
    %4545 = vmatprep.subr.mxu0 0.0
    %4546 = vmatpush1.msra.mxu0 0.0
    %4547 = vmatprep.subr.mxu0 0.0
    %4548 = vmatpush1.msra.mxu0 0.0
    %4549 = vmatprep.subr.mxu0 0.0
    %4550 = vmatpush1.msra.mxu0 0.0
    %4551 = vmatprep.subr.mxu0 0.0
    %4552 = vmatpush1.msra.mxu0 0.0
    %4553 = vmatprep.subr.mxu0 0.0
    %4554 = vmatpush1.msra.mxu0 0.0
    %4555 = vmatprep.subr.mxu0 0.0
    %4556 = vmatpush1.msra.mxu0 0.0
    %4557 = vmatprep.subr.mxu0 0.0
    %4558 = vmatpush1.msra.mxu0 0.0
    %4559 = vmatprep.subr.mxu0 0.0
    %4560 = vmatpush1.msra.mxu0 0.0
    %4561 = vmatprep.subr.mxu0 0.0
    %4562 = vmatpush1.msra.mxu0 0.0
    %4563 = vmatprep.subr.mxu0 0.0
    %4564 = vmatpush1.msra.mxu0 0.0
    %4565 = vmatprep.subr.mxu0 0.0
    %4566 = vmatpush1.msra.mxu0 0.0
    %4567 = vmatprep.subr.mxu0 0.0
    %4568 = vmatpush1.msra.mxu0 0.0
    %4569 = vmatprep.subr.mxu0 0.0
    %4570 = vmatpush1.msra.mxu0 0.0
    %4571 = vmatprep.mubr.f32.mxu0 0.0
    %4572 = vmatmul.mubr.f32.gmra.mrb[0].mxu0 %v4502
    %v4573 = vpop.f32.mrb[0].mxu0
    %v4574 = vadd.f32 0.0, %v4573
    %v4575 = vpop.f32.mrb[0].mxu0
    %4576 = vmatprep.mubr.f32.mxu0 0.0
    %4577 = vmatmul.mubr.f32.gmra.mrb[0].mxu0 %v4505
    %v4578 = vpop.f32.mrb[0].mxu0
    %v4579 = vadd.f32 0.0, %v4578
    %v4580 = vpop.f32.mrb[0].mxu0
    %4581 = vdwg.mxu0
    %4584 = vrot.lane.b32.xlu0 %v4166, 8
    %v4585 = vpop.permute.xlu0 %4584
    %4586 = vrot.lane.b32.xlu0 %v4171, 8
    %v4587 = vpop.permute.xlu0 %4586
    %4592 = vrot.lane.b32.xlu0 %v4370, 16
    %v4593 = vpop.permute.xlu0 %4592
    %4594 = vrot.lane.b32.xlu0 %v4375, 16
    %v4595 = vpop.permute.xlu0 %4594
    %4600 = vrot.lane.b32.xlu0 %v4574, 24
    %v4601 = vpop.permute.xlu0 %4600
    %4602 = vrot.lane.b32.xlu0 %v4579, 24
    %v4603 = vpop.permute.xlu0 %4602
    %v4606 = vsel %vm1069, %v3962, %v4585
    %v4607 = vsel %vm1069, %v3967, %v4587
    %v4608 = vsel %vm891, %v4606, %v4593
    %v4609 = vsel %vm891, %v4607, %v4595
    %v4610 = vsel %vm1906, %v4608, %v4601
    %v4611 = vsel %vm1906, %v4609, %v4603
    %v4613 = vlaneseq
    %v4614 = vshrl.u32 %v4613, 7
    %v4615 = vsub.s32 0, %v4614
    %v4616 = vrot.slane %v751, %v4615
    %v4619 = vsel %vm981, %v4610, 0
    %v4622 = vsel %vm981, %v4611, 0
    %4624 = vmatprep.subr.mxu0 0.0
    %4625 = vmatpush1.msra.mxu0 %v753
    %4626 = vmatprep.subr.mxu0 0.0
    %4627 = vmatpush1.msra.mxu0 %v754
    %4628 = vmatprep.subr.mxu0 0.0
    %4629 = vmatpush1.msra.mxu0 %v755
    %4630 = vmatprep.subr.mxu0 0.0
    %4631 = vmatpush1.msra.mxu0 %v756
    %4632 = vmatprep.subr.mxu0 0.0
    %4633 = vmatpush1.msra.mxu0 0.0
    %4634 = vmatprep.subr.mxu0 0.0
    %4635 = vmatpush1.msra.mxu0 0.0
    %4636 = vmatprep.subr.mxu0 0.0
    %4637 = vmatpush1.msra.mxu0 0.0
    %4638 = vmatprep.subr.mxu0 0.0
    %4639 = vmatpush1.msra.mxu0 0.0
    %4640 = vmatprep.subr.mxu0 0.0
    %4641 = vmatpush1.msra.mxu0 0.0
    %4642 = vmatprep.subr.mxu0 0.0
    %4643 = vmatpush1.msra.mxu0 0.0
    %4644 = vmatprep.subr.mxu0 0.0
    %4645 = vmatpush1.msra.mxu0 0.0
    %4646 = vmatprep.subr.mxu0 0.0
    %4647 = vmatpush1.msra.mxu0 0.0
    %4648 = vmatprep.subr.mxu0 0.0
    %4649 = vmatpush1.msra.mxu0 0.0
    %4650 = vmatprep.subr.mxu0 0.0
    %4651 = vmatpush1.msra.mxu0 0.0
    %4652 = vmatprep.subr.mxu0 0.0
    %4653 = vmatpush1.msra.mxu0 0.0
    %4654 = vmatprep.subr.mxu0 0.0
    %4655 = vmatpush1.msra.mxu0 0.0
    %4656 = vmatprep.subr.mxu0 0.0
    %4657 = vmatpush1.msra.mxu0 0.0
    %4658 = vmatprep.subr.mxu0 0.0
    %4659 = vmatpush1.msra.mxu0 0.0
    %4660 = vmatprep.subr.mxu0 0.0
    %4661 = vmatpush1.msra.mxu0 0.0
    %4662 = vmatprep.subr.mxu0 0.0
    %4663 = vmatpush1.msra.mxu0 0.0
    %4664 = vmatprep.subr.mxu0 0.0
    %4665 = vmatpush1.msra.mxu0 0.0
    %4666 = vmatprep.subr.mxu0 0.0
    %4667 = vmatpush1.msra.mxu0 0.0
    %4668 = vmatprep.subr.mxu0 0.0
    %4669 = vmatpush1.msra.mxu0 0.0
    %4670 = vmatprep.subr.mxu0 0.0
    %4671 = vmatpush1.msra.mxu0 0.0
    %4672 = vmatprep.subr.mxu0 0.0
    %4673 = vmatpush1.msra.mxu0 0.0
    %4674 = vmatprep.subr.mxu0 0.0
    %4675 = vmatpush1.msra.mxu0 0.0
    %4676 = vmatprep.subr.mxu0 0.0
    %4677 = vmatpush1.msra.mxu0 0.0
    %4678 = vmatprep.subr.mxu0 0.0
    %4679 = vmatpush1.msra.mxu0 0.0
    %4680 = vmatprep.subr.mxu0 0.0
    %4681 = vmatpush1.msra.mxu0 0.0
    %4682 = vmatprep.subr.mxu0 0.0
    %4683 = vmatpush1.msra.mxu0 0.0
    %4684 = vmatprep.subr.mxu0 0.0
    %4685 = vmatpush1.msra.mxu0 0.0
    %4686 = vmatprep.subr.mxu0 0.0
    %4687 = vmatpush1.msra.mxu0 0.0
    %4688 = vmatprep.mubr.f32.mxu0 0.0
    %4689 = vmatmul.mubr.f32.gmra.mrb[0].mxu0 %v4619
    %v4690 = vpop.f32.mrb[0].mxu0
    %v4691 = vadd.f32 %v4616, %v4690
    %v4692 = vpop.f32.mrb[0].mxu0
    %4693 = vmatprep.mubr.f32.mxu0 0.0
    %4694 = vmatmul.mubr.f32.gmra.mrb[0].mxu0 %v4622
    %v4695 = vpop.f32.mrb[0].mxu0
    %v4696 = vadd.f32 %v4616, %v4695
    %v4697 = vpop.f32.mrb[0].mxu0
    %4698 = vdwg.mxu0
    %v4699 = vadd.f32 %v3679, %v4691
    %v4700 = vadd.f32 %v3680, %v4696
    %v4701 = vsel %vm981, %v4699, 0.0
    %4702 = vadd.xlane.f32.xlu0 %v4701
    %v4703 = vpop.xlane.xlu0 %4702
    %v4704 = vsel %vm981, %v4700, 0.0
    %4705 = vadd.xlane.f32.xlu0 %v4704
    %v4706 = vpop.xlane.xlu0 %4705
    %v4707 = vmul.f32 %v4703, %v2004
    %v4708 = vmul.f32 %v4706, %v2004
    %v4709 = vsub.f32 %v4699, %v4707
    %v4710 = vsub.f32 %v4700, %v4708
    %v4711 = vmul.f32 %v4709, %v4709
    %v4712 = vmul.f32 %v4710, %v4710
    %v4713 = vsel %vm981, %v4711, 0.0
    %4714 = vadd.xlane.f32.xlu0 %v4713
    %v4715 = vpop.xlane.xlu0 %4714
    %v4716 = vsel %vm981, %v4712, 0.0
    %4717 = vadd.xlane.f32.xlu0 %v4716
    %v4718 = vpop.xlane.xlu0 %4717
    %v4719 = vmul.f32 %v4715, %v2004
    %v4720 = vmul.f32 %v4718, %v2004
    %v4721 = vadd.f32 %v4719, 1e-05
    %v4722 = vadd.f32 %v4720, 1e-05
    %v4723 = vrsqrt.pop %v4721
    %v4724 = vrsqrt.pop %v4722
    %v4725 = vmul.f32 %v4709, %v4723
    %v4726 = vmul.f32 %v4710, %v4724
    %v4728 = vlaneseq
    %v4729 = vshrl.u32 %v4728, 7
    %v4730 = vsub.s32 0, %v4729
    %v4731 = vrot.slane %v746, %v4730
    %v4733 = vmul.f32 %v4725, %v4731
    %v4734 = vmul.f32 %v4726, %v4731
    %v4736 = vlaneseq
    %v4737 = vshrl.u32 %v4736, 7
    %v4738 = vsub.s32 0, %v4737
    %v4739 = vrot.slane %v745, %v4738
    %v4741 = vadd.f32 %v4733, %v4739
    %v4742 = vadd.f32 %v4734, %v4739
    %v4744 = vlaneseq
    %v4745 = vshrl.u32 %v4744, 7
    %v4746 = vsub.s32 0, %v4745
    %v4747 = vrot.slane %v718, %v4746
    %v4750 = vsel %vm981, %v4741, 0
    %v4753 = vsel %vm981, %v4742, 0
    %4755 = vmatprep.subr.mxu0 0.0
    %4756 = vmatpush1.msra.mxu0 %v727
    %4757 = vmatprep.subr.mxu0 0.0
    %4758 = vmatpush1.msra.mxu0 %v728
    %4759 = vmatprep.subr.mxu0 0.0
    %4760 = vmatpush1.msra.mxu0 %v729
    %4761 = vmatprep.subr.mxu0 0.0
    %4762 = vmatpush1.msra.mxu0 %v730
    %4763 = vmatprep.subr.mxu0 0.0
    %4764 = vmatpush1.msra.mxu0 0.0
    %4765 = vmatprep.subr.mxu0 0.0
    %4766 = vmatpush1.msra.mxu0 0.0
    %4767 = vmatprep.subr.mxu0 0.0
    %4768 = vmatpush1.msra.mxu0 0.0
    %4769 = vmatprep.subr.mxu0 0.0
    %4770 = vmatpush1.msra.mxu0 0.0
    %4771 = vmatprep.subr.mxu0 0.0
    %4772 = vmatpush1.msra.mxu0 0.0
    %4773 = vmatprep.subr.mxu0 0.0
    %4774 = vmatpush1.msra.mxu0 0.0
    %4775 = vmatprep.subr.mxu0 0.0
    %4776 = vmatpush1.msra.mxu0 0.0
    %4777 = vmatprep.subr.mxu0 0.0
    %4778 = vmatpush1.msra.mxu0 0.0
    %4779 = vmatprep.subr.mxu0 0.0
    %4780 = vmatpush1.msra.mxu0 0.0
    %4781 = vmatprep.subr.mxu0 0.0
    %4782 = vmatpush1.msra.mxu0 0.0
    %4783 = vmatprep.subr.mxu0 0.0
    %4784 = vmatpush1.msra.mxu0 0.0
    %4785 = vmatprep.subr.mxu0 0.0
    %4786 = vmatpush1.msra.mxu0 0.0
    %4787 = vmatprep.subr.mxu0 0.0
    %4788 = vmatpush1.msra.mxu0 0.0
    %4789 = vmatprep.subr.mxu0 0.0
    %4790 = vmatpush1.msra.mxu0 0.0
    %4791 = vmatprep.subr.mxu0 0.0
    %4792 = vmatpush1.msra.mxu0 0.0
    %4793 = vmatprep.subr.mxu0 0.0
    %4794 = vmatpush1.msra.mxu0 0.0
    %4795 = vmatprep.subr.mxu0 0.0
    %4796 = vmatpush1.msra.mxu0 0.0
    %4797 = vmatprep.subr.mxu0 0.0
    %4798 = vmatpush1.msra.mxu0 0.0
    %4799 = vmatprep.subr.mxu0 0.0
    %4800 = vmatpush1.msra.mxu0 0.0
    %4801 = vmatprep.subr.mxu0 0.0
    %4802 = vmatpush1.msra.mxu0 0.0
    %4803 = vmatprep.subr.mxu0 0.0
    %4804 = vmatpush1.msra.mxu0 0.0
    %4805 = vmatprep.subr.mxu0 0.0
    %4806 = vmatpush1.msra.mxu0 0.0
    %4807 = vmatprep.subr.mxu0 0.0
    %4808 = vmatpush1.msra.mxu0 0.0
    %4809 = vmatprep.subr.mxu0 0.0
    %4810 = vmatpush1.msra.mxu0 0.0
    %4811 = vmatprep.subr.mxu0 0.0
    %4812 = vmatpush1.msra.mxu0 0.0
    %4813 = vmatprep.subr.mxu0 0.0
    %4814 = vmatpush1.msra.mxu0 0.0
    %4815 = vmatprep.subr.mxu0 0.0
    %4816 = vmatpush1.msra.mxu0 0.0
    %4817 = vmatprep.subr.mxu0 0.0
    %4818 = vmatpush1.msra.mxu0 0.0
    %4819 = vmatprep.mubr.f32.mxu0 0.0
    %4820 = vmatmul.mubr.f32.gmra.mrb[0].mxu0 %v4750
    %v4821 = vpop.f32.mrb[0].mxu0
    %v4822 = vadd.f32 %v4747, %v4821
    %v4823 = vpop.f32.mrb[0].mxu0
    %4824 = vmatprep.mubr.f32.mxu0 0.0
    %4825 = vmatmul.mubr.f32.gmra.mrb[0].mxu0 %v4753
    %v4826 = vpop.f32.mrb[0].mxu0
    %v4827 = vadd.f32 %v4747, %v4826
    %v4828 = vpop.f32.mrb[0].mxu0
    %4829 = vdwg.mxu0
    %v4831 = vlaneseq
    %v4832 = vshrl.u32 %v4831, 7
    %v4833 = vsub.s32 0, %v4832
    %v4834 = vrot.slane %v716, %v4833
    %v4837 = vsel %vm981, %v3584, 0
    %v4840 = vsel %vm981, %v3585, 0
    %4842 = vmatprep.subr.mxu0 0.0
    %4843 = vmatpush1.msra.mxu0 %v719
    %4844 = vmatprep.subr.mxu0 0.0
    %4845 = vmatpush1.msra.mxu0 %v720
    %4846 = vmatprep.subr.mxu0 0.0
    %4847 = vmatpush1.msra.mxu0 %v721
    %4848 = vmatprep.subr.mxu0 0.0
    %4849 = vmatpush1.msra.mxu0 %v722
    %4850 = vmatprep.subr.mxu0 0.0
    %4851 = vmatpush1.msra.mxu0 0.0
    %4852 = vmatprep.subr.mxu0 0.0
    %4853 = vmatpush1.msra.mxu0 0.0
    %4854 = vmatprep.subr.mxu0 0.0
    %4855 = vmatpush1.msra.mxu0 0.0
    %4856 = vmatprep.subr.mxu0 0.0
    %4857 = vmatpush1.msra.mxu0 0.0
    %4858 = vmatprep.subr.mxu0 0.0
    %4859 = vmatpush1.msra.mxu0 0.0
    %4860 = vmatprep.subr.mxu0 0.0
    %4861 = vmatpush1.msra.mxu0 0.0
    %4862 = vmatprep.subr.mxu0 0.0
    %4863 = vmatpush1.msra.mxu0 0.0
    %4864 = vmatprep.subr.mxu0 0.0
    %4865 = vmatpush1.msra.mxu0 0.0
    %4866 = vmatprep.subr.mxu0 0.0
    %4867 = vmatpush1.msra.mxu0 0.0
    %4868 = vmatprep.subr.mxu0 0.0
    %4869 = vmatpush1.msra.mxu0 0.0
    %4870 = vmatprep.subr.mxu0 0.0
    %4871 = vmatpush1.msra.mxu0 0.0
    %4872 = vmatprep.subr.mxu0 0.0
    %4873 = vmatpush1.msra.mxu0 0.0
    %4874 = vmatprep.subr.mxu0 0.0
    %4875 = vmatpush1.msra.mxu0 0.0
    %4876 = vmatprep.subr.mxu0 0.0
    %4877 = vmatpush1.msra.mxu0 0.0
    %4878 = vmatprep.subr.mxu0 0.0
    %4879 = vmatpush1.msra.mxu0 0.0
    %4880 = vmatprep.subr.mxu0 0.0
    %4881 = vmatpush1.msra.mxu0 0.0
    %4882 = vmatprep.subr.mxu0 0.0
    %4883 = vmatpush1.msra.mxu0 0.0
    %4884 = vmatprep.subr.mxu0 0.0
    %4885 = vmatpush1.msra.mxu0 0.0
    %4886 = vmatprep.subr.mxu0 0.0
    %4887 = vmatpush1.msra.mxu0 0.0
    %4888 = vmatprep.subr.mxu0 0.0
    %4889 = vmatpush1.msra.mxu0 0.0
    %4890 = vmatprep.subr.mxu0 0.0
    %4891 = vmatpush1.msra.mxu0 0.0
    %4892 = vmatprep.subr.mxu0 0.0
    %4893 = vmatpush1.msra.mxu0 0.0
    %4894 = vmatprep.subr.mxu0 0.0
    %4895 = vmatpush1.msra.mxu0 0.0
    %4896 = vmatprep.subr.mxu0 0.0
    %4897 = vmatpush1.msra.mxu0 0.0
    %4898 = vmatprep.subr.mxu0 0.0
    %4899 = vmatpush1.msra.mxu0 0.0
    %4900 = vmatprep.subr.mxu0 0.0
    %4901 = vmatpush1.msra.mxu0 0.0
    %4902 = vmatprep.subr.mxu0 0.0
    %4903 = vmatpush1.msra.mxu0 0.0
    %4904 = vmatprep.subr.mxu0 0.0
    %4905 = vmatpush1.msra.mxu0 0.0
    %4906 = vmatprep.mubr.f32.mxu0 0.0
    %4907 = vmatmul.mubr.f32.gmra.mrb[0].mxu0 %v4837
    %v4908 = vpop.f32.mrb[0].mxu0
    %v4909 = vadd.f32 %v4834, %v4908
    %v4910 = vpop.f32.mrb[0].mxu0
    %4911 = vmatprep.mubr.f32.mxu0 0.0
    %4912 = vmatmul.mubr.f32.gmra.mrb[0].mxu0 %v4840
    %v4913 = vpop.f32.mrb[0].mxu0
    %v4914 = vadd.f32 %v4834, %v4913
    %v4915 = vpop.f32.mrb[0].mxu0
    %4916 = vdwg.mxu0
    %v4918 = vsel %vm1069, %v4822, 0
    %v4921 = vsel %vm1069, %v4827, 0
    %v4924 = vsel %vm1069, %v4909, 0
    %v4927 = vsel %vm1069, %v4914, 0
    %4929 = vmatprep.subr.mxu0 0.0
    %4930 = vmatpush1.xpose.msra.mxu0 %v4924
    %4931 = vmatprep.subr.mxu0 0.0
    %4932 = vmatpush1.xpose.msra.mxu0 %v4927
    %4933 = vmatprep.subr.mxu0 0.0
    %4934 = vmatpush1.xpose.msra.mxu0 0.0
    %4935 = vmatprep.subr.mxu0 0.0
    %4936 = vmatpush1.xpose.msra.mxu0 0.0
    %4937 = vmatprep.subr.mxu0 0.0
    %4938 = vmatpush1.xpose.msra.mxu0 0.0
    %4939 = vmatprep.subr.mxu0 0.0
    %4940 = vmatpush1.xpose.msra.mxu0 0.0
    %4941 = vmatprep.subr.mxu0 0.0
    %4942 = vmatpush1.xpose.msra.mxu0 0.0
    %4943 = vmatprep.subr.mxu0 0.0
    %4944 = vmatpush1.xpose.msra.mxu0 0.0
    %4945 = vmatprep.subr.mxu0 0.0
    %4946 = vmatpush1.xpose.msra.mxu0 0.0
    %4947 = vmatprep.subr.mxu0 0.0
    %4948 = vmatpush1.xpose.msra.mxu0 0.0
    %4949 = vmatprep.subr.mxu0 0.0
    %4950 = vmatpush1.xpose.msra.mxu0 0.0
    %4951 = vmatprep.subr.mxu0 0.0
    %4952 = vmatpush1.xpose.msra.mxu0 0.0
    %4953 = vmatprep.subr.mxu0 0.0
    %4954 = vmatpush1.xpose.msra.mxu0 0.0
    %4955 = vmatprep.subr.mxu0 0.0
    %4956 = vmatpush1.xpose.msra.mxu0 0.0
    %4957 = vmatprep.subr.mxu0 0.0
    %4958 = vmatpush1.xpose.msra.mxu0 0.0
    %4959 = vmatprep.subr.mxu0 0.0
    %4960 = vmatpush1.xpose.msra.mxu0 0.0
    %4961 = vmatprep.subr.mxu0 0.0
    %4962 = vmatpush1.xpose.msra.mxu0 0.0
    %4963 = vmatprep.subr.mxu0 0.0
    %4964 = vmatpush1.xpose.msra.mxu0 0.0
    %4965 = vmatprep.subr.mxu0 0.0
    %4966 = vmatpush1.xpose.msra.mxu0 0.0
    %4967 = vmatprep.subr.mxu0 0.0
    %4968 = vmatpush1.xpose.msra.mxu0 0.0
    %4969 = vmatprep.subr.mxu0 0.0
    %4970 = vmatpush1.xpose.msra.mxu0 0.0
    %4971 = vmatprep.subr.mxu0 0.0
    %4972 = vmatpush1.xpose.msra.mxu0 0.0
    %4973 = vmatprep.subr.mxu0 0.0
    %4974 = vmatpush1.xpose.msra.mxu0 0.0
    %4975 = vmatprep.subr.mxu0 0.0
    %4976 = vmatpush1.xpose.msra.mxu0 0.0
    %4977 = vmatprep.subr.mxu0 0.0
    %4978 = vmatpush1.xpose.msra.mxu0 0.0
    %4979 = vmatprep.subr.mxu0 0.0
    %4980 = vmatpush1.xpose.msra.mxu0 0.0
    %4981 = vmatprep.subr.mxu0 0.0
    %4982 = vmatpush1.xpose.msra.mxu0 0.0
    %4983 = vmatprep.subr.mxu0 0.0
    %4984 = vmatpush1.xpose.msra.mxu0 0.0
    %4985 = vmatprep.subr.mxu0 0.0
    %4986 = vmatpush1.xpose.msra.mxu0 0.0
    %4987 = vmatprep.subr.mxu0 0.0
    %4988 = vmatpush1.xpose.msra.mxu0 0.0
    %4989 = vmatprep.subr.mxu0 0.0
    %4990 = vmatpush1.xpose.msra.mxu0 0.0
    %4991 = vmatprep.subr.mxu0 0.0
    %4992 = vmatpush1.xpose.msra.mxu0 0.0
    %4993 = vmatprep.mubr.f32.mxu0 0.0
    %4994 = vmatmul.mubr.f32.gmra.mrb[0].mxu0 %v4918
    %v4995 = vpop.f32.mrb[0].mxu0
    %v4996 = vadd.f32 0.0, %v4995
    %v4997 = vpop.f32.mrb[0].mxu0
    %4998 = vmatprep.mubr.f32.mxu0 0.0
    %4999 = vmatmul.mubr.f32.gmra.mrb[0].mxu0 %v4921
    %v5000 = vpop.f32.mrb[0].mxu0
    %v5001 = vadd.f32 0.0, %v5000
    %v5002 = vpop.f32.mrb[0].mxu0
    %5003 = vdwg.mxu0
    %v5004 = vmul.f32 %v4996, 0.35355338
    %v5005 = vmul.f32 %v5001, 0.35355338
    %v5006 = vadd.f32 %v5004, %v875
    %v5007 = vadd.f32 %v5005, %v876
    %v5008 = vsel %vm891, %v5006, -inf
    %5009 = vmax.xlane.f32.xlu0 %v5008
    %v5010 = vpop.xlane.xlu0 %5009
    %v5011 = vsel %vm891, %v5007, -inf
    %5012 = vmax.xlane.f32.xlu0 %v5011
    %v5013 = vpop.xlane.xlu0 %5012
    %v5014 = vsub.f32 %v5006, %v5010
    %v5015 = vsub.f32 %v5007, %v5013
    %v5016 = vmul.f32 %v5014, 1.442695
    %v5017 = vpow.pop %v5016
    %v5018 = vmul.f32 %v5015, 1.442695
    %v5019 = vpow.pop %v5018
    %v5020 = vsel %vm891, %v5017, 0.0
    %5021 = vadd.xlane.f32.xlu0 %v5020
    %v5022 = vpop.xlane.xlu0 %5021
    %v5023 = vsel %vm891, %v5019, 0.0
    %5024 = vadd.xlane.f32.xlu0 %v5023
    %v5025 = vpop.xlane.xlu0 %5024
    %v5026 = vrcp.pop %v5022
    %v5027 = vrcp.pop %v5025
    %v5028 = vmul.f32 %v5017, %v5026
    %v5029 = vmul.f32 %v5019, %v5027
    %5030 = vrot.lane.b32.xlu0 %v4909, 96
    %v5031 = vpop.permute.xlu0 %5030
    %5032 = vrot.lane.b32.xlu0 %v4914, 96
    %v5033 = vpop.permute.xlu0 %5032
    %v5037 = vsel %vm891, %v5028, 0
    %v5040 = vsel %vm891, %v5029, 0
    %5042 = vmatprep.subr.mxu0 0.0
    %5043 = vmatpush1.msra.mxu0 %v5031
    %5044 = vmatprep.subr.mxu0 0.0
    %5045 = vmatpush1.msra.mxu0 %v5033
    %5046 = vmatprep.subr.mxu0 0.0
    %5047 = vmatpush1.msra.mxu0 0.0
    %5048 = vmatprep.subr.mxu0 0.0
    %5049 = vmatpush1.msra.mxu0 0.0
    %5050 = vmatprep.subr.mxu0 0.0
    %5051 = vmatpush1.msra.mxu0 0.0
    %5052 = vmatprep.subr.mxu0 0.0
    %5053 = vmatpush1.msra.mxu0 0.0
    %5054 = vmatprep.subr.mxu0 0.0
    %5055 = vmatpush1.msra.mxu0 0.0
    %5056 = vmatprep.subr.mxu0 0.0
    %5057 = vmatpush1.msra.mxu0 0.0
    %5058 = vmatprep.subr.mxu0 0.0
    %5059 = vmatpush1.msra.mxu0 0.0
    %5060 = vmatprep.subr.mxu0 0.0
    %5061 = vmatpush1.msra.mxu0 0.0
    %5062 = vmatprep.subr.mxu0 0.0
    %5063 = vmatpush1.msra.mxu0 0.0
    %5064 = vmatprep.subr.mxu0 0.0
    %5065 = vmatpush1.msra.mxu0 0.0
    %5066 = vmatprep.subr.mxu0 0.0
    %5067 = vmatpush1.msra.mxu0 0.0
    %5068 = vmatprep.subr.mxu0 0.0
    %5069 = vmatpush1.msra.mxu0 0.0
    %5070 = vmatprep.subr.mxu0 0.0
    %5071 = vmatpush1.msra.mxu0 0.0
    %5072 = vmatprep.subr.mxu0 0.0
    %5073 = vmatpush1.msra.mxu0 0.0
    %5074 = vmatprep.subr.mxu0 0.0
    %5075 = vmatpush1.msra.mxu0 0.0
    %5076 = vmatprep.subr.mxu0 0.0
    %5077 = vmatpush1.msra.mxu0 0.0
    %5078 = vmatprep.subr.mxu0 0.0
    %5079 = vmatpush1.msra.mxu0 0.0
    %5080 = vmatprep.subr.mxu0 0.0
    %5081 = vmatpush1.msra.mxu0 0.0
    %5082 = vmatprep.subr.mxu0 0.0
    %5083 = vmatpush1.msra.mxu0 0.0
    %5084 = vmatprep.subr.mxu0 0.0
    %5085 = vmatpush1.msra.mxu0 0.0
    %5086 = vmatprep.subr.mxu0 0.0
    %5087 = vmatpush1.msra.mxu0 0.0
    %5088 = vmatprep.subr.mxu0 0.0
    %5089 = vmatpush1.msra.mxu0 0.0
    %5090 = vmatprep.subr.mxu0 0.0
    %5091 = vmatpush1.msra.mxu0 0.0
    %5092 = vmatprep.subr.mxu0 0.0
    %5093 = vmatpush1.msra.mxu0 0.0
    %5094 = vmatprep.subr.mxu0 0.0
    %5095 = vmatpush1.msra.mxu0 0.0
    %5096 = vmatprep.subr.mxu0 0.0
    %5097 = vmatpush1.msra.mxu0 0.0
    %5098 = vmatprep.subr.mxu0 0.0
    %5099 = vmatpush1.msra.mxu0 0.0
    %5100 = vmatprep.subr.mxu0 0.0
    %5101 = vmatpush1.msra.mxu0 0.0
    %5102 = vmatprep.subr.mxu0 0.0
    %5103 = vmatpush1.msra.mxu0 0.0
    %5104 = vmatprep.subr.mxu0 0.0
    %5105 = vmatpush1.msra.mxu0 0.0
    %5106 = vmatprep.mubr.f32.mxu0 0.0
    %5107 = vmatmul.mubr.f32.gmra.mrb[0].mxu0 %v5037
    %v5108 = vpop.f32.mrb[0].mxu0
    %v5109 = vadd.f32 0.0, %v5108
    %v5110 = vpop.f32.mrb[0].mxu0
    %5111 = vmatprep.mubr.f32.mxu0 0.0
    %5112 = vmatmul.mubr.f32.gmra.mrb[0].mxu0 %v5040
    %v5113 = vpop.f32.mrb[0].mxu0
    %v5114 = vadd.f32 0.0, %v5113
    %v5115 = vpop.f32.mrb[0].mxu0
    %5116 = vdwg.mxu0
    %5117 = vrot.lane.b32.xlu0 %v4822, 120
    %v5118 = vpop.permute.xlu0 %5117
    %5119 = vrot.lane.b32.xlu0 %v4827, 120
    %v5120 = vpop.permute.xlu0 %5119
    %5121 = vrot.lane.b32.xlu0 %v4909, 120
    %v5122 = vpop.permute.xlu0 %5121
    %5123 = vrot.lane.b32.xlu0 %v4914, 120
    %v5124 = vpop.permute.xlu0 %5123
    %v5125 = vsel %vm1069, %v5118, 0
    %v5127 = vsel %vm1069, %v5120, 0
    %v5129 = vsel %vm1069, %v5122, 0
    %v5131 = vsel %vm1069, %v5124, 0
    %5133 = vmatprep.subr.mxu0 0.0
    %5134 = vmatpush1.xpose.msra.mxu0 %v5129
    %5135 = vmatprep.subr.mxu0 0.0
    %5136 = vmatpush1.xpose.msra.mxu0 %v5131
    %5137 = vmatprep.subr.mxu0 0.0
    %5138 = vmatpush1.xpose.msra.mxu0 0.0
    %5139 = vmatprep.subr.mxu0 0.0
    %5140 = vmatpush1.xpose.msra.mxu0 0.0
    %5141 = vmatprep.subr.mxu0 0.0
    %5142 = vmatpush1.xpose.msra.mxu0 0.0
    %5143 = vmatprep.subr.mxu0 0.0
    %5144 = vmatpush1.xpose.msra.mxu0 0.0
    %5145 = vmatprep.subr.mxu0 0.0
    %5146 = vmatpush1.xpose.msra.mxu0 0.0
    %5147 = vmatprep.subr.mxu0 0.0
    %5148 = vmatpush1.xpose.msra.mxu0 0.0
    %5149 = vmatprep.subr.mxu0 0.0
    %5150 = vmatpush1.xpose.msra.mxu0 0.0
    %5151 = vmatprep.subr.mxu0 0.0
    %5152 = vmatpush1.xpose.msra.mxu0 0.0
    %5153 = vmatprep.subr.mxu0 0.0
    %5154 = vmatpush1.xpose.msra.mxu0 0.0
    %5155 = vmatprep.subr.mxu0 0.0
    %5156 = vmatpush1.xpose.msra.mxu0 0.0
    %5157 = vmatprep.subr.mxu0 0.0
    %5158 = vmatpush1.xpose.msra.mxu0 0.0
    %5159 = vmatprep.subr.mxu0 0.0
    %5160 = vmatpush1.xpose.msra.mxu0 0.0
    %5161 = vmatprep.subr.mxu0 0.0
    %5162 = vmatpush1.xpose.msra.mxu0 0.0
    %5163 = vmatprep.subr.mxu0 0.0
    %5164 = vmatpush1.xpose.msra.mxu0 0.0
    %5165 = vmatprep.subr.mxu0 0.0
    %5166 = vmatpush1.xpose.msra.mxu0 0.0
    %5167 = vmatprep.subr.mxu0 0.0
    %5168 = vmatpush1.xpose.msra.mxu0 0.0
    %5169 = vmatprep.subr.mxu0 0.0
    %5170 = vmatpush1.xpose.msra.mxu0 0.0
    %5171 = vmatprep.subr.mxu0 0.0
    %5172 = vmatpush1.xpose.msra.mxu0 0.0
    %5173 = vmatprep.subr.mxu0 0.0
    %5174 = vmatpush1.xpose.msra.mxu0 0.0
    %5175 = vmatprep.subr.mxu0 0.0
    %5176 = vmatpush1.xpose.msra.mxu0 0.0
    %5177 = vmatprep.subr.mxu0 0.0
    %5178 = vmatpush1.xpose.msra.mxu0 0.0
    %5179 = vmatprep.subr.mxu0 0.0
    %5180 = vmatpush1.xpose.msra.mxu0 0.0
    %5181 = vmatprep.subr.mxu0 0.0
    %5182 = vmatpush1.xpose.msra.mxu0 0.0
    %5183 = vmatprep.subr.mxu0 0.0
    %5184 = vmatpush1.xpose.msra.mxu0 0.0
    %5185 = vmatprep.subr.mxu0 0.0
    %5186 = vmatpush1.xpose.msra.mxu0 0.0
    %5187 = vmatprep.subr.mxu0 0.0
    %5188 = vmatpush1.xpose.msra.mxu0 0.0
    %5189 = vmatprep.subr.mxu0 0.0
    %5190 = vmatpush1.xpose.msra.mxu0 0.0
    %5191 = vmatprep.subr.mxu0 0.0
    %5192 = vmatpush1.xpose.msra.mxu0 0.0
    %5193 = vmatprep.subr.mxu0 0.0
    %5194 = vmatpush1.xpose.msra.mxu0 0.0
    %5195 = vmatprep.subr.mxu0 0.0
    %5196 = vmatpush1.xpose.msra.mxu0 0.0
    %5197 = vmatprep.mubr.f32.mxu0 0.0
    %5198 = vmatmul.mubr.f32.gmra.mrb[0].mxu0 %v5125
    %v5199 = vpop.f32.mrb[0].mxu0
    %v5200 = vadd.f32 0.0, %v5199
    %v5201 = vpop.f32.mrb[0].mxu0
    %5202 = vmatprep.mubr.f32.mxu0 0.0
    %5203 = vmatmul.mubr.f32.gmra.mrb[0].mxu0 %v5127
    %v5204 = vpop.f32.mrb[0].mxu0
    %v5205 = vadd.f32 0.0, %v5204
    %v5206 = vpop.f32.mrb[0].mxu0
    %5207 = vdwg.mxu0
    %v5208 = vmul.f32 %v5200, 0.35355338
    %v5209 = vmul.f32 %v5205, 0.35355338
    %v5210 = vadd.f32 %v5208, %v875
    %v5211 = vadd.f32 %v5209, %v876
    %v5212 = vsel %vm891, %v5210, -inf
    %5213 = vmax.xlane.f32.xlu0 %v5212
    %v5214 = vpop.xlane.xlu0 %5213
    %v5215 = vsel %vm891, %v5211, -inf
    %5216 = vmax.xlane.f32.xlu0 %v5215
    %v5217 = vpop.xlane.xlu0 %5216
    %v5218 = vsub.f32 %v5210, %v5214
    %v5219 = vsub.f32 %v5211, %v5217
    %v5220 = vmul.f32 %v5218, 1.442695
    %v5221 = vpow.pop %v5220
    %v5222 = vmul.f32 %v5219, 1.442695
    %v5223 = vpow.pop %v5222
    %v5224 = vsel %vm891, %v5221, 0.0
    %5225 = vadd.xlane.f32.xlu0 %v5224
    %v5226 = vpop.xlane.xlu0 %5225
    %v5227 = vsel %vm891, %v5223, 0.0
    %5228 = vadd.xlane.f32.xlu0 %v5227
    %v5229 = vpop.xlane.xlu0 %5228
    %v5230 = vrcp.pop %v5226
    %v5231 = vrcp.pop %v5229
    %v5232 = vmul.f32 %v5221, %v5230
    %v5233 = vmul.f32 %v5223, %v5231
    %5234 = vrot.lane.b32.xlu0 %v4909, 88
    %v5235 = vpop.permute.xlu0 %5234
    %5236 = vrot.lane.b32.xlu0 %v4914, 88
    %v5237 = vpop.permute.xlu0 %5236
    %v5241 = vsel %vm891, %v5232, 0
    %v5244 = vsel %vm891, %v5233, 0
    %5246 = vmatprep.subr.mxu0 0.0
    %5247 = vmatpush1.msra.mxu0 %v5235
    %5248 = vmatprep.subr.mxu0 0.0
    %5249 = vmatpush1.msra.mxu0 %v5237
    %5250 = vmatprep.subr.mxu0 0.0
    %5251 = vmatpush1.msra.mxu0 0.0
    %5252 = vmatprep.subr.mxu0 0.0
    %5253 = vmatpush1.msra.mxu0 0.0
    %5254 = vmatprep.subr.mxu0 0.0
    %5255 = vmatpush1.msra.mxu0 0.0
    %5256 = vmatprep.subr.mxu0 0.0
    %5257 = vmatpush1.msra.mxu0 0.0
    %5258 = vmatprep.subr.mxu0 0.0
    %5259 = vmatpush1.msra.mxu0 0.0
    %5260 = vmatprep.subr.mxu0 0.0
    %5261 = vmatpush1.msra.mxu0 0.0
    %5262 = vmatprep.subr.mxu0 0.0
    %5263 = vmatpush1.msra.mxu0 0.0
    %5264 = vmatprep.subr.mxu0 0.0
    %5265 = vmatpush1.msra.mxu0 0.0
    %5266 = vmatprep.subr.mxu0 0.0
    %5267 = vmatpush1.msra.mxu0 0.0
    %5268 = vmatprep.subr.mxu0 0.0
    %5269 = vmatpush1.msra.mxu0 0.0
    %5270 = vmatprep.subr.mxu0 0.0
    %5271 = vmatpush1.msra.mxu0 0.0
    %5272 = vmatprep.subr.mxu0 0.0
    %5273 = vmatpush1.msra.mxu0 0.0
    %5274 = vmatprep.subr.mxu0 0.0
    %5275 = vmatpush1.msra.mxu0 0.0
    %5276 = vmatprep.subr.mxu0 0.0
    %5277 = vmatpush1.msra.mxu0 0.0
    %5278 = vmatprep.subr.mxu0 0.0
    %5279 = vmatpush1.msra.mxu0 0.0
    %5280 = vmatprep.subr.mxu0 0.0
    %5281 = vmatpush1.msra.mxu0 0.0
    %5282 = vmatprep.subr.mxu0 0.0
    %5283 = vmatpush1.msra.mxu0 0.0
    %5284 = vmatprep.subr.mxu0 0.0
    %5285 = vmatpush1.msra.mxu0 0.0
    %5286 = vmatprep.subr.mxu0 0.0
    %5287 = vmatpush1.msra.mxu0 0.0
    %5288 = vmatprep.subr.mxu0 0.0
    %5289 = vmatpush1.msra.mxu0 0.0
    %5290 = vmatprep.subr.mxu0 0.0
    %5291 = vmatpush1.msra.mxu0 0.0
    %5292 = vmatprep.subr.mxu0 0.0
    %5293 = vmatpush1.msra.mxu0 0.0
    %5294 = vmatprep.subr.mxu0 0.0
    %5295 = vmatpush1.msra.mxu0 0.0
    %5296 = vmatprep.subr.mxu0 0.0
    %5297 = vmatpush1.msra.mxu0 0.0
    %5298 = vmatprep.subr.mxu0 0.0
    %5299 = vmatpush1.msra.mxu0 0.0
    %5300 = vmatprep.subr.mxu0 0.0
    %5301 = vmatpush1.msra.mxu0 0.0
    %5302 = vmatprep.subr.mxu0 0.0
    %5303 = vmatpush1.msra.mxu0 0.0
    %5304 = vmatprep.subr.mxu0 0.0
    %5305 = vmatpush1.msra.mxu0 0.0
    %5306 = vmatprep.subr.mxu0 0.0
    %5307 = vmatpush1.msra.mxu0 0.0
    %5308 = vmatprep.subr.mxu0 0.0
    %5309 = vmatpush1.msra.mxu0 0.0
    %5310 = vmatprep.mubr.f32.mxu0 0.0
    %5311 = vmatmul.mubr.f32.gmra.mrb[0].mxu0 %v5241
    %v5312 = vpop.f32.mrb[0].mxu0
    %v5313 = vadd.f32 0.0, %v5312
    %v5314 = vpop.f32.mrb[0].mxu0
    %5315 = vmatprep.mubr.f32.mxu0 0.0
    %5316 = vmatmul.mubr.f32.gmra.mrb[0].mxu0 %v5244
    %v5317 = vpop.f32.mrb[0].mxu0
    %v5318 = vadd.f32 0.0, %v5317
    %v5319 = vpop.f32.mrb[0].mxu0
    %5320 = vdwg.mxu0
    %5321 = vrot.lane.b32.xlu0 %v4822, 112
    %v5322 = vpop.permute.xlu0 %5321
    %5323 = vrot.lane.b32.xlu0 %v4827, 112
    %v5324 = vpop.permute.xlu0 %5323
    %5325 = vrot.lane.b32.xlu0 %v4909, 112
    %v5326 = vpop.permute.xlu0 %5325
    %5327 = vrot.lane.b32.xlu0 %v4914, 112
    %v5328 = vpop.permute.xlu0 %5327
    %v5329 = vsel %vm1069, %v5322, 0
    %v5331 = vsel %vm1069, %v5324, 0
    %v5333 = vsel %vm1069, %v5326, 0
    %v5335 = vsel %vm1069, %v5328, 0
    %5337 = vmatprep.subr.mxu0 0.0
    %5338 = vmatpush1.xpose.msra.mxu0 %v5333
    %5339 = vmatprep.subr.mxu0 0.0
    %5340 = vmatpush1.xpose.msra.mxu0 %v5335
    %5341 = vmatprep.subr.mxu0 0.0
    %5342 = vmatpush1.xpose.msra.mxu0 0.0
    %5343 = vmatprep.subr.mxu0 0.0
    %5344 = vmatpush1.xpose.msra.mxu0 0.0
    %5345 = vmatprep.subr.mxu0 0.0
    %5346 = vmatpush1.xpose.msra.mxu0 0.0
    %5347 = vmatprep.subr.mxu0 0.0
    %5348 = vmatpush1.xpose.msra.mxu0 0.0
    %5349 = vmatprep.subr.mxu0 0.0
    %5350 = vmatpush1.xpose.msra.mxu0 0.0
    %5351 = vmatprep.subr.mxu0 0.0
    %5352 = vmatpush1.xpose.msra.mxu0 0.0
    %5353 = vmatprep.subr.mxu0 0.0
    %5354 = vmatpush1.xpose.msra.mxu0 0.0
    %5355 = vmatprep.subr.mxu0 0.0
    %5356 = vmatpush1.xpose.msra.mxu0 0.0
    %5357 = vmatprep.subr.mxu0 0.0
    %5358 = vmatpush1.xpose.msra.mxu0 0.0
    %5359 = vmatprep.subr.mxu0 0.0
    %5360 = vmatpush1.xpose.msra.mxu0 0.0
    %5361 = vmatprep.subr.mxu0 0.0
    %5362 = vmatpush1.xpose.msra.mxu0 0.0
    %5363 = vmatprep.subr.mxu0 0.0
    %5364 = vmatpush1.xpose.msra.mxu0 0.0
    %5365 = vmatprep.subr.mxu0 0.0
    %5366 = vmatpush1.xpose.msra.mxu0 0.0
    %5367 = vmatprep.subr.mxu0 0.0
    %5368 = vmatpush1.xpose.msra.mxu0 0.0
    %5369 = vmatprep.subr.mxu0 0.0
    %5370 = vmatpush1.xpose.msra.mxu0 0.0
    %5371 = vmatprep.subr.mxu0 0.0
    %5372 = vmatpush1.xpose.msra.mxu0 0.0
    %5373 = vmatprep.subr.mxu0 0.0
    %5374 = vmatpush1.xpose.msra.mxu0 0.0
    %5375 = vmatprep.subr.mxu0 0.0
    %5376 = vmatpush1.xpose.msra.mxu0 0.0
    %5377 = vmatprep.subr.mxu0 0.0
    %5378 = vmatpush1.xpose.msra.mxu0 0.0
    %5379 = vmatprep.subr.mxu0 0.0
    %5380 = vmatpush1.xpose.msra.mxu0 0.0
    %5381 = vmatprep.subr.mxu0 0.0
    %5382 = vmatpush1.xpose.msra.mxu0 0.0
    %5383 = vmatprep.subr.mxu0 0.0
    %5384 = vmatpush1.xpose.msra.mxu0 0.0
    %5385 = vmatprep.subr.mxu0 0.0
    %5386 = vmatpush1.xpose.msra.mxu0 0.0
    %5387 = vmatprep.subr.mxu0 0.0
    %5388 = vmatpush1.xpose.msra.mxu0 0.0
    %5389 = vmatprep.subr.mxu0 0.0
    %5390 = vmatpush1.xpose.msra.mxu0 0.0
    %5391 = vmatprep.subr.mxu0 0.0
    %5392 = vmatpush1.xpose.msra.mxu0 0.0
    %5393 = vmatprep.subr.mxu0 0.0
    %5394 = vmatpush1.xpose.msra.mxu0 0.0
    %5395 = vmatprep.subr.mxu0 0.0
    %5396 = vmatpush1.xpose.msra.mxu0 0.0
    %5397 = vmatprep.subr.mxu0 0.0
    %5398 = vmatpush1.xpose.msra.mxu0 0.0
    %5399 = vmatprep.subr.mxu0 0.0
    %5400 = vmatpush1.xpose.msra.mxu0 0.0
    %5401 = vmatprep.mubr.f32.mxu0 0.0
    %5402 = vmatmul.mubr.f32.gmra.mrb[0].mxu0 %v5329
    %v5403 = vpop.f32.mrb[0].mxu0
    %v5404 = vadd.f32 0.0, %v5403
    %v5405 = vpop.f32.mrb[0].mxu0
    %5406 = vmatprep.mubr.f32.mxu0 0.0
    %5407 = vmatmul.mubr.f32.gmra.mrb[0].mxu0 %v5331
    %v5408 = vpop.f32.mrb[0].mxu0
    %v5409 = vadd.f32 0.0, %v5408
    %v5410 = vpop.f32.mrb[0].mxu0
    %5411 = vdwg.mxu0
    %v5412 = vmul.f32 %v5404, 0.35355338
    %v5413 = vmul.f32 %v5409, 0.35355338
    %v5414 = vadd.f32 %v5412, %v875
    %v5415 = vadd.f32 %v5413, %v876
    %v5416 = vsel %vm891, %v5414, -inf
    %5417 = vmax.xlane.f32.xlu0 %v5416
    %v5418 = vpop.xlane.xlu0 %5417
    %v5419 = vsel %vm891, %v5415, -inf
    %5420 = vmax.xlane.f32.xlu0 %v5419
    %v5421 = vpop.xlane.xlu0 %5420
    %v5422 = vsub.f32 %v5414, %v5418
    %v5423 = vsub.f32 %v5415, %v5421
    %v5424 = vmul.f32 %v5422, 1.442695
    %v5425 = vpow.pop %v5424
    %v5426 = vmul.f32 %v5423, 1.442695
    %v5427 = vpow.pop %v5426
    %v5428 = vsel %vm891, %v5425, 0.0
    %5429 = vadd.xlane.f32.xlu0 %v5428
    %v5430 = vpop.xlane.xlu0 %5429
    %v5431 = vsel %vm891, %v5427, 0.0
    %5432 = vadd.xlane.f32.xlu0 %v5431
    %v5433 = vpop.xlane.xlu0 %5432
    %v5434 = vrcp.pop %v5430
    %v5435 = vrcp.pop %v5433
    %v5436 = vmul.f32 %v5425, %v5434
    %v5437 = vmul.f32 %v5427, %v5435
    %5438 = vrot.lane.b32.xlu0 %v4909, 80
    %v5439 = vpop.permute.xlu0 %5438
    %5440 = vrot.lane.b32.xlu0 %v4914, 80
    %v5441 = vpop.permute.xlu0 %5440
    %v5445 = vsel %vm891, %v5436, 0
    %v5448 = vsel %vm891, %v5437, 0
    %5450 = vmatprep.subr.mxu0 0.0
    %5451 = vmatpush1.msra.mxu0 %v5439
    %5452 = vmatprep.subr.mxu0 0.0
    %5453 = vmatpush1.msra.mxu0 %v5441
    %5454 = vmatprep.subr.mxu0 0.0
    %5455 = vmatpush1.msra.mxu0 0.0
    %5456 = vmatprep.subr.mxu0 0.0
    %5457 = vmatpush1.msra.mxu0 0.0
    %5458 = vmatprep.subr.mxu0 0.0
    %5459 = vmatpush1.msra.mxu0 0.0
    %5460 = vmatprep.subr.mxu0 0.0
    %5461 = vmatpush1.msra.mxu0 0.0
    %5462 = vmatprep.subr.mxu0 0.0
    %5463 = vmatpush1.msra.mxu0 0.0
    %5464 = vmatprep.subr.mxu0 0.0
    %5465 = vmatpush1.msra.mxu0 0.0
    %5466 = vmatprep.subr.mxu0 0.0
    %5467 = vmatpush1.msra.mxu0 0.0
    %5468 = vmatprep.subr.mxu0 0.0
    %5469 = vmatpush1.msra.mxu0 0.0
    %5470 = vmatprep.subr.mxu0 0.0
    %5471 = vmatpush1.msra.mxu0 0.0
    %5472 = vmatprep.subr.mxu0 0.0
    %5473 = vmatpush1.msra.mxu0 0.0
    %5474 = vmatprep.subr.mxu0 0.0
    %5475 = vmatpush1.msra.mxu0 0.0
    %5476 = vmatprep.subr.mxu0 0.0
    %5477 = vmatpush1.msra.mxu0 0.0
    %5478 = vmatprep.subr.mxu0 0.0
    %5479 = vmatpush1.msra.mxu0 0.0
    %5480 = vmatprep.subr.mxu0 0.0
    %5481 = vmatpush1.msra.mxu0 0.0
    %5482 = vmatprep.subr.mxu0 0.0
    %5483 = vmatpush1.msra.mxu0 0.0
    %5484 = vmatprep.subr.mxu0 0.0
    %5485 = vmatpush1.msra.mxu0 0.0
    %5486 = vmatprep.subr.mxu0 0.0
    %5487 = vmatpush1.msra.mxu0 0.0
    %5488 = vmatprep.subr.mxu0 0.0
    %5489 = vmatpush1.msra.mxu0 0.0
    %5490 = vmatprep.subr.mxu0 0.0
    %5491 = vmatpush1.msra.mxu0 0.0
    %5492 = vmatprep.subr.mxu0 0.0
    %5493 = vmatpush1.msra.mxu0 0.0
    %5494 = vmatprep.subr.mxu0 0.0
    %5495 = vmatpush1.msra.mxu0 0.0
    %5496 = vmatprep.subr.mxu0 0.0
    %5497 = vmatpush1.msra.mxu0 0.0
    %5498 = vmatprep.subr.mxu0 0.0
    %5499 = vmatpush1.msra.mxu0 0.0
    %5500 = vmatprep.subr.mxu0 0.0
    %5501 = vmatpush1.msra.mxu0 0.0
    %5502 = vmatprep.subr.mxu0 0.0
    %5503 = vmatpush1.msra.mxu0 0.0
    %5504 = vmatprep.subr.mxu0 0.0
    %5505 = vmatpush1.msra.mxu0 0.0
    %5506 = vmatprep.subr.mxu0 0.0
    %5507 = vmatpush1.msra.mxu0 0.0
    %5508 = vmatprep.subr.mxu0 0.0
    %5509 = vmatpush1.msra.mxu0 0.0
    %5510 = vmatprep.subr.mxu0 0.0
    %5511 = vmatpush1.msra.mxu0 0.0
    %5512 = vmatprep.subr.mxu0 0.0
    %5513 = vmatpush1.msra.mxu0 0.0
    %5514 = vmatprep.mubr.f32.mxu0 0.0
    %5515 = vmatmul.mubr.f32.gmra.mrb[0].mxu0 %v5445
    %v5516 = vpop.f32.mrb[0].mxu0
    %v5517 = vadd.f32 0.0, %v5516
    %v5518 = vpop.f32.mrb[0].mxu0
    %5519 = vmatprep.mubr.f32.mxu0 0.0
    %5520 = vmatmul.mubr.f32.gmra.mrb[0].mxu0 %v5448
    %v5521 = vpop.f32.mrb[0].mxu0
    %v5522 = vadd.f32 0.0, %v5521
    %v5523 = vpop.f32.mrb[0].mxu0
    %5524 = vdwg.mxu0
    %5525 = vrot.lane.b32.xlu0 %v4822, 104
    %v5526 = vpop.permute.xlu0 %5525
    %5527 = vrot.lane.b32.xlu0 %v4827, 104
    %v5528 = vpop.permute.xlu0 %5527
    %5529 = vrot.lane.b32.xlu0 %v4909, 104
    %v5530 = vpop.permute.xlu0 %5529
    %5531 = vrot.lane.b32.xlu0 %v4914, 104
    %v5532 = vpop.permute.xlu0 %5531
    %v5533 = vsel %vm1069, %v5526, 0
    %v5535 = vsel %vm1069, %v5528, 0
    %v5537 = vsel %vm1069, %v5530, 0
    %v5539 = vsel %vm1069, %v5532, 0
    %5541 = vmatprep.subr.mxu0 0.0
    %5542 = vmatpush1.xpose.msra.mxu0 %v5537
    %5543 = vmatprep.subr.mxu0 0.0
    %5544 = vmatpush1.xpose.msra.mxu0 %v5539
    %5545 = vmatprep.subr.mxu0 0.0
    %5546 = vmatpush1.xpose.msra.mxu0 0.0
    %5547 = vmatprep.subr.mxu0 0.0
    %5548 = vmatpush1.xpose.msra.mxu0 0.0
    %5549 = vmatprep.subr.mxu0 0.0
    %5550 = vmatpush1.xpose.msra.mxu0 0.0
    %5551 = vmatprep.subr.mxu0 0.0
    %5552 = vmatpush1.xpose.msra.mxu0 0.0
    %5553 = vmatprep.subr.mxu0 0.0
    %5554 = vmatpush1.xpose.msra.mxu0 0.0
    %5555 = vmatprep.subr.mxu0 0.0
    %5556 = vmatpush1.xpose.msra.mxu0 0.0
    %5557 = vmatprep.subr.mxu0 0.0
    %5558 = vmatpush1.xpose.msra.mxu0 0.0
    %5559 = vmatprep.subr.mxu0 0.0
    %5560 = vmatpush1.xpose.msra.mxu0 0.0
    %5561 = vmatprep.subr.mxu0 0.0
    %5562 = vmatpush1.xpose.msra.mxu0 0.0
    %5563 = vmatprep.subr.mxu0 0.0
    %5564 = vmatpush1.xpose.msra.mxu0 0.0
    %5565 = vmatprep.subr.mxu0 0.0
    %5566 = vmatpush1.xpose.msra.mxu0 0.0
    %5567 = vmatprep.subr.mxu0 0.0
    %5568 = vmatpush1.xpose.msra.mxu0 0.0
    %5569 = vmatprep.subr.mxu0 0.0
    %5570 = vmatpush1.xpose.msra.mxu0 0.0
    %5571 = vmatprep.subr.mxu0 0.0
    %5572 = vmatpush1.xpose.msra.mxu0 0.0
    %5573 = vmatprep.subr.mxu0 0.0
    %5574 = vmatpush1.xpose.msra.mxu0 0.0
    %5575 = vmatprep.subr.mxu0 0.0
    %5576 = vmatpush1.xpose.msra.mxu0 0.0
    %5577 = vmatprep.subr.mxu0 0.0
    %5578 = vmatpush1.xpose.msra.mxu0 0.0
    %5579 = vmatprep.subr.mxu0 0.0
    %5580 = vmatpush1.xpose.msra.mxu0 0.0
    %5581 = vmatprep.subr.mxu0 0.0
    %5582 = vmatpush1.xpose.msra.mxu0 0.0
    %5583 = vmatprep.subr.mxu0 0.0
    %5584 = vmatpush1.xpose.msra.mxu0 0.0
    %5585 = vmatprep.subr.mxu0 0.0
    %5586 = vmatpush1.xpose.msra.mxu0 0.0
    %5587 = vmatprep.subr.mxu0 0.0
    %5588 = vmatpush1.xpose.msra.mxu0 0.0
    %5589 = vmatprep.subr.mxu0 0.0
    %5590 = vmatpush1.xpose.msra.mxu0 0.0
    %5591 = vmatprep.subr.mxu0 0.0
    %5592 = vmatpush1.xpose.msra.mxu0 0.0
    %5593 = vmatprep.subr.mxu0 0.0
    %5594 = vmatpush1.xpose.msra.mxu0 0.0
    %5595 = vmatprep.subr.mxu0 0.0
    %5596 = vmatpush1.xpose.msra.mxu0 0.0
    %5597 = vmatprep.subr.mxu0 0.0
    %5598 = vmatpush1.xpose.msra.mxu0 0.0
    %5599 = vmatprep.subr.mxu0 0.0
    %5600 = vmatpush1.xpose.msra.mxu0 0.0
    %5601 = vmatprep.subr.mxu0 0.0
    %5602 = vmatpush1.xpose.msra.mxu0 0.0
    %5603 = vmatprep.subr.mxu0 0.0
    %5604 = vmatpush1.xpose.msra.mxu0 0.0
    %5605 = vmatprep.mubr.f32.mxu0 0.0
    %5606 = vmatmul.mubr.f32.gmra.mrb[0].mxu0 %v5533
    %v5607 = vpop.f32.mrb[0].mxu0
    %v5608 = vadd.f32 0.0, %v5607
    %v5609 = vpop.f32.mrb[0].mxu0
    %5610 = vmatprep.mubr.f32.mxu0 0.0
    %5611 = vmatmul.mubr.f32.gmra.mrb[0].mxu0 %v5535
    %v5612 = vpop.f32.mrb[0].mxu0
    %v5613 = vadd.f32 0.0, %v5612
    %v5614 = vpop.f32.mrb[0].mxu0
    %5615 = vdwg.mxu0
    %v5616 = vmul.f32 %v5608, 0.35355338
    %v5617 = vmul.f32 %v5613, 0.35355338
    %v5618 = vadd.f32 %v5616, %v875
    %v5619 = vadd.f32 %v5617, %v876
    %v5620 = vsel %vm891, %v5618, -inf
    %5621 = vmax.xlane.f32.xlu0 %v5620
    %v5622 = vpop.xlane.xlu0 %5621
    %v5623 = vsel %vm891, %v5619, -inf
    %5624 = vmax.xlane.f32.xlu0 %v5623
    %v5625 = vpop.xlane.xlu0 %5624
    %v5626 = vsub.f32 %v5618, %v5622
    %v5627 = vsub.f32 %v5619, %v5625
    %v5628 = vmul.f32 %v5626, 1.442695
    %v5629 = vpow.pop %v5628
    %v5630 = vmul.f32 %v5627, 1.442695
    %v5631 = vpow.pop %v5630
    %v5632 = vsel %vm891, %v5629, 0.0
    %5633 = vadd.xlane.f32.xlu0 %v5632
    %v5634 = vpop.xlane.xlu0 %5633
    %v5635 = vsel %vm891, %v5631, 0.0
    %5636 = vadd.xlane.f32.xlu0 %v5635
    %v5637 = vpop.xlane.xlu0 %5636
    %v5638 = vrcp.pop %v5634
    %v5639 = vrcp.pop %v5637
    %v5640 = vmul.f32 %v5629, %v5638
    %v5641 = vmul.f32 %v5631, %v5639
    %5642 = vrot.lane.b32.xlu0 %v4909, 72
    %v5643 = vpop.permute.xlu0 %5642
    %5644 = vrot.lane.b32.xlu0 %v4914, 72
    %v5645 = vpop.permute.xlu0 %5644
    %v5649 = vsel %vm891, %v5640, 0
    %v5652 = vsel %vm891, %v5641, 0
    %5654 = vmatprep.subr.mxu0 0.0
    %5655 = vmatpush1.msra.mxu0 %v5643
    %5656 = vmatprep.subr.mxu0 0.0
    %5657 = vmatpush1.msra.mxu0 %v5645
    %5658 = vmatprep.subr.mxu0 0.0
    %5659 = vmatpush1.msra.mxu0 0.0
    %5660 = vmatprep.subr.mxu0 0.0
    %5661 = vmatpush1.msra.mxu0 0.0
    %5662 = vmatprep.subr.mxu0 0.0
    %5663 = vmatpush1.msra.mxu0 0.0
    %5664 = vmatprep.subr.mxu0 0.0
    %5665 = vmatpush1.msra.mxu0 0.0
    %5666 = vmatprep.subr.mxu0 0.0
    %5667 = vmatpush1.msra.mxu0 0.0
    %5668 = vmatprep.subr.mxu0 0.0
    %5669 = vmatpush1.msra.mxu0 0.0
    %5670 = vmatprep.subr.mxu0 0.0
    %5671 = vmatpush1.msra.mxu0 0.0
    %5672 = vmatprep.subr.mxu0 0.0
    %5673 = vmatpush1.msra.mxu0 0.0
    %5674 = vmatprep.subr.mxu0 0.0
    %5675 = vmatpush1.msra.mxu0 0.0
    %5676 = vmatprep.subr.mxu0 0.0
    %5677 = vmatpush1.msra.mxu0 0.0
    %5678 = vmatprep.subr.mxu0 0.0
    %5679 = vmatpush1.msra.mxu0 0.0
    %5680 = vmatprep.subr.mxu0 0.0
    %5681 = vmatpush1.msra.mxu0 0.0
    %5682 = vmatprep.subr.mxu0 0.0
    %5683 = vmatpush1.msra.mxu0 0.0
    %5684 = vmatprep.subr.mxu0 0.0
    %5685 = vmatpush1.msra.mxu0 0.0
    %5686 = vmatprep.subr.mxu0 0.0
    %5687 = vmatpush1.msra.mxu0 0.0
    %5688 = vmatprep.subr.mxu0 0.0
    %5689 = vmatpush1.msra.mxu0 0.0
    %5690 = vmatprep.subr.mxu0 0.0
    %5691 = vmatpush1.msra.mxu0 0.0
    %5692 = vmatprep.subr.mxu0 0.0
    %5693 = vmatpush1.msra.mxu0 0.0
    %5694 = vmatprep.subr.mxu0 0.0
    %5695 = vmatpush1.msra.mxu0 0.0
    %5696 = vmatprep.subr.mxu0 0.0
    %5697 = vmatpush1.msra.mxu0 0.0
    %5698 = vmatprep.subr.mxu0 0.0
    %5699 = vmatpush1.msra.mxu0 0.0
    %5700 = vmatprep.subr.mxu0 0.0
    %5701 = vmatpush1.msra.mxu0 0.0
    %5702 = vmatprep.subr.mxu0 0.0
    %5703 = vmatpush1.msra.mxu0 0.0
    %5704 = vmatprep.subr.mxu0 0.0
    %5705 = vmatpush1.msra.mxu0 0.0
    %5706 = vmatprep.subr.mxu0 0.0
    %5707 = vmatpush1.msra.mxu0 0.0
    %5708 = vmatprep.subr.mxu0 0.0
    %5709 = vmatpush1.msra.mxu0 0.0
    %5710 = vmatprep.subr.mxu0 0.0
    %5711 = vmatpush1.msra.mxu0 0.0
    %5712 = vmatprep.subr.mxu0 0.0
    %5713 = vmatpush1.msra.mxu0 0.0
    %5714 = vmatprep.subr.mxu0 0.0
    %5715 = vmatpush1.msra.mxu0 0.0
    %5716 = vmatprep.subr.mxu0 0.0
    %5717 = vmatpush1.msra.mxu0 0.0
    %5718 = vmatprep.mubr.f32.mxu0 0.0
    %5719 = vmatmul.mubr.f32.gmra.mrb[0].mxu0 %v5649
    %v5720 = vpop.f32.mrb[0].mxu0
    %v5721 = vadd.f32 0.0, %v5720
    %v5722 = vpop.f32.mrb[0].mxu0
    %5723 = vmatprep.mubr.f32.mxu0 0.0
    %5724 = vmatmul.mubr.f32.gmra.mrb[0].mxu0 %v5652
    %v5725 = vpop.f32.mrb[0].mxu0
    %v5726 = vadd.f32 0.0, %v5725
    %v5727 = vpop.f32.mrb[0].mxu0
    %5728 = vdwg.mxu0
    %5731 = vrot.lane.b32.xlu0 %v5313, 8
    %v5732 = vpop.permute.xlu0 %5731
    %5733 = vrot.lane.b32.xlu0 %v5318, 8
    %v5734 = vpop.permute.xlu0 %5733
    %5739 = vrot.lane.b32.xlu0 %v5517, 16
    %v5740 = vpop.permute.xlu0 %5739
    %5741 = vrot.lane.b32.xlu0 %v5522, 16
    %v5742 = vpop.permute.xlu0 %5741
    %5747 = vrot.lane.b32.xlu0 %v5721, 24
    %v5748 = vpop.permute.xlu0 %5747
    %5749 = vrot.lane.b32.xlu0 %v5726, 24
    %v5750 = vpop.permute.xlu0 %5749
    %v5753 = vsel %vm1069, %v5109, %v5732
    %v5754 = vsel %vm1069, %v5114, %v5734
    %v5755 = vsel %vm891, %v5753, %v5740
    %v5756 = vsel %vm891, %v5754, %v5742
    %v5757 = vsel %vm1906, %v5755, %v5748
    %v5758 = vsel %vm1906, %v5756, %v5750
    %v5760 = vlaneseq
    %v5761 = vshrl.u32 %v5760, 7
    %v5762 = vsub.s32 0, %v5761
    %v5763 = vrot.slane %v717, %v5762
    %v5766 = vsel %vm981, %v5757, 0
    %v5769 = vsel %vm981, %v5758, 0
    %5771 = vmatprep.subr.mxu0 0.0
    %5772 = vmatpush1.msra.mxu0 %v723
    %5773 = vmatprep.subr.mxu0 0.0
    %5774 = vmatpush1.msra.mxu0 %v724
    %5775 = vmatprep.subr.mxu0 0.0
    %5776 = vmatpush1.msra.mxu0 %v725
    %5777 = vmatprep.subr.mxu0 0.0
    %5778 = vmatpush1.msra.mxu0 %v726
    %5779 = vmatprep.subr.mxu0 0.0
    %5780 = vmatpush1.msra.mxu0 0.0
    %5781 = vmatprep.subr.mxu0 0.0
    %5782 = vmatpush1.msra.mxu0 0.0
    %5783 = vmatprep.subr.mxu0 0.0
    %5784 = vmatpush1.msra.mxu0 0.0
    %5785 = vmatprep.subr.mxu0 0.0
    %5786 = vmatpush1.msra.mxu0 0.0
    %5787 = vmatprep.subr.mxu0 0.0
    %5788 = vmatpush1.msra.mxu0 0.0
    %5789 = vmatprep.subr.mxu0 0.0
    %5790 = vmatpush1.msra.mxu0 0.0
    %5791 = vmatprep.subr.mxu0 0.0
    %5792 = vmatpush1.msra.mxu0 0.0
    %5793 = vmatprep.subr.mxu0 0.0
    %5794 = vmatpush1.msra.mxu0 0.0
    %5795 = vmatprep.subr.mxu0 0.0
    %5796 = vmatpush1.msra.mxu0 0.0
    %5797 = vmatprep.subr.mxu0 0.0
    %5798 = vmatpush1.msra.mxu0 0.0
    %5799 = vmatprep.subr.mxu0 0.0
    %5800 = vmatpush1.msra.mxu0 0.0
    %5801 = vmatprep.subr.mxu0 0.0
    %5802 = vmatpush1.msra.mxu0 0.0
    %5803 = vmatprep.subr.mxu0 0.0
    %5804 = vmatpush1.msra.mxu0 0.0
    %5805 = vmatprep.subr.mxu0 0.0
    %5806 = vmatpush1.msra.mxu0 0.0
    %5807 = vmatprep.subr.mxu0 0.0
    %5808 = vmatpush1.msra.mxu0 0.0
    %5809 = vmatprep.subr.mxu0 0.0
    %5810 = vmatpush1.msra.mxu0 0.0
    %5811 = vmatprep.subr.mxu0 0.0
    %5812 = vmatpush1.msra.mxu0 0.0
    %5813 = vmatprep.subr.mxu0 0.0
    %5814 = vmatpush1.msra.mxu0 0.0
    %5815 = vmatprep.subr.mxu0 0.0
    %5816 = vmatpush1.msra.mxu0 0.0
    %5817 = vmatprep.subr.mxu0 0.0
    %5818 = vmatpush1.msra.mxu0 0.0
    %5819 = vmatprep.subr.mxu0 0.0
    %5820 = vmatpush1.msra.mxu0 0.0
    %5821 = vmatprep.subr.mxu0 0.0
    %5822 = vmatpush1.msra.mxu0 0.0
    %5823 = vmatprep.subr.mxu0 0.0
    %5824 = vmatpush1.msra.mxu0 0.0
    %5825 = vmatprep.subr.mxu0 0.0
    %5826 = vmatpush1.msra.mxu0 0.0
    %5827 = vmatprep.subr.mxu0 0.0
    %5828 = vmatpush1.msra.mxu0 0.0
    %5829 = vmatprep.subr.mxu0 0.0
    %5830 = vmatpush1.msra.mxu0 0.0
    %5831 = vmatprep.subr.mxu0 0.0
    %5832 = vmatpush1.msra.mxu0 0.0
    %5833 = vmatprep.subr.mxu0 0.0
    %5834 = vmatpush1.msra.mxu0 0.0
    %5835 = vmatprep.mubr.f32.mxu0 0.0
    %5836 = vmatmul.mubr.f32.gmra.mrb[0].mxu0 %v5766
    %v5837 = vpop.f32.mrb[0].mxu0
    %v5838 = vadd.f32 %v5763, %v5837
    %v5839 = vpop.f32.mrb[0].mxu0
    %5840 = vmatprep.mubr.f32.mxu0 0.0
    %5841 = vmatmul.mubr.f32.gmra.mrb[0].mxu0 %v5769
    %v5842 = vpop.f32.mrb[0].mxu0
    %v5843 = vadd.f32 %v5763, %v5842
    %v5844 = vpop.f32.mrb[0].mxu0
    %5845 = vdwg.mxu0
    %v5846 = vadd.f32 %v4741, %v5838
    %v5847 = vadd.f32 %v4742, %v5843
    %v5848 = vsel %vm981, %v5846, 0.0
    %5849 = vadd.xlane.f32.xlu0 %v5848
    %v5850 = vpop.xlane.xlu0 %5849
    %v5851 = vsel %vm981, %v5847, 0.0
    %5852 = vadd.xlane.f32.xlu0 %v5851
    %v5853 = vpop.xlane.xlu0 %5852
    %v5854 = vmul.f32 %v5850, %v2004
    %v5855 = vmul.f32 %v5853, %v2004
    %v5856 = vsub.f32 %v5846, %v5854
    %v5857 = vsub.f32 %v5847, %v5855
    %v5858 = vmul.f32 %v5856, %v5856
    %v5859 = vmul.f32 %v5857, %v5857
    %v5860 = vsel %vm981, %v5858, 0.0
    %5861 = vadd.xlane.f32.xlu0 %v5860
    %v5862 = vpop.xlane.xlu0 %5861
    %v5863 = vsel %vm981, %v5859, 0.0
    %5864 = vadd.xlane.f32.xlu0 %v5863
    %v5865 = vpop.xlane.xlu0 %5864
    %v5866 = vmul.f32 %v5862, %v2004
    %v5867 = vmul.f32 %v5865, %v2004
    %v5868 = vadd.f32 %v5866, 1e-05
    %v5869 = vadd.f32 %v5867, 1e-05
    %v5870 = vrsqrt.pop %v5868
    %v5871 = vrsqrt.pop %v5869
    %v5872 = vmul.f32 %v5856, %v5870
    %v5873 = vmul.f32 %v5857, %v5871
    %v5875 = vlaneseq
    %v5876 = vshrl.u32 %v5875, 7
    %v5877 = vsub.s32 0, %v5876
    %v5878 = vrot.slane %v748, %v5877
    %v5880 = vmul.f32 %v5872, %v5878
    %v5881 = vmul.f32 %v5873, %v5878
    %v5883 = vlaneseq
    %v5884 = vshrl.u32 %v5883, 7
    %v5885 = vsub.s32 0, %v5884
    %v5886 = vrot.slane %v747, %v5885
    %v5888 = vadd.f32 %v5880, %v5886
    %v5889 = vadd.f32 %v5881, %v5886
    %v5891 = vlaneseq
    %v5892 = vshrl.u32 %v5891, 7
    %v5893 = vsub.s32 0, %v5892
    %v5894 = vrot.slane %v731, %v5893
    %v5897 = vsel %vm981, %v5888, 0
    %v5900 = vsel %vm981, %v5889, 0
    %5902 = vmatprep.subr.mxu0 0.0
    %5903 = vmatpush1.msra.mxu0 %v733
    %5904 = vmatprep.subr.mxu0 0.0
    %5905 = vmatpush1.msra.mxu0 %v734
    %5906 = vmatprep.subr.mxu0 0.0
    %5907 = vmatpush1.msra.mxu0 %v735
    %5908 = vmatprep.subr.mxu0 0.0
    %5909 = vmatpush1.msra.mxu0 %v736
    %5910 = vmatprep.subr.mxu0 0.0
    %5911 = vmatpush1.msra.mxu0 0.0
    %5912 = vmatprep.subr.mxu0 0.0
    %5913 = vmatpush1.msra.mxu0 0.0
    %5914 = vmatprep.subr.mxu0 0.0
    %5915 = vmatpush1.msra.mxu0 0.0
    %5916 = vmatprep.subr.mxu0 0.0
    %5917 = vmatpush1.msra.mxu0 0.0
    %5918 = vmatprep.subr.mxu0 0.0
    %5919 = vmatpush1.msra.mxu0 0.0
    %5920 = vmatprep.subr.mxu0 0.0
    %5921 = vmatpush1.msra.mxu0 0.0
    %5922 = vmatprep.subr.mxu0 0.0
    %5923 = vmatpush1.msra.mxu0 0.0
    %5924 = vmatprep.subr.mxu0 0.0
    %5925 = vmatpush1.msra.mxu0 0.0
    %5926 = vmatprep.subr.mxu0 0.0
    %5927 = vmatpush1.msra.mxu0 0.0
    %5928 = vmatprep.subr.mxu0 0.0
    %5929 = vmatpush1.msra.mxu0 0.0
    %5930 = vmatprep.subr.mxu0 0.0
    %5931 = vmatpush1.msra.mxu0 0.0
    %5932 = vmatprep.subr.mxu0 0.0
    %5933 = vmatpush1.msra.mxu0 0.0
    %5934 = vmatprep.subr.mxu0 0.0
    %5935 = vmatpush1.msra.mxu0 0.0
    %5936 = vmatprep.subr.mxu0 0.0
    %5937 = vmatpush1.msra.mxu0 0.0
    %5938 = vmatprep.subr.mxu0 0.0
    %5939 = vmatpush1.msra.mxu0 0.0
    %5940 = vmatprep.subr.mxu0 0.0
    %5941 = vmatpush1.msra.mxu0 0.0
    %5942 = vmatprep.subr.mxu0 0.0
    %5943 = vmatpush1.msra.mxu0 0.0
    %5944 = vmatprep.subr.mxu0 0.0
    %5945 = vmatpush1.msra.mxu0 0.0
    %5946 = vmatprep.subr.mxu0 0.0
    %5947 = vmatpush1.msra.mxu0 0.0
    %5948 = vmatprep.subr.mxu0 0.0
    %5949 = vmatpush1.msra.mxu0 0.0
    %5950 = vmatprep.subr.mxu0 0.0
    %5951 = vmatpush1.msra.mxu0 0.0
    %5952 = vmatprep.subr.mxu0 0.0
    %5953 = vmatpush1.msra.mxu0 0.0
    %5954 = vmatprep.subr.mxu0 0.0
    %5955 = vmatpush1.msra.mxu0 0.0
    %5956 = vmatprep.subr.mxu0 0.0
    %5957 = vmatpush1.msra.mxu0 0.0
    %5958 = vmatprep.subr.mxu0 0.0
    %5959 = vmatpush1.msra.mxu0 0.0
    %5960 = vmatprep.subr.mxu0 0.0
    %5961 = vmatpush1.msra.mxu0 0.0
    %5962 = vmatprep.subr.mxu0 0.0
    %5963 = vmatpush1.msra.mxu0 0.0
    %5964 = vmatprep.subr.mxu0 0.0
    %5965 = vmatpush1.msra.mxu0 0.0
    %5966 = vmatprep.mubr.f32.mxu0 0.0
    %5967 = vmatmul.mubr.f32.gmra.mrb[0].mxu0 %v5897
    %v5968 = vpop.f32.mrb[0].mxu0
    %v5969 = vadd.f32 %v5894, %v5968
    %v5970 = vpop.f32.mrb[0].mxu0
    %5971 = vmatprep.mubr.f32.mxu0 0.0
    %5972 = vmatmul.mubr.f32.gmra.mrb[0].mxu0 %v5900
    %v5973 = vpop.f32.mrb[0].mxu0
    %v5974 = vadd.f32 %v5894, %v5973
    %v5975 = vpop.f32.mrb[0].mxu0
    %5976 = vdwg.mxu0
    %v5977 = vmax.f32 %v5969, 0.0
    %v5978 = vmax.f32 %v5974, 0.0
    %v5980 = vlaneseq
    %v5981 = vshrl.u32 %v5980, 7
    %v5982 = vsub.s32 0, %v5981
    %v5983 = vrot.slane %v732, %v5982
    %v5986 = vsel %vm2136, %v5977, 0
    %v5989 = vsel %vm2136, %v5978, 0
    %5991 = vmatprep.subr.mxu0 0.0
    %5992 = vmatpush1.msra.mxu0 %v737
    %5993 = vmatprep.subr.mxu0 0.0
    %5994 = vmatpush1.msra.mxu0 %v738
    %5995 = vmatprep.subr.mxu0 0.0
    %5996 = vmatpush1.msra.mxu0 %v739
    %5997 = vmatprep.subr.mxu0 0.0
    %5998 = vmatpush1.msra.mxu0 %v740
    %5999 = vmatprep.subr.mxu0 0.0
    %6000 = vmatpush1.msra.mxu0 %v741
    %6001 = vmatprep.subr.mxu0 0.0
    %6002 = vmatpush1.msra.mxu0 %v742
    %6003 = vmatprep.subr.mxu0 0.0
    %6004 = vmatpush1.msra.mxu0 %v743
    %6005 = vmatprep.subr.mxu0 0.0
    %6006 = vmatpush1.msra.mxu0 %v744
    %6007 = vmatprep.subr.mxu0 0.0
    %6008 = vmatpush1.msra.mxu0 0.0
    %6009 = vmatprep.subr.mxu0 0.0
    %6010 = vmatpush1.msra.mxu0 0.0
    %6011 = vmatprep.subr.mxu0 0.0
    %6012 = vmatpush1.msra.mxu0 0.0
    %6013 = vmatprep.subr.mxu0 0.0
    %6014 = vmatpush1.msra.mxu0 0.0
    %6015 = vmatprep.subr.mxu0 0.0
    %6016 = vmatpush1.msra.mxu0 0.0
    %6017 = vmatprep.subr.mxu0 0.0
    %6018 = vmatpush1.msra.mxu0 0.0
    %6019 = vmatprep.subr.mxu0 0.0
    %6020 = vmatpush1.msra.mxu0 0.0
    %6021 = vmatprep.subr.mxu0 0.0
    %6022 = vmatpush1.msra.mxu0 0.0
    %6023 = vmatprep.subr.mxu0 0.0
    %6024 = vmatpush1.msra.mxu0 0.0
    %6025 = vmatprep.subr.mxu0 0.0
    %6026 = vmatpush1.msra.mxu0 0.0
    %6027 = vmatprep.subr.mxu0 0.0
    %6028 = vmatpush1.msra.mxu0 0.0
    %6029 = vmatprep.subr.mxu0 0.0
    %6030 = vmatpush1.msra.mxu0 0.0
    %6031 = vmatprep.subr.mxu0 0.0
    %6032 = vmatpush1.msra.mxu0 0.0
    %6033 = vmatprep.subr.mxu0 0.0
    %6034 = vmatpush1.msra.mxu0 0.0
    %6035 = vmatprep.subr.mxu0 0.0
    %6036 = vmatpush1.msra.mxu0 0.0
    %6037 = vmatprep.subr.mxu0 0.0
    %6038 = vmatpush1.msra.mxu0 0.0
    %6039 = vmatprep.subr.mxu0 0.0
    %6040 = vmatpush1.msra.mxu0 0.0
    %6041 = vmatprep.subr.mxu0 0.0
    %6042 = vmatpush1.msra.mxu0 0.0
    %6043 = vmatprep.subr.mxu0 0.0
    %6044 = vmatpush1.msra.mxu0 0.0
    %6045 = vmatprep.subr.mxu0 0.0
    %6046 = vmatpush1.msra.mxu0 0.0
    %6047 = vmatprep.subr.mxu0 0.0
    %6048 = vmatpush1.msra.mxu0 0.0
    %6049 = vmatprep.subr.mxu0 0.0
    %6050 = vmatpush1.msra.mxu0 0.0
    %6051 = vmatprep.subr.mxu0 0.0
    %6052 = vmatpush1.msra.mxu0 0.0
    %6053 = vmatprep.subr.mxu0 0.0
    %6054 = vmatpush1.msra.mxu0 0.0
    %6055 = vmatprep.mubr.f32.mxu0 0.0
    %6056 = vmatmul.mubr.f32.gmra.mrb[0].mxu0 %v5986
    %v6057 = vpop.f32.mrb[0].mxu0
    %v6058 = vadd.f32 %v5983, %v6057
    %v6059 = vpop.f32.mrb[0].mxu0
    %6060 = vmatprep.mubr.f32.mxu0 0.0
    %6061 = vmatmul.mubr.f32.gmra.mrb[0].mxu0 %v5989
    %v6062 = vpop.f32.mrb[0].mxu0
    %v6063 = vadd.f32 %v5983, %v6062
    %v6064 = vpop.f32.mrb[0].mxu0
    %6065 = vdwg.mxu0
    %v6066 = vadd.f32 %v5888, %v6058
    %v6067 = vadd.f32 %v5889, %v6063
    %v6068 = vsel %vm981, %v6066, 0.0
    %6069 = vadd.xlane.f32.xlu0 %v6068
    %v6070 = vpop.xlane.xlu0 %6069
    %v6071 = vsel %vm981, %v6067, 0.0
    %6072 = vadd.xlane.f32.xlu0 %v6071
    %v6073 = vpop.xlane.xlu0 %6072
    %v6074 = vmul.f32 %v6070, %v2004
    %v6075 = vmul.f32 %v6073, %v2004
    %v6076 = vsub.f32 %v6066, %v6074
    %v6077 = vsub.f32 %v6067, %v6075
    %v6078 = vmul.f32 %v6076, %v6076
    %v6079 = vmul.f32 %v6077, %v6077
    %v6080 = vsel %vm981, %v6078, 0.0
    %6081 = vadd.xlane.f32.xlu0 %v6080
    %v6082 = vpop.xlane.xlu0 %6081
    %v6083 = vsel %vm981, %v6079, 0.0
    %6084 = vadd.xlane.f32.xlu0 %v6083
    %v6085 = vpop.xlane.xlu0 %6084
    %v6086 = vmul.f32 %v6082, %v2004
    %v6087 = vmul.f32 %v6085, %v2004
    %v6088 = vadd.f32 %v6086, 1e-05
    %v6089 = vadd.f32 %v6087, 1e-05
    %v6090 = vrsqrt.pop %v6088
    %v6091 = vrsqrt.pop %v6089
    %v6092 = vmul.f32 %v6076, %v6090
    %v6093 = vmul.f32 %v6077, %v6091
    %v6095 = vlaneseq
    %v6096 = vshrl.u32 %v6095, 7
    %v6097 = vsub.s32 0, %v6096
    %v6098 = vrot.slane %v750, %v6097
    %v6100 = vmul.f32 %v6092, %v6098
    %v6101 = vmul.f32 %v6093, %v6098
    %v6103 = vlaneseq
    %v6104 = vshrl.u32 %v6103, 7
    %v6105 = vsub.s32 0, %v6104
    %v6106 = vrot.slane %v749, %v6105
    %v6108 = vadd.f32 %v6100, %v6106
    %v6109 = vadd.f32 %v6101, %v6106
    %v6111 = vlaneseq
    %v6112 = vshrl.u32 %v6111, 7
    %v6113 = vsub.s32 0, %v6112
    %v6114 = vrot.slane %v797, %v6113
    %v6117 = vsel %vm981, %v6108, 0
    %v6120 = vsel %vm981, %v6109, 0
    %6122 = vmatprep.subr.mxu0 0.0
    %6123 = vmatpush1.msra.mxu0 %v802
    %6124 = vmatprep.subr.mxu0 0.0
    %6125 = vmatpush1.msra.mxu0 %v803
    %6126 = vmatprep.subr.mxu0 0.0
    %6127 = vmatpush1.msra.mxu0 %v804
    %6128 = vmatprep.subr.mxu0 0.0
    %6129 = vmatpush1.msra.mxu0 %v805
    %6130 = vmatprep.subr.mxu0 0.0
    %6131 = vmatpush1.msra.mxu0 0.0
    %6132 = vmatprep.subr.mxu0 0.0
    %6133 = vmatpush1.msra.mxu0 0.0
    %6134 = vmatprep.subr.mxu0 0.0
    %6135 = vmatpush1.msra.mxu0 0.0
    %6136 = vmatprep.subr.mxu0 0.0
    %6137 = vmatpush1.msra.mxu0 0.0
    %6138 = vmatprep.subr.mxu0 0.0
    %6139 = vmatpush1.msra.mxu0 0.0
    %6140 = vmatprep.subr.mxu0 0.0
    %6141 = vmatpush1.msra.mxu0 0.0
    %6142 = vmatprep.subr.mxu0 0.0
    %6143 = vmatpush1.msra.mxu0 0.0
    %6144 = vmatprep.subr.mxu0 0.0
    %6145 = vmatpush1.msra.mxu0 0.0
    %6146 = vmatprep.subr.mxu0 0.0
    %6147 = vmatpush1.msra.mxu0 0.0
    %6148 = vmatprep.subr.mxu0 0.0
    %6149 = vmatpush1.msra.mxu0 0.0
    %6150 = vmatprep.subr.mxu0 0.0
    %6151 = vmatpush1.msra.mxu0 0.0
    %6152 = vmatprep.subr.mxu0 0.0
    %6153 = vmatpush1.msra.mxu0 0.0
    %6154 = vmatprep.subr.mxu0 0.0
    %6155 = vmatpush1.msra.mxu0 0.0
    %6156 = vmatprep.subr.mxu0 0.0
    %6157 = vmatpush1.msra.mxu0 0.0
    %6158 = vmatprep.subr.mxu0 0.0
    %6159 = vmatpush1.msra.mxu0 0.0
    %6160 = vmatprep.subr.mxu0 0.0
    %6161 = vmatpush1.msra.mxu0 0.0
    %6162 = vmatprep.subr.mxu0 0.0
    %6163 = vmatpush1.msra.mxu0 0.0
    %6164 = vmatprep.subr.mxu0 0.0
    %6165 = vmatpush1.msra.mxu0 0.0
    %6166 = vmatprep.subr.mxu0 0.0
    %6167 = vmatpush1.msra.mxu0 0.0
    %6168 = vmatprep.subr.mxu0 0.0
    %6169 = vmatpush1.msra.mxu0 0.0
    %6170 = vmatprep.subr.mxu0 0.0
    %6171 = vmatpush1.msra.mxu0 0.0
    %6172 = vmatprep.subr.mxu0 0.0
    %6173 = vmatpush1.msra.mxu0 0.0
    %6174 = vmatprep.subr.mxu0 0.0
    %6175 = vmatpush1.msra.mxu0 0.0
    %6176 = vmatprep.subr.mxu0 0.0
    %6177 = vmatpush1.msra.mxu0 0.0
    %6178 = vmatprep.subr.mxu0 0.0
    %6179 = vmatpush1.msra.mxu0 0.0
    %6180 = vmatprep.subr.mxu0 0.0
    %6181 = vmatpush1.msra.mxu0 0.0
    %6182 = vmatprep.subr.mxu0 0.0
    %6183 = vmatpush1.msra.mxu0 0.0
    %6184 = vmatprep.subr.mxu0 0.0
    %6185 = vmatpush1.msra.mxu0 0.0
    %6186 = vmatprep.mubr.f32.mxu0 0.0
    %6187 = vmatmul.mubr.f32.gmra.mrb[0].mxu0 %v6117
    %v6188 = vpop.f32.mrb[0].mxu0
    %v6189 = vadd.f32 %v6114, %v6188
    %v6190 = vpop.f32.mrb[0].mxu0
    %6191 = vmatprep.mubr.f32.mxu0 0.0
    %6192 = vmatmul.mubr.f32.gmra.mrb[0].mxu0 %v6120
    %v6193 = vpop.f32.mrb[0].mxu0
    %v6194 = vadd.f32 %v6114, %v6193
    %v6195 = vpop.f32.mrb[0].mxu0
    %6196 = vdwg.mxu0
    %6199 = vrot.lane.b32.xlu0 %v6189, 96
    %v6200 = vpop.permute.xlu0 %6199
    %6201 = vrot.lane.b32.xlu0 %v6194, 96
    %v6202 = vpop.permute.xlu0 %6201
    %v6203 = vsel %vm1069, %v6189, 0
    %v6205 = vsel %vm1069, %v6194, 0
    %v6207 = vsel %vm1069, %v6200, 0
    %v6209 = vsel %vm1069, %v6202, 0
    %6211 = vmatprep.subr.mxu0 0.0
    %6212 = vmatpush1.xpose.msra.mxu0 %v6207
    %6213 = vmatprep.subr.mxu0 0.0
    %6214 = vmatpush1.xpose.msra.mxu0 %v6209
    %6215 = vmatprep.subr.mxu0 0.0
    %6216 = vmatpush1.xpose.msra.mxu0 0.0
    %6217 = vmatprep.subr.mxu0 0.0
    %6218 = vmatpush1.xpose.msra.mxu0 0.0
    %6219 = vmatprep.subr.mxu0 0.0
    %6220 = vmatpush1.xpose.msra.mxu0 0.0
    %6221 = vmatprep.subr.mxu0 0.0
    %6222 = vmatpush1.xpose.msra.mxu0 0.0
    %6223 = vmatprep.subr.mxu0 0.0
    %6224 = vmatpush1.xpose.msra.mxu0 0.0
    %6225 = vmatprep.subr.mxu0 0.0
    %6226 = vmatpush1.xpose.msra.mxu0 0.0
    %6227 = vmatprep.subr.mxu0 0.0
    %6228 = vmatpush1.xpose.msra.mxu0 0.0
    %6229 = vmatprep.subr.mxu0 0.0
    %6230 = vmatpush1.xpose.msra.mxu0 0.0
    %6231 = vmatprep.subr.mxu0 0.0
    %6232 = vmatpush1.xpose.msra.mxu0 0.0
    %6233 = vmatprep.subr.mxu0 0.0
    %6234 = vmatpush1.xpose.msra.mxu0 0.0
    %6235 = vmatprep.subr.mxu0 0.0
    %6236 = vmatpush1.xpose.msra.mxu0 0.0
    %6237 = vmatprep.subr.mxu0 0.0
    %6238 = vmatpush1.xpose.msra.mxu0 0.0
    %6239 = vmatprep.subr.mxu0 0.0
    %6240 = vmatpush1.xpose.msra.mxu0 0.0
    %6241 = vmatprep.subr.mxu0 0.0
    %6242 = vmatpush1.xpose.msra.mxu0 0.0
    %6243 = vmatprep.subr.mxu0 0.0
    %6244 = vmatpush1.xpose.msra.mxu0 0.0
    %6245 = vmatprep.subr.mxu0 0.0
    %6246 = vmatpush1.xpose.msra.mxu0 0.0
    %6247 = vmatprep.subr.mxu0 0.0
    %6248 = vmatpush1.xpose.msra.mxu0 0.0
    %6249 = vmatprep.subr.mxu0 0.0
    %6250 = vmatpush1.xpose.msra.mxu0 0.0
    %6251 = vmatprep.subr.mxu0 0.0
    %6252 = vmatpush1.xpose.msra.mxu0 0.0
    %6253 = vmatprep.subr.mxu0 0.0
    %6254 = vmatpush1.xpose.msra.mxu0 0.0
    %6255 = vmatprep.subr.mxu0 0.0
    %6256 = vmatpush1.xpose.msra.mxu0 0.0
    %6257 = vmatprep.subr.mxu0 0.0
    %6258 = vmatpush1.xpose.msra.mxu0 0.0
    %6259 = vmatprep.subr.mxu0 0.0
    %6260 = vmatpush1.xpose.msra.mxu0 0.0
    %6261 = vmatprep.subr.mxu0 0.0
    %6262 = vmatpush1.xpose.msra.mxu0 0.0
    %6263 = vmatprep.subr.mxu0 0.0
    %6264 = vmatpush1.xpose.msra.mxu0 0.0
    %6265 = vmatprep.subr.mxu0 0.0
    %6266 = vmatpush1.xpose.msra.mxu0 0.0
    %6267 = vmatprep.subr.mxu0 0.0
    %6268 = vmatpush1.xpose.msra.mxu0 0.0
    %6269 = vmatprep.subr.mxu0 0.0
    %6270 = vmatpush1.xpose.msra.mxu0 0.0
    %6271 = vmatprep.subr.mxu0 0.0
    %6272 = vmatpush1.xpose.msra.mxu0 0.0
    %6273 = vmatprep.subr.mxu0 0.0
    %6274 = vmatpush1.xpose.msra.mxu0 0.0
    %6275 = vmatprep.mubr.f32.mxu0 0.0
    %6276 = vmatmul.mubr.f32.gmra.mrb[0].mxu0 %v6203
    %v6277 = vpop.f32.mrb[0].mxu0
    %v6278 = vadd.f32 0.0, %v6277
    %v6279 = vpop.f32.mrb[0].mxu0
    %6280 = vmatprep.mubr.f32.mxu0 0.0
    %6281 = vmatmul.mubr.f32.gmra.mrb[0].mxu0 %v6205
    %v6282 = vpop.f32.mrb[0].mxu0
    %v6283 = vadd.f32 0.0, %v6282
    %v6284 = vpop.f32.mrb[0].mxu0
    %6285 = vdwg.mxu0
    %v6286 = vmul.f32 %v6278, 0.35355338
    %v6287 = vmul.f32 %v6283, 0.35355338
    %v6288 = vadd.f32 %v6286, %v873
    %v6289 = vadd.f32 %v6287, %v874
    %v6290 = vsel %vm891, %v6288, -inf
    %6291 = vmax.xlane.f32.xlu0 %v6290
    %v6292 = vpop.xlane.xlu0 %6291
    %v6293 = vsel %vm891, %v6289, -inf
    %6294 = vmax.xlane.f32.xlu0 %v6293
    %v6295 = vpop.xlane.xlu0 %6294
    %v6296 = vsub.f32 %v6288, %v6292
    %v6297 = vsub.f32 %v6289, %v6295
    %v6298 = vmul.f32 %v6296, 1.442695
    %v6299 = vpow.pop %v6298
    %v6300 = vmul.f32 %v6297, 1.442695
    %v6301 = vpow.pop %v6300
    %v6302 = vsel %vm891, %v6299, 0.0
    %6303 = vadd.xlane.f32.xlu0 %v6302
    %v6304 = vpop.xlane.xlu0 %6303
    %v6305 = vsel %vm891, %v6301, 0.0
    %6306 = vadd.xlane.f32.xlu0 %v6305
    %v6307 = vpop.xlane.xlu0 %6306
    %v6308 = vrcp.pop %v6304
    %v6309 = vrcp.pop %v6307
    %v6310 = vmul.f32 %v6299, %v6308
    %v6311 = vmul.f32 %v6301, %v6309
    %6312 = vrot.lane.b32.xlu0 %v6189, 64
    %v6313 = vpop.permute.xlu0 %6312
    %6314 = vrot.lane.b32.xlu0 %v6194, 64
    %v6315 = vpop.permute.xlu0 %6314
    %v6319 = vsel %vm891, %v6310, 0
    %v6322 = vsel %vm891, %v6311, 0
    %6324 = vmatprep.subr.mxu0 0.0
    %6325 = vmatpush1.msra.mxu0 %v6313
    %6326 = vmatprep.subr.mxu0 0.0
    %6327 = vmatpush1.msra.mxu0 %v6315
    %6328 = vmatprep.subr.mxu0 0.0
    %6329 = vmatpush1.msra.mxu0 0.0
    %6330 = vmatprep.subr.mxu0 0.0
    %6331 = vmatpush1.msra.mxu0 0.0
    %6332 = vmatprep.subr.mxu0 0.0
    %6333 = vmatpush1.msra.mxu0 0.0
    %6334 = vmatprep.subr.mxu0 0.0
    %6335 = vmatpush1.msra.mxu0 0.0
    %6336 = vmatprep.subr.mxu0 0.0
    %6337 = vmatpush1.msra.mxu0 0.0
    %6338 = vmatprep.subr.mxu0 0.0
    %6339 = vmatpush1.msra.mxu0 0.0
    %6340 = vmatprep.subr.mxu0 0.0
    %6341 = vmatpush1.msra.mxu0 0.0
    %6342 = vmatprep.subr.mxu0 0.0
    %6343 = vmatpush1.msra.mxu0 0.0
    %6344 = vmatprep.subr.mxu0 0.0
    %6345 = vmatpush1.msra.mxu0 0.0
    %6346 = vmatprep.subr.mxu0 0.0
    %6347 = vmatpush1.msra.mxu0 0.0
    %6348 = vmatprep.subr.mxu0 0.0
    %6349 = vmatpush1.msra.mxu0 0.0
    %6350 = vmatprep.subr.mxu0 0.0
    %6351 = vmatpush1.msra.mxu0 0.0
    %6352 = vmatprep.subr.mxu0 0.0
    %6353 = vmatpush1.msra.mxu0 0.0
    %6354 = vmatprep.subr.mxu0 0.0
    %6355 = vmatpush1.msra.mxu0 0.0
    %6356 = vmatprep.subr.mxu0 0.0
    %6357 = vmatpush1.msra.mxu0 0.0
    %6358 = vmatprep.subr.mxu0 0.0
    %6359 = vmatpush1.msra.mxu0 0.0
    %6360 = vmatprep.subr.mxu0 0.0
    %6361 = vmatpush1.msra.mxu0 0.0
    %6362 = vmatprep.subr.mxu0 0.0
    %6363 = vmatpush1.msra.mxu0 0.0
    %6364 = vmatprep.subr.mxu0 0.0
    %6365 = vmatpush1.msra.mxu0 0.0
    %6366 = vmatprep.subr.mxu0 0.0
    %6367 = vmatpush1.msra.mxu0 0.0
    %6368 = vmatprep.subr.mxu0 0.0
    %6369 = vmatpush1.msra.mxu0 0.0
    %6370 = vmatprep.subr.mxu0 0.0
    %6371 = vmatpush1.msra.mxu0 0.0
    %6372 = vmatprep.subr.mxu0 0.0
    %6373 = vmatpush1.msra.mxu0 0.0
    %6374 = vmatprep.subr.mxu0 0.0
    %6375 = vmatpush1.msra.mxu0 0.0
    %6376 = vmatprep.subr.mxu0 0.0
    %6377 = vmatpush1.msra.mxu0 0.0
    %6378 = vmatprep.subr.mxu0 0.0
    %6379 = vmatpush1.msra.mxu0 0.0
    %6380 = vmatprep.subr.mxu0 0.0
    %6381 = vmatpush1.msra.mxu0 0.0
    %6382 = vmatprep.subr.mxu0 0.0
    %6383 = vmatpush1.msra.mxu0 0.0
    %6384 = vmatprep.subr.mxu0 0.0
    %6385 = vmatpush1.msra.mxu0 0.0
    %6386 = vmatprep.subr.mxu0 0.0
    %6387 = vmatpush1.msra.mxu0 0.0
    %6388 = vmatprep.mubr.f32.mxu0 0.0
    %6389 = vmatmul.mubr.f32.gmra.mrb[0].mxu0 %v6319
    %v6390 = vpop.f32.mrb[0].mxu0
    %v6391 = vadd.f32 0.0, %v6390
    %v6392 = vpop.f32.mrb[0].mxu0
    %6393 = vmatprep.mubr.f32.mxu0 0.0
    %6394 = vmatmul.mubr.f32.gmra.mrb[0].mxu0 %v6322
    %v6395 = vpop.f32.mrb[0].mxu0
    %v6396 = vadd.f32 0.0, %v6395
    %v6397 = vpop.f32.mrb[0].mxu0
    %6398 = vdwg.mxu0
    %6399 = vrot.lane.b32.xlu0 %v6189, 120
    %v6400 = vpop.permute.xlu0 %6399
    %6401 = vrot.lane.b32.xlu0 %v6194, 120
    %v6402 = vpop.permute.xlu0 %6401
    %6403 = vrot.lane.b32.xlu0 %v6189, 88
    %v6404 = vpop.permute.xlu0 %6403
    %6405 = vrot.lane.b32.xlu0 %v6194, 88
    %v6406 = vpop.permute.xlu0 %6405
    %v6407 = vsel %vm1069, %v6400, 0
    %v6409 = vsel %vm1069, %v6402, 0
    %v6411 = vsel %vm1069, %v6404, 0
    %v6413 = vsel %vm1069, %v6406, 0
    %6415 = vmatprep.subr.mxu0 0.0
    %6416 = vmatpush1.xpose.msra.mxu0 %v6411
    %6417 = vmatprep.subr.mxu0 0.0
    %6418 = vmatpush1.xpose.msra.mxu0 %v6413
    %6419 = vmatprep.subr.mxu0 0.0
    %6420 = vmatpush1.xpose.msra.mxu0 0.0
    %6421 = vmatprep.subr.mxu0 0.0
    %6422 = vmatpush1.xpose.msra.mxu0 0.0
    %6423 = vmatprep.subr.mxu0 0.0
    %6424 = vmatpush1.xpose.msra.mxu0 0.0
    %6425 = vmatprep.subr.mxu0 0.0
    %6426 = vmatpush1.xpose.msra.mxu0 0.0
    %6427 = vmatprep.subr.mxu0 0.0
    %6428 = vmatpush1.xpose.msra.mxu0 0.0
    %6429 = vmatprep.subr.mxu0 0.0
    %6430 = vmatpush1.xpose.msra.mxu0 0.0
    %6431 = vmatprep.subr.mxu0 0.0
    %6432 = vmatpush1.xpose.msra.mxu0 0.0
    %6433 = vmatprep.subr.mxu0 0.0
    %6434 = vmatpush1.xpose.msra.mxu0 0.0
    %6435 = vmatprep.subr.mxu0 0.0
    %6436 = vmatpush1.xpose.msra.mxu0 0.0
    %6437 = vmatprep.subr.mxu0 0.0
    %6438 = vmatpush1.xpose.msra.mxu0 0.0
    %6439 = vmatprep.subr.mxu0 0.0
    %6440 = vmatpush1.xpose.msra.mxu0 0.0
    %6441 = vmatprep.subr.mxu0 0.0
    %6442 = vmatpush1.xpose.msra.mxu0 0.0
    %6443 = vmatprep.subr.mxu0 0.0
    %6444 = vmatpush1.xpose.msra.mxu0 0.0
    %6445 = vmatprep.subr.mxu0 0.0
    %6446 = vmatpush1.xpose.msra.mxu0 0.0
    %6447 = vmatprep.subr.mxu0 0.0
    %6448 = vmatpush1.xpose.msra.mxu0 0.0
    %6449 = vmatprep.subr.mxu0 0.0
    %6450 = vmatpush1.xpose.msra.mxu0 0.0
    %6451 = vmatprep.subr.mxu0 0.0
    %6452 = vmatpush1.xpose.msra.mxu0 0.0
    %6453 = vmatprep.subr.mxu0 0.0
    %6454 = vmatpush1.xpose.msra.mxu0 0.0
    %6455 = vmatprep.subr.mxu0 0.0
    %6456 = vmatpush1.xpose.msra.mxu0 0.0
    %6457 = vmatprep.subr.mxu0 0.0
    %6458 = vmatpush1.xpose.msra.mxu0 0.0
    %6459 = vmatprep.subr.mxu0 0.0
    %6460 = vmatpush1.xpose.msra.mxu0 0.0
    %6461 = vmatprep.subr.mxu0 0.0
    %6462 = vmatpush1.xpose.msra.mxu0 0.0
    %6463 = vmatprep.subr.mxu0 0.0
    %6464 = vmatpush1.xpose.msra.mxu0 0.0
    %6465 = vmatprep.subr.mxu0 0.0
    %6466 = vmatpush1.xpose.msra.mxu0 0.0
    %6467 = vmatprep.subr.mxu0 0.0
    %6468 = vmatpush1.xpose.msra.mxu0 0.0
    %6469 = vmatprep.subr.mxu0 0.0
    %6470 = vmatpush1.xpose.msra.mxu0 0.0
    %6471 = vmatprep.subr.mxu0 0.0
    %6472 = vmatpush1.xpose.msra.mxu0 0.0
    %6473 = vmatprep.subr.mxu0 0.0
    %6474 = vmatpush1.xpose.msra.mxu0 0.0
    %6475 = vmatprep.subr.mxu0 0.0
    %6476 = vmatpush1.xpose.msra.mxu0 0.0
    %6477 = vmatprep.subr.mxu0 0.0
    %6478 = vmatpush1.xpose.msra.mxu0 0.0
    %6479 = vmatprep.mubr.f32.mxu0 0.0
    %6480 = vmatmul.mubr.f32.gmra.mrb[0].mxu0 %v6407
    %v6481 = vpop.f32.mrb[0].mxu0
    %v6482 = vadd.f32 0.0, %v6481
    %v6483 = vpop.f32.mrb[0].mxu0
    %6484 = vmatprep.mubr.f32.mxu0 0.0
    %6485 = vmatmul.mubr.f32.gmra.mrb[0].mxu0 %v6409
    %v6486 = vpop.f32.mrb[0].mxu0
    %v6487 = vadd.f32 0.0, %v6486
    %v6488 = vpop.f32.mrb[0].mxu0
    %6489 = vdwg.mxu0
    %v6490 = vmul.f32 %v6482, 0.35355338
    %v6491 = vmul.f32 %v6487, 0.35355338
    %v6492 = vadd.f32 %v6490, %v873
    %v6493 = vadd.f32 %v6491, %v874
    %v6494 = vsel %vm891, %v6492, -inf
    %6495 = vmax.xlane.f32.xlu0 %v6494
    %v6496 = vpop.xlane.xlu0 %6495
    %v6497 = vsel %vm891, %v6493, -inf
    %6498 = vmax.xlane.f32.xlu0 %v6497
    %v6499 = vpop.xlane.xlu0 %6498
    %v6500 = vsub.f32 %v6492, %v6496
    %v6501 = vsub.f32 %v6493, %v6499
    %v6502 = vmul.f32 %v6500, 1.442695
    %v6503 = vpow.pop %v6502
    %v6504 = vmul.f32 %v6501, 1.442695
    %v6505 = vpow.pop %v6504
    %v6506 = vsel %vm891, %v6503, 0.0
    %6507 = vadd.xlane.f32.xlu0 %v6506
    %v6508 = vpop.xlane.xlu0 %6507
    %v6509 = vsel %vm891, %v6505, 0.0
    %6510 = vadd.xlane.f32.xlu0 %v6509
    %v6511 = vpop.xlane.xlu0 %6510
    %v6512 = vrcp.pop %v6508
    %v6513 = vrcp.pop %v6511
    %v6514 = vmul.f32 %v6503, %v6512
    %v6515 = vmul.f32 %v6505, %v6513
    %6516 = vrot.lane.b32.xlu0 %v6189, 56
    %v6517 = vpop.permute.xlu0 %6516
    %6518 = vrot.lane.b32.xlu0 %v6194, 56
    %v6519 = vpop.permute.xlu0 %6518
    %v6523 = vsel %vm891, %v6514, 0
    %v6526 = vsel %vm891, %v6515, 0
    %6528 = vmatprep.subr.mxu0 0.0
    %6529 = vmatpush1.msra.mxu0 %v6517
    %6530 = vmatprep.subr.mxu0 0.0
    %6531 = vmatpush1.msra.mxu0 %v6519
    %6532 = vmatprep.subr.mxu0 0.0
    %6533 = vmatpush1.msra.mxu0 0.0
    %6534 = vmatprep.subr.mxu0 0.0
    %6535 = vmatpush1.msra.mxu0 0.0
    %6536 = vmatprep.subr.mxu0 0.0
    %6537 = vmatpush1.msra.mxu0 0.0
    %6538 = vmatprep.subr.mxu0 0.0
    %6539 = vmatpush1.msra.mxu0 0.0
    %6540 = vmatprep.subr.mxu0 0.0
    %6541 = vmatpush1.msra.mxu0 0.0
    %6542 = vmatprep.subr.mxu0 0.0
    %6543 = vmatpush1.msra.mxu0 0.0
    %6544 = vmatprep.subr.mxu0 0.0
    %6545 = vmatpush1.msra.mxu0 0.0
    %6546 = vmatprep.subr.mxu0 0.0
    %6547 = vmatpush1.msra.mxu0 0.0
    %6548 = vmatprep.subr.mxu0 0.0
    %6549 = vmatpush1.msra.mxu0 0.0
    %6550 = vmatprep.subr.mxu0 0.0
    %6551 = vmatpush1.msra.mxu0 0.0
    %6552 = vmatprep.subr.mxu0 0.0
    %6553 = vmatpush1.msra.mxu0 0.0
    %6554 = vmatprep.subr.mxu0 0.0
    %6555 = vmatpush1.msra.mxu0 0.0
    %6556 = vmatprep.subr.mxu0 0.0
    %6557 = vmatpush1.msra.mxu0 0.0
    %6558 = vmatprep.subr.mxu0 0.0
    %6559 = vmatpush1.msra.mxu0 0.0
    %6560 = vmatprep.subr.mxu0 0.0
    %6561 = vmatpush1.msra.mxu0 0.0
    %6562 = vmatprep.subr.mxu0 0.0
    %6563 = vmatpush1.msra.mxu0 0.0
    %6564 = vmatprep.subr.mxu0 0.0
    %6565 = vmatpush1.msra.mxu0 0.0
    %6566 = vmatprep.subr.mxu0 0.0
    %6567 = vmatpush1.msra.mxu0 0.0
    %6568 = vmatprep.subr.mxu0 0.0
    %6569 = vmatpush1.msra.mxu0 0.0
    %6570 = vmatprep.subr.mxu0 0.0
    %6571 = vmatpush1.msra.mxu0 0.0
    %6572 = vmatprep.subr.mxu0 0.0
    %6573 = vmatpush1.msra.mxu0 0.0
    %6574 = vmatprep.subr.mxu0 0.0
    %6575 = vmatpush1.msra.mxu0 0.0
    %6576 = vmatprep.subr.mxu0 0.0
    %6577 = vmatpush1.msra.mxu0 0.0
    %6578 = vmatprep.subr.mxu0 0.0
    %6579 = vmatpush1.msra.mxu0 0.0
    %6580 = vmatprep.subr.mxu0 0.0
    %6581 = vmatpush1.msra.mxu0 0.0
    %6582 = vmatprep.subr.mxu0 0.0
    %6583 = vmatpush1.msra.mxu0 0.0
    %6584 = vmatprep.subr.mxu0 0.0
    %6585 = vmatpush1.msra.mxu0 0.0
    %6586 = vmatprep.subr.mxu0 0.0
    %6587 = vmatpush1.msra.mxu0 0.0
    %6588 = vmatprep.subr.mxu0 0.0
    %6589 = vmatpush1.msra.mxu0 0.0
    %6590 = vmatprep.subr.mxu0 0.0
    %6591 = vmatpush1.msra.mxu0 0.0
    %6592 = vmatprep.mubr.f32.mxu0 0.0
    %6593 = vmatmul.mubr.f32.gmra.mrb[0].mxu0 %v6523
    %v6594 = vpop.f32.mrb[0].mxu0
    %v6595 = vadd.f32 0.0, %v6594
    %v6596 = vpop.f32.mrb[0].mxu0
    %6597 = vmatprep.mubr.f32.mxu0 0.0
    %6598 = vmatmul.mubr.f32.gmra.mrb[0].mxu0 %v6526
    %v6599 = vpop.f32.mrb[0].mxu0
    %v6600 = vadd.f32 0.0, %v6599
    %v6601 = vpop.f32.mrb[0].mxu0
    %6602 = vdwg.mxu0
    %6603 = vrot.lane.b32.xlu0 %v6189, 112
    %v6604 = vpop.permute.xlu0 %6603
    %6605 = vrot.lane.b32.xlu0 %v6194, 112
    %v6606 = vpop.permute.xlu0 %6605
    %6607 = vrot.lane.b32.xlu0 %v6189, 80
    %v6608 = vpop.permute.xlu0 %6607
    %6609 = vrot.lane.b32.xlu0 %v6194, 80
    %v6610 = vpop.permute.xlu0 %6609
    %v6611 = vsel %vm1069, %v6604, 0
    %v6613 = vsel %vm1069, %v6606, 0
    %v6615 = vsel %vm1069, %v6608, 0
    %v6617 = vsel %vm1069, %v6610, 0
    %6619 = vmatprep.subr.mxu0 0.0
    %6620 = vmatpush1.xpose.msra.mxu0 %v6615
    %6621 = vmatprep.subr.mxu0 0.0
    %6622 = vmatpush1.xpose.msra.mxu0 %v6617
    %6623 = vmatprep.subr.mxu0 0.0
    %6624 = vmatpush1.xpose.msra.mxu0 0.0
    %6625 = vmatprep.subr.mxu0 0.0
    %6626 = vmatpush1.xpose.msra.mxu0 0.0
    %6627 = vmatprep.subr.mxu0 0.0
    %6628 = vmatpush1.xpose.msra.mxu0 0.0
    %6629 = vmatprep.subr.mxu0 0.0
    %6630 = vmatpush1.xpose.msra.mxu0 0.0
    %6631 = vmatprep.subr.mxu0 0.0
    %6632 = vmatpush1.xpose.msra.mxu0 0.0
    %6633 = vmatprep.subr.mxu0 0.0
    %6634 = vmatpush1.xpose.msra.mxu0 0.0
    %6635 = vmatprep.subr.mxu0 0.0
    %6636 = vmatpush1.xpose.msra.mxu0 0.0
    %6637 = vmatprep.subr.mxu0 0.0
    %6638 = vmatpush1.xpose.msra.mxu0 0.0
    %6639 = vmatprep.subr.mxu0 0.0
    %6640 = vmatpush1.xpose.msra.mxu0 0.0
    %6641 = vmatprep.subr.mxu0 0.0
    %6642 = vmatpush1.xpose.msra.mxu0 0.0
    %6643 = vmatprep.subr.mxu0 0.0
    %6644 = vmatpush1.xpose.msra.mxu0 0.0
    %6645 = vmatprep.subr.mxu0 0.0
    %6646 = vmatpush1.xpose.msra.mxu0 0.0
    %6647 = vmatprep.subr.mxu0 0.0
    %6648 = vmatpush1.xpose.msra.mxu0 0.0
    %6649 = vmatprep.subr.mxu0 0.0
    %6650 = vmatpush1.xpose.msra.mxu0 0.0
    %6651 = vmatprep.subr.mxu0 0.0
    %6652 = vmatpush1.xpose.msra.mxu0 0.0
    %6653 = vmatprep.subr.mxu0 0.0
    %6654 = vmatpush1.xpose.msra.mxu0 0.0
    %6655 = vmatprep.subr.mxu0 0.0
    %6656 = vmatpush1.xpose.msra.mxu0 0.0
    %6657 = vmatprep.subr.mxu0 0.0
    %6658 = vmatpush1.xpose.msra.mxu0 0.0
    %6659 = vmatprep.subr.mxu0 0.0
    %6660 = vmatpush1.xpose.msra.mxu0 0.0
    %6661 = vmatprep.subr.mxu0 0.0
    %6662 = vmatpush1.xpose.msra.mxu0 0.0
    %6663 = vmatprep.subr.mxu0 0.0
    %6664 = vmatpush1.xpose.msra.mxu0 0.0
    %6665 = vmatprep.subr.mxu0 0.0
    %6666 = vmatpush1.xpose.msra.mxu0 0.0
    %6667 = vmatprep.subr.mxu0 0.0
    %6668 = vmatpush1.xpose.msra.mxu0 0.0
    %6669 = vmatprep.subr.mxu0 0.0
    %6670 = vmatpush1.xpose.msra.mxu0 0.0
    %6671 = vmatprep.subr.mxu0 0.0
    %6672 = vmatpush1.xpose.msra.mxu0 0.0
    %6673 = vmatprep.subr.mxu0 0.0
    %6674 = vmatpush1.xpose.msra.mxu0 0.0
    %6675 = vmatprep.subr.mxu0 0.0
    %6676 = vmatpush1.xpose.msra.mxu0 0.0
    %6677 = vmatprep.subr.mxu0 0.0
    %6678 = vmatpush1.xpose.msra.mxu0 0.0
    %6679 = vmatprep.subr.mxu0 0.0
    %6680 = vmatpush1.xpose.msra.mxu0 0.0
    %6681 = vmatprep.subr.mxu0 0.0
    %6682 = vmatpush1.xpose.msra.mxu0 0.0
    %6683 = vmatprep.mubr.f32.mxu0 0.0
    %6684 = vmatmul.mubr.f32.gmra.mrb[0].mxu0 %v6611
    %v6685 = vpop.f32.mrb[0].mxu0
    %v6686 = vadd.f32 0.0, %v6685
    %v6687 = vpop.f32.mrb[0].mxu0
    %6688 = vmatprep.mubr.f32.mxu0 0.0
    %6689 = vmatmul.mubr.f32.gmra.mrb[0].mxu0 %v6613
    %v6690 = vpop.f32.mrb[0].mxu0
    %v6691 = vadd.f32 0.0, %v6690
    %v6692 = vpop.f32.mrb[0].mxu0
    %6693 = vdwg.mxu0
    %v6694 = vmul.f32 %v6686, 0.35355338
    %v6695 = vmul.f32 %v6691, 0.35355338
    %v6696 = vadd.f32 %v6694, %v873
    %v6697 = vadd.f32 %v6695, %v874
    %v6698 = vsel %vm891, %v6696, -inf
    %6699 = vmax.xlane.f32.xlu0 %v6698
    %v6700 = vpop.xlane.xlu0 %6699
    %v6701 = vsel %vm891, %v6697, -inf
    %6702 = vmax.xlane.f32.xlu0 %v6701
    %v6703 = vpop.xlane.xlu0 %6702
    %v6704 = vsub.f32 %v6696, %v6700
    %v6705 = vsub.f32 %v6697, %v6703
    %v6706 = vmul.f32 %v6704, 1.442695
    %v6707 = vpow.pop %v6706
    %v6708 = vmul.f32 %v6705, 1.442695
    %v6709 = vpow.pop %v6708
    %v6710 = vsel %vm891, %v6707, 0.0
    %6711 = vadd.xlane.f32.xlu0 %v6710
    %v6712 = vpop.xlane.xlu0 %6711
    %v6713 = vsel %vm891, %v6709, 0.0
    %6714 = vadd.xlane.f32.xlu0 %v6713
    %v6715 = vpop.xlane.xlu0 %6714
    %v6716 = vrcp.pop %v6712
    %v6717 = vrcp.pop %v6715
    %v6718 = vmul.f32 %v6707, %v6716
    %v6719 = vmul.f32 %v6709, %v6717
    %6720 = vrot.lane.b32.xlu0 %v6189, 48
    %v6721 = vpop.permute.xlu0 %6720
    %6722 = vrot.lane.b32.xlu0 %v6194, 48
    %v6723 = vpop.permute.xlu0 %6722
    %v6727 = vsel %vm891, %v6718, 0
    %v6730 = vsel %vm891, %v6719, 0
    %6732 = vmatprep.subr.mxu0 0.0
    %6733 = vmatpush1.msra.mxu0 %v6721
    %6734 = vmatprep.subr.mxu0 0.0
    %6735 = vmatpush1.msra.mxu0 %v6723
    %6736 = vmatprep.subr.mxu0 0.0
    %6737 = vmatpush1.msra.mxu0 0.0
    %6738 = vmatprep.subr.mxu0 0.0
    %6739 = vmatpush1.msra.mxu0 0.0
    %6740 = vmatprep.subr.mxu0 0.0
    %6741 = vmatpush1.msra.mxu0 0.0
    %6742 = vmatprep.subr.mxu0 0.0
    %6743 = vmatpush1.msra.mxu0 0.0
    %6744 = vmatprep.subr.mxu0 0.0
    %6745 = vmatpush1.msra.mxu0 0.0
    %6746 = vmatprep.subr.mxu0 0.0
    %6747 = vmatpush1.msra.mxu0 0.0
    %6748 = vmatprep.subr.mxu0 0.0
    %6749 = vmatpush1.msra.mxu0 0.0
    %6750 = vmatprep.subr.mxu0 0.0
    %6751 = vmatpush1.msra.mxu0 0.0
    %6752 = vmatprep.subr.mxu0 0.0
    %6753 = vmatpush1.msra.mxu0 0.0
    %6754 = vmatprep.subr.mxu0 0.0
    %6755 = vmatpush1.msra.mxu0 0.0
    %6756 = vmatprep.subr.mxu0 0.0
    %6757 = vmatpush1.msra.mxu0 0.0
    %6758 = vmatprep.subr.mxu0 0.0
    %6759 = vmatpush1.msra.mxu0 0.0
    %6760 = vmatprep.subr.mxu0 0.0
    %6761 = vmatpush1.msra.mxu0 0.0
    %6762 = vmatprep.subr.mxu0 0.0
    %6763 = vmatpush1.msra.mxu0 0.0
    %6764 = vmatprep.subr.mxu0 0.0
    %6765 = vmatpush1.msra.mxu0 0.0
    %6766 = vmatprep.subr.mxu0 0.0
    %6767 = vmatpush1.msra.mxu0 0.0
    %6768 = vmatprep.subr.mxu0 0.0
    %6769 = vmatpush1.msra.mxu0 0.0
    %6770 = vmatprep.subr.mxu0 0.0
    %6771 = vmatpush1.msra.mxu0 0.0
    %6772 = vmatprep.subr.mxu0 0.0
    %6773 = vmatpush1.msra.mxu0 0.0
    %6774 = vmatprep.subr.mxu0 0.0
    %6775 = vmatpush1.msra.mxu0 0.0
    %6776 = vmatprep.subr.mxu0 0.0
    %6777 = vmatpush1.msra.mxu0 0.0
    %6778 = vmatprep.subr.mxu0 0.0
    %6779 = vmatpush1.msra.mxu0 0.0
    %6780 = vmatprep.subr.mxu0 0.0
    %6781 = vmatpush1.msra.mxu0 0.0
    %6782 = vmatprep.subr.mxu0 0.0
    %6783 = vmatpush1.msra.mxu0 0.0
    %6784 = vmatprep.subr.mxu0 0.0
    %6785 = vmatpush1.msra.mxu0 0.0
    %6786 = vmatprep.subr.mxu0 0.0
    %6787 = vmatpush1.msra.mxu0 0.0
    %6788 = vmatprep.subr.mxu0 0.0
    %6789 = vmatpush1.msra.mxu0 0.0
    %6790 = vmatprep.subr.mxu0 0.0
    %6791 = vmatpush1.msra.mxu0 0.0
    %6792 = vmatprep.subr.mxu0 0.0
    %6793 = vmatpush1.msra.mxu0 0.0
    %6794 = vmatprep.subr.mxu0 0.0
    %6795 = vmatpush1.msra.mxu0 0.0
    %6796 = vmatprep.mubr.f32.mxu0 0.0
    %6797 = vmatmul.mubr.f32.gmra.mrb[0].mxu0 %v6727
    %v6798 = vpop.f32.mrb[0].mxu0
    %v6799 = vadd.f32 0.0, %v6798
    %v6800 = vpop.f32.mrb[0].mxu0
    %6801 = vmatprep.mubr.f32.mxu0 0.0
    %6802 = vmatmul.mubr.f32.gmra.mrb[0].mxu0 %v6730
    %v6803 = vpop.f32.mrb[0].mxu0
    %v6804 = vadd.f32 0.0, %v6803
    %v6805 = vpop.f32.mrb[0].mxu0
    %6806 = vdwg.mxu0
    %6807 = vrot.lane.b32.xlu0 %v6189, 104
    %v6808 = vpop.permute.xlu0 %6807
    %6809 = vrot.lane.b32.xlu0 %v6194, 104
    %v6810 = vpop.permute.xlu0 %6809
    %6811 = vrot.lane.b32.xlu0 %v6189, 72
    %v6812 = vpop.permute.xlu0 %6811
    %6813 = vrot.lane.b32.xlu0 %v6194, 72
    %v6814 = vpop.permute.xlu0 %6813
    %v6815 = vsel %vm1069, %v6808, 0
    %v6817 = vsel %vm1069, %v6810, 0
    %v6819 = vsel %vm1069, %v6812, 0
    %v6821 = vsel %vm1069, %v6814, 0
    %6823 = vmatprep.subr.mxu0 0.0
    %6824 = vmatpush1.xpose.msra.mxu0 %v6819
    %6825 = vmatprep.subr.mxu0 0.0
    %6826 = vmatpush1.xpose.msra.mxu0 %v6821
    %6827 = vmatprep.subr.mxu0 0.0
    %6828 = vmatpush1.xpose.msra.mxu0 0.0
    %6829 = vmatprep.subr.mxu0 0.0
    %6830 = vmatpush1.xpose.msra.mxu0 0.0
    %6831 = vmatprep.subr.mxu0 0.0
    %6832 = vmatpush1.xpose.msra.mxu0 0.0
    %6833 = vmatprep.subr.mxu0 0.0
    %6834 = vmatpush1.xpose.msra.mxu0 0.0
    %6835 = vmatprep.subr.mxu0 0.0
    %6836 = vmatpush1.xpose.msra.mxu0 0.0
    %6837 = vmatprep.subr.mxu0 0.0
    %6838 = vmatpush1.xpose.msra.mxu0 0.0
    %6839 = vmatprep.subr.mxu0 0.0
    %6840 = vmatpush1.xpose.msra.mxu0 0.0
    %6841 = vmatprep.subr.mxu0 0.0
    %6842 = vmatpush1.xpose.msra.mxu0 0.0
    %6843 = vmatprep.subr.mxu0 0.0
    %6844 = vmatpush1.xpose.msra.mxu0 0.0
    %6845 = vmatprep.subr.mxu0 0.0
    %6846 = vmatpush1.xpose.msra.mxu0 0.0
    %6847 = vmatprep.subr.mxu0 0.0
    %6848 = vmatpush1.xpose.msra.mxu0 0.0
    %6849 = vmatprep.subr.mxu0 0.0
    %6850 = vmatpush1.xpose.msra.mxu0 0.0
    %6851 = vmatprep.subr.mxu0 0.0
    %6852 = vmatpush1.xpose.msra.mxu0 0.0
    %6853 = vmatprep.subr.mxu0 0.0
    %6854 = vmatpush1.xpose.msra.mxu0 0.0
    %6855 = vmatprep.subr.mxu0 0.0
    %6856 = vmatpush1.xpose.msra.mxu0 0.0
    %6857 = vmatprep.subr.mxu0 0.0
    %6858 = vmatpush1.xpose.msra.mxu0 0.0
    %6859 = vmatprep.subr.mxu0 0.0
    %6860 = vmatpush1.xpose.msra.mxu0 0.0
    %6861 = vmatprep.subr.mxu0 0.0
    %6862 = vmatpush1.xpose.msra.mxu0 0.0
    %6863 = vmatprep.subr.mxu0 0.0
    %6864 = vmatpush1.xpose.msra.mxu0 0.0
    %6865 = vmatprep.subr.mxu0 0.0
    %6866 = vmatpush1.xpose.msra.mxu0 0.0
    %6867 = vmatprep.subr.mxu0 0.0
    %6868 = vmatpush1.xpose.msra.mxu0 0.0
    %6869 = vmatprep.subr.mxu0 0.0
    %6870 = vmatpush1.xpose.msra.mxu0 0.0
    %6871 = vmatprep.subr.mxu0 0.0
    %6872 = vmatpush1.xpose.msra.mxu0 0.0
    %6873 = vmatprep.subr.mxu0 0.0
    %6874 = vmatpush1.xpose.msra.mxu0 0.0
    %6875 = vmatprep.subr.mxu0 0.0
    %6876 = vmatpush1.xpose.msra.mxu0 0.0
    %6877 = vmatprep.subr.mxu0 0.0
    %6878 = vmatpush1.xpose.msra.mxu0 0.0
    %6879 = vmatprep.subr.mxu0 0.0
    %6880 = vmatpush1.xpose.msra.mxu0 0.0
    %6881 = vmatprep.subr.mxu0 0.0
    %6882 = vmatpush1.xpose.msra.mxu0 0.0
    %6883 = vmatprep.subr.mxu0 0.0
    %6884 = vmatpush1.xpose.msra.mxu0 0.0
    %6885 = vmatprep.subr.mxu0 0.0
    %6886 = vmatpush1.xpose.msra.mxu0 0.0
    %6887 = vmatprep.mubr.f32.mxu0 0.0
    %6888 = vmatmul.mubr.f32.gmra.mrb[0].mxu0 %v6815
    %v6889 = vpop.f32.mrb[0].mxu0
    %v6890 = vadd.f32 0.0, %v6889
    %v6891 = vpop.f32.mrb[0].mxu0
    %6892 = vmatprep.mubr.f32.mxu0 0.0
    %6893 = vmatmul.mubr.f32.gmra.mrb[0].mxu0 %v6817
    %v6894 = vpop.f32.mrb[0].mxu0
    %v6895 = vadd.f32 0.0, %v6894
    %v6896 = vpop.f32.mrb[0].mxu0
    %6897 = vdwg.mxu0
    %v6898 = vmul.f32 %v6890, 0.35355338
    %v6899 = vmul.f32 %v6895, 0.35355338
    %v6900 = vadd.f32 %v6898, %v873
    %v6901 = vadd.f32 %v6899, %v874
    %v6902 = vsel %vm891, %v6900, -inf
    %6903 = vmax.xlane.f32.xlu0 %v6902
    %v6904 = vpop.xlane.xlu0 %6903
    %v6905 = vsel %vm891, %v6901, -inf
    %6906 = vmax.xlane.f32.xlu0 %v6905
    %v6907 = vpop.xlane.xlu0 %6906
    %v6908 = vsub.f32 %v6900, %v6904
    %v6909 = vsub.f32 %v6901, %v6907
    %v6910 = vmul.f32 %v6908, 1.442695
    %v6911 = vpow.pop %v6910
    %v6912 = vmul.f32 %v6909, 1.442695
    %v6913 = vpow.pop %v6912
    %v6914 = vsel %vm891, %v6911, 0.0
    %6915 = vadd.xlane.f32.xlu0 %v6914
    %v6916 = vpop.xlane.xlu0 %6915
    %v6917 = vsel %vm891, %v6913, 0.0
    %6918 = vadd.xlane.f32.xlu0 %v6917
    %v6919 = vpop.xlane.xlu0 %6918
    %v6920 = vrcp.pop %v6916
    %v6921 = vrcp.pop %v6919
    %v6922 = vmul.f32 %v6911, %v6920
    %v6923 = vmul.f32 %v6913, %v6921
    %6924 = vrot.lane.b32.xlu0 %v6189, 40
    %v6925 = vpop.permute.xlu0 %6924
    %6926 = vrot.lane.b32.xlu0 %v6194, 40
    %v6927 = vpop.permute.xlu0 %6926
    %v6931 = vsel %vm891, %v6922, 0
    %v6934 = vsel %vm891, %v6923, 0
    %6936 = vmatprep.subr.mxu0 0.0
    %6937 = vmatpush1.msra.mxu0 %v6925
    %6938 = vmatprep.subr.mxu0 0.0
    %6939 = vmatpush1.msra.mxu0 %v6927
    %6940 = vmatprep.subr.mxu0 0.0
    %6941 = vmatpush1.msra.mxu0 0.0
    %6942 = vmatprep.subr.mxu0 0.0
    %6943 = vmatpush1.msra.mxu0 0.0
    %6944 = vmatprep.subr.mxu0 0.0
    %6945 = vmatpush1.msra.mxu0 0.0
    %6946 = vmatprep.subr.mxu0 0.0
    %6947 = vmatpush1.msra.mxu0 0.0
    %6948 = vmatprep.subr.mxu0 0.0
    %6949 = vmatpush1.msra.mxu0 0.0
    %6950 = vmatprep.subr.mxu0 0.0
    %6951 = vmatpush1.msra.mxu0 0.0
    %6952 = vmatprep.subr.mxu0 0.0
    %6953 = vmatpush1.msra.mxu0 0.0
    %6954 = vmatprep.subr.mxu0 0.0
    %6955 = vmatpush1.msra.mxu0 0.0
    %6956 = vmatprep.subr.mxu0 0.0
    %6957 = vmatpush1.msra.mxu0 0.0
    %6958 = vmatprep.subr.mxu0 0.0
    %6959 = vmatpush1.msra.mxu0 0.0
    %6960 = vmatprep.subr.mxu0 0.0
    %6961 = vmatpush1.msra.mxu0 0.0
    %6962 = vmatprep.subr.mxu0 0.0
    %6963 = vmatpush1.msra.mxu0 0.0
    %6964 = vmatprep.subr.mxu0 0.0
    %6965 = vmatpush1.msra.mxu0 0.0
    %6966 = vmatprep.subr.mxu0 0.0
    %6967 = vmatpush1.msra.mxu0 0.0
    %6968 = vmatprep.subr.mxu0 0.0
    %6969 = vmatpush1.msra.mxu0 0.0
    %6970 = vmatprep.subr.mxu0 0.0
    %6971 = vmatpush1.msra.mxu0 0.0
    %6972 = vmatprep.subr.mxu0 0.0
    %6973 = vmatpush1.msra.mxu0 0.0
    %6974 = vmatprep.subr.mxu0 0.0
    %6975 = vmatpush1.msra.mxu0 0.0
    %6976 = vmatprep.subr.mxu0 0.0
    %6977 = vmatpush1.msra.mxu0 0.0
    %6978 = vmatprep.subr.mxu0 0.0
    %6979 = vmatpush1.msra.mxu0 0.0
    %6980 = vmatprep.subr.mxu0 0.0
    %6981 = vmatpush1.msra.mxu0 0.0
    %6982 = vmatprep.subr.mxu0 0.0
    %6983 = vmatpush1.msra.mxu0 0.0
    %6984 = vmatprep.subr.mxu0 0.0
    %6985 = vmatpush1.msra.mxu0 0.0
    %6986 = vmatprep.subr.mxu0 0.0
    %6987 = vmatpush1.msra.mxu0 0.0
    %6988 = vmatprep.subr.mxu0 0.0
    %6989 = vmatpush1.msra.mxu0 0.0
    %6990 = vmatprep.subr.mxu0 0.0
    %6991 = vmatpush1.msra.mxu0 0.0
    %6992 = vmatprep.subr.mxu0 0.0
    %6993 = vmatpush1.msra.mxu0 0.0
    %6994 = vmatprep.subr.mxu0 0.0
    %6995 = vmatpush1.msra.mxu0 0.0
    %6996 = vmatprep.subr.mxu0 0.0
    %6997 = vmatpush1.msra.mxu0 0.0
    %6998 = vmatprep.subr.mxu0 0.0
    %6999 = vmatpush1.msra.mxu0 0.0
    %7000 = vmatprep.mubr.f32.mxu0 0.0
    %7001 = vmatmul.mubr.f32.gmra.mrb[0].mxu0 %v6931
    %v7002 = vpop.f32.mrb[0].mxu0
    %v7003 = vadd.f32 0.0, %v7002
    %v7004 = vpop.f32.mrb[0].mxu0
    %7005 = vmatprep.mubr.f32.mxu0 0.0
    %7006 = vmatmul.mubr.f32.gmra.mrb[0].mxu0 %v6934
    %v7007 = vpop.f32.mrb[0].mxu0
    %v7008 = vadd.f32 0.0, %v7007
    %v7009 = vpop.f32.mrb[0].mxu0
    %7010 = vdwg.mxu0
    %7013 = vrot.lane.b32.xlu0 %v6595, 8
    %v7014 = vpop.permute.xlu0 %7013
    %7015 = vrot.lane.b32.xlu0 %v6600, 8
    %v7016 = vpop.permute.xlu0 %7015
    %7021 = vrot.lane.b32.xlu0 %v6799, 16
    %v7022 = vpop.permute.xlu0 %7021
    %7023 = vrot.lane.b32.xlu0 %v6804, 16
    %v7024 = vpop.permute.xlu0 %7023
    %7029 = vrot.lane.b32.xlu0 %v7003, 24
    %v7030 = vpop.permute.xlu0 %7029
    %7031 = vrot.lane.b32.xlu0 %v7008, 24
    %v7032 = vpop.permute.xlu0 %7031
    %v7035 = vsel %vm1069, %v6391, %v7014
    %v7036 = vsel %vm1069, %v6396, %v7016
    %v7037 = vsel %vm891, %v7035, %v7022
    %v7038 = vsel %vm891, %v7036, %v7024
    %v7039 = vsel %vm1906, %v7037, %v7030
    %v7040 = vsel %vm1906, %v7038, %v7032
    %v7042 = vlaneseq
    %v7043 = vshrl.u32 %v7042, 7
    %v7044 = vsub.s32 0, %v7043
    %v7045 = vrot.slane %v796, %v7044
    %v7048 = vsel %vm981, %v7039, 0
    %v7051 = vsel %vm981, %v7040, 0
    %7053 = vmatprep.subr.mxu0 0.0
    %7054 = vmatpush1.msra.mxu0 %v798
    %7055 = vmatprep.subr.mxu0 0.0
    %7056 = vmatpush1.msra.mxu0 %v799
    %7057 = vmatprep.subr.mxu0 0.0
    %7058 = vmatpush1.msra.mxu0 %v800
    %7059 = vmatprep.subr.mxu0 0.0
    %7060 = vmatpush1.msra.mxu0 %v801
    %7061 = vmatprep.subr.mxu0 0.0
    %7062 = vmatpush1.msra.mxu0 0.0
    %7063 = vmatprep.subr.mxu0 0.0
    %7064 = vmatpush1.msra.mxu0 0.0
    %7065 = vmatprep.subr.mxu0 0.0
    %7066 = vmatpush1.msra.mxu0 0.0
    %7067 = vmatprep.subr.mxu0 0.0
    %7068 = vmatpush1.msra.mxu0 0.0
    %7069 = vmatprep.subr.mxu0 0.0
    %7070 = vmatpush1.msra.mxu0 0.0
    %7071 = vmatprep.subr.mxu0 0.0
    %7072 = vmatpush1.msra.mxu0 0.0
    %7073 = vmatprep.subr.mxu0 0.0
    %7074 = vmatpush1.msra.mxu0 0.0
    %7075 = vmatprep.subr.mxu0 0.0
    %7076 = vmatpush1.msra.mxu0 0.0
    %7077 = vmatprep.subr.mxu0 0.0
    %7078 = vmatpush1.msra.mxu0 0.0
    %7079 = vmatprep.subr.mxu0 0.0
    %7080 = vmatpush1.msra.mxu0 0.0
    %7081 = vmatprep.subr.mxu0 0.0
    %7082 = vmatpush1.msra.mxu0 0.0
    %7083 = vmatprep.subr.mxu0 0.0
    %7084 = vmatpush1.msra.mxu0 0.0
    %7085 = vmatprep.subr.mxu0 0.0
    %7086 = vmatpush1.msra.mxu0 0.0
    %7087 = vmatprep.subr.mxu0 0.0
    %7088 = vmatpush1.msra.mxu0 0.0
    %7089 = vmatprep.subr.mxu0 0.0
    %7090 = vmatpush1.msra.mxu0 0.0
    %7091 = vmatprep.subr.mxu0 0.0
    %7092 = vmatpush1.msra.mxu0 0.0
    %7093 = vmatprep.subr.mxu0 0.0
    %7094 = vmatpush1.msra.mxu0 0.0
    %7095 = vmatprep.subr.mxu0 0.0
    %7096 = vmatpush1.msra.mxu0 0.0
    %7097 = vmatprep.subr.mxu0 0.0
    %7098 = vmatpush1.msra.mxu0 0.0
    %7099 = vmatprep.subr.mxu0 0.0
    %7100 = vmatpush1.msra.mxu0 0.0
    %7101 = vmatprep.subr.mxu0 0.0
    %7102 = vmatpush1.msra.mxu0 0.0
    %7103 = vmatprep.subr.mxu0 0.0
    %7104 = vmatpush1.msra.mxu0 0.0
    %7105 = vmatprep.subr.mxu0 0.0
    %7106 = vmatpush1.msra.mxu0 0.0
    %7107 = vmatprep.subr.mxu0 0.0
    %7108 = vmatpush1.msra.mxu0 0.0
    %7109 = vmatprep.subr.mxu0 0.0
    %7110 = vmatpush1.msra.mxu0 0.0
    %7111 = vmatprep.subr.mxu0 0.0
    %7112 = vmatpush1.msra.mxu0 0.0
    %7113 = vmatprep.subr.mxu0 0.0
    %7114 = vmatpush1.msra.mxu0 0.0
    %7115 = vmatprep.subr.mxu0 0.0
    %7116 = vmatpush1.msra.mxu0 0.0
    %7117 = vmatprep.mubr.f32.mxu0 0.0
    %7118 = vmatmul.mubr.f32.gmra.mrb[0].mxu0 %v7048
    %v7119 = vpop.f32.mrb[0].mxu0
    %v7120 = vadd.f32 %v7045, %v7119
    %v7121 = vpop.f32.mrb[0].mxu0
    %7122 = vmatprep.mubr.f32.mxu0 0.0
    %7123 = vmatmul.mubr.f32.gmra.mrb[0].mxu0 %v7051
    %v7124 = vpop.f32.mrb[0].mxu0
    %v7125 = vadd.f32 %v7045, %v7124
    %v7126 = vpop.f32.mrb[0].mxu0
    %7127 = vdwg.mxu0
    %v7128 = vadd.f32 %v6108, %v7120
    %v7129 = vadd.f32 %v6109, %v7125
    %v7130 = vsel %vm981, %v7128, 0.0
    %7131 = vadd.xlane.f32.xlu0 %v7130
    %v7132 = vpop.xlane.xlu0 %7131
    %v7133 = vsel %vm981, %v7129, 0.0
    %7134 = vadd.xlane.f32.xlu0 %v7133
    %v7135 = vpop.xlane.xlu0 %7134
    %v7136 = vmul.f32 %v7132, %v2004
    %v7137 = vmul.f32 %v7135, %v2004
    %v7138 = vsub.f32 %v7128, %v7136
    %v7139 = vsub.f32 %v7129, %v7137
    %v7140 = vmul.f32 %v7138, %v7138
    %v7141 = vmul.f32 %v7139, %v7139
    %v7142 = vsel %vm981, %v7140, 0.0
    %7143 = vadd.xlane.f32.xlu0 %v7142
    %v7144 = vpop.xlane.xlu0 %7143
    %v7145 = vsel %vm981, %v7141, 0.0
    %7146 = vadd.xlane.f32.xlu0 %v7145
    %v7147 = vpop.xlane.xlu0 %7146
    %v7148 = vmul.f32 %v7144, %v2004
    %v7149 = vmul.f32 %v7147, %v2004
    %v7150 = vadd.f32 %v7148, 1e-05
    %v7151 = vadd.f32 %v7149, 1e-05
    %v7152 = vrsqrt.pop %v7150
    %v7153 = vrsqrt.pop %v7151
    %v7154 = vmul.f32 %v7138, %v7152
    %v7155 = vmul.f32 %v7139, %v7153
    %v7157 = vlaneseq
    %v7158 = vshrl.u32 %v7157, 7
    %v7159 = vsub.s32 0, %v7158
    %v7160 = vrot.slane %v791, %v7159
    %v7162 = vmul.f32 %v7154, %v7160
    %v7163 = vmul.f32 %v7155, %v7160
    %v7165 = vlaneseq
    %v7166 = vshrl.u32 %v7165, 7
    %v7167 = vsub.s32 0, %v7166
    %v7168 = vrot.slane %v790, %v7167
    %v7170 = vadd.f32 %v7162, %v7168
    %v7171 = vadd.f32 %v7163, %v7168
    %v7173 = vlaneseq
    %v7174 = vshrl.u32 %v7173, 7
    %v7175 = vsub.s32 0, %v7174
    %v7176 = vrot.slane %v763, %v7175
    %v7179 = vsel %vm981, %v7170, 0
    %v7182 = vsel %vm981, %v7171, 0
    %7184 = vmatprep.subr.mxu0 0.0
    %7185 = vmatpush1.msra.mxu0 %v772
    %7186 = vmatprep.subr.mxu0 0.0
    %7187 = vmatpush1.msra.mxu0 %v773
    %7188 = vmatprep.subr.mxu0 0.0
    %7189 = vmatpush1.msra.mxu0 %v774
    %7190 = vmatprep.subr.mxu0 0.0
    %7191 = vmatpush1.msra.mxu0 %v775
    %7192 = vmatprep.subr.mxu0 0.0
    %7193 = vmatpush1.msra.mxu0 0.0
    %7194 = vmatprep.subr.mxu0 0.0
    %7195 = vmatpush1.msra.mxu0 0.0
    %7196 = vmatprep.subr.mxu0 0.0
    %7197 = vmatpush1.msra.mxu0 0.0
    %7198 = vmatprep.subr.mxu0 0.0
    %7199 = vmatpush1.msra.mxu0 0.0
    %7200 = vmatprep.subr.mxu0 0.0
    %7201 = vmatpush1.msra.mxu0 0.0
    %7202 = vmatprep.subr.mxu0 0.0
    %7203 = vmatpush1.msra.mxu0 0.0
    %7204 = vmatprep.subr.mxu0 0.0
    %7205 = vmatpush1.msra.mxu0 0.0
    %7206 = vmatprep.subr.mxu0 0.0
    %7207 = vmatpush1.msra.mxu0 0.0
    %7208 = vmatprep.subr.mxu0 0.0
    %7209 = vmatpush1.msra.mxu0 0.0
    %7210 = vmatprep.subr.mxu0 0.0
    %7211 = vmatpush1.msra.mxu0 0.0
    %7212 = vmatprep.subr.mxu0 0.0
    %7213 = vmatpush1.msra.mxu0 0.0
    %7214 = vmatprep.subr.mxu0 0.0
    %7215 = vmatpush1.msra.mxu0 0.0
    %7216 = vmatprep.subr.mxu0 0.0
    %7217 = vmatpush1.msra.mxu0 0.0
    %7218 = vmatprep.subr.mxu0 0.0
    %7219 = vmatpush1.msra.mxu0 0.0
    %7220 = vmatprep.subr.mxu0 0.0
    %7221 = vmatpush1.msra.mxu0 0.0
    %7222 = vmatprep.subr.mxu0 0.0
    %7223 = vmatpush1.msra.mxu0 0.0
    %7224 = vmatprep.subr.mxu0 0.0
    %7225 = vmatpush1.msra.mxu0 0.0
    %7226 = vmatprep.subr.mxu0 0.0
    %7227 = vmatpush1.msra.mxu0 0.0
    %7228 = vmatprep.subr.mxu0 0.0
    %7229 = vmatpush1.msra.mxu0 0.0
    %7230 = vmatprep.subr.mxu0 0.0
    %7231 = vmatpush1.msra.mxu0 0.0
    %7232 = vmatprep.subr.mxu0 0.0
    %7233 = vmatpush1.msra.mxu0 0.0
    %7234 = vmatprep.subr.mxu0 0.0
    %7235 = vmatpush1.msra.mxu0 0.0
    %7236 = vmatprep.subr.mxu0 0.0
    %7237 = vmatpush1.msra.mxu0 0.0
    %7238 = vmatprep.subr.mxu0 0.0
    %7239 = vmatpush1.msra.mxu0 0.0
    %7240 = vmatprep.subr.mxu0 0.0
    %7241 = vmatpush1.msra.mxu0 0.0
    %7242 = vmatprep.subr.mxu0 0.0
    %7243 = vmatpush1.msra.mxu0 0.0
    %7244 = vmatprep.subr.mxu0 0.0
    %7245 = vmatpush1.msra.mxu0 0.0
    %7246 = vmatprep.subr.mxu0 0.0
    %7247 = vmatpush1.msra.mxu0 0.0
    %7248 = vmatprep.mubr.f32.mxu0 0.0
    %7249 = vmatmul.mubr.f32.gmra.mrb[0].mxu0 %v7179
    %v7250 = vpop.f32.mrb[0].mxu0
    %v7251 = vadd.f32 %v7176, %v7250
    %v7252 = vpop.f32.mrb[0].mxu0
    %7253 = vmatprep.mubr.f32.mxu0 0.0
    %7254 = vmatmul.mubr.f32.gmra.mrb[0].mxu0 %v7182
    %v7255 = vpop.f32.mrb[0].mxu0
    %v7256 = vadd.f32 %v7176, %v7255
    %v7257 = vpop.f32.mrb[0].mxu0
    %7258 = vdwg.mxu0
    %v7260 = vlaneseq
    %v7261 = vshrl.u32 %v7260, 7
    %v7262 = vsub.s32 0, %v7261
    %v7263 = vrot.slane %v761, %v7262
    %7265 = vmatprep.subr.mxu0 0.0
    %7266 = vmatpush1.msra.mxu0 %v764
    %7267 = vmatprep.subr.mxu0 0.0
    %7268 = vmatpush1.msra.mxu0 %v765
    %7269 = vmatprep.subr.mxu0 0.0
    %7270 = vmatpush1.msra.mxu0 %v766
    %7271 = vmatprep.subr.mxu0 0.0
    %7272 = vmatpush1.msra.mxu0 %v767
    %7273 = vmatprep.subr.mxu0 0.0
    %7274 = vmatpush1.msra.mxu0 0.0
    %7275 = vmatprep.subr.mxu0 0.0
    %7276 = vmatpush1.msra.mxu0 0.0
    %7277 = vmatprep.subr.mxu0 0.0
    %7278 = vmatpush1.msra.mxu0 0.0
    %7279 = vmatprep.subr.mxu0 0.0
    %7280 = vmatpush1.msra.mxu0 0.0
    %7281 = vmatprep.subr.mxu0 0.0
    %7282 = vmatpush1.msra.mxu0 0.0
    %7283 = vmatprep.subr.mxu0 0.0
    %7284 = vmatpush1.msra.mxu0 0.0
    %7285 = vmatprep.subr.mxu0 0.0
    %7286 = vmatpush1.msra.mxu0 0.0
    %7287 = vmatprep.subr.mxu0 0.0
    %7288 = vmatpush1.msra.mxu0 0.0
    %7289 = vmatprep.subr.mxu0 0.0
    %7290 = vmatpush1.msra.mxu0 0.0
    %7291 = vmatprep.subr.mxu0 0.0
    %7292 = vmatpush1.msra.mxu0 0.0
    %7293 = vmatprep.subr.mxu0 0.0
    %7294 = vmatpush1.msra.mxu0 0.0
    %7295 = vmatprep.subr.mxu0 0.0
    %7296 = vmatpush1.msra.mxu0 0.0
    %7297 = vmatprep.subr.mxu0 0.0
    %7298 = vmatpush1.msra.mxu0 0.0
    %7299 = vmatprep.subr.mxu0 0.0
    %7300 = vmatpush1.msra.mxu0 0.0
    %7301 = vmatprep.subr.mxu0 0.0
    %7302 = vmatpush1.msra.mxu0 0.0
    %7303 = vmatprep.subr.mxu0 0.0
    %7304 = vmatpush1.msra.mxu0 0.0
    %7305 = vmatprep.subr.mxu0 0.0
    %7306 = vmatpush1.msra.mxu0 0.0
    %7307 = vmatprep.subr.mxu0 0.0
    %7308 = vmatpush1.msra.mxu0 0.0
    %7309 = vmatprep.subr.mxu0 0.0
    %7310 = vmatpush1.msra.mxu0 0.0
    %7311 = vmatprep.subr.mxu0 0.0
    %7312 = vmatpush1.msra.mxu0 0.0
    %7313 = vmatprep.subr.mxu0 0.0
    %7314 = vmatpush1.msra.mxu0 0.0
    %7315 = vmatprep.subr.mxu0 0.0
    %7316 = vmatpush1.msra.mxu0 0.0
    %7317 = vmatprep.subr.mxu0 0.0
    %7318 = vmatpush1.msra.mxu0 0.0
    %7319 = vmatprep.subr.mxu0 0.0
    %7320 = vmatpush1.msra.mxu0 0.0
    %7321 = vmatprep.subr.mxu0 0.0
    %7322 = vmatpush1.msra.mxu0 0.0
    %7323 = vmatprep.subr.mxu0 0.0
    %7324 = vmatpush1.msra.mxu0 0.0
    %7325 = vmatprep.subr.mxu0 0.0
    %7326 = vmatpush1.msra.mxu0 0.0
    %7327 = vmatprep.subr.mxu0 0.0
    %7328 = vmatpush1.msra.mxu0 0.0
    %7329 = vmatprep.mubr.f32.mxu0 0.0
    %7330 = vmatmul.mubr.f32.gmra.mrb[0].mxu0 %v4837
    %v7331 = vpop.f32.mrb[0].mxu0
    %v7332 = vadd.f32 %v7263, %v7331
    %v7333 = vpop.f32.mrb[0].mxu0
    %7334 = vmatprep.mubr.f32.mxu0 0.0
    %7335 = vmatmul.mubr.f32.gmra.mrb[0].mxu0 %v4840
    %v7336 = vpop.f32.mrb[0].mxu0
    %v7337 = vadd.f32 %v7263, %v7336
    %v7338 = vpop.f32.mrb[0].mxu0
    %7339 = vdwg.mxu0
    %v7341 = vsel %vm1069, %v7251, 0
    %v7344 = vsel %vm1069, %v7256, 0
    %v7347 = vsel %vm1069, %v7332, 0
    %v7350 = vsel %vm1069, %v7337, 0
    %7352 = vmatprep.subr.mxu0 0.0
    %7353 = vmatpush1.xpose.msra.mxu0 %v7347
    %7354 = vmatprep.subr.mxu0 0.0
    %7355 = vmatpush1.xpose.msra.mxu0 %v7350
    %7356 = vmatprep.subr.mxu0 0.0
    %7357 = vmatpush1.xpose.msra.mxu0 0.0
    %7358 = vmatprep.subr.mxu0 0.0
    %7359 = vmatpush1.xpose.msra.mxu0 0.0
    %7360 = vmatprep.subr.mxu0 0.0
    %7361 = vmatpush1.xpose.msra.mxu0 0.0
    %7362 = vmatprep.subr.mxu0 0.0
    %7363 = vmatpush1.xpose.msra.mxu0 0.0
    %7364 = vmatprep.subr.mxu0 0.0
    %7365 = vmatpush1.xpose.msra.mxu0 0.0
    %7366 = vmatprep.subr.mxu0 0.0
    %7367 = vmatpush1.xpose.msra.mxu0 0.0
    %7368 = vmatprep.subr.mxu0 0.0
    %7369 = vmatpush1.xpose.msra.mxu0 0.0
    %7370 = vmatprep.subr.mxu0 0.0
    %7371 = vmatpush1.xpose.msra.mxu0 0.0
    %7372 = vmatprep.subr.mxu0 0.0
    %7373 = vmatpush1.xpose.msra.mxu0 0.0
    %7374 = vmatprep.subr.mxu0 0.0
    %7375 = vmatpush1.xpose.msra.mxu0 0.0
    %7376 = vmatprep.subr.mxu0 0.0
    %7377 = vmatpush1.xpose.msra.mxu0 0.0
    %7378 = vmatprep.subr.mxu0 0.0
    %7379 = vmatpush1.xpose.msra.mxu0 0.0
    %7380 = vmatprep.subr.mxu0 0.0
    %7381 = vmatpush1.xpose.msra.mxu0 0.0
    %7382 = vmatprep.subr.mxu0 0.0
    %7383 = vmatpush1.xpose.msra.mxu0 0.0
    %7384 = vmatprep.subr.mxu0 0.0
    %7385 = vmatpush1.xpose.msra.mxu0 0.0
    %7386 = vmatprep.subr.mxu0 0.0
    %7387 = vmatpush1.xpose.msra.mxu0 0.0
    %7388 = vmatprep.subr.mxu0 0.0
    %7389 = vmatpush1.xpose.msra.mxu0 0.0
    %7390 = vmatprep.subr.mxu0 0.0
    %7391 = vmatpush1.xpose.msra.mxu0 0.0
    %7392 = vmatprep.subr.mxu0 0.0
    %7393 = vmatpush1.xpose.msra.mxu0 0.0
    %7394 = vmatprep.subr.mxu0 0.0
    %7395 = vmatpush1.xpose.msra.mxu0 0.0
    %7396 = vmatprep.subr.mxu0 0.0
    %7397 = vmatpush1.xpose.msra.mxu0 0.0
    %7398 = vmatprep.subr.mxu0 0.0
    %7399 = vmatpush1.xpose.msra.mxu0 0.0
    %7400 = vmatprep.subr.mxu0 0.0
    %7401 = vmatpush1.xpose.msra.mxu0 0.0
    %7402 = vmatprep.subr.mxu0 0.0
    %7403 = vmatpush1.xpose.msra.mxu0 0.0
    %7404 = vmatprep.subr.mxu0 0.0
    %7405 = vmatpush1.xpose.msra.mxu0 0.0
    %7406 = vmatprep.subr.mxu0 0.0
    %7407 = vmatpush1.xpose.msra.mxu0 0.0
    %7408 = vmatprep.subr.mxu0 0.0
    %7409 = vmatpush1.xpose.msra.mxu0 0.0
    %7410 = vmatprep.subr.mxu0 0.0
    %7411 = vmatpush1.xpose.msra.mxu0 0.0
    %7412 = vmatprep.subr.mxu0 0.0
    %7413 = vmatpush1.xpose.msra.mxu0 0.0
    %7414 = vmatprep.subr.mxu0 0.0
    %7415 = vmatpush1.xpose.msra.mxu0 0.0
    %7416 = vmatprep.mubr.f32.mxu0 0.0
    %7417 = vmatmul.mubr.f32.gmra.mrb[0].mxu0 %v7341
    %v7418 = vpop.f32.mrb[0].mxu0
    %v7419 = vadd.f32 0.0, %v7418
    %v7420 = vpop.f32.mrb[0].mxu0
    %7421 = vmatprep.mubr.f32.mxu0 0.0
    %7422 = vmatmul.mubr.f32.gmra.mrb[0].mxu0 %v7344
    %v7423 = vpop.f32.mrb[0].mxu0
    %v7424 = vadd.f32 0.0, %v7423
    %v7425 = vpop.f32.mrb[0].mxu0
    %7426 = vdwg.mxu0
    %v7427 = vmul.f32 %v7419, 0.35355338
    %v7428 = vmul.f32 %v7424, 0.35355338
    %v7429 = vadd.f32 %v7427, %v875
    %v7430 = vadd.f32 %v7428, %v876
    %v7431 = vsel %vm891, %v7429, -inf
    %7432 = vmax.xlane.f32.xlu0 %v7431
    %v7433 = vpop.xlane.xlu0 %7432
    %v7434 = vsel %vm891, %v7430, -inf
    %7435 = vmax.xlane.f32.xlu0 %v7434
    %v7436 = vpop.xlane.xlu0 %7435
    %v7437 = vsub.f32 %v7429, %v7433
    %v7438 = vsub.f32 %v7430, %v7436
    %v7439 = vmul.f32 %v7437, 1.442695
    %v7440 = vpow.pop %v7439
    %v7441 = vmul.f32 %v7438, 1.442695
    %v7442 = vpow.pop %v7441
    %v7443 = vsel %vm891, %v7440, 0.0
    %7444 = vadd.xlane.f32.xlu0 %v7443
    %v7445 = vpop.xlane.xlu0 %7444
    %v7446 = vsel %vm891, %v7442, 0.0
    %7447 = vadd.xlane.f32.xlu0 %v7446
    %v7448 = vpop.xlane.xlu0 %7447
    %v7449 = vrcp.pop %v7445
    %v7450 = vrcp.pop %v7448
    %v7451 = vmul.f32 %v7440, %v7449
    %v7452 = vmul.f32 %v7442, %v7450
    %7453 = vrot.lane.b32.xlu0 %v7332, 96
    %v7454 = vpop.permute.xlu0 %7453
    %7455 = vrot.lane.b32.xlu0 %v7337, 96
    %v7456 = vpop.permute.xlu0 %7455
    %v7460 = vsel %vm891, %v7451, 0
    %v7463 = vsel %vm891, %v7452, 0
    %7465 = vmatprep.subr.mxu0 0.0
    %7466 = vmatpush1.msra.mxu0 %v7454
    %7467 = vmatprep.subr.mxu0 0.0
    %7468 = vmatpush1.msra.mxu0 %v7456
    %7469 = vmatprep.subr.mxu0 0.0
    %7470 = vmatpush1.msra.mxu0 0.0
    %7471 = vmatprep.subr.mxu0 0.0
    %7472 = vmatpush1.msra.mxu0 0.0
    %7473 = vmatprep.subr.mxu0 0.0
    %7474 = vmatpush1.msra.mxu0 0.0
    %7475 = vmatprep.subr.mxu0 0.0
    %7476 = vmatpush1.msra.mxu0 0.0
    %7477 = vmatprep.subr.mxu0 0.0
    %7478 = vmatpush1.msra.mxu0 0.0
    %7479 = vmatprep.subr.mxu0 0.0
    %7480 = vmatpush1.msra.mxu0 0.0
    %7481 = vmatprep.subr.mxu0 0.0
    %7482 = vmatpush1.msra.mxu0 0.0
    %7483 = vmatprep.subr.mxu0 0.0
    %7484 = vmatpush1.msra.mxu0 0.0
    %7485 = vmatprep.subr.mxu0 0.0
    %7486 = vmatpush1.msra.mxu0 0.0
    %7487 = vmatprep.subr.mxu0 0.0
    %7488 = vmatpush1.msra.mxu0 0.0
    %7489 = vmatprep.subr.mxu0 0.0
    %7490 = vmatpush1.msra.mxu0 0.0
    %7491 = vmatprep.subr.mxu0 0.0
    %7492 = vmatpush1.msra.mxu0 0.0
    %7493 = vmatprep.subr.mxu0 0.0
    %7494 = vmatpush1.msra.mxu0 0.0
    %7495 = vmatprep.subr.mxu0 0.0
    %7496 = vmatpush1.msra.mxu0 0.0
    %7497 = vmatprep.subr.mxu0 0.0
    %7498 = vmatpush1.msra.mxu0 0.0
    %7499 = vmatprep.subr.mxu0 0.0
    %7500 = vmatpush1.msra.mxu0 0.0
    %7501 = vmatprep.subr.mxu0 0.0
    %7502 = vmatpush1.msra.mxu0 0.0
    %7503 = vmatprep.subr.mxu0 0.0
    %7504 = vmatpush1.msra.mxu0 0.0
    %7505 = vmatprep.subr.mxu0 0.0
    %7506 = vmatpush1.msra.mxu0 0.0
    %7507 = vmatprep.subr.mxu0 0.0
    %7508 = vmatpush1.msra.mxu0 0.0
    %7509 = vmatprep.subr.mxu0 0.0
    %7510 = vmatpush1.msra.mxu0 0.0
    %7511 = vmatprep.subr.mxu0 0.0
    %7512 = vmatpush1.msra.mxu0 0.0
    %7513 = vmatprep.subr.mxu0 0.0
    %7514 = vmatpush1.msra.mxu0 0.0
    %7515 = vmatprep.subr.mxu0 0.0
    %7516 = vmatpush1.msra.mxu0 0.0
    %7517 = vmatprep.subr.mxu0 0.0
    %7518 = vmatpush1.msra.mxu0 0.0
    %7519 = vmatprep.subr.mxu0 0.0
    %7520 = vmatpush1.msra.mxu0 0.0
    %7521 = vmatprep.subr.mxu0 0.0
    %7522 = vmatpush1.msra.mxu0 0.0
    %7523 = vmatprep.subr.mxu0 0.0
    %7524 = vmatpush1.msra.mxu0 0.0
    %7525 = vmatprep.subr.mxu0 0.0
    %7526 = vmatpush1.msra.mxu0 0.0
    %7527 = vmatprep.subr.mxu0 0.0
    %7528 = vmatpush1.msra.mxu0 0.0
    %7529 = vmatprep.mubr.f32.mxu0 0.0
    %7530 = vmatmul.mubr.f32.gmra.mrb[0].mxu0 %v7460
    %v7531 = vpop.f32.mrb[0].mxu0
    %v7532 = vadd.f32 0.0, %v7531
    %v7533 = vpop.f32.mrb[0].mxu0
    %7534 = vmatprep.mubr.f32.mxu0 0.0
    %7535 = vmatmul.mubr.f32.gmra.mrb[0].mxu0 %v7463
    %v7536 = vpop.f32.mrb[0].mxu0
    %v7537 = vadd.f32 0.0, %v7536
    %v7538 = vpop.f32.mrb[0].mxu0
    %7539 = vdwg.mxu0
    %7540 = vrot.lane.b32.xlu0 %v7251, 120
    %v7541 = vpop.permute.xlu0 %7540
    %7542 = vrot.lane.b32.xlu0 %v7256, 120
    %v7543 = vpop.permute.xlu0 %7542
    %7544 = vrot.lane.b32.xlu0 %v7332, 120
    %v7545 = vpop.permute.xlu0 %7544
    %7546 = vrot.lane.b32.xlu0 %v7337, 120
    %v7547 = vpop.permute.xlu0 %7546
    %v7548 = vsel %vm1069, %v7541, 0
    %v7550 = vsel %vm1069, %v7543, 0
    %v7552 = vsel %vm1069, %v7545, 0
    %v7554 = vsel %vm1069, %v7547, 0
    %7556 = vmatprep.subr.mxu0 0.0
    %7557 = vmatpush1.xpose.msra.mxu0 %v7552
    %7558 = vmatprep.subr.mxu0 0.0
    %7559 = vmatpush1.xpose.msra.mxu0 %v7554
    %7560 = vmatprep.subr.mxu0 0.0
    %7561 = vmatpush1.xpose.msra.mxu0 0.0
    %7562 = vmatprep.subr.mxu0 0.0
    %7563 = vmatpush1.xpose.msra.mxu0 0.0
    %7564 = vmatprep.subr.mxu0 0.0
    %7565 = vmatpush1.xpose.msra.mxu0 0.0
    %7566 = vmatprep.subr.mxu0 0.0
    %7567 = vmatpush1.xpose.msra.mxu0 0.0
    %7568 = vmatprep.subr.mxu0 0.0
    %7569 = vmatpush1.xpose.msra.mxu0 0.0
    %7570 = vmatprep.subr.mxu0 0.0
    %7571 = vmatpush1.xpose.msra.mxu0 0.0
    %7572 = vmatprep.subr.mxu0 0.0
    %7573 = vmatpush1.xpose.msra.mxu0 0.0
    %7574 = vmatprep.subr.mxu0 0.0
    %7575 = vmatpush1.xpose.msra.mxu0 0.0
    %7576 = vmatprep.subr.mxu0 0.0
    %7577 = vmatpush1.xpose.msra.mxu0 0.0
    %7578 = vmatprep.subr.mxu0 0.0
    %7579 = vmatpush1.xpose.msra.mxu0 0.0
    %7580 = vmatprep.subr.mxu0 0.0
    %7581 = vmatpush1.xpose.msra.mxu0 0.0
    %7582 = vmatprep.subr.mxu0 0.0
    %7583 = vmatpush1.xpose.msra.mxu0 0.0
    %7584 = vmatprep.subr.mxu0 0.0
    %7585 = vmatpush1.xpose.msra.mxu0 0.0
    %7586 = vmatprep.subr.mxu0 0.0
    %7587 = vmatpush1.xpose.msra.mxu0 0.0
    %7588 = vmatprep.subr.mxu0 0.0
    %7589 = vmatpush1.xpose.msra.mxu0 0.0
    %7590 = vmatprep.subr.mxu0 0.0
    %7591 = vmatpush1.xpose.msra.mxu0 0.0
    %7592 = vmatprep.subr.mxu0 0.0
    %7593 = vmatpush1.xpose.msra.mxu0 0.0
    %7594 = vmatprep.subr.mxu0 0.0
    %7595 = vmatpush1.xpose.msra.mxu0 0.0
    %7596 = vmatprep.subr.mxu0 0.0
    %7597 = vmatpush1.xpose.msra.mxu0 0.0
    %7598 = vmatprep.subr.mxu0 0.0
    %7599 = vmatpush1.xpose.msra.mxu0 0.0
    %7600 = vmatprep.subr.mxu0 0.0
    %7601 = vmatpush1.xpose.msra.mxu0 0.0
    %7602 = vmatprep.subr.mxu0 0.0
    %7603 = vmatpush1.xpose.msra.mxu0 0.0
    %7604 = vmatprep.subr.mxu0 0.0
    %7605 = vmatpush1.xpose.msra.mxu0 0.0
    %7606 = vmatprep.subr.mxu0 0.0
    %7607 = vmatpush1.xpose.msra.mxu0 0.0
    %7608 = vmatprep.subr.mxu0 0.0
    %7609 = vmatpush1.xpose.msra.mxu0 0.0
    %7610 = vmatprep.subr.mxu0 0.0
    %7611 = vmatpush1.xpose.msra.mxu0 0.0
    %7612 = vmatprep.subr.mxu0 0.0
    %7613 = vmatpush1.xpose.msra.mxu0 0.0
    %7614 = vmatprep.subr.mxu0 0.0
    %7615 = vmatpush1.xpose.msra.mxu0 0.0
    %7616 = vmatprep.subr.mxu0 0.0
    %7617 = vmatpush1.xpose.msra.mxu0 0.0
    %7618 = vmatprep.subr.mxu0 0.0
    %7619 = vmatpush1.xpose.msra.mxu0 0.0
    %7620 = vmatprep.mubr.f32.mxu0 0.0
    %7621 = vmatmul.mubr.f32.gmra.mrb[0].mxu0 %v7548
    %v7622 = vpop.f32.mrb[0].mxu0
    %v7623 = vadd.f32 0.0, %v7622
    %v7624 = vpop.f32.mrb[0].mxu0
    %7625 = vmatprep.mubr.f32.mxu0 0.0
    %7626 = vmatmul.mubr.f32.gmra.mrb[0].mxu0 %v7550
    %v7627 = vpop.f32.mrb[0].mxu0
    %v7628 = vadd.f32 0.0, %v7627
    %v7629 = vpop.f32.mrb[0].mxu0
    %7630 = vdwg.mxu0
    %v7631 = vmul.f32 %v7623, 0.35355338
    %v7632 = vmul.f32 %v7628, 0.35355338
    %v7633 = vadd.f32 %v7631, %v875
    %v7634 = vadd.f32 %v7632, %v876
    %v7635 = vsel %vm891, %v7633, -inf
    %7636 = vmax.xlane.f32.xlu0 %v7635
    %v7637 = vpop.xlane.xlu0 %7636
    %v7638 = vsel %vm891, %v7634, -inf
    %7639 = vmax.xlane.f32.xlu0 %v7638
    %v7640 = vpop.xlane.xlu0 %7639
    %v7641 = vsub.f32 %v7633, %v7637
    %v7642 = vsub.f32 %v7634, %v7640
    %v7643 = vmul.f32 %v7641, 1.442695
    %v7644 = vpow.pop %v7643
    %v7645 = vmul.f32 %v7642, 1.442695
    %v7646 = vpow.pop %v7645
    %v7647 = vsel %vm891, %v7644, 0.0
    %7648 = vadd.xlane.f32.xlu0 %v7647
    %v7649 = vpop.xlane.xlu0 %7648
    %v7650 = vsel %vm891, %v7646, 0.0
    %7651 = vadd.xlane.f32.xlu0 %v7650
    %v7652 = vpop.xlane.xlu0 %7651
    %v7653 = vrcp.pop %v7649
    %v7654 = vrcp.pop %v7652
    %v7655 = vmul.f32 %v7644, %v7653
    %v7656 = vmul.f32 %v7646, %v7654
    %7657 = vrot.lane.b32.xlu0 %v7332, 88
    %v7658 = vpop.permute.xlu0 %7657
    %7659 = vrot.lane.b32.xlu0 %v7337, 88
    %v7660 = vpop.permute.xlu0 %7659
    %v7664 = vsel %vm891, %v7655, 0
    %v7667 = vsel %vm891, %v7656, 0
    %7669 = vmatprep.subr.mxu0 0.0
    %7670 = vmatpush1.msra.mxu0 %v7658
    %7671 = vmatprep.subr.mxu0 0.0
    %7672 = vmatpush1.msra.mxu0 %v7660
    %7673 = vmatprep.subr.mxu0 0.0
    %7674 = vmatpush1.msra.mxu0 0.0
    %7675 = vmatprep.subr.mxu0 0.0
    %7676 = vmatpush1.msra.mxu0 0.0
    %7677 = vmatprep.subr.mxu0 0.0
    %7678 = vmatpush1.msra.mxu0 0.0
    %7679 = vmatprep.subr.mxu0 0.0
    %7680 = vmatpush1.msra.mxu0 0.0
    %7681 = vmatprep.subr.mxu0 0.0
    %7682 = vmatpush1.msra.mxu0 0.0
    %7683 = vmatprep.subr.mxu0 0.0
    %7684 = vmatpush1.msra.mxu0 0.0
    %7685 = vmatprep.subr.mxu0 0.0
    %7686 = vmatpush1.msra.mxu0 0.0
    %7687 = vmatprep.subr.mxu0 0.0
    %7688 = vmatpush1.msra.mxu0 0.0
    %7689 = vmatprep.subr.mxu0 0.0
    %7690 = vmatpush1.msra.mxu0 0.0
    %7691 = vmatprep.subr.mxu0 0.0
    %7692 = vmatpush1.msra.mxu0 0.0
    %7693 = vmatprep.subr.mxu0 0.0
    %7694 = vmatpush1.msra.mxu0 0.0
    %7695 = vmatprep.subr.mxu0 0.0
    %7696 = vmatpush1.msra.mxu0 0.0
    %7697 = vmatprep.subr.mxu0 0.0
    %7698 = vmatpush1.msra.mxu0 0.0
    %7699 = vmatprep.subr.mxu0 0.0
    %7700 = vmatpush1.msra.mxu0 0.0
    %7701 = vmatprep.subr.mxu0 0.0
    %7702 = vmatpush1.msra.mxu0 0.0
    %7703 = vmatprep.subr.mxu0 0.0
    %7704 = vmatpush1.msra.mxu0 0.0
    %7705 = vmatprep.subr.mxu0 0.0
    %7706 = vmatpush1.msra.mxu0 0.0
    %7707 = vmatprep.subr.mxu0 0.0
    %7708 = vmatpush1.msra.mxu0 0.0
    %7709 = vmatprep.subr.mxu0 0.0
    %7710 = vmatpush1.msra.mxu0 0.0
    %7711 = vmatprep.subr.mxu0 0.0
    %7712 = vmatpush1.msra.mxu0 0.0
    %7713 = vmatprep.subr.mxu0 0.0
    %7714 = vmatpush1.msra.mxu0 0.0
    %7715 = vmatprep.subr.mxu0 0.0
    %7716 = vmatpush1.msra.mxu0 0.0
    %7717 = vmatprep.subr.mxu0 0.0
    %7718 = vmatpush1.msra.mxu0 0.0
    %7719 = vmatprep.subr.mxu0 0.0
    %7720 = vmatpush1.msra.mxu0 0.0
    %7721 = vmatprep.subr.mxu0 0.0
    %7722 = vmatpush1.msra.mxu0 0.0
    %7723 = vmatprep.subr.mxu0 0.0
    %7724 = vmatpush1.msra.mxu0 0.0
    %7725 = vmatprep.subr.mxu0 0.0
    %7726 = vmatpush1.msra.mxu0 0.0
    %7727 = vmatprep.subr.mxu0 0.0
    %7728 = vmatpush1.msra.mxu0 0.0
    %7729 = vmatprep.subr.mxu0 0.0
    %7730 = vmatpush1.msra.mxu0 0.0
    %7731 = vmatprep.subr.mxu0 0.0
    %7732 = vmatpush1.msra.mxu0 0.0
    %7733 = vmatprep.mubr.f32.mxu0 0.0
    %7734 = vmatmul.mubr.f32.gmra.mrb[0].mxu0 %v7664
    %v7735 = vpop.f32.mrb[0].mxu0
    %v7736 = vadd.f32 0.0, %v7735
    %v7737 = vpop.f32.mrb[0].mxu0
    %7738 = vmatprep.mubr.f32.mxu0 0.0
    %7739 = vmatmul.mubr.f32.gmra.mrb[0].mxu0 %v7667
    %v7740 = vpop.f32.mrb[0].mxu0
    %v7741 = vadd.f32 0.0, %v7740
    %v7742 = vpop.f32.mrb[0].mxu0
    %7743 = vdwg.mxu0
    %7744 = vrot.lane.b32.xlu0 %v7251, 112
    %v7745 = vpop.permute.xlu0 %7744
    %7746 = vrot.lane.b32.xlu0 %v7256, 112
    %v7747 = vpop.permute.xlu0 %7746
    %7748 = vrot.lane.b32.xlu0 %v7332, 112
    %v7749 = vpop.permute.xlu0 %7748
    %7750 = vrot.lane.b32.xlu0 %v7337, 112
    %v7751 = vpop.permute.xlu0 %7750
    %v7752 = vsel %vm1069, %v7745, 0
    %v7754 = vsel %vm1069, %v7747, 0
    %v7756 = vsel %vm1069, %v7749, 0
    %v7758 = vsel %vm1069, %v7751, 0
    %7760 = vmatprep.subr.mxu0 0.0
    %7761 = vmatpush1.xpose.msra.mxu0 %v7756
    %7762 = vmatprep.subr.mxu0 0.0
    %7763 = vmatpush1.xpose.msra.mxu0 %v7758
    %7764 = vmatprep.subr.mxu0 0.0
    %7765 = vmatpush1.xpose.msra.mxu0 0.0
    %7766 = vmatprep.subr.mxu0 0.0
    %7767 = vmatpush1.xpose.msra.mxu0 0.0
    %7768 = vmatprep.subr.mxu0 0.0
    %7769 = vmatpush1.xpose.msra.mxu0 0.0
    %7770 = vmatprep.subr.mxu0 0.0
    %7771 = vmatpush1.xpose.msra.mxu0 0.0
    %7772 = vmatprep.subr.mxu0 0.0
    %7773 = vmatpush1.xpose.msra.mxu0 0.0
    %7774 = vmatprep.subr.mxu0 0.0
    %7775 = vmatpush1.xpose.msra.mxu0 0.0
    %7776 = vmatprep.subr.mxu0 0.0
    %7777 = vmatpush1.xpose.msra.mxu0 0.0
    %7778 = vmatprep.subr.mxu0 0.0
    %7779 = vmatpush1.xpose.msra.mxu0 0.0
    %7780 = vmatprep.subr.mxu0 0.0
    %7781 = vmatpush1.xpose.msra.mxu0 0.0
    %7782 = vmatprep.subr.mxu0 0.0
    %7783 = vmatpush1.xpose.msra.mxu0 0.0
    %7784 = vmatprep.subr.mxu0 0.0
    %7785 = vmatpush1.xpose.msra.mxu0 0.0
    %7786 = vmatprep.subr.mxu0 0.0
    %7787 = vmatpush1.xpose.msra.mxu0 0.0
    %7788 = vmatprep.subr.mxu0 0.0
    %7789 = vmatpush1.xpose.msra.mxu0 0.0
    %7790 = vmatprep.subr.mxu0 0.0
    %7791 = vmatpush1.xpose.msra.mxu0 0.0
    %7792 = vmatprep.subr.mxu0 0.0
    %7793 = vmatpush1.xpose.msra.mxu0 0.0
    %7794 = vmatprep.subr.mxu0 0.0
    %7795 = vmatpush1.xpose.msra.mxu0 0.0
    %7796 = vmatprep.subr.mxu0 0.0
    %7797 = vmatpush1.xpose.msra.mxu0 0.0
    %7798 = vmatprep.subr.mxu0 0.0
    %7799 = vmatpush1.xpose.msra.mxu0 0.0
    %7800 = vmatprep.subr.mxu0 0.0
    %7801 = vmatpush1.xpose.msra.mxu0 0.0
    %7802 = vmatprep.subr.mxu0 0.0
    %7803 = vmatpush1.xpose.msra.mxu0 0.0
    %7804 = vmatprep.subr.mxu0 0.0
    %7805 = vmatpush1.xpose.msra.mxu0 0.0
    %7806 = vmatprep.subr.mxu0 0.0
    %7807 = vmatpush1.xpose.msra.mxu0 0.0
    %7808 = vmatprep.subr.mxu0 0.0
    %7809 = vmatpush1.xpose.msra.mxu0 0.0
    %7810 = vmatprep.subr.mxu0 0.0
    %7811 = vmatpush1.xpose.msra.mxu0 0.0
    %7812 = vmatprep.subr.mxu0 0.0
    %7813 = vmatpush1.xpose.msra.mxu0 0.0
    %7814 = vmatprep.subr.mxu0 0.0
    %7815 = vmatpush1.xpose.msra.mxu0 0.0
    %7816 = vmatprep.subr.mxu0 0.0
    %7817 = vmatpush1.xpose.msra.mxu0 0.0
    %7818 = vmatprep.subr.mxu0 0.0
    %7819 = vmatpush1.xpose.msra.mxu0 0.0
    %7820 = vmatprep.subr.mxu0 0.0
    %7821 = vmatpush1.xpose.msra.mxu0 0.0
    %7822 = vmatprep.subr.mxu0 0.0
    %7823 = vmatpush1.xpose.msra.mxu0 0.0
    %7824 = vmatprep.mubr.f32.mxu0 0.0
    %7825 = vmatmul.mubr.f32.gmra.mrb[0].mxu0 %v7752
    %v7826 = vpop.f32.mrb[0].mxu0
    %v7827 = vadd.f32 0.0, %v7826
    %v7828 = vpop.f32.mrb[0].mxu0
    %7829 = vmatprep.mubr.f32.mxu0 0.0
    %7830 = vmatmul.mubr.f32.gmra.mrb[0].mxu0 %v7754
    %v7831 = vpop.f32.mrb[0].mxu0
    %v7832 = vadd.f32 0.0, %v7831
    %v7833 = vpop.f32.mrb[0].mxu0
    %7834 = vdwg.mxu0
    %v7835 = vmul.f32 %v7827, 0.35355338
    %v7836 = vmul.f32 %v7832, 0.35355338
    %v7837 = vadd.f32 %v7835, %v875
    %v7838 = vadd.f32 %v7836, %v876
    %v7839 = vsel %vm891, %v7837, -inf
    %7840 = vmax.xlane.f32.xlu0 %v7839
    %v7841 = vpop.xlane.xlu0 %7840
    %v7842 = vsel %vm891, %v7838, -inf
    %7843 = vmax.xlane.f32.xlu0 %v7842
    %v7844 = vpop.xlane.xlu0 %7843
    %v7845 = vsub.f32 %v7837, %v7841
    %v7846 = vsub.f32 %v7838, %v7844
    %v7847 = vmul.f32 %v7845, 1.442695
    %v7848 = vpow.pop %v7847
    %v7849 = vmul.f32 %v7846, 1.442695
    %v7850 = vpow.pop %v7849
    %v7851 = vsel %vm891, %v7848, 0.0
    %7852 = vadd.xlane.f32.xlu0 %v7851
    %v7853 = vpop.xlane.xlu0 %7852
    %v7854 = vsel %vm891, %v7850, 0.0
    %7855 = vadd.xlane.f32.xlu0 %v7854
    %v7856 = vpop.xlane.xlu0 %7855
    %v7857 = vrcp.pop %v7853
    %v7858 = vrcp.pop %v7856
    %v7859 = vmul.f32 %v7848, %v7857
    %v7860 = vmul.f32 %v7850, %v7858
    %7861 = vrot.lane.b32.xlu0 %v7332, 80
    %v7862 = vpop.permute.xlu0 %7861
    %7863 = vrot.lane.b32.xlu0 %v7337, 80
    %v7864 = vpop.permute.xlu0 %7863
    %v7868 = vsel %vm891, %v7859, 0
    %v7871 = vsel %vm891, %v7860, 0
    %7873 = vmatprep.subr.mxu0 0.0
    %7874 = vmatpush1.msra.mxu0 %v7862
    %7875 = vmatprep.subr.mxu0 0.0
    %7876 = vmatpush1.msra.mxu0 %v7864
    %7877 = vmatprep.subr.mxu0 0.0
    %7878 = vmatpush1.msra.mxu0 0.0
    %7879 = vmatprep.subr.mxu0 0.0
    %7880 = vmatpush1.msra.mxu0 0.0
    %7881 = vmatprep.subr.mxu0 0.0
    %7882 = vmatpush1.msra.mxu0 0.0
    %7883 = vmatprep.subr.mxu0 0.0
    %7884 = vmatpush1.msra.mxu0 0.0
    %7885 = vmatprep.subr.mxu0 0.0
    %7886 = vmatpush1.msra.mxu0 0.0
    %7887 = vmatprep.subr.mxu0 0.0
    %7888 = vmatpush1.msra.mxu0 0.0
    %7889 = vmatprep.subr.mxu0 0.0
    %7890 = vmatpush1.msra.mxu0 0.0
    %7891 = vmatprep.subr.mxu0 0.0
    %7892 = vmatpush1.msra.mxu0 0.0
    %7893 = vmatprep.subr.mxu0 0.0
    %7894 = vmatpush1.msra.mxu0 0.0
    %7895 = vmatprep.subr.mxu0 0.0
    %7896 = vmatpush1.msra.mxu0 0.0
    %7897 = vmatprep.subr.mxu0 0.0
    %7898 = vmatpush1.msra.mxu0 0.0
    %7899 = vmatprep.subr.mxu0 0.0
    %7900 = vmatpush1.msra.mxu0 0.0
    %7901 = vmatprep.subr.mxu0 0.0
    %7902 = vmatpush1.msra.mxu0 0.0
    %7903 = vmatprep.subr.mxu0 0.0
    %7904 = vmatpush1.msra.mxu0 0.0
    %7905 = vmatprep.subr.mxu0 0.0
    %7906 = vmatpush1.msra.mxu0 0.0
    %7907 = vmatprep.subr.mxu0 0.0
    %7908 = vmatpush1.msra.mxu0 0.0
    %7909 = vmatprep.subr.mxu0 0.0
    %7910 = vmatpush1.msra.mxu0 0.0
    %7911 = vmatprep.subr.mxu0 0.0
    %7912 = vmatpush1.msra.mxu0 0.0
    %7913 = vmatprep.subr.mxu0 0.0
    %7914 = vmatpush1.msra.mxu0 0.0
    %7915 = vmatprep.subr.mxu0 0.0
    %7916 = vmatpush1.msra.mxu0 0.0
    %7917 = vmatprep.subr.mxu0 0.0
    %7918 = vmatpush1.msra.mxu0 0.0
    %7919 = vmatprep.subr.mxu0 0.0
    %7920 = vmatpush1.msra.mxu0 0.0
    %7921 = vmatprep.subr.mxu0 0.0
    %7922 = vmatpush1.msra.mxu0 0.0
    %7923 = vmatprep.subr.mxu0 0.0
    %7924 = vmatpush1.msra.mxu0 0.0
    %7925 = vmatprep.subr.mxu0 0.0
    %7926 = vmatpush1.msra.mxu0 0.0
    %7927 = vmatprep.subr.mxu0 0.0
    %7928 = vmatpush1.msra.mxu0 0.0
    %7929 = vmatprep.subr.mxu0 0.0
    %7930 = vmatpush1.msra.mxu0 0.0
    %7931 = vmatprep.subr.mxu0 0.0
    %7932 = vmatpush1.msra.mxu0 0.0
    %7933 = vmatprep.subr.mxu0 0.0
    %7934 = vmatpush1.msra.mxu0 0.0
    %7935 = vmatprep.subr.mxu0 0.0
    %7936 = vmatpush1.msra.mxu0 0.0
    %7937 = vmatprep.mubr.f32.mxu0 0.0
    %7938 = vmatmul.mubr.f32.gmra.mrb[0].mxu0 %v7868
    %v7939 = vpop.f32.mrb[0].mxu0
    %v7940 = vadd.f32 0.0, %v7939
    %v7941 = vpop.f32.mrb[0].mxu0
    %7942 = vmatprep.mubr.f32.mxu0 0.0
    %7943 = vmatmul.mubr.f32.gmra.mrb[0].mxu0 %v7871
    %v7944 = vpop.f32.mrb[0].mxu0
    %v7945 = vadd.f32 0.0, %v7944
    %v7946 = vpop.f32.mrb[0].mxu0
    %7947 = vdwg.mxu0
    %7948 = vrot.lane.b32.xlu0 %v7251, 104
    %v7949 = vpop.permute.xlu0 %7948
    %7950 = vrot.lane.b32.xlu0 %v7256, 104
    %v7951 = vpop.permute.xlu0 %7950
    %7952 = vrot.lane.b32.xlu0 %v7332, 104
    %v7953 = vpop.permute.xlu0 %7952
    %7954 = vrot.lane.b32.xlu0 %v7337, 104
    %v7955 = vpop.permute.xlu0 %7954
    %v7956 = vsel %vm1069, %v7949, 0
    %v7958 = vsel %vm1069, %v7951, 0
    %v7960 = vsel %vm1069, %v7953, 0
    %v7962 = vsel %vm1069, %v7955, 0
    %7964 = vmatprep.subr.mxu0 0.0
    %7965 = vmatpush1.xpose.msra.mxu0 %v7960
    %7966 = vmatprep.subr.mxu0 0.0
    %7967 = vmatpush1.xpose.msra.mxu0 %v7962
    %7968 = vmatprep.subr.mxu0 0.0
    %7969 = vmatpush1.xpose.msra.mxu0 0.0
    %7970 = vmatprep.subr.mxu0 0.0
    %7971 = vmatpush1.xpose.msra.mxu0 0.0
    %7972 = vmatprep.subr.mxu0 0.0
    %7973 = vmatpush1.xpose.msra.mxu0 0.0
    %7974 = vmatprep.subr.mxu0 0.0
    %7975 = vmatpush1.xpose.msra.mxu0 0.0
    %7976 = vmatprep.subr.mxu0 0.0
    %7977 = vmatpush1.xpose.msra.mxu0 0.0
    %7978 = vmatprep.subr.mxu0 0.0
    %7979 = vmatpush1.xpose.msra.mxu0 0.0
    %7980 = vmatprep.subr.mxu0 0.0
    %7981 = vmatpush1.xpose.msra.mxu0 0.0
    %7982 = vmatprep.subr.mxu0 0.0
    %7983 = vmatpush1.xpose.msra.mxu0 0.0
    %7984 = vmatprep.subr.mxu0 0.0
    %7985 = vmatpush1.xpose.msra.mxu0 0.0
    %7986 = vmatprep.subr.mxu0 0.0
    %7987 = vmatpush1.xpose.msra.mxu0 0.0
    %7988 = vmatprep.subr.mxu0 0.0
    %7989 = vmatpush1.xpose.msra.mxu0 0.0
    %7990 = vmatprep.subr.mxu0 0.0
    %7991 = vmatpush1.xpose.msra.mxu0 0.0
    %7992 = vmatprep.subr.mxu0 0.0
    %7993 = vmatpush1.xpose.msra.mxu0 0.0
    %7994 = vmatprep.subr.mxu0 0.0
    %7995 = vmatpush1.xpose.msra.mxu0 0.0
    %7996 = vmatprep.subr.mxu0 0.0
    %7997 = vmatpush1.xpose.msra.mxu0 0.0
    %7998 = vmatprep.subr.mxu0 0.0
    %7999 = vmatpush1.xpose.msra.mxu0 0.0
    %8000 = vmatprep.subr.mxu0 0.0
    %8001 = vmatpush1.xpose.msra.mxu0 0.0
    %8002 = vmatprep.subr.mxu0 0.0
    %8003 = vmatpush1.xpose.msra.mxu0 0.0
    %8004 = vmatprep.subr.mxu0 0.0
    %8005 = vmatpush1.xpose.msra.mxu0 0.0
    %8006 = vmatprep.subr.mxu0 0.0
    %8007 = vmatpush1.xpose.msra.mxu0 0.0
    %8008 = vmatprep.subr.mxu0 0.0
    %8009 = vmatpush1.xpose.msra.mxu0 0.0
    %8010 = vmatprep.subr.mxu0 0.0
    %8011 = vmatpush1.xpose.msra.mxu0 0.0
    %8012 = vmatprep.subr.mxu0 0.0
    %8013 = vmatpush1.xpose.msra.mxu0 0.0
    %8014 = vmatprep.subr.mxu0 0.0
    %8015 = vmatpush1.xpose.msra.mxu0 0.0
    %8016 = vmatprep.subr.mxu0 0.0
    %8017 = vmatpush1.xpose.msra.mxu0 0.0
    %8018 = vmatprep.subr.mxu0 0.0
    %8019 = vmatpush1.xpose.msra.mxu0 0.0
    %8020 = vmatprep.subr.mxu0 0.0
    %8021 = vmatpush1.xpose.msra.mxu0 0.0
    %8022 = vmatprep.subr.mxu0 0.0
    %8023 = vmatpush1.xpose.msra.mxu0 0.0
    %8024 = vmatprep.subr.mxu0 0.0
    %8025 = vmatpush1.xpose.msra.mxu0 0.0
    %8026 = vmatprep.subr.mxu0 0.0
    %8027 = vmatpush1.xpose.msra.mxu0 0.0
    %8028 = vmatprep.mubr.f32.mxu0 0.0
    %8029 = vmatmul.mubr.f32.gmra.mrb[0].mxu0 %v7956
    %v8030 = vpop.f32.mrb[0].mxu0
    %v8031 = vadd.f32 0.0, %v8030
    %v8032 = vpop.f32.mrb[0].mxu0
    %8033 = vmatprep.mubr.f32.mxu0 0.0
    %8034 = vmatmul.mubr.f32.gmra.mrb[0].mxu0 %v7958
    %v8035 = vpop.f32.mrb[0].mxu0
    %v8036 = vadd.f32 0.0, %v8035
    %v8037 = vpop.f32.mrb[0].mxu0
    %8038 = vdwg.mxu0
    %v8039 = vmul.f32 %v8031, 0.35355338
    %v8040 = vmul.f32 %v8036, 0.35355338
    %v8041 = vadd.f32 %v8039, %v875
    %v8042 = vadd.f32 %v8040, %v876
    %v8043 = vsel %vm891, %v8041, -inf
    %8044 = vmax.xlane.f32.xlu0 %v8043
    %v8045 = vpop.xlane.xlu0 %8044
    %v8046 = vsel %vm891, %v8042, -inf
    %8047 = vmax.xlane.f32.xlu0 %v8046
    %v8048 = vpop.xlane.xlu0 %8047
    %v8049 = vsub.f32 %v8041, %v8045
    %v8050 = vsub.f32 %v8042, %v8048
    %v8051 = vmul.f32 %v8049, 1.442695
    %v8052 = vpow.pop %v8051
    %v8053 = vmul.f32 %v8050, 1.442695
    %v8054 = vpow.pop %v8053
    %v8055 = vsel %vm891, %v8052, 0.0
    %8056 = vadd.xlane.f32.xlu0 %v8055
    %v8057 = vpop.xlane.xlu0 %8056
    %v8058 = vsel %vm891, %v8054, 0.0
    %8059 = vadd.xlane.f32.xlu0 %v8058
    %v8060 = vpop.xlane.xlu0 %8059
    %v8061 = vrcp.pop %v8057
    %v8062 = vrcp.pop %v8060
    %v8063 = vmul.f32 %v8052, %v8061
    %v8064 = vmul.f32 %v8054, %v8062
    %8065 = vrot.lane.b32.xlu0 %v7332, 72
    %v8066 = vpop.permute.xlu0 %8065
    %8067 = vrot.lane.b32.xlu0 %v7337, 72
    %v8068 = vpop.permute.xlu0 %8067
    %v8072 = vsel %vm891, %v8063, 0
    %v8075 = vsel %vm891, %v8064, 0
    %8077 = vmatprep.subr.mxu0 0.0
    %8078 = vmatpush1.msra.mxu0 %v8066
    %8079 = vmatprep.subr.mxu0 0.0
    %8080 = vmatpush1.msra.mxu0 %v8068
    %8081 = vmatprep.subr.mxu0 0.0
    %8082 = vmatpush1.msra.mxu0 0.0
    %8083 = vmatprep.subr.mxu0 0.0
    %8084 = vmatpush1.msra.mxu0 0.0
    %8085 = vmatprep.subr.mxu0 0.0
    %8086 = vmatpush1.msra.mxu0 0.0
    %8087 = vmatprep.subr.mxu0 0.0
    %8088 = vmatpush1.msra.mxu0 0.0
    %8089 = vmatprep.subr.mxu0 0.0
    %8090 = vmatpush1.msra.mxu0 0.0
    %8091 = vmatprep.subr.mxu0 0.0
    %8092 = vmatpush1.msra.mxu0 0.0
    %8093 = vmatprep.subr.mxu0 0.0
    %8094 = vmatpush1.msra.mxu0 0.0
    %8095 = vmatprep.subr.mxu0 0.0
    %8096 = vmatpush1.msra.mxu0 0.0
    %8097 = vmatprep.subr.mxu0 0.0
    %8098 = vmatpush1.msra.mxu0 0.0
    %8099 = vmatprep.subr.mxu0 0.0
    %8100 = vmatpush1.msra.mxu0 0.0
    %8101 = vmatprep.subr.mxu0 0.0
    %8102 = vmatpush1.msra.mxu0 0.0
    %8103 = vmatprep.subr.mxu0 0.0
    %8104 = vmatpush1.msra.mxu0 0.0
    %8105 = vmatprep.subr.mxu0 0.0
    %8106 = vmatpush1.msra.mxu0 0.0
    %8107 = vmatprep.subr.mxu0 0.0
    %8108 = vmatpush1.msra.mxu0 0.0
    %8109 = vmatprep.subr.mxu0 0.0
    %8110 = vmatpush1.msra.mxu0 0.0
    %8111 = vmatprep.subr.mxu0 0.0
    %8112 = vmatpush1.msra.mxu0 0.0
    %8113 = vmatprep.subr.mxu0 0.0
    %8114 = vmatpush1.msra.mxu0 0.0
    %8115 = vmatprep.subr.mxu0 0.0
    %8116 = vmatpush1.msra.mxu0 0.0
    %8117 = vmatprep.subr.mxu0 0.0
    %8118 = vmatpush1.msra.mxu0 0.0
    %8119 = vmatprep.subr.mxu0 0.0
    %8120 = vmatpush1.msra.mxu0 0.0
    %8121 = vmatprep.subr.mxu0 0.0
    %8122 = vmatpush1.msra.mxu0 0.0
    %8123 = vmatprep.subr.mxu0 0.0
    %8124 = vmatpush1.msra.mxu0 0.0
    %8125 = vmatprep.subr.mxu0 0.0
    %8126 = vmatpush1.msra.mxu0 0.0
    %8127 = vmatprep.subr.mxu0 0.0
    %8128 = vmatpush1.msra.mxu0 0.0
    %8129 = vmatprep.subr.mxu0 0.0
    %8130 = vmatpush1.msra.mxu0 0.0
    %8131 = vmatprep.subr.mxu0 0.0
    %8132 = vmatpush1.msra.mxu0 0.0
    %8133 = vmatprep.subr.mxu0 0.0
    %8134 = vmatpush1.msra.mxu0 0.0
    %8135 = vmatprep.subr.mxu0 0.0
    %8136 = vmatpush1.msra.mxu0 0.0
    %8137 = vmatprep.subr.mxu0 0.0
    %8138 = vmatpush1.msra.mxu0 0.0
    %8139 = vmatprep.subr.mxu0 0.0
    %8140 = vmatpush1.msra.mxu0 0.0
    %8141 = vmatprep.mubr.f32.mxu0 0.0
    %8142 = vmatmul.mubr.f32.gmra.mrb[0].mxu0 %v8072
    %v8143 = vpop.f32.mrb[0].mxu0
    %v8144 = vadd.f32 0.0, %v8143
    %v8145 = vpop.f32.mrb[0].mxu0
    %8146 = vmatprep.mubr.f32.mxu0 0.0
    %8147 = vmatmul.mubr.f32.gmra.mrb[0].mxu0 %v8075
    %v8148 = vpop.f32.mrb[0].mxu0
    %v8149 = vadd.f32 0.0, %v8148
    %v8150 = vpop.f32.mrb[0].mxu0
    %8151 = vdwg.mxu0
    %8154 = vrot.lane.b32.xlu0 %v7736, 8
    %v8155 = vpop.permute.xlu0 %8154
    %8156 = vrot.lane.b32.xlu0 %v7741, 8
    %v8157 = vpop.permute.xlu0 %8156
    %8162 = vrot.lane.b32.xlu0 %v7940, 16
    %v8163 = vpop.permute.xlu0 %8162
    %8164 = vrot.lane.b32.xlu0 %v7945, 16
    %v8165 = vpop.permute.xlu0 %8164
    %8170 = vrot.lane.b32.xlu0 %v8144, 24
    %v8171 = vpop.permute.xlu0 %8170
    %8172 = vrot.lane.b32.xlu0 %v8149, 24
    %v8173 = vpop.permute.xlu0 %8172
    %v8176 = vsel %vm1069, %v7532, %v8155
    %v8177 = vsel %vm1069, %v7537, %v8157
    %v8178 = vsel %vm891, %v8176, %v8163
    %v8179 = vsel %vm891, %v8177, %v8165
    %v8180 = vsel %vm1906, %v8178, %v8171
    %v8181 = vsel %vm1906, %v8179, %v8173
    %v8183 = vlaneseq
    %v8184 = vshrl.u32 %v8183, 7
    %v8185 = vsub.s32 0, %v8184
    %v8186 = vrot.slane %v762, %v8185
    %v8189 = vsel %vm981, %v8180, 0
    %v8192 = vsel %vm981, %v8181, 0
    %8194 = vmatprep.subr.mxu0 0.0
    %8195 = vmatpush1.msra.mxu0 %v768
    %8196 = vmatprep.subr.mxu0 0.0
    %8197 = vmatpush1.msra.mxu0 %v769
    %8198 = vmatprep.subr.mxu0 0.0
    %8199 = vmatpush1.msra.mxu0 %v770
    %8200 = vmatprep.subr.mxu0 0.0
    %8201 = vmatpush1.msra.mxu0 %v771
    %8202 = vmatprep.subr.mxu0 0.0
    %8203 = vmatpush1.msra.mxu0 0.0
    %8204 = vmatprep.subr.mxu0 0.0
    %8205 = vmatpush1.msra.mxu0 0.0
    %8206 = vmatprep.subr.mxu0 0.0
    %8207 = vmatpush1.msra.mxu0 0.0
    %8208 = vmatprep.subr.mxu0 0.0
    %8209 = vmatpush1.msra.mxu0 0.0
    %8210 = vmatprep.subr.mxu0 0.0
    %8211 = vmatpush1.msra.mxu0 0.0
    %8212 = vmatprep.subr.mxu0 0.0
    %8213 = vmatpush1.msra.mxu0 0.0
    %8214 = vmatprep.subr.mxu0 0.0
    %8215 = vmatpush1.msra.mxu0 0.0
    %8216 = vmatprep.subr.mxu0 0.0
    %8217 = vmatpush1.msra.mxu0 0.0
    %8218 = vmatprep.subr.mxu0 0.0
    %8219 = vmatpush1.msra.mxu0 0.0
    %8220 = vmatprep.subr.mxu0 0.0
    %8221 = vmatpush1.msra.mxu0 0.0
    %8222 = vmatprep.subr.mxu0 0.0
    %8223 = vmatpush1.msra.mxu0 0.0
    %8224 = vmatprep.subr.mxu0 0.0
    %8225 = vmatpush1.msra.mxu0 0.0
    %8226 = vmatprep.subr.mxu0 0.0
    %8227 = vmatpush1.msra.mxu0 0.0
    %8228 = vmatprep.subr.mxu0 0.0
    %8229 = vmatpush1.msra.mxu0 0.0
    %8230 = vmatprep.subr.mxu0 0.0
    %8231 = vmatpush1.msra.mxu0 0.0
    %8232 = vmatprep.subr.mxu0 0.0
    %8233 = vmatpush1.msra.mxu0 0.0
    %8234 = vmatprep.subr.mxu0 0.0
    %8235 = vmatpush1.msra.mxu0 0.0
    %8236 = vmatprep.subr.mxu0 0.0
    %8237 = vmatpush1.msra.mxu0 0.0
    %8238 = vmatprep.subr.mxu0 0.0
    %8239 = vmatpush1.msra.mxu0 0.0
    %8240 = vmatprep.subr.mxu0 0.0
    %8241 = vmatpush1.msra.mxu0 0.0
    %8242 = vmatprep.subr.mxu0 0.0
    %8243 = vmatpush1.msra.mxu0 0.0
    %8244 = vmatprep.subr.mxu0 0.0
    %8245 = vmatpush1.msra.mxu0 0.0
    %8246 = vmatprep.subr.mxu0 0.0
    %8247 = vmatpush1.msra.mxu0 0.0
    %8248 = vmatprep.subr.mxu0 0.0
    %8249 = vmatpush1.msra.mxu0 0.0
    %8250 = vmatprep.subr.mxu0 0.0
    %8251 = vmatpush1.msra.mxu0 0.0
    %8252 = vmatprep.subr.mxu0 0.0
    %8253 = vmatpush1.msra.mxu0 0.0
    %8254 = vmatprep.subr.mxu0 0.0
    %8255 = vmatpush1.msra.mxu0 0.0
    %8256 = vmatprep.subr.mxu0 0.0
    %8257 = vmatpush1.msra.mxu0 0.0
    %8258 = vmatprep.mubr.f32.mxu0 0.0
    %8259 = vmatmul.mubr.f32.gmra.mrb[0].mxu0 %v8189
    %v8260 = vpop.f32.mrb[0].mxu0
    %v8261 = vadd.f32 %v8186, %v8260
    %v8262 = vpop.f32.mrb[0].mxu0
    %8263 = vmatprep.mubr.f32.mxu0 0.0
    %8264 = vmatmul.mubr.f32.gmra.mrb[0].mxu0 %v8192
    %v8265 = vpop.f32.mrb[0].mxu0
    %v8266 = vadd.f32 %v8186, %v8265
    %v8267 = vpop.f32.mrb[0].mxu0
    %8268 = vdwg.mxu0
    %v8269 = vadd.f32 %v7170, %v8261
    %v8270 = vadd.f32 %v7171, %v8266
    %v8271 = vsel %vm981, %v8269, 0.0
    %8272 = vadd.xlane.f32.xlu0 %v8271
    %v8273 = vpop.xlane.xlu0 %8272
    %v8274 = vsel %vm981, %v8270, 0.0
    %8275 = vadd.xlane.f32.xlu0 %v8274
    %v8276 = vpop.xlane.xlu0 %8275
    %v8277 = vmul.f32 %v8273, %v2004
    %v8278 = vmul.f32 %v8276, %v2004
    %v8279 = vsub.f32 %v8269, %v8277
    %v8280 = vsub.f32 %v8270, %v8278
    %v8281 = vmul.f32 %v8279, %v8279
    %v8282 = vmul.f32 %v8280, %v8280
    %v8283 = vsel %vm981, %v8281, 0.0
    %8284 = vadd.xlane.f32.xlu0 %v8283
    %v8285 = vpop.xlane.xlu0 %8284
    %v8286 = vsel %vm981, %v8282, 0.0
    %8287 = vadd.xlane.f32.xlu0 %v8286
    %v8288 = vpop.xlane.xlu0 %8287
    %v8289 = vmul.f32 %v8285, %v2004
    %v8290 = vmul.f32 %v8288, %v2004
    %v8291 = vadd.f32 %v8289, 1e-05
    %v8292 = vadd.f32 %v8290, 1e-05
    %v8293 = vrsqrt.pop %v8291
    %v8294 = vrsqrt.pop %v8292
    %v8295 = vmul.f32 %v8279, %v8293
    %v8296 = vmul.f32 %v8280, %v8294
    %v8298 = vlaneseq
    %v8299 = vshrl.u32 %v8298, 7
    %v8300 = vsub.s32 0, %v8299
    %v8301 = vrot.slane %v793, %v8300
    %v8303 = vmul.f32 %v8295, %v8301
    %v8304 = vmul.f32 %v8296, %v8301
    %v8306 = vlaneseq
    %v8307 = vshrl.u32 %v8306, 7
    %v8308 = vsub.s32 0, %v8307
    %v8309 = vrot.slane %v792, %v8308
    %v8311 = vadd.f32 %v8303, %v8309
    %v8312 = vadd.f32 %v8304, %v8309
    %v8314 = vlaneseq
    %v8315 = vshrl.u32 %v8314, 7
    %v8316 = vsub.s32 0, %v8315
    %v8317 = vrot.slane %v776, %v8316
    %v8320 = vsel %vm981, %v8311, 0
    %v8323 = vsel %vm981, %v8312, 0
    %8325 = vmatprep.subr.mxu0 0.0
    %8326 = vmatpush1.msra.mxu0 %v778
    %8327 = vmatprep.subr.mxu0 0.0
    %8328 = vmatpush1.msra.mxu0 %v779
    %8329 = vmatprep.subr.mxu0 0.0
    %8330 = vmatpush1.msra.mxu0 %v780
    %8331 = vmatprep.subr.mxu0 0.0
    %8332 = vmatpush1.msra.mxu0 %v781
    %8333 = vmatprep.subr.mxu0 0.0
    %8334 = vmatpush1.msra.mxu0 0.0
    %8335 = vmatprep.subr.mxu0 0.0
    %8336 = vmatpush1.msra.mxu0 0.0
    %8337 = vmatprep.subr.mxu0 0.0
    %8338 = vmatpush1.msra.mxu0 0.0
    %8339 = vmatprep.subr.mxu0 0.0
    %8340 = vmatpush1.msra.mxu0 0.0
    %8341 = vmatprep.subr.mxu0 0.0
    %8342 = vmatpush1.msra.mxu0 0.0
    %8343 = vmatprep.subr.mxu0 0.0
    %8344 = vmatpush1.msra.mxu0 0.0
    %8345 = vmatprep.subr.mxu0 0.0
    %8346 = vmatpush1.msra.mxu0 0.0
    %8347 = vmatprep.subr.mxu0 0.0
    %8348 = vmatpush1.msra.mxu0 0.0
    %8349 = vmatprep.subr.mxu0 0.0
    %8350 = vmatpush1.msra.mxu0 0.0
    %8351 = vmatprep.subr.mxu0 0.0
    %8352 = vmatpush1.msra.mxu0 0.0
    %8353 = vmatprep.subr.mxu0 0.0
    %8354 = vmatpush1.msra.mxu0 0.0
    %8355 = vmatprep.subr.mxu0 0.0
    %8356 = vmatpush1.msra.mxu0 0.0
    %8357 = vmatprep.subr.mxu0 0.0
    %8358 = vmatpush1.msra.mxu0 0.0
    %8359 = vmatprep.subr.mxu0 0.0
    %8360 = vmatpush1.msra.mxu0 0.0
    %8361 = vmatprep.subr.mxu0 0.0
    %8362 = vmatpush1.msra.mxu0 0.0
    %8363 = vmatprep.subr.mxu0 0.0
    %8364 = vmatpush1.msra.mxu0 0.0
    %8365 = vmatprep.subr.mxu0 0.0
    %8366 = vmatpush1.msra.mxu0 0.0
    %8367 = vmatprep.subr.mxu0 0.0
    %8368 = vmatpush1.msra.mxu0 0.0
    %8369 = vmatprep.subr.mxu0 0.0
    %8370 = vmatpush1.msra.mxu0 0.0
    %8371 = vmatprep.subr.mxu0 0.0
    %8372 = vmatpush1.msra.mxu0 0.0
    %8373 = vmatprep.subr.mxu0 0.0
    %8374 = vmatpush1.msra.mxu0 0.0
    %8375 = vmatprep.subr.mxu0 0.0
    %8376 = vmatpush1.msra.mxu0 0.0
    %8377 = vmatprep.subr.mxu0 0.0
    %8378 = vmatpush1.msra.mxu0 0.0
    %8379 = vmatprep.subr.mxu0 0.0
    %8380 = vmatpush1.msra.mxu0 0.0
    %8381 = vmatprep.subr.mxu0 0.0
    %8382 = vmatpush1.msra.mxu0 0.0
    %8383 = vmatprep.subr.mxu0 0.0
    %8384 = vmatpush1.msra.mxu0 0.0
    %8385 = vmatprep.subr.mxu0 0.0
    %8386 = vmatpush1.msra.mxu0 0.0
    %8387 = vmatprep.subr.mxu0 0.0
    %8388 = vmatpush1.msra.mxu0 0.0
    %8389 = vmatprep.mubr.f32.mxu0 0.0
    %8390 = vmatmul.mubr.f32.gmra.mrb[0].mxu0 %v8320
    %v8391 = vpop.f32.mrb[0].mxu0
    %v8392 = vadd.f32 %v8317, %v8391
    %v8393 = vpop.f32.mrb[0].mxu0
    %8394 = vmatprep.mubr.f32.mxu0 0.0
    %8395 = vmatmul.mubr.f32.gmra.mrb[0].mxu0 %v8323
    %v8396 = vpop.f32.mrb[0].mxu0
    %v8397 = vadd.f32 %v8317, %v8396
    %v8398 = vpop.f32.mrb[0].mxu0
    %8399 = vdwg.mxu0
    %v8400 = vmax.f32 %v8392, 0.0
    %v8401 = vmax.f32 %v8397, 0.0
    %v8403 = vlaneseq
    %v8404 = vshrl.u32 %v8403, 7
    %v8405 = vsub.s32 0, %v8404
    %v8406 = vrot.slane %v777, %v8405
    %v8409 = vsel %vm2136, %v8400, 0
    %v8412 = vsel %vm2136, %v8401, 0
    %8414 = vmatprep.subr.mxu0 0.0
    %8415 = vmatpush1.msra.mxu0 %v782
    %8416 = vmatprep.subr.mxu0 0.0
    %8417 = vmatpush1.msra.mxu0 %v783
    %8418 = vmatprep.subr.mxu0 0.0
    %8419 = vmatpush1.msra.mxu0 %v784
    %8420 = vmatprep.subr.mxu0 0.0
    %8421 = vmatpush1.msra.mxu0 %v785
    %8422 = vmatprep.subr.mxu0 0.0
    %8423 = vmatpush1.msra.mxu0 %v786
    %8424 = vmatprep.subr.mxu0 0.0
    %8425 = vmatpush1.msra.mxu0 %v787
    %8426 = vmatprep.subr.mxu0 0.0
    %8427 = vmatpush1.msra.mxu0 %v788
    %8428 = vmatprep.subr.mxu0 0.0
    %8429 = vmatpush1.msra.mxu0 %v789
    %8430 = vmatprep.subr.mxu0 0.0
    %8431 = vmatpush1.msra.mxu0 0.0
    %8432 = vmatprep.subr.mxu0 0.0
    %8433 = vmatpush1.msra.mxu0 0.0
    %8434 = vmatprep.subr.mxu0 0.0
    %8435 = vmatpush1.msra.mxu0 0.0
    %8436 = vmatprep.subr.mxu0 0.0
    %8437 = vmatpush1.msra.mxu0 0.0
    %8438 = vmatprep.subr.mxu0 0.0
    %8439 = vmatpush1.msra.mxu0 0.0
    %8440 = vmatprep.subr.mxu0 0.0
    %8441 = vmatpush1.msra.mxu0 0.0
    %8442 = vmatprep.subr.mxu0 0.0
    %8443 = vmatpush1.msra.mxu0 0.0
    %8444 = vmatprep.subr.mxu0 0.0
    %8445 = vmatpush1.msra.mxu0 0.0
    %8446 = vmatprep.subr.mxu0 0.0
    %8447 = vmatpush1.msra.mxu0 0.0
    %8448 = vmatprep.subr.mxu0 0.0
    %8449 = vmatpush1.msra.mxu0 0.0
    %8450 = vmatprep.subr.mxu0 0.0
    %8451 = vmatpush1.msra.mxu0 0.0
    %8452 = vmatprep.subr.mxu0 0.0
    %8453 = vmatpush1.msra.mxu0 0.0
    %8454 = vmatprep.subr.mxu0 0.0
    %8455 = vmatpush1.msra.mxu0 0.0
    %8456 = vmatprep.subr.mxu0 0.0
    %8457 = vmatpush1.msra.mxu0 0.0
    %8458 = vmatprep.subr.mxu0 0.0
    %8459 = vmatpush1.msra.mxu0 0.0
    %8460 = vmatprep.subr.mxu0 0.0
    %8461 = vmatpush1.msra.mxu0 0.0
    %8462 = vmatprep.subr.mxu0 0.0
    %8463 = vmatpush1.msra.mxu0 0.0
    %8464 = vmatprep.subr.mxu0 0.0
    %8465 = vmatpush1.msra.mxu0 0.0
    %8466 = vmatprep.subr.mxu0 0.0
    %8467 = vmatpush1.msra.mxu0 0.0
    %8468 = vmatprep.subr.mxu0 0.0
    %8469 = vmatpush1.msra.mxu0 0.0
    %8470 = vmatprep.subr.mxu0 0.0
    %8471 = vmatpush1.msra.mxu0 0.0
    %8472 = vmatprep.subr.mxu0 0.0
    %8473 = vmatpush1.msra.mxu0 0.0
    %8474 = vmatprep.subr.mxu0 0.0
    %8475 = vmatpush1.msra.mxu0 0.0
    %8476 = vmatprep.subr.mxu0 0.0
    %8477 = vmatpush1.msra.mxu0 0.0
    %8478 = vmatprep.mubr.f32.mxu0 0.0
    %8479 = vmatmul.mubr.f32.gmra.mrb[0].mxu0 %v8409
    %v8480 = vpop.f32.mrb[0].mxu0
    %v8481 = vadd.f32 %v8406, %v8480
    %v8482 = vpop.f32.mrb[0].mxu0
    %8483 = vmatprep.mubr.f32.mxu0 0.0
    %8484 = vmatmul.mubr.f32.gmra.mrb[0].mxu0 %v8412
    %v8485 = vpop.f32.mrb[0].mxu0
    %v8486 = vadd.f32 %v8406, %v8485
    %v8487 = vpop.f32.mrb[0].mxu0
    %8488 = vdwg.mxu0
    %v8489 = vadd.f32 %v8311, %v8481
    %v8490 = vadd.f32 %v8312, %v8486
    %v8491 = vsel %vm981, %v8489, 0.0
    %8492 = vadd.xlane.f32.xlu0 %v8491
    %v8493 = vpop.xlane.xlu0 %8492
    %v8494 = vsel %vm981, %v8490, 0.0
    %8495 = vadd.xlane.f32.xlu0 %v8494
    %v8496 = vpop.xlane.xlu0 %8495
    %v8497 = vmul.f32 %v8493, %v2004
    %v8498 = vmul.f32 %v8496, %v2004
    %v8499 = vsub.f32 %v8489, %v8497
    %v8500 = vsub.f32 %v8490, %v8498
    %v8501 = vmul.f32 %v8499, %v8499
    %v8502 = vmul.f32 %v8500, %v8500
    %v8503 = vsel %vm981, %v8501, 0.0
    %8504 = vadd.xlane.f32.xlu0 %v8503
    %v8505 = vpop.xlane.xlu0 %8504
    %v8506 = vsel %vm981, %v8502, 0.0
    %8507 = vadd.xlane.f32.xlu0 %v8506
    %v8508 = vpop.xlane.xlu0 %8507
    %v8509 = vmul.f32 %v8505, %v2004
    %v8510 = vmul.f32 %v8508, %v2004
    %v8511 = vadd.f32 %v8509, 1e-05
    %v8512 = vadd.f32 %v8510, 1e-05
    %v8513 = vrsqrt.pop %v8511
    %v8514 = vrsqrt.pop %v8512
    %v8515 = vmul.f32 %v8499, %v8513
    %v8516 = vmul.f32 %v8500, %v8514
    %v8518 = vlaneseq
    %v8519 = vshrl.u32 %v8518, 7
    %v8520 = vsub.s32 0, %v8519
    %v8521 = vrot.slane %v795, %v8520
    %v8523 = vmul.f32 %v8515, %v8521
    %v8524 = vmul.f32 %v8516, %v8521
    %v8526 = vlaneseq
    %v8527 = vshrl.u32 %v8526, 7
    %v8528 = vsub.s32 0, %v8527
    %v8529 = vrot.slane %v794, %v8528
    %v8531 = vadd.f32 %v8523, %v8529
    %v8532 = vadd.f32 %v8524, %v8529
    %v8533 = vsel %vm981, %v8531, 0.0
    %8534 = vadd.xlane.f32.xlu0 %v8533
    %v8535 = vpop.xlane.xlu0 %8534
    %v8536 = vsel %vm981, %v8532, 0.0
    %8537 = vadd.xlane.f32.xlu0 %v8536
    %v8538 = vpop.xlane.xlu0 %8537
    %v8539 = vmul.f32 %v8535, %v2004
    %v8540 = vmul.f32 %v8538, %v2004
    %v8541 = vsub.f32 %v8531, %v8539
    %v8542 = vsub.f32 %v8532, %v8540
    %v8543 = vmul.f32 %v8541, %v8541
    %v8544 = vmul.f32 %v8542, %v8542
    %v8545 = vsel %vm981, %v8543, 0.0
    %8546 = vadd.xlane.f32.xlu0 %v8545
    %v8547 = vpop.xlane.xlu0 %8546
    %v8548 = vsel %vm981, %v8544, 0.0
    %8549 = vadd.xlane.f32.xlu0 %v8548
    %v8550 = vpop.xlane.xlu0 %8549
    %v8551 = vmul.f32 %v8547, %v2004
    %v8552 = vmul.f32 %v8550, %v2004
    %v8553 = vadd.f32 %v8551, 1e-05
    %v8554 = vadd.f32 %v8552, 1e-05
    %v8555 = vrsqrt.pop %v8553
    %v8556 = vrsqrt.pop %v8554
    %v8557 = vmul.f32 %v8541, %v8555
    %v8558 = vmul.f32 %v8542, %v8556
    %v8560 = vlaneseq
    %v8561 = vshrl.u32 %v8560, 7
    %v8562 = vsub.s32 0, %v8561
    %v8563 = vrot.slane %v715, %v8562
    %v8565 = vmul.f32 %v8557, %v8563
    %v8566 = vmul.f32 %v8558, %v8563
    %v8568 = vlaneseq
    %v8569 = vshrl.u32 %v8568, 7
    %v8570 = vsub.s32 0, %v8569
    %v8571 = vrot.slane %v714, %v8570
    %v8573 = vadd.f32 %v8565, %v8571
    %v8574 = vadd.f32 %v8566, %v8571
    %v8576 = vlaneseq
    %v8577 = vshrl.u32 %v8576, 7
    %v8578 = vsub.s32 0, %v8577
    %v8579 = vrot.slane %v866, %v8578
    %v8582 = vsel %vm981, %v8573, 0
    %v8585 = vsel %vm981, %v8574, 0
    %8587 = vmatprep.subr.mxu0 0.0
    %8588 = vmatpush1.msra.mxu0 %v867
    %8589 = vmatprep.subr.mxu0 0.0
    %8590 = vmatpush1.msra.mxu0 %v868
    %8591 = vmatprep.subr.mxu0 0.0
    %8592 = vmatpush1.msra.mxu0 %v869
    %8593 = vmatprep.subr.mxu0 0.0
    %8594 = vmatpush1.msra.mxu0 %v870
    %8595 = vmatprep.subr.mxu0 0.0
    %8596 = vmatpush1.msra.mxu0 0.0
    %8597 = vmatprep.subr.mxu0 0.0
    %8598 = vmatpush1.msra.mxu0 0.0
    %8599 = vmatprep.subr.mxu0 0.0
    %8600 = vmatpush1.msra.mxu0 0.0
    %8601 = vmatprep.subr.mxu0 0.0
    %8602 = vmatpush1.msra.mxu0 0.0
    %8603 = vmatprep.subr.mxu0 0.0
    %8604 = vmatpush1.msra.mxu0 0.0
    %8605 = vmatprep.subr.mxu0 0.0
    %8606 = vmatpush1.msra.mxu0 0.0
    %8607 = vmatprep.subr.mxu0 0.0
    %8608 = vmatpush1.msra.mxu0 0.0
    %8609 = vmatprep.subr.mxu0 0.0
    %8610 = vmatpush1.msra.mxu0 0.0
    %8611 = vmatprep.subr.mxu0 0.0
    %8612 = vmatpush1.msra.mxu0 0.0
    %8613 = vmatprep.subr.mxu0 0.0
    %8614 = vmatpush1.msra.mxu0 0.0
    %8615 = vmatprep.subr.mxu0 0.0
    %8616 = vmatpush1.msra.mxu0 0.0
    %8617 = vmatprep.subr.mxu0 0.0
    %8618 = vmatpush1.msra.mxu0 0.0
    %8619 = vmatprep.subr.mxu0 0.0
    %8620 = vmatpush1.msra.mxu0 0.0
    %8621 = vmatprep.subr.mxu0 0.0
    %8622 = vmatpush1.msra.mxu0 0.0
    %8623 = vmatprep.subr.mxu0 0.0
    %8624 = vmatpush1.msra.mxu0 0.0
    %8625 = vmatprep.subr.mxu0 0.0
    %8626 = vmatpush1.msra.mxu0 0.0
    %8627 = vmatprep.subr.mxu0 0.0
    %8628 = vmatpush1.msra.mxu0 0.0
    %8629 = vmatprep.subr.mxu0 0.0
    %8630 = vmatpush1.msra.mxu0 0.0
    %8631 = vmatprep.subr.mxu0 0.0
    %8632 = vmatpush1.msra.mxu0 0.0
    %8633 = vmatprep.subr.mxu0 0.0
    %8634 = vmatpush1.msra.mxu0 0.0
    %8635 = vmatprep.subr.mxu0 0.0
    %8636 = vmatpush1.msra.mxu0 0.0
    %8637 = vmatprep.subr.mxu0 0.0
    %8638 = vmatpush1.msra.mxu0 0.0
    %8639 = vmatprep.subr.mxu0 0.0
    %8640 = vmatpush1.msra.mxu0 0.0
    %8641 = vmatprep.subr.mxu0 0.0
    %8642 = vmatpush1.msra.mxu0 0.0
    %8643 = vmatprep.subr.mxu0 0.0
    %8644 = vmatpush1.msra.mxu0 0.0
    %8645 = vmatprep.subr.mxu0 0.0
    %8646 = vmatpush1.msra.mxu0 0.0
    %8647 = vmatprep.subr.mxu0 0.0
    %8648 = vmatpush1.msra.mxu0 0.0
    %8649 = vmatprep.subr.mxu0 0.0
    %8650 = vmatpush1.msra.mxu0 0.0
    %8651 = vmatprep.mubr.f32.mxu0 0.0
    %8652 = vmatmul.mubr.f32.gmra.mrb[0].mxu0 %v8582
    %v8653 = vpop.f32.mrb[0].mxu0
    %v8654 = vadd.f32 %v8579, %v8653
    %v8655 = vpop.f32.mrb[0].mxu0
    %8656 = vmatprep.mubr.f32.mxu0 0.0
    %8657 = vmatmul.mubr.f32.gmra.mrb[0].mxu0 %v8585
    %v8658 = vpop.f32.mrb[0].mxu0
    %v8659 = vadd.f32 %v8579, %v8658
    %v8660 = vpop.f32.mrb[0].mxu0
    %8661 = vdwg.mxu0
    %8662 = vst.msk [vmem:[#allocation56] sm:$0xff] %vm981, %v8654
    %8663 = vst.msk [vmem:[#allocation56 + $0x8] sm:$0xff] %vm981, %v8659
    // Predicated region
    $region446: #{transformer_forward.1} parent=1 // pred_check
      _
    $region447: #{transformer_forward.1} parent=1 // pred_check_branch
      %8665 = sbr.rel (0) target = $region449
    $region448: #{transformer_forward.1} parent=1 // pred_region
      %s8667 = ssub.s32 256, 256
      %8668 = vsyncadd [#allocation4], %s8667
      %s8669 = sshll.u32 [#allocation56], 4
      %s8670 = int_to_ptr.vmem [resolvable:$true] %s8669
      %8675 = dma.vmem_to_hbm [thread:$0]  %s8670, 256, %s153, [#allocation4], 128, 128, 8
    $region449: #{transformer_forward.1} parent=1 // pred_fallthru
      _
    // Predicated region
    $region450: #{transformer_forward.1} parent=1 // pred_check
      _
    $region451: #{transformer_forward.1} parent=1 // pred_check_branch
      %8677 = sbr.rel (0) target = $region453
    $region452: #{transformer_forward.1} parent=1 // pred_region
      %8678 = dma.done [#allocation4], 256
    $region453: #{transformer_forward.1} parent=1 // pred_fallthru
      _
    %8679 = vsyncpa [#allocation3], 1
    %8680 = vsyncpa [#allocation6], 1
    %8681 = vsyncpa [#allocation9], 1
    %8682 = vsyncpa [#allocation12], 1
    %8683 = vsyncpa [#allocation15], 1
    %8684 = vsyncpa [#allocation18], 1
    %8685 = vsyncpa [#allocation21], 1
    %8686 = vsyncpa [#allocation24], 1
    %8687 = vsyncpa [#allocation27], 1
    %8688 = vsyncpa [#allocation30], 1
    %8689 = vsyncpa [#allocation33], 1
    %8690 = vsyncpa [#allocation36], 1
    %8691 = vsyncpa [#allocation39], 1
    %8692 = vsyncpa [#allocation42], 1
    %8693 = vsyncpa [#allocation45], 1
    %8694 = vsyncpa [#allocation48], 1
    %8695 = vsyncpa [#allocation51], 1
    %8696 = vsyncpa [#allocation54], 1
    %8697 = vsyncpa [#allocation4], 1

</llo_original>
